<compile_context>
chip_gen: v5e
topology: v5e:2x2
jax: 0.10.0
libtpu: 0.0.40
codegen_flags: <defaults>
</compile_context>

<pallas_src>
import jax
import jax.numpy as jnp
from jax.experimental import pallas as pl
from jax.experimental.pallas import tpu as pltpu


def _cdiv(a, b):
    return (a + b - 1) // b


def _round_up(x, m):
    return _cdiv(x, m) * m


def _detect_tile_budget():
    """Max M-tile rows (and scoped-VMEM override) per TPU generation."""
    try:
        vmem = pltpu.get_tpu_info().vmem_capacity_bytes
        if vmem >= (96 << 20):          # v5e / v6e: 128 MiB VMEM -> bigger tiles
            return 1024, 64 << 20
    except Exception:
        pass
    return 512, None                    # v7x (64 MiB) / unknown: conservative


_MAX_TM, _VMEM_LIMIT = _detect_tile_budget()
_MIN_SPLIT_M = 256   # with >= this many rows, force >=2 grid steps (v7x: 2 TCs)


def _pick_tiling(m):
    """Returns (tm, m_padded, n_tiles).

    Small M: one full-dim block (no (8,128) divisibility requirement, no pad).
    Large M: near-even 16-row-aligned tiles, so padding is <= 15 rows per tile
    (e.g. conv1 at B=2: M=800 -> 2 tiles of 400, zero padding) instead of the
    old round-up-to-512 jnp.pad copy.
    """
    nt = _cdiv(m, _MAX_TM)
    if nt == 1 and m >= _MIN_SPLIT_M:
        nt = 2
    if nt == 1:
        return m, m, 1
    tm = _round_up(_cdiv(m, nt), 16)
    return tm, tm * nt, nt


def _compiler_params():
    return pltpu.CompilerParams(
        dimension_semantics=("parallel",),
        vmem_limit_bytes=_VMEM_LIMIT,
    )


def _maybe_pad_rows(a, mp):
    m = a.shape[0]
    return a if mp == m else jnp.pad(a, ((0, mp - m), (0, 0)))


# ---------------------------------------------------------------------------
# Pallas kernels (bf16 operands, f32 MXU accumulation).
# ---------------------------------------------------------------------------
def _conv_mm_kernel(a_ref, w_ref, b_ref, o_ref):
    acc = jnp.dot(a_ref[...], w_ref[...], preferred_element_type=jnp.float32)
    acc = jnp.maximum(acc + b_ref[...], 0.0)
    o_ref[...] = acc.astype(o_ref.dtype)


def _fc_fused_kernel(a_ref, w1_ref, b1_ref, w2_ref, b2_ref, o_ref):
    h = jnp.dot(a_ref[...], w1_ref[...], preferred_element_type=jnp.float32)
    h = jnp.maximum(h + b1_ref[...], 0.0).astype(w2_ref.dtype)
    o = jnp.dot(h, w2_ref[...], preferred_element_type=jnp.float32)
    o_ref[...] = (o + b2_ref[...]).astype(o_ref.dtype)


# ---------------------------------------------------------------------------
# Wrappers
# ---------------------------------------------------------------------------
def conv_matmul_bias_relu(a, w_mat, b_row):
    """relu(A @ W + b): A (M,K) bf16, W (K,N) bf16, b (1,N) f32 -> (M,N) bf16."""
    M, K = a.shape
    _, N = w_mat.shape
    tm, mp, nt = _pick_tiling(M)
    a = _maybe_pad_rows(a, mp)
    out = pl.pallas_call(
        _conv_mm_kernel,
        out_shape=jax.ShapeDtypeStruct((mp, N), jnp.bfloat16),
        grid=(nt,),
        in_specs=[
            pl.BlockSpec((tm, K), lambda i: (i, 0)),   # A: tiled along M, full K
            pl.BlockSpec((K, N), lambda i: (0, 0)),    # W: resident across grid
            pl.BlockSpec((1, N), lambda i: (0, 0)),    # bias: resident
        ],
        out_specs=pl.BlockSpec((tm, N), lambda i: (i, 0)),
        compiler_params=_compiler_params(),
    )(a, w_mat, b_row)
    return out if mp == M else out[:M]


def fc_head(a, w1, b1, w2p, b2p, num_actions):
    """Fused relu(A@W1+b1) @ W2p + b2p in one Pallas kernel.

    W2p / b2p have their output dim zero-padded to a multiple of 128 so the
    final store is lane-dense; the (M, num_actions) result is sliced out here.
    """
    M, K = a.shape
    H = w1.shape[1]
    Np = w2p.shape[1]
    tm, mp, nt = _pick_tiling(M)
    a = _maybe_pad_rows(a, mp)
    out = pl.pallas_call(
        _fc_fused_kernel,
        out_shape=jax.ShapeDtypeStruct((mp, Np), jnp.float32),
        grid=(nt,),
        in_specs=[
            pl.BlockSpec((tm, K), lambda i: (i, 0)),   # activations, tiled on M
            pl.BlockSpec((K, H), lambda i: (0, 0)),    # fc1 weight, resident
            pl.BlockSpec((1, H), lambda i: (0, 0)),    # fc1 bias
            pl.BlockSpec((H, Np), lambda i: (0, 0)),   # fc2 weight (padded N)
            pl.BlockSpec((1, Np), lambda i: (0, 0)),   # fc2 bias  (padded N)
        ],
        out_specs=pl.BlockSpec((tm, Np), lambda i: (i, 0)),
        compiler_params=_compiler_params(),
    )(a, w1, b1, w2p, b2p)
    return out[:M, :num_actions]


# ---------------------------------------------------------------------------
# Patch extraction (XLA, no gather).  Feature order of the patches is
# (C, kh, kw)-major -- exactly PyTorch's weight.reshape(OC, -1) order.
# ---------------------------------------------------------------------------
def _extract_patches_nhwc(x_nhwc, k, s):
    B, H, W, C = x_nhwc.shape
    OH = (H - k) // s + 1
    OW = (W - k) // s + 1
    patches = jax.lax.conv_general_dilated_patches(
        x_nhwc,
        filter_shape=(k, k),
        window_strides=(s, s),
        padding="VALID",
        dimension_numbers=("NHWC", "HWIO", "NHWC"),
    )                                               # (B, OH, OW, C*k*k)
    return patches.reshape(B * OH * OW, C * k * k), OH, OW


def conv2d_relu_nhwc(x_nhwc, w_mat, b_row, *, ksize, stride, oc):
    B = x_nhwc.shape[0]
    cols, OH, OW = _extract_patches_nhwc(x_nhwc, ksize, stride)
    out = conv_matmul_bias_relu(cols, w_mat, b_row)
    return out.reshape(B, OH, OW, oc)               # stays NHWC, no transpose


# ---------------------------------------------------------------------------
# Parameter init (PyTorch layout) + ONE-TIME kernel relayout.
# ---------------------------------------------------------------------------
def init_params(key, in_channels, num_actions):
    ks = jax.random.split(key, 10)

    def w(k, shape, fan_in):
        return jax.random.normal(k, shape, jnp.float32) / jnp.sqrt(fan_in)

    return {
        "conv1_w": w(ks[0], (32, in_channels, 8, 8), in_channels * 8 * 8),
        "conv1_b": w(ks[1], (32,), in_channels * 8 * 8),
        "conv2_w": w(ks[2], (64, 32, 4, 4), 32 * 4 * 4),
        "conv2_b": w(ks[3], (64,), 32 * 4 * 4),
        "conv3_w": w(ks[4], (64, 64, 3, 3), 64 * 3 * 3),
        "conv3_b": w(ks[5], (64,), 64 * 3 * 3),
        "fc1_w": w(ks[6], (512, 64 * 7 * 7), 64 * 7 * 7),   # torch Linear: (out, in)
        "fc1_b": w(ks[7], (512,), 64 * 7 * 7),
        "fc2_w": w(ks[8], (num_actions, 512), 512),
        "fc2_b": w(ks[9], (num_actions,), 512),
    }


def prepare_params(params):
    """One-time conversion: (K,N) bf16 weights, (1,N) f32 biases, fc2 padded."""
    def conv_mat(w):   # (OC, IC, KH, KW) -> (IC*KH*KW, OC); rows (c, kh, kw)-major
        return w.reshape(w.shape[0], -1).T.astype(jnp.bfloat16)

    # fc1 consumes PyTorch's NCHW flatten (C,H,W); our activations flatten as
    # NHWC (H,W,C) -> permute fc1's input columns once here.
    fc1 = params["fc1_w"].reshape(512, 64, 7, 7)                # (out, C, H, W)
    fc1 = jnp.transpose(fc1, (0, 2, 3, 1)).reshape(512, -1)     # (out, H, W, C)

    # fc2: zero-pad the output dim (num_actions) to 128 lanes for a lane-dense
    # store in the fused FC kernel; the caller slices back to num_actions.
    A = params["fc2_w"].shape[0]
    n2p = _round_up(max(A, 1), 128)
    fc2_w = jnp.zeros((512, n2p), jnp.float32).at[:, :A].set(params["fc2_w"].T)
    fc2_b = jnp.zeros((1, n2p), jnp.float32).at[0, :A].set(params["fc2_b"])

    return {
        "c1_w": conv_mat(params["conv1_w"]), "c1_b": params["conv1_b"].reshape(1, -1),
        "c2_w": conv_mat(params["conv2_w"]), "c2_b": params["conv2_b"].reshape(1, -1),
        "c3_w": conv_mat(params["conv3_w"]), "c3_b": params["conv3_b"].reshape(1, -1),
        "fc1_w": fc1.T.astype(jnp.bfloat16), "fc1_b": params["fc1_b"].reshape(1, -1),
        "fc2_w": fc2_w.astype(jnp.bfloat16), "fc2_b": fc2_b,
    }


# ---------------------------------------------------------------------------
# Forward pass mirroring CustomCNN.forward (NHWC internally).
# ---------------------------------------------------------------------------
def custom_cnn_forward(kparams, x_nchw, num_actions):
    # Single layout shuffle: NCHW -> NHWC, plus bf16 cast for MXU-native matmuls.
    x = jnp.transpose(x_nchw, (0, 2, 3, 1)).astype(jnp.bfloat16)

    x = conv2d_relu_nhwc(x, kparams["c1_w"], kparams["c1_b"], ksize=8, stride=4, oc=32)  # (B,20,20,32)
    x = conv2d_relu_nhwc(x, kparams["c2_w"], kparams["c2_b"], ksize=4, stride=2, oc=64)  # (B, 9, 9,64)
    x = conv2d_relu_nhwc(x, kparams["c3_w"], kparams["c3_b"], ksize=3, stride=1, oc=64)  # (B, 7, 7,64)

    B = x.shape[0]
    x = x.reshape(B, -1)   # NHWC flatten; fc1 columns were permuted to match torch view(B,-1)

    # fc1 (+ReLU) and fc2 fused in one Pallas kernel; output sliced to (B, A).
    return fc_head(x, kparams["fc1_w"], kparams["fc1_b"],
                   kparams["fc2_w"], kparams["fc2_b"], num_actions)


# ---------------------------------------------------------------------------
# Pure-JAX f32 reference (PyTorch semantics) for the correctness check.
# ---------------------------------------------------------------------------
def reference_forward(params, x):
    def conv(x, w, b, s):
        y = jax.lax.conv_general_dilated(
            x, w, (s, s), "VALID", dimension_numbers=("NCHW", "OIHW", "NCHW"))
        return jax.nn.relu(y + b[None, :, None, None])

    x = conv(x, params["conv1_w"], params["conv1_b"], 4)
    x = conv(x, params["conv2_w"], params["conv2_b"], 2)
    x = conv(x, params["conv3_w"], params["conv3_b"], 1)
    x = x.reshape(x.shape[0], -1)                                  # NCHW flatten
    x = jax.nn.relu(x @ params["fc1_w"].T + params["fc1_b"])
    return x @ params["fc2_w"].T + params["fc2_b"]


if __name__ == "__main__":
    # The FC layer (64*7*7) pins the spatial input size to 84x84 (Atari DQN).
    batch, in_channels, num_actions = 2, 4, 5
    key = jax.random.PRNGKey(0)
    k_x, k_p = jax.random.split(key)

    x = jax.random.normal(k_x, (batch, in_channels, 84, 84), jnp.float32)
    params = init_params(k_p, in_channels, num_actions)
    kparams = prepare_params(params)        # weight relayout done once, not per step

    fwd = jax.jit(custom_cnn_forward, static_argnames=("num_actions",))
    out = jax.block_until_ready(fwd(kparams, x, num_actions=num_actions))

    assert out.shape == (batch, num_actions), out.shape
    assert bool(jnp.all(jnp.isfinite(out)))

    # Numerical check vs f32 reference (bf16 operands / f32 accumulation in the
    # kernels -> loose tolerance).  Also validates the patch-feature ordering
    # and the fc1 NHWC/NCHW column permutation.
    ref = reference_forward(params, x)
    assert bool(jnp.allclose(out, ref, rtol=5e-2, atol=5e-2)), \
        float(jnp.max(jnp.abs(out - ref)))

    print("KERNEL_OK")
</pallas_src>

<mosaic_0001>
module attributes {stable_mosaic.version = 11 : i64} {
  func.func @_conv_mm_kernel(%arg0: i32, %arg1: memref<400x256xbf16, #tpu.memory_space<vmem>>, %arg2: memref<256x32xbf16, #tpu.memory_space<vmem>>, %arg3: memref<1x32xf32, #tpu.memory_space<vmem>>, %arg4: memref<400x32xbf16, #tpu.memory_space<vmem>>) attributes {dimension_semantics = [#tpu.dimension_semantics<parallel>], iteration_bounds = array<i64: 2>, scalar_prefetch = 0 : i64, scratch_operands = 0 : i64, tpu.core_type = #tpu.core_type<tc>, window_params = [{transform_indices = @transform_0, window_bounds = array<i64: 400, 256>}, {pipeline_mode = #tpu.pipeline_mode<synchronous>, transform_indices = @transform_1, window_bounds = array<i64: 256, 32>}, {pipeline_mode = #tpu.pipeline_mode<synchronous>, transform_indices = @transform_2, window_bounds = array<i64: 1, 32>}, {transform_indices = @transform_3, window_bounds = array<i64: 400, 32>}]} {
    %c0 = arith.constant 0 : index
    %c0_0 = arith.constant 0 : index
    %0 = vector.load %arg1[%c0, %c0_0] : memref<400x256xbf16, #tpu.memory_space<vmem>>, vector<400x256xbf16>
    %c0_1 = arith.constant 0 : index
    %c0_2 = arith.constant 0 : index
    %1 = vector.load %arg2[%c0_1, %c0_2] : memref<256x32xbf16, #tpu.memory_space<vmem>>, vector<256x32xbf16>
    %cst = arith.constant dense<0.000000e+00> : vector<400x32xf32>
    %2 = tpu.matmul %0, %1, %cst {dimension_numbers = #tpu.dot_dimension_numbers<[1], [0], [0], [1], [0, 0, 1, 1], [], []>} : vector<400x256xbf16>, vector<256x32xbf16>, vector<400x32xf32> -> vector<400x32xf32>
    %c0_3 = arith.constant 0 : index
    %c0_4 = arith.constant 0 : index
    %3 = vector.load %arg3[%c0_3, %c0_4] : memref<1x32xf32, #tpu.memory_space<vmem>>, vector<1x32xf32>
    %4 = vector.broadcast %3 : vector<1x32xf32> to vector<400x32xf32>
    %5 = arith.addf %2, %4 : vector<400x32xf32>
    %cst_5 = arith.constant 0.000000e+00 : f32
    %6 = vector.broadcast %cst_5 : f32 to vector<400x32xf32>
    %7 = arith.maximumf %5, %6 : vector<400x32xf32>
    %8 = arith.truncf %7 : vector<400x32xf32> to vector<400x32xbf16>
    %c0_6 = arith.constant 0 : index
    %c0_7 = arith.constant 0 : index
    %9 = vector.load %arg4[%c0_6, %c0_7] : memref<400x32xbf16, #tpu.memory_space<vmem>>, vector<400x32xbf16>
    tpu.vector_store %arg4[%c0_6, %c0_7], %8 {strides = array<i32>} : memref<400x32xbf16, #tpu.memory_space<vmem>>, vector<400x32xbf16>,
    return
  }
  func.func @transform_0(%arg0: i32) -> (i32, i32) {
    %c0_i32 = arith.constant 0 : i32
    %c0_i32_0 = arith.constant 0 : i32
    return %arg0, %c0_i32 : i32, i32
  }
  func.func @transform_1(%arg0: i32) -> (i32, i32) {
    %c0_i32 = arith.constant 0 : i32
    %c0_i32_0 = arith.constant 0 : i32
    %c0_i32_1 = arith.constant 0 : i32
    return %c0_i32, %c0_i32_0 : i32, i32
  }
  func.func @transform_2(%arg0: i32) -> (i32, i32) {
    %c0_i32 = arith.constant 0 : i32
    %c0_i32_0 = arith.constant 0 : i32
    %c0_i32_1 = arith.constant 0 : i32
    return %c0_i32, %c0_i32_0 : i32, i32
  }
  func.func @transform_3(%arg0: i32) -> (i32, i32) {
    %c0_i32 = arith.constant 0 : i32
    %c0_i32_0 = arith.constant 0 : i32
    return %arg0, %c0_i32 : i32, i32
  }
}

module attributes {stable_mosaic.version = 11 : i64} {
  func.func @_conv_mm_kernel(%arg0: i32, %arg1: memref<162x512xbf16, #tpu.memory_space<vmem>>, %arg2: memref<512x64xbf16, #tpu.memory_space<vmem>>, %arg3: memref<1x64xf32, #tpu.memory_space<vmem>>, %arg4: memref<162x64xbf16, #tpu.memory_space<vmem>>) attributes {dimension_semantics = [#tpu.dimension_semantics<parallel>], iteration_bounds = array<i64: 1>, scalar_prefetch = 0 : i64, scratch_operands = 0 : i64, tpu.core_type = #tpu.core_type<tc>, window_params = [{transform_indices = @transform_0, window_bounds = array<i64: 162, 512>}, {pipeline_mode = #tpu.pipeline_mode<synchronous>, transform_indices = @transform_1, window_bounds = array<i64: 512, 64>}, {pipeline_mode = #tpu.pipeline_mode<synchronous>, transform_indices = @transform_2, window_bounds = array<i64: 1, 64>}, {transform_indices = @transform_3, window_bounds = array<i64: 162, 64>}]} {
    %c0 = arith.constant 0 : index
    %c0_0 = arith.constant 0 : index
    %0 = vector.load %arg1[%c0, %c0_0] : memref<162x512xbf16, #tpu.memory_space<vmem>>, vector<162x512xbf16>
    %c0_1 = arith.constant 0 : index
    %c0_2 = arith.constant 0 : index
    %1 = vector.load %arg2[%c0_1, %c0_2] : memref<512x64xbf16, #tpu.memory_space<vmem>>, vector<512x64xbf16>
    %cst = arith.constant dense<0.000000e+00> : vector<162x64xf32>
    %2 = tpu.matmul %0, %1, %cst {dimension_numbers = #tpu.dot_dimension_numbers<[1], [0], [0], [1], [0, 0, 1, 1], [], []>} : vector<162x512xbf16>, vector<512x64xbf16>, vector<162x64xf32> -> vector<162x64xf32>
    %c0_3 = arith.constant 0 : index
    %c0_4 = arith.constant 0 : index
    %3 = vector.load %arg3[%c0_3, %c0_4] : memref<1x64xf32, #tpu.memory_space<vmem>>, vector<1x64xf32>
    %4 = vector.broadcast %3 : vector<1x64xf32> to vector<162x64xf32>
    %5 = arith.addf %2, %4 : vector<162x64xf32>
    %cst_5 = arith.constant 0.000000e+00 : f32
    %6 = vector.broadcast %cst_5 : f32 to vector<162x64xf32>
    %7 = arith.maximumf %5, %6 : vector<162x64xf32>
    %8 = arith.truncf %7 : vector<162x64xf32> to vector<162x64xbf16>
    %c0_6 = arith.constant 0 : index
    %c0_7 = arith.constant 0 : index
    %9 = vector.load %arg4[%c0_6, %c0_7] : memref<162x64xbf16, #tpu.memory_space<vmem>>, vector<162x64xbf16>
    tpu.vector_store %arg4[%c0_6, %c0_7], %8 {strides = array<i32>} : memref<162x64xbf16, #tpu.memory_space<vmem>>, vector<162x64xbf16>,
    return
  }
  func.func @transform_0(%arg0: i32) -> (i32, i32) {
    %c0_i32 = arith.constant 0 : i32
    %c0_i32_0 = arith.constant 0 : i32
    return %arg0, %c0_i32 : i32, i32
  }
  func.func @transform_1(%arg0: i32) -> (i32, i32) {
    %c0_i32 = arith.constant 0 : i32
    %c0_i32_0 = arith.constant 0 : i32
    %c0_i32_1 = arith.constant 0 : i32
    return %c0_i32, %c0_i32_0 : i32, i32
  }
  func.func @transform_2(%arg0: i32) -> (i32, i32) {
    %c0_i32 = arith.constant 0 : i32
    %c0_i32_0 = arith.constant 0 : i32
    %c0_i32_1 = arith.constant 0 : i32
    return %c0_i32, %c0_i32_0 : i32, i32
  }
  func.func @transform_3(%arg0: i32) -> (i32, i32) {
    %c0_i32 = arith.constant 0 : i32
    %c0_i32_0 = arith.constant 0 : i32
    return %arg0, %c0_i32 : i32, i32
  }
}

module attributes {stable_mosaic.version = 11 : i64} {
  func.func @_conv_mm_kernel(%arg0: i32, %arg1: memref<98x576xbf16, #tpu.memory_space<vmem>>, %arg2: memref<576x64xbf16, #tpu.memory_space<vmem>>, %arg3: memref<1x64xf32, #tpu.memory_space<vmem>>, %arg4: memref<98x64xbf16, #tpu.memory_space<vmem>>) attributes {dimension_semantics = [#tpu.dimension_semantics<parallel>], iteration_bounds = array<i64: 1>, scalar_prefetch = 0 : i64, scratch_operands = 0 : i64, tpu.core_type = #tpu.core_type<tc>, window_params = [{transform_indices = @transform_0, window_bounds = array<i64: 98, 576>}, {pipeline_mode = #tpu.pipeline_mode<synchronous>, transform_indices = @transform_1, window_bounds = array<i64: 576, 64>}, {pipeline_mode = #tpu.pipeline_mode<synchronous>, transform_indices = @transform_2, window_bounds = array<i64: 1, 64>}, {transform_indices = @transform_3, window_bounds = array<i64: 98, 64>}]} {
    %c0 = arith.constant 0 : index
    %c0_0 = arith.constant 0 : index
    %0 = vector.load %arg1[%c0, %c0_0] : memref<98x576xbf16, #tpu.memory_space<vmem>>, vector<98x576xbf16>
    %c0_1 = arith.constant 0 : index
    %c0_2 = arith.constant 0 : index
    %1 = vector.load %arg2[%c0_1, %c0_2] : memref<576x64xbf16, #tpu.memory_space<vmem>>, vector<576x64xbf16>
    %cst = arith.constant dense<0.000000e+00> : vector<98x64xf32>
    %2 = tpu.matmul %0, %1, %cst {dimension_numbers = #tpu.dot_dimension_numbers<[1], [0], [0], [1], [0, 0, 1, 1], [], []>} : vector<98x576xbf16>, vector<576x64xbf16>, vector<98x64xf32> -> vector<98x64xf32>
    %c0_3 = arith.constant 0 : index
    %c0_4 = arith.constant 0 : index
    %3 = vector.load %arg3[%c0_3, %c0_4] : memref<1x64xf32, #tpu.memory_space<vmem>>, vector<1x64xf32>
    %4 = vector.broadcast %3 : vector<1x64xf32> to vector<98x64xf32>
    %5 = arith.addf %2, %4 : vector<98x64xf32>
    %cst_5 = arith.constant 0.000000e+00 : f32
    %6 = vector.broadcast %cst_5 : f32 to vector<98x64xf32>
    %7 = arith.maximumf %5, %6 : vector<98x64xf32>
    %8 = arith.truncf %7 : vector<98x64xf32> to vector<98x64xbf16>
    %c0_6 = arith.constant 0 : index
    %c0_7 = arith.constant 0 : index
    %9 = vector.load %arg4[%c0_6, %c0_7] : memref<98x64xbf16, #tpu.memory_space<vmem>>, vector<98x64xbf16>
    tpu.vector_store %arg4[%c0_6, %c0_7], %8 {strides = array<i32>} : memref<98x64xbf16, #tpu.memory_space<vmem>>, vector<98x64xbf16>,
    return
  }
  func.func @transform_0(%arg0: i32) -> (i32, i32) {
    %c0_i32 = arith.constant 0 : i32
    %c0_i32_0 = arith.constant 0 : i32
    return %arg0, %c0_i32 : i32, i32
  }
  func.func @transform_1(%arg0: i32) -> (i32, i32) {
    %c0_i32 = arith.constant 0 : i32
    %c0_i32_0 = arith.constant 0 : i32
    %c0_i32_1 = arith.constant 0 : i32
    return %c0_i32, %c0_i32_0 : i32, i32
  }
  func.func @transform_2(%arg0: i32) -> (i32, i32) {
    %c0_i32 = arith.constant 0 : i32
    %c0_i32_0 = arith.constant 0 : i32
    %c0_i32_1 = arith.constant 0 : i32
    return %c0_i32, %c0_i32_0 : i32, i32
  }
  func.func @transform_3(%arg0: i32) -> (i32, i32) {
    %c0_i32 = arith.constant 0 : i32
    %c0_i32_0 = arith.constant 0 : i32
    return %arg0, %c0_i32 : i32, i32
  }
}

module attributes {stable_mosaic.version = 11 : i64} {
  func.func @_fc_fused_kernel(%arg0: i32, %arg1: memref<2x3136xbf16, #tpu.memory_space<vmem>>, %arg2: memref<3136x512xbf16, #tpu.memory_space<vmem>>, %arg3: memref<1x512xf32, #tpu.memory_space<vmem>>, %arg4: memref<512x128xbf16, #tpu.memory_space<vmem>>, %arg5: memref<1x128xf32, #tpu.memory_space<vmem>>, %arg6: memref<2x128xf32, #tpu.memory_space<vmem>>) attributes {dimension_semantics = [#tpu.dimension_semantics<parallel>], iteration_bounds = array<i64: 1>, scalar_prefetch = 0 : i64, scratch_operands = 0 : i64, tpu.core_type = #tpu.core_type<tc>, window_params = [{transform_indices = @transform_0, window_bounds = array<i64: 2, 3136>}, {pipeline_mode = #tpu.pipeline_mode<synchronous>, transform_indices = @transform_1, window_bounds = array<i64: 3136, 512>}, {pipeline_mode = #tpu.pipeline_mode<synchronous>, transform_indices = @transform_2, window_bounds = array<i64: 1, 512>}, {pipeline_mode = #tpu.pipeline_mode<synchronous>, transform_indices = @transform_3, window_bounds = array<i64: 512, 128>}, {pipeline_mode = #tpu.pipeline_mode<synchronous>, transform_indices = @transform_4, window_bounds = array<i64: 1, 128>}, {transform_indices = @transform_5, window_bounds = array<i64: 2, 128>}]} {
    %c0 = arith.constant 0 : index
    %c0_0 = arith.constant 0 : index
    %0 = vector.load %arg1[%c0, %c0_0] : memref<2x3136xbf16, #tpu.memory_space<vmem>>, vector<2x3136xbf16>
    %c0_1 = arith.constant 0 : index
    %c0_2 = arith.constant 0 : index
    %1 = vector.load %arg2[%c0_1, %c0_2] : memref<3136x512xbf16, #tpu.memory_space<vmem>>, vector<3136x512xbf16>
    %cst = arith.constant dense<0.000000e+00> : vector<2x512xf32>
    %2 = tpu.matmul %0, %1, %cst {dimension_numbers = #tpu.dot_dimension_numbers<[1], [0], [0], [1], [0, 0, 1, 1], [], []>} : vector<2x3136xbf16>, vector<3136x512xbf16>, vector<2x512xf32> -> vector<2x512xf32>
    %c0_3 = arith.constant 0 : index
    %c0_4 = arith.constant 0 : index
    %3 = vector.load %arg3[%c0_3, %c0_4] : memref<1x512xf32, #tpu.memory_space<vmem>>, vector<1x512xf32>
    %4 = vector.broadcast %3 : vector<1x512xf32> to vector<2x512xf32>
    %5 = arith.addf %2, %4 : vector<2x512xf32>
    %cst_5 = arith.constant 0.000000e+00 : f32
    %6 = vector.broadcast %cst_5 : f32 to vector<2x512xf32>
    %7 = arith.maximumf %5, %6 : vector<2x512xf32>
    %8 = arith.truncf %7 : vector<2x512xf32> to vector<2x512xbf16>
    %c0_6 = arith.constant 0 : index
    %c0_7 = arith.constant 0 : index
    %9 = vector.load %arg4[%c0_6, %c0_7] : memref<512x128xbf16, #tpu.memory_space<vmem>>, vector<512x128xbf16>
    %cst_8 = arith.constant dense<0.000000e+00> : vector<2x128xf32>
    %10 = tpu.matmul %8, %9, %cst_8 {dimension_numbers = #tpu.dot_dimension_numbers<[1], [0], [0], [1], [0, 0, 1, 1], [], []>} : vector<2x512xbf16>, vector<512x128xbf16>, vector<2x128xf32> -> vector<2x128xf32>
    %c0_9 = arith.constant 0 : index
    %c0_10 = arith.constant 0 : index
    %11 = vector.load %arg5[%c0_9, %c0_10] : memref<1x128xf32, #tpu.memory_space<vmem>>, vector<1x128xf32>
    %12 = vector.broadcast %11 : vector<1x128xf32> to vector<2x128xf32>
    %13 = arith.addf %10, %12 : vector<2x128xf32>
    %c0_11 = arith.constant 0 : index
    %c0_12 = arith.constant 0 : index
    %14 = vector.load %arg6[%c0_11, %c0_12] : memref<2x128xf32, #tpu.memory_space<vmem>>, vector<2x128xf32>
    tpu.vector_store %arg6[%c0_11, %c0_12], %13 {strides = array<i32>} : memref<2x128xf32, #tpu.memory_space<vmem>>, vector<2x128xf32>,
    return
  }
  func.func @transform_0(%arg0: i32) -> (i32, i32) {
    %c0_i32 = arith.constant 0 : i32
    %c0_i32_0 = arith.constant 0 : i32
    return %arg0, %c0_i32 : i32, i32
  }
  func.func @transform_1(%arg0: i32) -> (i32, i32) {
    %c0_i32 = arith.constant 0 : i32
    %c0_i32_0 = arith.constant 0 : i32
    %c0_i32_1 = arith.constant 0 : i32
    return %c0_i32, %c0_i32_0 : i32, i32
  }
  func.func @transform_2(%arg0: i32) -> (i32, i32) {
    %c0_i32 = arith.constant 0 : i32
    %c0_i32_0 = arith.constant 0 : i32
    %c0_i32_1 = arith.constant 0 : i32
    return %c0_i32, %c0_i32_0 : i32, i32
  }
  func.func @transform_3(%arg0: i32) -> (i32, i32) {
    %c0_i32 = arith.constant 0 : i32
    %c0_i32_0 = arith.constant 0 : i32
    %c0_i32_1 = arith.constant 0 : i32
    return %c0_i32, %c0_i32_0 : i32, i32
  }
  func.func @transform_4(%arg0: i32) -> (i32, i32) {
    %c0_i32 = arith.constant 0 : i32
    %c0_i32_0 = arith.constant 0 : i32
    %c0_i32_1 = arith.constant 0 : i32
    return %c0_i32, %c0_i32_0 : i32, i32
  }
  func.func @transform_5(%arg0: i32) -> (i32, i32) {
    %c0_i32 = arith.constant 0 : i32
    %c0_i32_0 = arith.constant 0 : i32
    return %arg0, %c0_i32 : i32, i32
  }
}

</mosaic_0001>

<llo_original>
// kernel: custom_cnn_forward.4
$region0: #{custom_cnn_forward.4}
  #allocation0 [shape = 'u32[]', space=smem, size = 0x4, offset = 0x4, fixed_abs, tag = 'smem constant byte address 0x4 - core index']
  #allocation1 [shape = 'u32[72,128]{1,0:T(1,128)}', space=vmem, size = 0x9000, scoped, tag = 'internal scratch']
  %s0 = inlined_call_operand.vmem [shape: bf16[800,256], index: 0, kind: input, shape index: {}]
  %s1 = inlined_call_operand.vmem [shape: bf16[256,32], index: 1, kind: input, shape index: {}]
  %s2 = inlined_call_operand.vmem [shape: f32[1,32], index: 2, kind: input, shape index: {}]
  %s3 = inlined_call_operand.vmem [shape: bf16[800,32], index: 3, kind: output, shape index: {}]
  %s4 = sld [smem:[#allocation0]]
  $region45: #{custom_cnn_forward.4} parent=0
    _
  %s6 = ssub.s32 1, %s4
  %s7 = scalar_select 0, %s6, %s4
  loop: start=0, step=1, limit=4
  $region2: #{custom_cnn_forward.4} parent=0 // loop_pre_header
    _
  $region3: #{custom_cnn_forward.4} parent=0 // loop_header
    %s9 = sphi 0, %s13
    %p10 = scmp.ge.s32.totalorder %s9, 4
    %s19 = sphi 0, %s21
    %s22 = sphi 0, %s19
    %s23 = sphi 0, %s22
    %s39 = sphi 0, %s23
    %s43 = sphi 0, %s43
    %s45 = sphi 0, %s43
    %s46 = sphi 0, %s45
    %s60 = sphi 0, %s46
    %s64 = sphi 0, %s64
    %s66 = sphi 0, %s64
    %s67 = sphi 0, %s66
    %s81 = sphi 0, %s67
    %s87 = sphi 0, %s89
    %s90 = sphi 0, %s87
    %s91 = sphi 0, %s90
    %s107 = sphi 0, %s91
  $region4: #{custom_cnn_forward.4} parent=0 // loop_header_branch
    %12 = sbr.rel (%p10) target = $region8
  $region5: #{custom_cnn_forward.4} parent=0 // loop_body
    %s14 = ssub.s32 %s9, 1
    %s15 = ssub.s32 %s9, 2
    %s16 = sadd.s32 %s9, 1
    %s17 = ssub.s32 %s9, %s16
    %p18 = scmp.eq.s32.totalorder %s17, 0
    %s20 = sadd.s32 %s19, 1
    %s21 = scalar_select %p18, %s19, %s20
    %p24 = pneg %p18
    %p25 = scmp.eq.s32.totalorder %s9, 1
    %p26 = por %p24, %p25
    %p27 = scmp.ne.s32.totalorder %s19, %s22
    %p28 = scmp.eq.s32.totalorder %s9, 0
    %p29 = por %p27, %p28
    %p30 = scmp.ne.s32.totalorder %s19, %s22
    %p31 = scmp.eq.s32.totalorder %s14, 1
    %p32 = por %p30, %p31
    %p33 = scmp.ne.s32.totalorder %s22, %s23
    %p34 = scmp.eq.s32.totalorder %s14, 0
    %p35 = por %p33, %p34
    %p36 = scmp.ne.s32.totalorder %s22, %s23
    %p37 = scmp.eq.s32.totalorder %s15, 1
    %p38 = por %p36, %p37
    %p40 = scmp.ne.s32.totalorder %s23, %s39
    %p41 = scmp.eq.s32.totalorder %s15, 0
    %p42 = por %p40, %p41
    %s44 = sadd.s32 %s43, 1
    %p47 = scmp.eq.s32.totalorder %s9, 1
    %p48 = scmp.ne.s32.totalorder %s43, %s45
    %p49 = scmp.eq.s32.totalorder %s9, 0
    %p50 = por %p48, %p49
    %p51 = scmp.ne.s32.totalorder %s43, %s45
    %p52 = scmp.eq.s32.totalorder %s14, 1
    %p53 = por %p51, %p52
    %p54 = scmp.ne.s32.totalorder %s45, %s46
    %p55 = scmp.eq.s32.totalorder %s14, 0
    %p56 = por %p54, %p55
    %p57 = scmp.ne.s32.totalorder %s45, %s46
    %p58 = scmp.eq.s32.totalorder %s15, 1
    %p59 = por %p57, %p58
    %p61 = scmp.ne.s32.totalorder %s46, %s60
    %p62 = scmp.eq.s32.totalorder %s15, 0
    %p63 = por %p61, %p62
    %s65 = sadd.s32 %s64, 1
    %p68 = scmp.eq.s32.totalorder %s9, 1
    %p69 = scmp.ne.s32.totalorder %s64, %s66
    %p70 = scmp.eq.s32.totalorder %s9, 0
    %p71 = por %p69, %p70
    %p72 = scmp.ne.s32.totalorder %s64, %s66
    %p73 = scmp.eq.s32.totalorder %s14, 1
    %p74 = por %p72, %p73
    %p75 = scmp.ne.s32.totalorder %s66, %s67
    %p76 = scmp.eq.s32.totalorder %s14, 0
    %p77 = por %p75, %p76
    %p78 = scmp.ne.s32.totalorder %s66, %s67
    %p79 = scmp.eq.s32.totalorder %s15, 1
    %p80 = por %p78, %p79
    %p82 = scmp.ne.s32.totalorder %s67, %s81
    %p83 = scmp.eq.s32.totalorder %s15, 0
    %p84 = por %p82, %p83
    %s85 = ssub.s32 %s9, %s16
    %p86 = scmp.eq.s32.totalorder %s85, 0
    %s88 = sadd.s32 %s87, 1
    %s89 = scalar_select %p86, %s87, %s88
    %p92 = pneg %p86
    %p93 = scmp.eq.s32.totalorder %s9, 1
    %p94 = por %p92, %p93
    %p95 = scmp.ne.s32.totalorder %s87, %s90
    %p96 = scmp.eq.s32.totalorder %s9, 0
    %p97 = por %p95, %p96
    %p98 = scmp.ne.s32.totalorder %s87, %s90
    %p99 = scmp.eq.s32.totalorder %s14, 1
    %p100 = por %p98, %p99
    %p101 = scmp.ne.s32.totalorder %s90, %s91
    %p102 = scmp.eq.s32.totalorder %s14, 0
    %p103 = por %p101, %p102
    %p104 = scmp.ne.s32.totalorder %s90, %s91
    %p105 = scmp.eq.s32.totalorder %s15, 1
    %p106 = por %p104, %p105
    %p108 = scmp.ne.s32.totalorder %s91, %s107
    %p109 = scmp.eq.s32.totalorder %s15, 0
    %p110 = por %p108, %p109
    %p111 = scmp.le.s32.totalorder 1, %s9
    %p112 = scmp.lt.s32.totalorder %s9, 3
    %p113 = pnand %p111, %p112
    %p114 = pneg %p113
    // Predicated region
    $region9: #{custom_cnn_forward.4} parent=5 // pred_check
      _
    $region10: #{custom_cnn_forward.4} parent=5 // pred_check_branch
      %116 = sbr.rel (%p113) target = $region12
    $region11: #{custom_cnn_forward.4} parent=5 // pred_region
      %s117 = ssub.s32 %s9, 1
      // Predicated region
      $region13: #{custom_cnn_forward.4} parent=11 // pred_check
        %p118 = pneg %p56
      $region14: #{custom_cnn_forward.4} parent=11 // pred_check_branch
        %120 = sbr.rel (%p118) target = $region16
      $region15: #{custom_cnn_forward.4} parent=11 // pred_region
        _
      $region16: #{custom_cnn_forward.4} parent=11 // pred_fallthru
        _
      // Predicated region
      $region17: #{custom_cnn_forward.4} parent=11 // pred_check
        %p121 = pneg %p77
      $region18: #{custom_cnn_forward.4} parent=11 // pred_check_branch
        %123 = sbr.rel (%p121) target = $region20
      $region19: #{custom_cnn_forward.4} parent=11 // pred_region
        _
      $region20: #{custom_cnn_forward.4} parent=11 // pred_fallthru
        _
    $region12: #{custom_cnn_forward.4} parent=5 // pred_fallthru
      _
    %p124 = scmp.lt.s32.totalorder %s9, 2
    // Predicated region
    $region21: #{custom_cnn_forward.4} parent=5 // pred_check
      %p125 = pneg %p124
    $region22: #{custom_cnn_forward.4} parent=5 // pred_check_branch
      %127 = sbr.rel (%p125) target = $region24
    $region23: #{custom_cnn_forward.4} parent=5 // pred_region
      // Predicated region
      $region25: #{custom_cnn_forward.4} parent=23 // pred_check
        %p128 = pneg %p29
      $region26: #{custom_cnn_forward.4} parent=23 // pred_check_branch
        %130 = sbr.rel (%p128) target = $region28
      $region27: #{custom_cnn_forward.4} parent=23 // pred_region
        %s131 = smul.u32 50, %s9
        %p132 = scmp.lt.s32.totalorder %s131, 99
        %s133 = scalar_select %p132, %s131, 99
        %s134 = smul.addr %s133, 2
        %s135 = smul.addr %s134, 4
        %s136 = scalar_lea.vmem %s0, %s135
        %s137 = smul.u32 50, %s9
      $region28: #{custom_cnn_forward.4} parent=23 // pred_fallthru
        _
    $region24: #{custom_cnn_forward.4} parent=5 // pred_fallthru
      _
    %p138 = scmp.le.s32.totalorder 1, %s9
    %p139 = scmp.lt.s32.totalorder %s9, 3
    %p140 = pnand %p138, %p139
    %p141 = pneg %p140
    // Predicated region
    $region29: #{custom_cnn_forward.4} parent=5 // pred_check
      _
    $region30: #{custom_cnn_forward.4} parent=5 // pred_check_branch
      %143 = sbr.rel (%p140) target = $region32
    $region31: #{custom_cnn_forward.4} parent=5 // pred_region
      %s144 = ssub.s32 %s9, 1
      %s145 = smul.u32 50, %s14
      %p146 = scmp.lt.s32.totalorder %s145, 99
      %s147 = scalar_select %p146, %s145, 99
      %s148 = smul.addr %s147, 2
      %s149 = smul.addr %s148, 4
      %s150 = scalar_lea.vmem %s0, %s149
      %p151 = pneg %p35
      %p152 = pneg %p32
      %p153 = pneg %p56
      %p154 = pneg %p53
      %p155 = pneg %p77
      %p156 = pneg %p74
      %p157 = pneg %p103
      %p158 = pneg %p100
      %s159 = smul.u32 50, %s14
      %p160 = scmp.lt.s32.totalorder %s159, 99
      %s161 = scalar_select %p160, %s159, 99
      %s162 = smul.addr %s161, 4
      %s163 = scalar_lea.vmem %s3, %s162
      %s164 = smul.u32 50, %s14
      %p165 = scmp.lt.s32.totalorder %s164, 99
      %s166 = scalar_select %p165, %s164, 99
      %s167 = smul.addr %s166, 2
      %s168 = smul.addr %s167, 4
      %s169 = scalar_lea.vmem %s0, %s168
      %s170 = smul.u32 50, %s14
      %s171 = smul.u32 50, %s14
      %p172 = scmp.lt.s32.totalorder %s171, 99
      %s173 = scalar_select %p172, %s171, 99
      %s174 = smul.addr %s173, 4
      %s175 = scalar_lea.vmem %s3, %s174
      %s176 = smul.u32 50, %s14
      %v177 = vld [vmem:[%s169] sm:$0xff]
      %v178 = vld [vmem:[%s169 + $0x8] sm:$0xff]
      %v179 = vld [vmem:[%s169 + $0x10] sm:$0xff]
      %v180 = vld [vmem:[%s169 + $0x18] sm:$0xff]
      %v181 = vld [vmem:[%s169 + $0x20] sm:$0xff]
      %v182 = vld [vmem:[%s169 + $0x28] sm:$0xff]
      %v183 = vld [vmem:[%s169 + $0x30] sm:$0xff]
      %v184 = vld [vmem:[%s169 + $0x38] sm:$0xff]
      %v185 = vld [vmem:[%s169 + $0x40] sm:$0xff]
      %v186 = vld [vmem:[%s169 + $0x48] sm:$0xff]
      %v187 = vld [vmem:[%s169 + $0x50] sm:$0xff]
      %v188 = vld [vmem:[%s169 + $0x58] sm:$0xff]
      %v189 = vld [vmem:[%s169 + $0x60] sm:$0xff]
      %v190 = vld [vmem:[%s169 + $0x68] sm:$0xff]
      %v191 = vld [vmem:[%s169 + $0x70] sm:$0xff]
      %v192 = vld [vmem:[%s169 + $0x78] sm:$0xff]
      %v193 = vld [vmem:[%s169 + $0x80] sm:$0xff]
      %v194 = vld [vmem:[%s169 + $0x88] sm:$0xff]
      %v195 = vld [vmem:[%s169 + $0x90] sm:$0xff]
      %v196 = vld [vmem:[%s169 + $0x98] sm:$0xff]
      %v197 = vld [vmem:[%s169 + $0xa0] sm:$0xff]
      %v198 = vld [vmem:[%s169 + $0xa8] sm:$0xff]
      %v199 = vld [vmem:[%s169 + $0xb0] sm:$0xff]
      %v200 = vld [vmem:[%s169 + $0xb8] sm:$0xff]
      %v201 = vld [vmem:[%s169 + $0xc0] sm:$0xff]
      %v202 = vld [vmem:[%s169 + $0xc8] sm:$0xff]
      %v203 = vld [vmem:[%s169 + $0xd0] sm:$0xff]
      %v204 = vld [vmem:[%s169 + $0xd8] sm:$0xff]
      %v205 = vld [vmem:[%s169 + $0xe0] sm:$0xff]
      %v206 = vld [vmem:[%s169 + $0xe8] sm:$0xff]
      %v207 = vld [vmem:[%s169 + $0xf0] sm:$0xff]
      %v208 = vld [vmem:[%s169 + $0xf8] sm:$0xff]
      %v209 = vld [vmem:[%s169 + $0x100] sm:$0xff]
      %v210 = vld [vmem:[%s169 + $0x108] sm:$0xff]
      %v211 = vld [vmem:[%s169 + $0x110] sm:$0xff]
      %v212 = vld [vmem:[%s169 + $0x118] sm:$0xff]
      %v213 = vld [vmem:[%s169 + $0x120] sm:$0xff]
      %v214 = vld [vmem:[%s169 + $0x128] sm:$0xff]
      %v215 = vld [vmem:[%s169 + $0x130] sm:$0xff]
      %v216 = vld [vmem:[%s169 + $0x138] sm:$0xff]
      %v217 = vld [vmem:[%s169 + $0x140] sm:$0xff]
      %v218 = vld [vmem:[%s169 + $0x148] sm:$0xff]
      %v219 = vld [vmem:[%s169 + $0x150] sm:$0xff]
      %v220 = vld [vmem:[%s169 + $0x158] sm:$0xff]
      %v221 = vld [vmem:[%s169 + $0x160] sm:$0xff]
      %v222 = vld [vmem:[%s169 + $0x168] sm:$0xff]
      %v223 = vld [vmem:[%s169 + $0x170] sm:$0xff]
      %v224 = vld [vmem:[%s169 + $0x178] sm:$0xff]
      %v225 = vld [vmem:[%s169 + $0x180] sm:$0xff]
      %v226 = vld [vmem:[%s169 + $0x188] sm:$0xff]
      %v227 = vld [vmem:[%s1] sm:$0xf]
      %v228 = vld [vmem:[%s1 + $0x4] sm:$0xf]
      %v229 = vld [vmem:[%s1 + $0x8] sm:$0xf]
      %v230 = vld [vmem:[%s1 + $0xc] sm:$0xf]
      %v231 = vld [vmem:[%s1 + $0x10] sm:$0xf]
      %v232 = vld [vmem:[%s1 + $0x14] sm:$0xf]
      %v233 = vld [vmem:[%s1 + $0x18] sm:$0xf]
      %v234 = vld [vmem:[%s1 + $0x1c] sm:$0xf]
      %v235 = vld [vmem:[%s1 + $0x20] sm:$0xf]
      %v236 = vld [vmem:[%s1 + $0x24] sm:$0xf]
      %v237 = vld [vmem:[%s1 + $0x28] sm:$0xf]
      %v238 = vld [vmem:[%s1 + $0x2c] sm:$0xf]
      %v239 = vld [vmem:[%s1 + $0x30] sm:$0xf]
      %v240 = vld [vmem:[%s1 + $0x34] sm:$0xf]
      %v241 = vld [vmem:[%s1 + $0x38] sm:$0xf]
      %v242 = vld [vmem:[%s1 + $0x3c] sm:$0xf]
      %v243 = vld [vmem:[%s1 + $0x40] sm:$0xf]
      %v244 = vld [vmem:[%s1 + $0x44] sm:$0xf]
      %v245 = vld [vmem:[%s1 + $0x48] sm:$0xf]
      %v246 = vld [vmem:[%s1 + $0x4c] sm:$0xf]
      %v247 = vld [vmem:[%s1 + $0x50] sm:$0xf]
      %v248 = vld [vmem:[%s1 + $0x54] sm:$0xf]
      %v249 = vld [vmem:[%s1 + $0x58] sm:$0xf]
      %v250 = vld [vmem:[%s1 + $0x5c] sm:$0xf]
      %v251 = vld [vmem:[%s1 + $0x60] sm:$0xf]
      %v252 = vld [vmem:[%s1 + $0x64] sm:$0xf]
      %v253 = vld [vmem:[%s1 + $0x68] sm:$0xf]
      %v254 = vld [vmem:[%s1 + $0x6c] sm:$0xf]
      %v255 = vld [vmem:[%s1 + $0x70] sm:$0xf]
      %v256 = vld [vmem:[%s1 + $0x74] sm:$0xf]
      %v257 = vld [vmem:[%s1 + $0x78] sm:$0xf]
      %v258 = vld [vmem:[%s1 + $0x7c] sm:$0xf]
      %v259 = vld [vmem:[%s2] sm:$0x1]
      %v261 = vperm.slane %v259, 0
      %v313 = vunpack.c.l.b16 %v177
      %v314 = vunpack.c.h.b16 %v177
      %v315 = vunpack.c.l.b16 %v178
      %v316 = vunpack.c.h.b16 %v178
      %v317 = vunpack.c.l.b16 %v179
      %v318 = vunpack.c.h.b16 %v179
      %v319 = vunpack.c.l.b16 %v180
      %v320 = vunpack.c.h.b16 %v180
      %v321 = vunpack.c.l.b16 %v181
      %v322 = vunpack.c.h.b16 %v181
      %v323 = vunpack.c.l.b16 %v182
      %v324 = vunpack.c.h.b16 %v182
      %v325 = vunpack.c.l.b16 %v183
      %v326 = vunpack.c.h.b16 %v183
      %v327 = vunpack.c.l.b16 %v184
      %v328 = vunpack.c.h.b16 %v184
      %v329 = vunpack.c.l.b16 %v185
      %v330 = vunpack.c.h.b16 %v185
      %v331 = vunpack.c.l.b16 %v186
      %v332 = vunpack.c.h.b16 %v186
      %v333 = vunpack.c.l.b16 %v187
      %v334 = vunpack.c.h.b16 %v187
      %v335 = vunpack.c.l.b16 %v188
      %v336 = vunpack.c.h.b16 %v188
      %v337 = vunpack.c.l.b16 %v189
      %v338 = vunpack.c.h.b16 %v189
      %v339 = vunpack.c.l.b16 %v190
      %v340 = vunpack.c.h.b16 %v190
      %v341 = vunpack.c.l.b16 %v191
      %v342 = vunpack.c.h.b16 %v191
      %v343 = vunpack.c.l.b16 %v192
      %v344 = vunpack.c.h.b16 %v192
      %v345 = vunpack.c.l.b16 %v193
      %v346 = vunpack.c.h.b16 %v193
      %v347 = vunpack.c.l.b16 %v194
      %v348 = vunpack.c.h.b16 %v194
      %v349 = vunpack.c.l.b16 %v195
      %v350 = vunpack.c.h.b16 %v195
      %v351 = vunpack.c.l.b16 %v196
      %v352 = vunpack.c.h.b16 %v196
      %v353 = vunpack.c.l.b16 %v197
      %v354 = vunpack.c.h.b16 %v197
      %v355 = vunpack.c.l.b16 %v198
      %v356 = vunpack.c.h.b16 %v198
      %v357 = vunpack.c.l.b16 %v199
      %v358 = vunpack.c.h.b16 %v199
      %v359 = vunpack.c.l.b16 %v200
      %v360 = vunpack.c.h.b16 %v200
      %v361 = vunpack.c.l.b16 %v201
      %v362 = vunpack.c.h.b16 %v201
      %v363 = vunpack.c.l.b16 %v202
      %v364 = vunpack.c.h.b16 %v202
      %v365 = vunpack.c.l.b16 %v203
      %v366 = vunpack.c.h.b16 %v203
      %v367 = vunpack.c.l.b16 %v204
      %v368 = vunpack.c.h.b16 %v204
      %v369 = vunpack.c.l.b16 %v205
      %v370 = vunpack.c.h.b16 %v205
      %v371 = vunpack.c.l.b16 %v206
      %v372 = vunpack.c.h.b16 %v206
      %v373 = vunpack.c.l.b16 %v207
      %v374 = vunpack.c.h.b16 %v207
      %v375 = vunpack.c.l.b16 %v208
      %v376 = vunpack.c.h.b16 %v208
      %v377 = vunpack.c.l.b16 %v209
      %v378 = vunpack.c.h.b16 %v209
      %v379 = vunpack.c.l.b16 %v210
      %v380 = vunpack.c.h.b16 %v210
      %v381 = vunpack.c.l.b16 %v211
      %v382 = vunpack.c.h.b16 %v211
      %v383 = vunpack.c.l.b16 %v212
      %v384 = vunpack.c.h.b16 %v212
      %v385 = vunpack.c.l.b16 %v213
      %v386 = vunpack.c.h.b16 %v213
      %v387 = vunpack.c.l.b16 %v214
      %v388 = vunpack.c.h.b16 %v214
      %v389 = vunpack.c.l.b16 %v215
      %v390 = vunpack.c.h.b16 %v215
      %v391 = vunpack.c.l.b16 %v216
      %v392 = vunpack.c.h.b16 %v216
      %v393 = vunpack.c.l.b16 %v217
      %v394 = vunpack.c.h.b16 %v217
      %v395 = vunpack.c.l.b16 %v218
      %v396 = vunpack.c.h.b16 %v218
      %v397 = vunpack.c.l.b16 %v219
      %v398 = vunpack.c.h.b16 %v219
      %v399 = vunpack.c.l.b16 %v220
      %v400 = vunpack.c.h.b16 %v220
      %v401 = vunpack.c.l.b16 %v221
      %v402 = vunpack.c.h.b16 %v221
      %v403 = vunpack.c.l.b16 %v222
      %v404 = vunpack.c.h.b16 %v222
      %v405 = vunpack.c.l.b16 %v223
      %v406 = vunpack.c.h.b16 %v223
      %v407 = vunpack.c.l.b16 %v224
      %v408 = vunpack.c.h.b16 %v224
      %v409 = vunpack.c.l.b16 %v225
      %v410 = vunpack.c.h.b16 %v225
      %v411 = vunpack.c.l.b16 %v226
      %v412 = vunpack.c.h.b16 %v226
      %v413 = vpack.c.b16 %v315, %v313
      %v414 = vpack.c.b16 %v316, %v314
      %v415 = vpack.c.b16 %v319, %v317
      %v416 = vpack.c.b16 %v320, %v318
      %v417 = vpack.c.b16 %v323, %v321
      %v418 = vpack.c.b16 %v324, %v322
      %v419 = vpack.c.b16 %v327, %v325
      %v420 = vpack.c.b16 %v328, %v326
      %v421 = vpack.c.b16 %v331, %v329
      %v422 = vpack.c.b16 %v332, %v330
      %v423 = vpack.c.b16 %v335, %v333
      %v424 = vpack.c.b16 %v336, %v334
      %v425 = vpack.c.b16 %v339, %v337
      %v426 = vpack.c.b16 %v340, %v338
      %v427 = vpack.c.b16 %v343, %v341
      %v428 = vpack.c.b16 %v344, %v342
      %v429 = vpack.c.b16 %v347, %v345
      %v430 = vpack.c.b16 %v348, %v346
      %v431 = vpack.c.b16 %v351, %v349
      %v432 = vpack.c.b16 %v352, %v350
      %v433 = vpack.c.b16 %v355, %v353
      %v434 = vpack.c.b16 %v356, %v354
      %v435 = vpack.c.b16 %v359, %v357
      %v436 = vpack.c.b16 %v360, %v358
      %v437 = vpack.c.b16 %v363, %v361
      %v438 = vpack.c.b16 %v364, %v362
      %v439 = vpack.c.b16 %v367, %v365
      %v440 = vpack.c.b16 %v368, %v366
      %v441 = vpack.c.b16 %v371, %v369
      %v442 = vpack.c.b16 %v372, %v370
      %v443 = vpack.c.b16 %v375, %v373
      %v444 = vpack.c.b16 %v376, %v374
      %v445 = vpack.c.b16 %v379, %v377
      %v446 = vpack.c.b16 %v380, %v378
      %v447 = vpack.c.b16 %v383, %v381
      %v448 = vpack.c.b16 %v384, %v382
      %v449 = vpack.c.b16 %v387, %v385
      %v450 = vpack.c.b16 %v388, %v386
      %v451 = vpack.c.b16 %v391, %v389
      %v452 = vpack.c.b16 %v392, %v390
      %v453 = vpack.c.b16 %v395, %v393
      %v454 = vpack.c.b16 %v396, %v394
      %v455 = vpack.c.b16 %v399, %v397
      %v456 = vpack.c.b16 %v400, %v398
      %v457 = vpack.c.b16 %v403, %v401
      %v458 = vpack.c.b16 %v404, %v402
      %v459 = vpack.c.b16 %v407, %v405
      %v460 = vpack.c.b16 %v408, %v406
      %v461 = vpack.c.b16 %v411, %v409
      %v462 = vpack.c.b16 %v412, %v410
      %v545 = vunpack.c.l.b16 %v227
      %v546 = vunpack.c.l.b16 %v228
      %v547 = vunpack.c.l.b16 %v229
      %v548 = vunpack.c.l.b16 %v230
      %v549 = vunpack.c.l.b16 %v231
      %v550 = vunpack.c.l.b16 %v232
      %v551 = vunpack.c.l.b16 %v233
      %v552 = vunpack.c.l.b16 %v234
      %v553 = vunpack.c.l.b16 %v235
      %v554 = vunpack.c.l.b16 %v236
      %v555 = vunpack.c.l.b16 %v237
      %v556 = vunpack.c.l.b16 %v238
      %v557 = vunpack.c.l.b16 %v239
      %v558 = vunpack.c.l.b16 %v240
      %v559 = vunpack.c.l.b16 %v241
      %v560 = vunpack.c.l.b16 %v242
      %v561 = vunpack.c.l.b16 %v243
      %v562 = vunpack.c.l.b16 %v244
      %v563 = vunpack.c.l.b16 %v245
      %v564 = vunpack.c.l.b16 %v246
      %v565 = vunpack.c.l.b16 %v247
      %v566 = vunpack.c.l.b16 %v248
      %v567 = vunpack.c.l.b16 %v249
      %v568 = vunpack.c.l.b16 %v250
      %v569 = vunpack.c.l.b16 %v251
      %v570 = vunpack.c.l.b16 %v252
      %v571 = vunpack.c.l.b16 %v253
      %v572 = vunpack.c.l.b16 %v254
      %v573 = vunpack.c.l.b16 %v255
      %v574 = vunpack.c.l.b16 %v256
      %v575 = vunpack.c.l.b16 %v257
      %v576 = vunpack.c.l.b16 %v258
      %v577 = vpack.c.b16 %v546, %v545
      %v578 = vpack.c.b16 %v548, %v547
      %v579 = vpack.c.b16 %v550, %v549
      %v580 = vpack.c.b16 %v552, %v551
      %v581 = vpack.c.b16 %v554, %v553
      %v582 = vpack.c.b16 %v556, %v555
      %v583 = vpack.c.b16 %v558, %v557
      %v584 = vpack.c.b16 %v560, %v559
      %v585 = vpack.c.b16 %v562, %v561
      %v586 = vpack.c.b16 %v564, %v563
      %v587 = vpack.c.b16 %v566, %v565
      %v588 = vpack.c.b16 %v568, %v567
      %v589 = vpack.c.b16 %v570, %v569
      %v590 = vpack.c.b16 %v572, %v571
      %v591 = vpack.c.b16 %v574, %v573
      %v592 = vpack.c.b16 %v576, %v575
      %609 = vmatpush.bf16.msra.mxu0 %v584
      %610 = vmatpush.bf16.msra.mxu0 %v583
      %611 = vmatpush.bf16.msra.mxu0 %v582
      %612 = vmatpush.bf16.msra.mxu0 %v581
      %613 = vmatpush.bf16.msra.mxu0 %v580
      %614 = vmatpush.bf16.msra.mxu0 %v579
      %615 = vmatpush.bf16.msra.mxu0 %v578
      %616 = vmatpush.bf16.msra.mxu0 %v577
      %617 = vmatmul.bf16.gmra.mxu0 %v413
      %v618 = vpop.f32.mrf.mxu0
      %v619 = vadd.f32 %v261, %v618
      %v620 = vpop.f32.mrf.mxu0
      %v621 = vadd.f32 %v261, %v620
      %622 = vmatmul.bf16.gmra.mxu0 %v415
      %v623 = vpop.f32.mrf.mxu0
      %v624 = vadd.f32 %v261, %v623
      %v625 = vpop.f32.mrf.mxu0
      %v626 = vadd.f32 %v261, %v625
      %627 = vmatmul.bf16.gmra.mxu0 %v417
      %v628 = vpop.f32.mrf.mxu0
      %v629 = vadd.f32 %v261, %v628
      %v630 = vpop.f32.mrf.mxu0
      %v631 = vadd.f32 %v261, %v630
      %632 = vmatmul.bf16.gmra.mxu0 %v419
      %v633 = vpop.f32.mrf.mxu0
      %v634 = vadd.f32 %v261, %v633
      %v635 = vpop.f32.mrf.mxu0
      %v636 = vadd.f32 %v261, %v635
      %637 = vmatmul.bf16.gmra.mxu0 %v421
      %v638 = vpop.f32.mrf.mxu0
      %v639 = vadd.f32 %v261, %v638
      %v640 = vpop.f32.mrf.mxu0
      %v641 = vadd.f32 %v261, %v640
      %642 = vmatmul.bf16.gmra.mxu0 %v423
      %v643 = vpop.f32.mrf.mxu0
      %v644 = vadd.f32 %v261, %v643
      %v645 = vpop.f32.mrf.mxu0
      %v646 = vadd.f32 %v261, %v645
      %647 = vmatmul.bf16.gmra.mxu0 %v425
      %v648 = vpop.f32.mrf.mxu0
      %v649 = vadd.f32 %v261, %v648
      %v650 = vpop.f32.mrf.mxu0
      %v651 = vadd.f32 %v261, %v650
      %652 = vmatmul.bf16.gmra.mxu0 %v427
      %v653 = vpop.f32.mrf.mxu0
      %v654 = vadd.f32 %v261, %v653
      %v655 = vpop.f32.mrf.mxu0
      %v656 = vadd.f32 %v261, %v655
      %657 = vmatmul.bf16.gmra.mxu0 %v429
      %v658 = vpop.f32.mrf.mxu0
      %v659 = vadd.f32 %v261, %v658
      %v660 = vpop.f32.mrf.mxu0
      %v661 = vadd.f32 %v261, %v660
      %662 = vmatmul.bf16.gmra.mxu0 %v431
      %v663 = vpop.f32.mrf.mxu0
      %v664 = vadd.f32 %v261, %v663
      %v665 = vpop.f32.mrf.mxu0
      %v666 = vadd.f32 %v261, %v665
      %667 = vmatmul.bf16.gmra.mxu0 %v433
      %v668 = vpop.f32.mrf.mxu0
      %v669 = vadd.f32 %v261, %v668
      %v670 = vpop.f32.mrf.mxu0
      %v671 = vadd.f32 %v261, %v670
      %672 = vmatmul.bf16.gmra.mxu0 %v435
      %v673 = vpop.f32.mrf.mxu0
      %v674 = vadd.f32 %v261, %v673
      %v675 = vpop.f32.mrf.mxu0
      %v676 = vadd.f32 %v261, %v675
      %677 = vmatmul.bf16.gmra.mxu0 %v437
      %v678 = vpop.f32.mrf.mxu0
      %v679 = vadd.f32 %v261, %v678
      %v680 = vpop.f32.mrf.mxu0
      %v681 = vadd.f32 %v261, %v680
      %682 = vmatmul.bf16.gmra.mxu0 %v439
      %v683 = vpop.f32.mrf.mxu0
      %v684 = vadd.f32 %v261, %v683
      %v685 = vpop.f32.mrf.mxu0
      %v686 = vadd.f32 %v261, %v685
      %687 = vmatmul.bf16.gmra.mxu0 %v441
      %v688 = vpop.f32.mrf.mxu0
      %v689 = vadd.f32 %v261, %v688
      %v690 = vpop.f32.mrf.mxu0
      %v691 = vadd.f32 %v261, %v690
      %692 = vmatmul.bf16.gmra.mxu0 %v443
      %v693 = vpop.f32.mrf.mxu0
      %v694 = vadd.f32 %v261, %v693
      %v695 = vpop.f32.mrf.mxu0
      %v696 = vadd.f32 %v261, %v695
      %697 = vmatmul.bf16.gmra.mxu0 %v445
      %v698 = vpop.f32.mrf.mxu0
      %v699 = vadd.f32 %v261, %v698
      %v700 = vpop.f32.mrf.mxu0
      %v701 = vadd.f32 %v261, %v700
      %702 = vmatmul.bf16.gmra.mxu0 %v447
      %v703 = vpop.f32.mrf.mxu0
      %v704 = vadd.f32 %v261, %v703
      %v705 = vpop.f32.mrf.mxu0
      %v706 = vadd.f32 %v261, %v705
      %707 = vmatmul.bf16.gmra.mxu0 %v449
      %v708 = vpop.f32.mrf.mxu0
      %v709 = vadd.f32 %v261, %v708
      %v710 = vpop.f32.mrf.mxu0
      %v711 = vadd.f32 %v261, %v710
      %712 = vmatmul.bf16.gmra.mxu0 %v451
      %v713 = vpop.f32.mrf.mxu0
      %v714 = vadd.f32 %v261, %v713
      %v715 = vpop.f32.mrf.mxu0
      %v716 = vadd.f32 %v261, %v715
      %717 = vmatmul.bf16.gmra.mxu0 %v453
      %v718 = vpop.f32.mrf.mxu0
      %v719 = vadd.f32 %v261, %v718
      %v720 = vpop.f32.mrf.mxu0
      %v721 = vadd.f32 %v261, %v720
      %722 = vmatmul.bf16.gmra.mxu0 %v455
      %v723 = vpop.f32.mrf.mxu0
      %v724 = vadd.f32 %v261, %v723
      %v725 = vpop.f32.mrf.mxu0
      %v726 = vadd.f32 %v261, %v725
      %727 = vmatmul.bf16.gmra.mxu0 %v457
      %v728 = vpop.f32.mrf.mxu0
      %v729 = vadd.f32 %v261, %v728
      %v730 = vpop.f32.mrf.mxu0
      %v731 = vadd.f32 %v261, %v730
      %732 = vmatmul.bf16.gmra.mxu0 %v459
      %v733 = vpop.f32.mrf.mxu0
      %v734 = vadd.f32 %v261, %v733
      %v735 = vpop.f32.mrf.mxu0
      %v736 = vadd.f32 %v261, %v735
      %737 = vmatmul.bf16.gmra.mxu0 %v461
      %v738 = vpop.f32.mrf.mxu0
      %v739 = vadd.f32 %v261, %v738
      %v740 = vpop.f32.mrf.mxu0
      %v741 = vadd.f32 %v261, %v740
      %742 = vdwg.mxu0
      %743 = vmatpush.bf16.msra.mxu0 %v592
      %744 = vmatpush.bf16.msra.mxu0 %v591
      %745 = vmatpush.bf16.msra.mxu0 %v590
      %746 = vmatpush.bf16.msra.mxu0 %v589
      %747 = vmatpush.bf16.msra.mxu0 %v588
      %748 = vmatpush.bf16.msra.mxu0 %v587
      %749 = vmatpush.bf16.msra.mxu0 %v586
      %750 = vmatpush.bf16.msra.mxu0 %v585
      %751 = vmatmul.bf16.gmra.mxu0 %v414
      %v752 = vpop.f32.mrf.mxu0
      %v753 = vadd.f32 %v619, %v752
      %v754 = vpop.f32.mrf.mxu0
      %v755 = vadd.f32 %v621, %v754
      %756 = vmatmul.bf16.gmra.mxu0 %v416
      %v757 = vpop.f32.mrf.mxu0
      %v758 = vadd.f32 %v624, %v757
      %v759 = vpop.f32.mrf.mxu0
      %v760 = vadd.f32 %v626, %v759
      %761 = vmatmul.bf16.gmra.mxu0 %v418
      %v762 = vpop.f32.mrf.mxu0
      %v763 = vadd.f32 %v629, %v762
      %v764 = vpop.f32.mrf.mxu0
      %v765 = vadd.f32 %v631, %v764
      %766 = vmatmul.bf16.gmra.mxu0 %v420
      %v767 = vpop.f32.mrf.mxu0
      %v768 = vadd.f32 %v634, %v767
      %v769 = vpop.f32.mrf.mxu0
      %v770 = vadd.f32 %v636, %v769
      %771 = vmatmul.bf16.gmra.mxu0 %v422
      %v772 = vpop.f32.mrf.mxu0
      %v773 = vadd.f32 %v639, %v772
      %v774 = vpop.f32.mrf.mxu0
      %v775 = vadd.f32 %v641, %v774
      %776 = vmatmul.bf16.gmra.mxu0 %v424
      %v777 = vpop.f32.mrf.mxu0
      %v778 = vadd.f32 %v644, %v777
      %v779 = vpop.f32.mrf.mxu0
      %v780 = vadd.f32 %v646, %v779
      %781 = vmatmul.bf16.gmra.mxu0 %v426
      %v782 = vpop.f32.mrf.mxu0
      %v783 = vadd.f32 %v649, %v782
      %v784 = vpop.f32.mrf.mxu0
      %v785 = vadd.f32 %v651, %v784
      %786 = vmatmul.bf16.gmra.mxu0 %v428
      %v787 = vpop.f32.mrf.mxu0
      %v788 = vadd.f32 %v654, %v787
      %v789 = vpop.f32.mrf.mxu0
      %v790 = vadd.f32 %v656, %v789
      %791 = vmatmul.bf16.gmra.mxu0 %v430
      %v792 = vpop.f32.mrf.mxu0
      %v793 = vadd.f32 %v659, %v792
      %v794 = vpop.f32.mrf.mxu0
      %v795 = vadd.f32 %v661, %v794
      %796 = vmatmul.bf16.gmra.mxu0 %v432
      %v797 = vpop.f32.mrf.mxu0
      %v798 = vadd.f32 %v664, %v797
      %v799 = vpop.f32.mrf.mxu0
      %v800 = vadd.f32 %v666, %v799
      %801 = vmatmul.bf16.gmra.mxu0 %v434
      %v802 = vpop.f32.mrf.mxu0
      %v803 = vadd.f32 %v669, %v802
      %v804 = vpop.f32.mrf.mxu0
      %v805 = vadd.f32 %v671, %v804
      %806 = vmatmul.bf16.gmra.mxu0 %v436
      %v807 = vpop.f32.mrf.mxu0
      %v808 = vadd.f32 %v674, %v807
      %v809 = vpop.f32.mrf.mxu0
      %v810 = vadd.f32 %v676, %v809
      %811 = vmatmul.bf16.gmra.mxu0 %v438
      %v812 = vpop.f32.mrf.mxu0
      %v813 = vadd.f32 %v679, %v812
      %v814 = vpop.f32.mrf.mxu0
      %v815 = vadd.f32 %v681, %v814
      %816 = vmatmul.bf16.gmra.mxu0 %v440
      %v817 = vpop.f32.mrf.mxu0
      %v818 = vadd.f32 %v684, %v817
      %v819 = vpop.f32.mrf.mxu0
      %v820 = vadd.f32 %v686, %v819
      %821 = vmatmul.bf16.gmra.mxu0 %v442
      %v822 = vpop.f32.mrf.mxu0
      %v823 = vadd.f32 %v689, %v822
      %v824 = vpop.f32.mrf.mxu0
      %v825 = vadd.f32 %v691, %v824
      %826 = vmatmul.bf16.gmra.mxu0 %v444
      %v827 = vpop.f32.mrf.mxu0
      %v828 = vadd.f32 %v694, %v827
      %v829 = vpop.f32.mrf.mxu0
      %v830 = vadd.f32 %v696, %v829
      %831 = vmatmul.bf16.gmra.mxu0 %v446
      %v832 = vpop.f32.mrf.mxu0
      %v833 = vadd.f32 %v699, %v832
      %v834 = vpop.f32.mrf.mxu0
      %v835 = vadd.f32 %v701, %v834
      %836 = vmatmul.bf16.gmra.mxu0 %v448
      %v837 = vpop.f32.mrf.mxu0
      %v838 = vadd.f32 %v704, %v837
      %v839 = vpop.f32.mrf.mxu0
      %v840 = vadd.f32 %v706, %v839
      %841 = vmatmul.bf16.gmra.mxu0 %v450
      %v842 = vpop.f32.mrf.mxu0
      %v843 = vadd.f32 %v709, %v842
      %v844 = vpop.f32.mrf.mxu0
      %v845 = vadd.f32 %v711, %v844
      %846 = vmatmul.bf16.gmra.mxu0 %v452
      %v847 = vpop.f32.mrf.mxu0
      %v848 = vadd.f32 %v714, %v847
      %v849 = vpop.f32.mrf.mxu0
      %v850 = vadd.f32 %v716, %v849
      %851 = vmatmul.bf16.gmra.mxu0 %v454
      %v852 = vpop.f32.mrf.mxu0
      %v853 = vadd.f32 %v719, %v852
      %v854 = vpop.f32.mrf.mxu0
      %v855 = vadd.f32 %v721, %v854
      %856 = vmatmul.bf16.gmra.mxu0 %v456
      %v857 = vpop.f32.mrf.mxu0
      %v858 = vadd.f32 %v724, %v857
      %v859 = vpop.f32.mrf.mxu0
      %v860 = vadd.f32 %v726, %v859
      %861 = vmatmul.bf16.gmra.mxu0 %v458
      %v862 = vpop.f32.mrf.mxu0
      %v863 = vadd.f32 %v729, %v862
      %v864 = vpop.f32.mrf.mxu0
      %v865 = vadd.f32 %v731, %v864
      %866 = vmatmul.bf16.gmra.mxu0 %v460
      %v867 = vpop.f32.mrf.mxu0
      %v868 = vadd.f32 %v734, %v867
      %v869 = vpop.f32.mrf.mxu0
      %v870 = vadd.f32 %v736, %v869
      %871 = vmatmul.bf16.gmra.mxu0 %v462
      %v872 = vpop.f32.mrf.mxu0
      %v873 = vadd.f32 %v739, %v872
      %v874 = vpop.f32.mrf.mxu0
      %v875 = vadd.f32 %v741, %v874
      %876 = vdwg.mxu0
      %v877 = vmax.f32 %v753, 0.0
      %v878 = vmax.f32 %v755, 0.0
      %v879 = vmax.f32 %v758, 0.0
      %v880 = vmax.f32 %v760, 0.0
      %v881 = vmax.f32 %v763, 0.0
      %v882 = vmax.f32 %v765, 0.0
      %v883 = vmax.f32 %v768, 0.0
      %v884 = vmax.f32 %v770, 0.0
      %v885 = vmax.f32 %v773, 0.0
      %v886 = vmax.f32 %v775, 0.0
      %v887 = vmax.f32 %v778, 0.0
      %v888 = vmax.f32 %v780, 0.0
      %v889 = vmax.f32 %v783, 0.0
      %v890 = vmax.f32 %v785, 0.0
      %v891 = vmax.f32 %v788, 0.0
      %v892 = vmax.f32 %v790, 0.0
      %v893 = vmax.f32 %v793, 0.0
      %v894 = vmax.f32 %v795, 0.0
      %v895 = vmax.f32 %v798, 0.0
      %v896 = vmax.f32 %v800, 0.0
      %v897 = vmax.f32 %v803, 0.0
      %v898 = vmax.f32 %v805, 0.0
      %v899 = vmax.f32 %v808, 0.0
      %v900 = vmax.f32 %v810, 0.0
      %v901 = vmax.f32 %v813, 0.0
      %v902 = vmax.f32 %v815, 0.0
      %v903 = vmax.f32 %v818, 0.0
      %v904 = vmax.f32 %v820, 0.0
      %v905 = vmax.f32 %v823, 0.0
      %v906 = vmax.f32 %v825, 0.0
      %v907 = vmax.f32 %v828, 0.0
      %v908 = vmax.f32 %v830, 0.0
      %v909 = vmax.f32 %v833, 0.0
      %v910 = vmax.f32 %v835, 0.0
      %v911 = vmax.f32 %v838, 0.0
      %v912 = vmax.f32 %v840, 0.0
      %v913 = vmax.f32 %v843, 0.0
      %v914 = vmax.f32 %v845, 0.0
      %v915 = vmax.f32 %v848, 0.0
      %v916 = vmax.f32 %v850, 0.0
      %v917 = vmax.f32 %v853, 0.0
      %v918 = vmax.f32 %v855, 0.0
      %v919 = vmax.f32 %v858, 0.0
      %v920 = vmax.f32 %v860, 0.0
      %v921 = vmax.f32 %v863, 0.0
      %v922 = vmax.f32 %v865, 0.0
      %v923 = vmax.f32 %v868, 0.0
      %v924 = vmax.f32 %v870, 0.0
      %v925 = vmax.f32 %v873, 0.0
      %v926 = vmax.f32 %v875, 0.0
      %v927 = vpack.c.bf16 %v877, %v877
      %v928 = vpack.c.bf16 %v878, %v878
      %v929 = vpack.c.bf16 %v879, %v879
      %v930 = vpack.c.bf16 %v880, %v880
      %v931 = vpack.c.bf16 %v881, %v881
      %v932 = vpack.c.bf16 %v882, %v882
      %v933 = vpack.c.bf16 %v883, %v883
      %v934 = vpack.c.bf16 %v884, %v884
      %v935 = vpack.c.bf16 %v885, %v885
      %v936 = vpack.c.bf16 %v886, %v886
      %v937 = vpack.c.bf16 %v887, %v887
      %v938 = vpack.c.bf16 %v888, %v888
      %v939 = vpack.c.bf16 %v889, %v889
      %v940 = vpack.c.bf16 %v890, %v890
      %v941 = vpack.c.bf16 %v891, %v891
      %v942 = vpack.c.bf16 %v892, %v892
      %v943 = vpack.c.bf16 %v893, %v893
      %v944 = vpack.c.bf16 %v894, %v894
      %v945 = vpack.c.bf16 %v895, %v895
      %v946 = vpack.c.bf16 %v896, %v896
      %v947 = vpack.c.bf16 %v897, %v897
      %v948 = vpack.c.bf16 %v898, %v898
      %v949 = vpack.c.bf16 %v899, %v899
      %v950 = vpack.c.bf16 %v900, %v900
      %v951 = vpack.c.bf16 %v901, %v901
      %v952 = vpack.c.bf16 %v902, %v902
      %v953 = vpack.c.bf16 %v903, %v903
      %v954 = vpack.c.bf16 %v904, %v904
      %v955 = vpack.c.bf16 %v905, %v905
      %v956 = vpack.c.bf16 %v906, %v906
      %v957 = vpack.c.bf16 %v907, %v907
      %v958 = vpack.c.bf16 %v908, %v908
      %v959 = vpack.c.bf16 %v909, %v909
      %v960 = vpack.c.bf16 %v910, %v910
      %v961 = vpack.c.bf16 %v911, %v911
      %v962 = vpack.c.bf16 %v912, %v912
      %v963 = vpack.c.bf16 %v913, %v913
      %v964 = vpack.c.bf16 %v914, %v914
      %v965 = vpack.c.bf16 %v915, %v915
      %v966 = vpack.c.bf16 %v916, %v916
      %v967 = vpack.c.bf16 %v917, %v917
      %v968 = vpack.c.bf16 %v918, %v918
      %v969 = vpack.c.bf16 %v919, %v919
      %v970 = vpack.c.bf16 %v920, %v920
      %v971 = vpack.c.bf16 %v921, %v921
      %v972 = vpack.c.bf16 %v922, %v922
      %v973 = vpack.c.bf16 %v923, %v923
      %v974 = vpack.c.bf16 %v924, %v924
      %v975 = vpack.c.bf16 %v925, %v925
      %v976 = vpack.c.bf16 %v926, %v926
      %vm977 = vcmask 257024
      %978 = vst.msk [vmem:[%s175] sm:$0xf] %vm977, %v927
      %979 = vst.msk [vmem:[%s175 + $0x4] sm:$0xf] %vm977, %v928
      %980 = vst.msk [vmem:[%s175 + $0x8] sm:$0xf] %vm977, %v929
      %981 = vst.msk [vmem:[%s175 + $0xc] sm:$0xf] %vm977, %v930
      %982 = vst.msk [vmem:[%s175 + $0x10] sm:$0xf] %vm977, %v931
      %983 = vst.msk [vmem:[%s175 + $0x14] sm:$0xf] %vm977, %v932
      %984 = vst.msk [vmem:[%s175 + $0x18] sm:$0xf] %vm977, %v933
      %985 = vst.msk [vmem:[%s175 + $0x1c] sm:$0xf] %vm977, %v934
      %986 = vst.msk [vmem:[%s175 + $0x20] sm:$0xf] %vm977, %v935
      %987 = vst.msk [vmem:[%s175 + $0x24] sm:$0xf] %vm977, %v936
      %988 = vst.msk [vmem:[%s175 + $0x28] sm:$0xf] %vm977, %v937
      %989 = vst.msk [vmem:[%s175 + $0x2c] sm:$0xf] %vm977, %v938
      %990 = vst.msk [vmem:[%s175 + $0x30] sm:$0xf] %vm977, %v939
      %991 = vst.msk [vmem:[%s175 + $0x34] sm:$0xf] %vm977, %v940
      %992 = vst.msk [vmem:[%s175 + $0x38] sm:$0xf] %vm977, %v941
      %993 = vst.msk [vmem:[%s175 + $0x3c] sm:$0xf] %vm977, %v942
      %994 = vst.msk [vmem:[%s175 + $0x40] sm:$0xf] %vm977, %v943
      %995 = vst.msk [vmem:[%s175 + $0x44] sm:$0xf] %vm977, %v944
      %996 = vst.msk [vmem:[%s175 + $0x48] sm:$0xf] %vm977, %v945
      %997 = vst.msk [vmem:[%s175 + $0x4c] sm:$0xf] %vm977, %v946
      %998 = vst.msk [vmem:[%s175 + $0x50] sm:$0xf] %vm977, %v947
      %999 = vst.msk [vmem:[%s175 + $0x54] sm:$0xf] %vm977, %v948
      %1000 = vst.msk [vmem:[%s175 + $0x58] sm:$0xf] %vm977, %v949
      %1001 = vst.msk [vmem:[%s175 + $0x5c] sm:$0xf] %vm977, %v950
      %1002 = vst.msk [vmem:[%s175 + $0x60] sm:$0xf] %vm977, %v951
      %1003 = vst.msk [vmem:[%s175 + $0x64] sm:$0xf] %vm977, %v952
      %1004 = vst.msk [vmem:[%s175 + $0x68] sm:$0xf] %vm977, %v953
      %1005 = vst.msk [vmem:[%s175 + $0x6c] sm:$0xf] %vm977, %v954
      %1006 = vst.msk [vmem:[%s175 + $0x70] sm:$0xf] %vm977, %v955
      %1007 = vst.msk [vmem:[%s175 + $0x74] sm:$0xf] %vm977, %v956
      %1008 = vst.msk [vmem:[%s175 + $0x78] sm:$0xf] %vm977, %v957
      %1009 = vst.msk [vmem:[%s175 + $0x7c] sm:$0xf] %vm977, %v958
      %1010 = vst.msk [vmem:[%s175 + $0x80] sm:$0xf] %vm977, %v959
      %1011 = vst.msk [vmem:[%s175 + $0x84] sm:$0xf] %vm977, %v960
      %1012 = vst.msk [vmem:[%s175 + $0x88] sm:$0xf] %vm977, %v961
      %1013 = vst.msk [vmem:[%s175 + $0x8c] sm:$0xf] %vm977, %v962
      %1014 = vst.msk [vmem:[%s175 + $0x90] sm:$0xf] %vm977, %v963
      %1015 = vst.msk [vmem:[%s175 + $0x94] sm:$0xf] %vm977, %v964
      %1016 = vst.msk [vmem:[%s175 + $0x98] sm:$0xf] %vm977, %v965
      %1017 = vst.msk [vmem:[%s175 + $0x9c] sm:$0xf] %vm977, %v966
      %1018 = vst.msk [vmem:[%s175 + $0xa0] sm:$0xf] %vm977, %v967
      %1019 = vst.msk [vmem:[%s175 + $0xa4] sm:$0xf] %vm977, %v968
      %1020 = vst.msk [vmem:[%s175 + $0xa8] sm:$0xf] %vm977, %v969
      %1021 = vst.msk [vmem:[%s175 + $0xac] sm:$0xf] %vm977, %v970
      %1022 = vst.msk [vmem:[%s175 + $0xb0] sm:$0xf] %vm977, %v971
      %1023 = vst.msk [vmem:[%s175 + $0xb4] sm:$0xf] %vm977, %v972
      %1024 = vst.msk [vmem:[%s175 + $0xb8] sm:$0xf] %vm977, %v973
      %1025 = vst.msk [vmem:[%s175 + $0xbc] sm:$0xf] %vm977, %v974
      %1026 = vst.msk [vmem:[%s175 + $0xc0] sm:$0xf] %vm977, %v975
      %1027 = vst.msk [vmem:[%s175 + $0xc4] sm:$0xf] %vm977, %v976
      %s1028 = smul.u32 50, %s14
      %p1029 = scmp.lt.s32.totalorder %s1028, 99
      %s1030 = scalar_select %p1029, %s1028, 99
      %s1031 = smul.addr %s1030, 4
      %s1032 = scalar_lea.vmem %s3, %s1031
      // Predicated region
      $region33: #{custom_cnn_forward.4} parent=31 // pred_check
        %p1033 = pneg %p100
      $region34: #{custom_cnn_forward.4} parent=31 // pred_check_branch
        %1035 = sbr.rel (%p1033) target = $region36
      $region35: #{custom_cnn_forward.4} parent=31 // pred_region
        %s1036 = smul.u32 50, %s14
      $region36: #{custom_cnn_forward.4} parent=31 // pred_fallthru
        _
    $region32: #{custom_cnn_forward.4} parent=5 // pred_fallthru
      _
    %p1037 = scmp.le.s32.totalorder 2, %s9
    // Predicated region
    $region37: #{custom_cnn_forward.4} parent=5 // pred_check
      %p1038 = pneg %p1037
    $region38: #{custom_cnn_forward.4} parent=5 // pred_check_branch
      %1040 = sbr.rel (%p1038) target = $region40
    $region39: #{custom_cnn_forward.4} parent=5 // pred_region
      %s1041 = ssub.s32 %s9, 2
      // Predicated region
      $region41: #{custom_cnn_forward.4} parent=39 // pred_check
        %p1042 = pneg %p106
      $region42: #{custom_cnn_forward.4} parent=39 // pred_check_branch
        %1044 = sbr.rel (%p1042) target = $region44
      $region43: #{custom_cnn_forward.4} parent=39 // pred_region
        %s1045 = smul.u32 50, %s15
        %p1046 = scmp.lt.s32.totalorder %s1045, 99
        %s1047 = scalar_select %p1046, %s1045, 99
        %s1048 = smul.addr %s1047, 4
        %s1049 = scalar_lea.vmem %s3, %s1048
      $region44: #{custom_cnn_forward.4} parent=39 // pred_fallthru
        _
    $region40: #{custom_cnn_forward.4} parent=5 // pred_fallthru
      _
  $region6: #{custom_cnn_forward.4} parent=0 // loop_footer
    %s13 = sadd.s32 1, %s9
  $region7: #{custom_cnn_forward.4} parent=0 // loop_footer_branch
    %8 = sbr.rel target = $region3
  $region8: #{custom_cnn_forward.4} parent=0 // loop_exit
    _

// kernel: custom_cnn_forward.5
$region0: #{custom_cnn_forward.5}
  #allocation0 [shape = 'u32[]', space=smem, size = 0x4, offset = 0x4, fixed_abs, tag = 'smem constant byte address 0x4 - core index']
  #allocation1 [shape = 'u32[72,128]{1,0:T(1,128)}', space=vmem, size = 0x9000, scoped, tag = 'internal scratch']
  %s0 = inlined_call_operand.vmem [shape: bf16[162,512], index: 0, kind: input, shape index: {}]
  %s1 = inlined_call_operand.vmem [shape: bf16[512,64], index: 1, kind: input, shape index: {}]
  %s2 = inlined_call_operand.vmem [shape: f32[1,64], index: 2, kind: input, shape index: {}]
  %s3 = inlined_call_operand.vmem [shape: bf16[162,64], index: 3, kind: output, shape index: {}]
  %s4 = sld [smem:[#allocation0]]
  $region22: #{custom_cnn_forward.5} parent=0
    _
  %s6 = ssub.s32 1, %s4
  %s7 = scalar_select 0, %s6, %s4
  // Predicated region
  $region2: #{custom_cnn_forward.5} parent=0 // pred_check
    _
  $region3: #{custom_cnn_forward.5} parent=0 // pred_check_branch
    %9 = sbr.rel (0) target = $region5
  $region4: #{custom_cnn_forward.5} parent=0 // pred_region
    _
  $region5: #{custom_cnn_forward.5} parent=0 // pred_fallthru
    _
  // Predicated region
  $region6: #{custom_cnn_forward.5} parent=0 // pred_check
    _
  $region7: #{custom_cnn_forward.5} parent=0 // pred_check_branch
    %11 = sbr.rel (0) target = $region9
  $region8: #{custom_cnn_forward.5} parent=0 // pred_region
    _
  $region9: #{custom_cnn_forward.5} parent=0 // pred_fallthru
    _
  // Predicated region
  $region10: #{custom_cnn_forward.5} parent=0 // pred_check
    _
  $region11: #{custom_cnn_forward.5} parent=0 // pred_check_branch
    %13 = sbr.rel (0) target = $region13
  $region12: #{custom_cnn_forward.5} parent=0 // pred_region
    _
  $region13: #{custom_cnn_forward.5} parent=0 // pred_fallthru
    _
  %v14 = vld [vmem:[%s0] sm:$0xff]
  %v15 = vld [vmem:[%s0 + $0x8] sm:$0xff]
  %v16 = vld [vmem:[%s0 + $0x10] sm:$0xff]
  %v17 = vld [vmem:[%s0 + $0x18] sm:$0xff]
  %v18 = vld [vmem:[%s0 + $0x20] sm:$0xff]
  %v19 = vld [vmem:[%s0 + $0x28] sm:$0xff]
  %v20 = vld [vmem:[%s0 + $0x30] sm:$0xff]
  %v21 = vld [vmem:[%s0 + $0x38] sm:$0xff]
  %v22 = vld [vmem:[%s0 + $0x40] sm:$0xff]
  %v23 = vld [vmem:[%s0 + $0x48] sm:$0xff]
  %v24 = vld [vmem:[%s0 + $0x50] sm:$0xff]
  %v25 = vld [vmem:[%s0 + $0x58] sm:$0xff]
  %v26 = vld [vmem:[%s0 + $0x60] sm:$0xff]
  %v27 = vld [vmem:[%s0 + $0x68] sm:$0xff]
  %v28 = vld [vmem:[%s0 + $0x70] sm:$0xff]
  %v29 = vld [vmem:[%s0 + $0x78] sm:$0xff]
  %v30 = vld [vmem:[%s0 + $0x80] sm:$0xff]
  %v31 = vld [vmem:[%s0 + $0x88] sm:$0xff]
  %v32 = vld [vmem:[%s0 + $0x90] sm:$0xff]
  %v33 = vld [vmem:[%s0 + $0x98] sm:$0xff]
  %v34 = vld [vmem:[%s0 + $0xa0] sm:$0xff]
  %v35 = vld [vmem:[%s0 + $0xa8] sm:$0xff]
  %v36 = vld [vmem:[%s0 + $0xb0] sm:$0xff]
  %v37 = vld [vmem:[%s0 + $0xb8] sm:$0xff]
  %v38 = vld [vmem:[%s0 + $0xc0] sm:$0xff]
  %v39 = vld [vmem:[%s0 + $0xc8] sm:$0xff]
  %v40 = vld [vmem:[%s0 + $0xd0] sm:$0xff]
  %v41 = vld [vmem:[%s0 + $0xd8] sm:$0xff]
  %v42 = vld [vmem:[%s0 + $0xe0] sm:$0xff]
  %v43 = vld [vmem:[%s0 + $0xe8] sm:$0xff]
  %v44 = vld [vmem:[%s0 + $0xf0] sm:$0xff]
  %v45 = vld [vmem:[%s0 + $0xf8] sm:$0xff]
  %v46 = vld [vmem:[%s0 + $0x100] sm:$0xff]
  %v47 = vld [vmem:[%s0 + $0x108] sm:$0xff]
  %v48 = vld [vmem:[%s0 + $0x110] sm:$0xff]
  %v49 = vld [vmem:[%s0 + $0x118] sm:$0xff]
  %v50 = vld [vmem:[%s0 + $0x120] sm:$0xff]
  %v51 = vld [vmem:[%s0 + $0x128] sm:$0xff]
  %v52 = vld [vmem:[%s0 + $0x130] sm:$0xff]
  %v53 = vld [vmem:[%s0 + $0x138] sm:$0xff]
  %v54 = vld [vmem:[%s0 + $0x140] sm:$0x11]
  %v55 = vld [vmem:[%s0 + $0x148] sm:$0x11]
  %v56 = vld [vmem:[%s1] sm:$0xf]
  %v57 = vld [vmem:[%s1 + $0x4] sm:$0xf]
  %v58 = vld [vmem:[%s1 + $0x8] sm:$0xf]
  %v59 = vld [vmem:[%s1 + $0xc] sm:$0xf]
  %v60 = vld [vmem:[%s1 + $0x10] sm:$0xf]
  %v61 = vld [vmem:[%s1 + $0x14] sm:$0xf]
  %v62 = vld [vmem:[%s1 + $0x18] sm:$0xf]
  %v63 = vld [vmem:[%s1 + $0x1c] sm:$0xf]
  %v64 = vld [vmem:[%s1 + $0x20] sm:$0xf]
  %v65 = vld [vmem:[%s1 + $0x24] sm:$0xf]
  %v66 = vld [vmem:[%s1 + $0x28] sm:$0xf]
  %v67 = vld [vmem:[%s1 + $0x2c] sm:$0xf]
  %v68 = vld [vmem:[%s1 + $0x30] sm:$0xf]
  %v69 = vld [vmem:[%s1 + $0x34] sm:$0xf]
  %v70 = vld [vmem:[%s1 + $0x38] sm:$0xf]
  %v71 = vld [vmem:[%s1 + $0x3c] sm:$0xf]
  %v72 = vld [vmem:[%s1 + $0x40] sm:$0xf]
  %v73 = vld [vmem:[%s1 + $0x44] sm:$0xf]
  %v74 = vld [vmem:[%s1 + $0x48] sm:$0xf]
  %v75 = vld [vmem:[%s1 + $0x4c] sm:$0xf]
  %v76 = vld [vmem:[%s1 + $0x50] sm:$0xf]
  %v77 = vld [vmem:[%s1 + $0x54] sm:$0xf]
  %v78 = vld [vmem:[%s1 + $0x58] sm:$0xf]
  %v79 = vld [vmem:[%s1 + $0x5c] sm:$0xf]
  %v80 = vld [vmem:[%s1 + $0x60] sm:$0xf]
  %v81 = vld [vmem:[%s1 + $0x64] sm:$0xf]
  %v82 = vld [vmem:[%s1 + $0x68] sm:$0xf]
  %v83 = vld [vmem:[%s1 + $0x6c] sm:$0xf]
  %v84 = vld [vmem:[%s1 + $0x70] sm:$0xf]
  %v85 = vld [vmem:[%s1 + $0x74] sm:$0xf]
  %v86 = vld [vmem:[%s1 + $0x78] sm:$0xf]
  %v87 = vld [vmem:[%s1 + $0x7c] sm:$0xf]
  %v88 = vld [vmem:[%s1 + $0x80] sm:$0xf]
  %v89 = vld [vmem:[%s1 + $0x84] sm:$0xf]
  %v90 = vld [vmem:[%s1 + $0x88] sm:$0xf]
  %v91 = vld [vmem:[%s1 + $0x8c] sm:$0xf]
  %v92 = vld [vmem:[%s1 + $0x90] sm:$0xf]
  %v93 = vld [vmem:[%s1 + $0x94] sm:$0xf]
  %v94 = vld [vmem:[%s1 + $0x98] sm:$0xf]
  %v95 = vld [vmem:[%s1 + $0x9c] sm:$0xf]
  %v96 = vld [vmem:[%s1 + $0xa0] sm:$0xf]
  %v97 = vld [vmem:[%s1 + $0xa4] sm:$0xf]
  %v98 = vld [vmem:[%s1 + $0xa8] sm:$0xf]
  %v99 = vld [vmem:[%s1 + $0xac] sm:$0xf]
  %v100 = vld [vmem:[%s1 + $0xb0] sm:$0xf]
  %v101 = vld [vmem:[%s1 + $0xb4] sm:$0xf]
  %v102 = vld [vmem:[%s1 + $0xb8] sm:$0xf]
  %v103 = vld [vmem:[%s1 + $0xbc] sm:$0xf]
  %v104 = vld [vmem:[%s1 + $0xc0] sm:$0xf]
  %v105 = vld [vmem:[%s1 + $0xc4] sm:$0xf]
  %v106 = vld [vmem:[%s1 + $0xc8] sm:$0xf]
  %v107 = vld [vmem:[%s1 + $0xcc] sm:$0xf]
  %v108 = vld [vmem:[%s1 + $0xd0] sm:$0xf]
  %v109 = vld [vmem:[%s1 + $0xd4] sm:$0xf]
  %v110 = vld [vmem:[%s1 + $0xd8] sm:$0xf]
  %v111 = vld [vmem:[%s1 + $0xdc] sm:$0xf]
  %v112 = vld [vmem:[%s1 + $0xe0] sm:$0xf]
  %v113 = vld [vmem:[%s1 + $0xe4] sm:$0xf]
  %v114 = vld [vmem:[%s1 + $0xe8] sm:$0xf]
  %v115 = vld [vmem:[%s1 + $0xec] sm:$0xf]
  %v116 = vld [vmem:[%s1 + $0xf0] sm:$0xf]
  %v117 = vld [vmem:[%s1 + $0xf4] sm:$0xf]
  %v118 = vld [vmem:[%s1 + $0xf8] sm:$0xf]
  %v119 = vld [vmem:[%s1 + $0xfc] sm:$0xf]
  %v120 = vld [vmem:[%s2] sm:$0x1]
  %v122 = vperm.slane %v120, 0
  %v166 = vunpack.c.l.b16 %v14
  %v167 = vunpack.c.h.b16 %v14
  %v168 = vunpack.c.l.b16 %v15
  %v169 = vunpack.c.h.b16 %v15
  %v170 = vunpack.c.l.b16 %v16
  %v171 = vunpack.c.h.b16 %v16
  %v172 = vunpack.c.l.b16 %v17
  %v173 = vunpack.c.h.b16 %v17
  %v174 = vunpack.c.l.b16 %v18
  %v175 = vunpack.c.h.b16 %v18
  %v176 = vunpack.c.l.b16 %v19
  %v177 = vunpack.c.h.b16 %v19
  %v178 = vunpack.c.l.b16 %v20
  %v179 = vunpack.c.h.b16 %v20
  %v180 = vunpack.c.l.b16 %v21
  %v181 = vunpack.c.h.b16 %v21
  %v182 = vunpack.c.l.b16 %v22
  %v183 = vunpack.c.h.b16 %v22
  %v184 = vunpack.c.l.b16 %v23
  %v185 = vunpack.c.h.b16 %v23
  %v186 = vunpack.c.l.b16 %v24
  %v187 = vunpack.c.h.b16 %v24
  %v188 = vunpack.c.l.b16 %v25
  %v189 = vunpack.c.h.b16 %v25
  %v190 = vunpack.c.l.b16 %v26
  %v191 = vunpack.c.h.b16 %v26
  %v192 = vunpack.c.l.b16 %v27
  %v193 = vunpack.c.h.b16 %v27
  %v194 = vunpack.c.l.b16 %v28
  %v195 = vunpack.c.h.b16 %v28
  %v196 = vunpack.c.l.b16 %v29
  %v197 = vunpack.c.h.b16 %v29
  %v198 = vunpack.c.l.b16 %v30
  %v199 = vunpack.c.h.b16 %v30
  %v200 = vunpack.c.l.b16 %v31
  %v201 = vunpack.c.h.b16 %v31
  %v202 = vunpack.c.l.b16 %v32
  %v203 = vunpack.c.h.b16 %v32
  %v204 = vunpack.c.l.b16 %v33
  %v205 = vunpack.c.h.b16 %v33
  %v206 = vunpack.c.l.b16 %v34
  %v207 = vunpack.c.h.b16 %v34
  %v208 = vunpack.c.l.b16 %v35
  %v209 = vunpack.c.h.b16 %v35
  %v210 = vunpack.c.l.b16 %v36
  %v211 = vunpack.c.h.b16 %v36
  %v212 = vunpack.c.l.b16 %v37
  %v213 = vunpack.c.h.b16 %v37
  %v214 = vunpack.c.l.b16 %v38
  %v215 = vunpack.c.h.b16 %v38
  %v216 = vunpack.c.l.b16 %v39
  %v217 = vunpack.c.h.b16 %v39
  %v218 = vunpack.c.l.b16 %v40
  %v219 = vunpack.c.h.b16 %v40
  %v220 = vunpack.c.l.b16 %v41
  %v221 = vunpack.c.h.b16 %v41
  %v222 = vunpack.c.l.b16 %v42
  %v223 = vunpack.c.h.b16 %v42
  %v224 = vunpack.c.l.b16 %v43
  %v225 = vunpack.c.h.b16 %v43
  %v226 = vunpack.c.l.b16 %v44
  %v227 = vunpack.c.h.b16 %v44
  %v228 = vunpack.c.l.b16 %v45
  %v229 = vunpack.c.h.b16 %v45
  %v230 = vunpack.c.l.b16 %v46
  %v231 = vunpack.c.h.b16 %v46
  %v232 = vunpack.c.l.b16 %v47
  %v233 = vunpack.c.h.b16 %v47
  %v234 = vunpack.c.l.b16 %v48
  %v235 = vunpack.c.h.b16 %v48
  %v236 = vunpack.c.l.b16 %v49
  %v237 = vunpack.c.h.b16 %v49
  %v238 = vunpack.c.l.b16 %v50
  %v239 = vunpack.c.h.b16 %v50
  %v240 = vunpack.c.l.b16 %v51
  %v241 = vunpack.c.h.b16 %v51
  %v242 = vunpack.c.l.b16 %v52
  %v243 = vunpack.c.h.b16 %v52
  %v244 = vunpack.c.l.b16 %v53
  %v245 = vunpack.c.h.b16 %v53
  %v246 = vunpack.c.l.b16 %v54
  %v247 = vunpack.c.h.b16 %v54
  %v248 = vunpack.c.l.b16 %v55
  %v249 = vunpack.c.h.b16 %v55
  %v250 = vpack.c.b16 %v170, %v166
  %v251 = vpack.c.b16 %v171, %v167
  %v252 = vpack.c.b16 %v172, %v168
  %v253 = vpack.c.b16 %v173, %v169
  %v254 = vpack.c.b16 %v178, %v174
  %v255 = vpack.c.b16 %v179, %v175
  %v256 = vpack.c.b16 %v180, %v176
  %v257 = vpack.c.b16 %v181, %v177
  %v258 = vpack.c.b16 %v186, %v182
  %v259 = vpack.c.b16 %v187, %v183
  %v260 = vpack.c.b16 %v188, %v184
  %v261 = vpack.c.b16 %v189, %v185
  %v262 = vpack.c.b16 %v194, %v190
  %v263 = vpack.c.b16 %v195, %v191
  %v264 = vpack.c.b16 %v196, %v192
  %v265 = vpack.c.b16 %v197, %v193
  %v266 = vpack.c.b16 %v202, %v198
  %v267 = vpack.c.b16 %v203, %v199
  %v268 = vpack.c.b16 %v204, %v200
  %v269 = vpack.c.b16 %v205, %v201
  %v270 = vpack.c.b16 %v210, %v206
  %v271 = vpack.c.b16 %v211, %v207
  %v272 = vpack.c.b16 %v212, %v208
  %v273 = vpack.c.b16 %v213, %v209
  %v274 = vpack.c.b16 %v218, %v214
  %v275 = vpack.c.b16 %v219, %v215
  %v276 = vpack.c.b16 %v220, %v216
  %v277 = vpack.c.b16 %v221, %v217
  %v278 = vpack.c.b16 %v226, %v222
  %v279 = vpack.c.b16 %v227, %v223
  %v280 = vpack.c.b16 %v228, %v224
  %v281 = vpack.c.b16 %v229, %v225
  %v282 = vpack.c.b16 %v234, %v230
  %v283 = vpack.c.b16 %v235, %v231
  %v284 = vpack.c.b16 %v236, %v232
  %v285 = vpack.c.b16 %v237, %v233
  %v286 = vpack.c.b16 %v242, %v238
  %v287 = vpack.c.b16 %v243, %v239
  %v288 = vpack.c.b16 %v244, %v240
  %v289 = vpack.c.b16 %v245, %v241
  %v290 = vpack.c.b16 %v246, %v246
  %v291 = vpack.c.b16 %v247, %v247
  %v292 = vpack.c.b16 %v248, %v248
  %v293 = vpack.c.b16 %v249, %v249
  %v402 = vunpack.c.l.b16 %v56
  %v403 = vunpack.c.l.b16 %v57
  %v404 = vunpack.c.l.b16 %v58
  %v405 = vunpack.c.l.b16 %v59
  %v406 = vunpack.c.l.b16 %v60
  %v407 = vunpack.c.l.b16 %v61
  %v408 = vunpack.c.l.b16 %v62
  %v409 = vunpack.c.l.b16 %v63
  %v410 = vunpack.c.l.b16 %v64
  %v411 = vunpack.c.l.b16 %v65
  %v412 = vunpack.c.l.b16 %v66
  %v413 = vunpack.c.l.b16 %v67
  %v414 = vunpack.c.l.b16 %v68
  %v415 = vunpack.c.l.b16 %v69
  %v416 = vunpack.c.l.b16 %v70
  %v417 = vunpack.c.l.b16 %v71
  %v418 = vunpack.c.l.b16 %v72
  %v419 = vunpack.c.l.b16 %v73
  %v420 = vunpack.c.l.b16 %v74
  %v421 = vunpack.c.l.b16 %v75
  %v422 = vunpack.c.l.b16 %v76
  %v423 = vunpack.c.l.b16 %v77
  %v424 = vunpack.c.l.b16 %v78
  %v425 = vunpack.c.l.b16 %v79
  %v426 = vunpack.c.l.b16 %v80
  %v427 = vunpack.c.l.b16 %v81
  %v428 = vunpack.c.l.b16 %v82
  %v429 = vunpack.c.l.b16 %v83
  %v430 = vunpack.c.l.b16 %v84
  %v431 = vunpack.c.l.b16 %v85
  %v432 = vunpack.c.l.b16 %v86
  %v433 = vunpack.c.l.b16 %v87
  %v434 = vunpack.c.l.b16 %v88
  %v435 = vunpack.c.l.b16 %v89
  %v436 = vunpack.c.l.b16 %v90
  %v437 = vunpack.c.l.b16 %v91
  %v438 = vunpack.c.l.b16 %v92
  %v439 = vunpack.c.l.b16 %v93
  %v440 = vunpack.c.l.b16 %v94
  %v441 = vunpack.c.l.b16 %v95
  %v442 = vunpack.c.l.b16 %v96
  %v443 = vunpack.c.l.b16 %v97
  %v444 = vunpack.c.l.b16 %v98
  %v445 = vunpack.c.l.b16 %v99
  %v446 = vunpack.c.l.b16 %v100
  %v447 = vunpack.c.l.b16 %v101
  %v448 = vunpack.c.l.b16 %v102
  %v449 = vunpack.c.l.b16 %v103
  %v450 = vunpack.c.l.b16 %v104
  %v451 = vunpack.c.l.b16 %v105
  %v452 = vunpack.c.l.b16 %v106
  %v453 = vunpack.c.l.b16 %v107
  %v454 = vunpack.c.l.b16 %v108
  %v455 = vunpack.c.l.b16 %v109
  %v456 = vunpack.c.l.b16 %v110
  %v457 = vunpack.c.l.b16 %v111
  %v458 = vunpack.c.l.b16 %v112
  %v459 = vunpack.c.l.b16 %v113
  %v460 = vunpack.c.l.b16 %v114
  %v461 = vunpack.c.l.b16 %v115
  %v462 = vunpack.c.l.b16 %v116
  %v463 = vunpack.c.l.b16 %v117
  %v464 = vunpack.c.l.b16 %v118
  %v465 = vunpack.c.l.b16 %v119
  %v466 = vpack.c.b16 %v403, %v402
  %v467 = vpack.c.b16 %v405, %v404
  %v468 = vpack.c.b16 %v407, %v406
  %v469 = vpack.c.b16 %v409, %v408
  %v470 = vpack.c.b16 %v411, %v410
  %v471 = vpack.c.b16 %v413, %v412
  %v472 = vpack.c.b16 %v415, %v414
  %v473 = vpack.c.b16 %v417, %v416
  %v474 = vpack.c.b16 %v419, %v418
  %v475 = vpack.c.b16 %v421, %v420
  %v476 = vpack.c.b16 %v423, %v422
  %v477 = vpack.c.b16 %v425, %v424
  %v478 = vpack.c.b16 %v427, %v426
  %v479 = vpack.c.b16 %v429, %v428
  %v480 = vpack.c.b16 %v431, %v430
  %v481 = vpack.c.b16 %v433, %v432
  %v482 = vpack.c.b16 %v435, %v434
  %v483 = vpack.c.b16 %v437, %v436
  %v484 = vpack.c.b16 %v439, %v438
  %v485 = vpack.c.b16 %v441, %v440
  %v486 = vpack.c.b16 %v443, %v442
  %v487 = vpack.c.b16 %v445, %v444
  %v488 = vpack.c.b16 %v447, %v446
  %v489 = vpack.c.b16 %v449, %v448
  %v490 = vpack.c.b16 %v451, %v450
  %v491 = vpack.c.b16 %v453, %v452
  %v492 = vpack.c.b16 %v455, %v454
  %v493 = vpack.c.b16 %v457, %v456
  %v494 = vpack.c.b16 %v459, %v458
  %v495 = vpack.c.b16 %v461, %v460
  %v496 = vpack.c.b16 %v463, %v462
  %v497 = vpack.c.b16 %v465, %v464
  %530 = vmatpush.bf16.msra.mxu0 %v473
  %531 = vmatpush.bf16.msra.mxu0 %v472
  %532 = vmatpush.bf16.msra.mxu0 %v471
  %533 = vmatpush.bf16.msra.mxu0 %v470
  %534 = vmatpush.bf16.msra.mxu0 %v469
  %535 = vmatpush.bf16.msra.mxu0 %v468
  %536 = vmatpush.bf16.msra.mxu0 %v467
  %537 = vmatpush.bf16.msra.mxu0 %v466
  %538 = vmatmul.bf16.gmra.mxu0 %v250
  %v539 = vpop.f32.mrf.mxu0
  %v540 = vadd.f32 %v122, %v539
  %v541 = vpop.f32.mrf.mxu0
  %v542 = vadd.f32 %v122, %v541
  %543 = vmatmul.bf16.gmra.mxu0 %v254
  %v544 = vpop.f32.mrf.mxu0
  %v545 = vadd.f32 %v122, %v544
  %v546 = vpop.f32.mrf.mxu0
  %v547 = vadd.f32 %v122, %v546
  %548 = vmatmul.bf16.gmra.mxu0 %v258
  %v549 = vpop.f32.mrf.mxu0
  %v550 = vadd.f32 %v122, %v549
  %v551 = vpop.f32.mrf.mxu0
  %v552 = vadd.f32 %v122, %v551
  %553 = vmatmul.bf16.gmra.mxu0 %v262
  %v554 = vpop.f32.mrf.mxu0
  %v555 = vadd.f32 %v122, %v554
  %v556 = vpop.f32.mrf.mxu0
  %v557 = vadd.f32 %v122, %v556
  %558 = vmatmul.bf16.gmra.mxu0 %v266
  %v559 = vpop.f32.mrf.mxu0
  %v560 = vadd.f32 %v122, %v559
  %v561 = vpop.f32.mrf.mxu0
  %v562 = vadd.f32 %v122, %v561
  %563 = vmatmul.bf16.gmra.mxu0 %v270
  %v564 = vpop.f32.mrf.mxu0
  %v565 = vadd.f32 %v122, %v564
  %v566 = vpop.f32.mrf.mxu0
  %v567 = vadd.f32 %v122, %v566
  %568 = vmatmul.bf16.gmra.mxu0 %v274
  %v569 = vpop.f32.mrf.mxu0
  %v570 = vadd.f32 %v122, %v569
  %v571 = vpop.f32.mrf.mxu0
  %v572 = vadd.f32 %v122, %v571
  %573 = vmatmul.bf16.gmra.mxu0 %v278
  %v574 = vpop.f32.mrf.mxu0
  %v575 = vadd.f32 %v122, %v574
  %v576 = vpop.f32.mrf.mxu0
  %v577 = vadd.f32 %v122, %v576
  %578 = vmatmul.bf16.gmra.mxu0 %v282
  %v579 = vpop.f32.mrf.mxu0
  %v580 = vadd.f32 %v122, %v579
  %v581 = vpop.f32.mrf.mxu0
  %v582 = vadd.f32 %v122, %v581
  %583 = vmatmul.bf16.gmra.mxu0 %v286
  %v584 = vpop.f32.mrf.mxu0
  %v585 = vadd.f32 %v122, %v584
  %v586 = vpop.f32.mrf.mxu0
  %v587 = vadd.f32 %v122, %v586
  %588 = vmatmul.bf16.gmra.mxu0 %v290
  %v589 = vpop.f32.mrf.mxu0
  %v590 = vadd.f32 %v122, %v589
  %v591 = vpop.f32.mrf.mxu0
  %592 = vdwg.mxu0
  %593 = vmatpush.bf16.msra.mxu0 %v481
  %594 = vmatpush.bf16.msra.mxu0 %v480
  %595 = vmatpush.bf16.msra.mxu0 %v479
  %596 = vmatpush.bf16.msra.mxu0 %v478
  %597 = vmatpush.bf16.msra.mxu0 %v477
  %598 = vmatpush.bf16.msra.mxu0 %v476
  %599 = vmatpush.bf16.msra.mxu0 %v475
  %600 = vmatpush.bf16.msra.mxu0 %v474
  %601 = vmatmul.bf16.gmra.mxu0 %v251
  %v602 = vpop.f32.mrf.mxu0
  %v603 = vadd.f32 %v540, %v602
  %v604 = vpop.f32.mrf.mxu0
  %v605 = vadd.f32 %v542, %v604
  %606 = vmatmul.bf16.gmra.mxu0 %v255
  %v607 = vpop.f32.mrf.mxu0
  %v608 = vadd.f32 %v545, %v607
  %v609 = vpop.f32.mrf.mxu0
  %v610 = vadd.f32 %v547, %v609
  %611 = vmatmul.bf16.gmra.mxu0 %v259
  %v612 = vpop.f32.mrf.mxu0
  %v613 = vadd.f32 %v550, %v612
  %v614 = vpop.f32.mrf.mxu0
  %v615 = vadd.f32 %v552, %v614
  %616 = vmatmul.bf16.gmra.mxu0 %v263
  %v617 = vpop.f32.mrf.mxu0
  %v618 = vadd.f32 %v555, %v617
  %v619 = vpop.f32.mrf.mxu0
  %v620 = vadd.f32 %v557, %v619
  %621 = vmatmul.bf16.gmra.mxu0 %v267
  %v622 = vpop.f32.mrf.mxu0
  %v623 = vadd.f32 %v560, %v622
  %v624 = vpop.f32.mrf.mxu0
  %v625 = vadd.f32 %v562, %v624
  %626 = vmatmul.bf16.gmra.mxu0 %v271
  %v627 = vpop.f32.mrf.mxu0
  %v628 = vadd.f32 %v565, %v627
  %v629 = vpop.f32.mrf.mxu0
  %v630 = vadd.f32 %v567, %v629
  %631 = vmatmul.bf16.gmra.mxu0 %v275
  %v632 = vpop.f32.mrf.mxu0
  %v633 = vadd.f32 %v570, %v632
  %v634 = vpop.f32.mrf.mxu0
  %v635 = vadd.f32 %v572, %v634
  %636 = vmatmul.bf16.gmra.mxu0 %v279
  %v637 = vpop.f32.mrf.mxu0
  %v638 = vadd.f32 %v575, %v637
  %v639 = vpop.f32.mrf.mxu0
  %v640 = vadd.f32 %v577, %v639
  %641 = vmatmul.bf16.gmra.mxu0 %v283
  %v642 = vpop.f32.mrf.mxu0
  %v643 = vadd.f32 %v580, %v642
  %v644 = vpop.f32.mrf.mxu0
  %v645 = vadd.f32 %v582, %v644
  %646 = vmatmul.bf16.gmra.mxu0 %v287
  %v647 = vpop.f32.mrf.mxu0
  %v648 = vadd.f32 %v585, %v647
  %v649 = vpop.f32.mrf.mxu0
  %v650 = vadd.f32 %v587, %v649
  %651 = vmatmul.bf16.gmra.mxu0 %v291
  %v652 = vpop.f32.mrf.mxu0
  %v653 = vadd.f32 %v590, %v652
  %v654 = vpop.f32.mrf.mxu0
  %655 = vdwg.mxu0
  %656 = vmatpush.bf16.msra.mxu0 %v489
  %657 = vmatpush.bf16.msra.mxu0 %v488
  %658 = vmatpush.bf16.msra.mxu0 %v487
  %659 = vmatpush.bf16.msra.mxu0 %v486
  %660 = vmatpush.bf16.msra.mxu0 %v485
  %661 = vmatpush.bf16.msra.mxu0 %v484
  %662 = vmatpush.bf16.msra.mxu0 %v483
  %663 = vmatpush.bf16.msra.mxu0 %v482
  %664 = vmatmul.bf16.gmra.mxu0 %v252
  %v665 = vpop.f32.mrf.mxu0
  %v666 = vadd.f32 %v603, %v665
  %v667 = vpop.f32.mrf.mxu0
  %v668 = vadd.f32 %v605, %v667
  %669 = vmatmul.bf16.gmra.mxu0 %v256
  %v670 = vpop.f32.mrf.mxu0
  %v671 = vadd.f32 %v608, %v670
  %v672 = vpop.f32.mrf.mxu0
  %v673 = vadd.f32 %v610, %v672
  %674 = vmatmul.bf16.gmra.mxu0 %v260
  %v675 = vpop.f32.mrf.mxu0
  %v676 = vadd.f32 %v613, %v675
  %v677 = vpop.f32.mrf.mxu0
  %v678 = vadd.f32 %v615, %v677
  %679 = vmatmul.bf16.gmra.mxu0 %v264
  %v680 = vpop.f32.mrf.mxu0
  %v681 = vadd.f32 %v618, %v680
  %v682 = vpop.f32.mrf.mxu0
  %v683 = vadd.f32 %v620, %v682
  %684 = vmatmul.bf16.gmra.mxu0 %v268
  %v685 = vpop.f32.mrf.mxu0
  %v686 = vadd.f32 %v623, %v685
  %v687 = vpop.f32.mrf.mxu0
  %v688 = vadd.f32 %v625, %v687
  %689 = vmatmul.bf16.gmra.mxu0 %v272
  %v690 = vpop.f32.mrf.mxu0
  %v691 = vadd.f32 %v628, %v690
  %v692 = vpop.f32.mrf.mxu0
  %v693 = vadd.f32 %v630, %v692
  %694 = vmatmul.bf16.gmra.mxu0 %v276
  %v695 = vpop.f32.mrf.mxu0
  %v696 = vadd.f32 %v633, %v695
  %v697 = vpop.f32.mrf.mxu0
  %v698 = vadd.f32 %v635, %v697
  %699 = vmatmul.bf16.gmra.mxu0 %v280
  %v700 = vpop.f32.mrf.mxu0
  %v701 = vadd.f32 %v638, %v700
  %v702 = vpop.f32.mrf.mxu0
  %v703 = vadd.f32 %v640, %v702
  %704 = vmatmul.bf16.gmra.mxu0 %v284
  %v705 = vpop.f32.mrf.mxu0
  %v706 = vadd.f32 %v643, %v705
  %v707 = vpop.f32.mrf.mxu0
  %v708 = vadd.f32 %v645, %v707
  %709 = vmatmul.bf16.gmra.mxu0 %v288
  %v710 = vpop.f32.mrf.mxu0
  %v711 = vadd.f32 %v648, %v710
  %v712 = vpop.f32.mrf.mxu0
  %v713 = vadd.f32 %v650, %v712
  %714 = vmatmul.bf16.gmra.mxu0 %v292
  %v715 = vpop.f32.mrf.mxu0
  %v716 = vadd.f32 %v653, %v715
  %v717 = vpop.f32.mrf.mxu0
  %718 = vdwg.mxu0
  %719 = vmatpush.bf16.msra.mxu0 %v497
  %720 = vmatpush.bf16.msra.mxu0 %v496
  %721 = vmatpush.bf16.msra.mxu0 %v495
  %722 = vmatpush.bf16.msra.mxu0 %v494
  %723 = vmatpush.bf16.msra.mxu0 %v493
  %724 = vmatpush.bf16.msra.mxu0 %v492
  %725 = vmatpush.bf16.msra.mxu0 %v491
  %726 = vmatpush.bf16.msra.mxu0 %v490
  %727 = vmatmul.bf16.gmra.mxu0 %v253
  %v728 = vpop.f32.mrf.mxu0
  %v729 = vadd.f32 %v666, %v728
  %v730 = vpop.f32.mrf.mxu0
  %v731 = vadd.f32 %v668, %v730
  %732 = vmatmul.bf16.gmra.mxu0 %v257
  %v733 = vpop.f32.mrf.mxu0
  %v734 = vadd.f32 %v671, %v733
  %v735 = vpop.f32.mrf.mxu0
  %v736 = vadd.f32 %v673, %v735
  %737 = vmatmul.bf16.gmra.mxu0 %v261
  %v738 = vpop.f32.mrf.mxu0
  %v739 = vadd.f32 %v676, %v738
  %v740 = vpop.f32.mrf.mxu0
  %v741 = vadd.f32 %v678, %v740
  %742 = vmatmul.bf16.gmra.mxu0 %v265
  %v743 = vpop.f32.mrf.mxu0
  %v744 = vadd.f32 %v681, %v743
  %v745 = vpop.f32.mrf.mxu0
  %v746 = vadd.f32 %v683, %v745
  %747 = vmatmul.bf16.gmra.mxu0 %v269
  %v748 = vpop.f32.mrf.mxu0
  %v749 = vadd.f32 %v686, %v748
  %v750 = vpop.f32.mrf.mxu0
  %v751 = vadd.f32 %v688, %v750
  %752 = vmatmul.bf16.gmra.mxu0 %v273
  %v753 = vpop.f32.mrf.mxu0
  %v754 = vadd.f32 %v691, %v753
  %v755 = vpop.f32.mrf.mxu0
  %v756 = vadd.f32 %v693, %v755
  %757 = vmatmul.bf16.gmra.mxu0 %v277
  %v758 = vpop.f32.mrf.mxu0
  %v759 = vadd.f32 %v696, %v758
  %v760 = vpop.f32.mrf.mxu0
  %v761 = vadd.f32 %v698, %v760
  %762 = vmatmul.bf16.gmra.mxu0 %v281
  %v763 = vpop.f32.mrf.mxu0
  %v764 = vadd.f32 %v701, %v763
  %v765 = vpop.f32.mrf.mxu0
  %v766 = vadd.f32 %v703, %v765
  %767 = vmatmul.bf16.gmra.mxu0 %v285
  %v768 = vpop.f32.mrf.mxu0
  %v769 = vadd.f32 %v706, %v768
  %v770 = vpop.f32.mrf.mxu0
  %v771 = vadd.f32 %v708, %v770
  %772 = vmatmul.bf16.gmra.mxu0 %v289
  %v773 = vpop.f32.mrf.mxu0
  %v774 = vadd.f32 %v711, %v773
  %v775 = vpop.f32.mrf.mxu0
  %v776 = vadd.f32 %v713, %v775
  %777 = vmatmul.bf16.gmra.mxu0 %v293
  %v778 = vpop.f32.mrf.mxu0
  %v779 = vadd.f32 %v716, %v778
  %v780 = vpop.f32.mrf.mxu0
  %781 = vdwg.mxu0
  %v782 = vmax.f32 %v729, 0.0
  %v783 = vmax.f32 %v731, 0.0
  %v784 = vmax.f32 %v734, 0.0
  %v785 = vmax.f32 %v736, 0.0
  %v786 = vmax.f32 %v739, 0.0
  %v787 = vmax.f32 %v741, 0.0
  %v788 = vmax.f32 %v744, 0.0
  %v789 = vmax.f32 %v746, 0.0
  %v790 = vmax.f32 %v749, 0.0
  %v791 = vmax.f32 %v751, 0.0
  %v792 = vmax.f32 %v754, 0.0
  %v793 = vmax.f32 %v756, 0.0
  %v794 = vmax.f32 %v759, 0.0
  %v795 = vmax.f32 %v761, 0.0
  %v796 = vmax.f32 %v764, 0.0
  %v797 = vmax.f32 %v766, 0.0
  %v798 = vmax.f32 %v769, 0.0
  %v799 = vmax.f32 %v771, 0.0
  %v800 = vmax.f32 %v774, 0.0
  %v801 = vmax.f32 %v776, 0.0
  %v802 = vmax.f32 %v779, 0.0
  %v803 = vpack.c.bf16 %v782, %v782
  %v804 = vpack.c.bf16 %v783, %v783
  %v805 = vpack.c.bf16 %v784, %v784
  %v806 = vpack.c.bf16 %v785, %v785
  %v807 = vpack.c.bf16 %v786, %v786
  %v808 = vpack.c.bf16 %v787, %v787
  %v809 = vpack.c.bf16 %v788, %v788
  %v810 = vpack.c.bf16 %v789, %v789
  %v811 = vpack.c.bf16 %v790, %v790
  %v812 = vpack.c.bf16 %v791, %v791
  %v813 = vpack.c.bf16 %v792, %v792
  %v814 = vpack.c.bf16 %v793, %v793
  %v815 = vpack.c.bf16 %v794, %v794
  %v816 = vpack.c.bf16 %v795, %v795
  %v817 = vpack.c.bf16 %v796, %v796
  %v818 = vpack.c.bf16 %v797, %v797
  %v819 = vpack.c.bf16 %v798, %v798
  %v820 = vpack.c.bf16 %v799, %v799
  %v821 = vpack.c.bf16 %v800, %v800
  %v822 = vpack.c.bf16 %v801, %v801
  %v823 = vpack.c.bf16 %v802, %v802
  %vm824 = vcmask 519168
  %825 = vst.msk [vmem:[%s3] sm:$0xf] %vm824, %v803
  %826 = vst.msk [vmem:[%s3 + $0x4] sm:$0xf] %vm824, %v804
  %827 = vst.msk [vmem:[%s3 + $0x8] sm:$0xf] %vm824, %v805
  %828 = vst.msk [vmem:[%s3 + $0xc] sm:$0xf] %vm824, %v806
  %829 = vst.msk [vmem:[%s3 + $0x10] sm:$0xf] %vm824, %v807
  %830 = vst.msk [vmem:[%s3 + $0x14] sm:$0xf] %vm824, %v808
  %831 = vst.msk [vmem:[%s3 + $0x18] sm:$0xf] %vm824, %v809
  %832 = vst.msk [vmem:[%s3 + $0x1c] sm:$0xf] %vm824, %v810
  %833 = vst.msk [vmem:[%s3 + $0x20] sm:$0xf] %vm824, %v811
  %834 = vst.msk [vmem:[%s3 + $0x24] sm:$0xf] %vm824, %v812
  %835 = vst.msk [vmem:[%s3 + $0x28] sm:$0xf] %vm824, %v813
  %836 = vst.msk [vmem:[%s3 + $0x2c] sm:$0xf] %vm824, %v814
  %837 = vst.msk [vmem:[%s3 + $0x30] sm:$0xf] %vm824, %v815
  %838 = vst.msk [vmem:[%s3 + $0x34] sm:$0xf] %vm824, %v816
  %839 = vst.msk [vmem:[%s3 + $0x38] sm:$0xf] %vm824, %v817
  %840 = vst.msk [vmem:[%s3 + $0x3c] sm:$0xf] %vm824, %v818
  %841 = vst.msk [vmem:[%s3 + $0x40] sm:$0xf] %vm824, %v819
  %842 = vst.msk [vmem:[%s3 + $0x44] sm:$0xf] %vm824, %v820
  %843 = vst.msk [vmem:[%s3 + $0x48] sm:$0xf] %vm824, %v821
  %844 = vst.msk [vmem:[%s3 + $0x4c] sm:$0xf] %vm824, %v822
  %vm845 = vcmask 516096
  %846 = vst.msk [vmem:[%s3 + $0x50] sm:$0x1] %vm845, %v823
  // Predicated region
  $region14: #{custom_cnn_forward.5} parent=0 // pred_check
    _
  $region15: #{custom_cnn_forward.5} parent=0 // pred_check_branch
    %848 = sbr.rel (0) target = $region17
  $region16: #{custom_cnn_forward.5} parent=0 // pred_region
    _
  $region17: #{custom_cnn_forward.5} parent=0 // pred_fallthru
    _
  // Predicated region
  $region18: #{custom_cnn_forward.5} parent=0 // pred_check
    _
  $region19: #{custom_cnn_forward.5} parent=0 // pred_check_branch
    %850 = sbr.rel (0) target = $region21
  $region20: #{custom_cnn_forward.5} parent=0 // pred_region
    _
  $region21: #{custom_cnn_forward.5} parent=0 // pred_fallthru
    _

// kernel: custom_cnn_forward.6
$region0: #{custom_cnn_forward.6}
  #allocation0 [shape = 'u32[]', space=smem, size = 0x4, offset = 0x4, fixed_abs, tag = 'smem constant byte address 0x4 - core index']
  #allocation1 [shape = 'u32[72,128]{1,0:T(1,128)}', space=vmem, size = 0x9000, scoped, tag = 'internal scratch']
  %s0 = inlined_call_operand.vmem [shape: bf16[98,576], index: 0, kind: input, shape index: {}]
  %s1 = inlined_call_operand.vmem [shape: bf16[576,64], index: 1, kind: input, shape index: {}]
  %s2 = inlined_call_operand.vmem [shape: f32[1,64], index: 2, kind: input, shape index: {}]
  %s3 = inlined_call_operand.vmem [shape: bf16[98,64], index: 3, kind: output, shape index: {}]
  %s4 = sld [smem:[#allocation0]]
  $region22: #{custom_cnn_forward.6} parent=0
    _
  %s6 = ssub.s32 1, %s4
  %s7 = scalar_select 0, %s6, %s4
  // Predicated region
  $region2: #{custom_cnn_forward.6} parent=0 // pred_check
    _
  $region3: #{custom_cnn_forward.6} parent=0 // pred_check_branch
    %9 = sbr.rel (0) target = $region5
  $region4: #{custom_cnn_forward.6} parent=0 // pred_region
    _
  $region5: #{custom_cnn_forward.6} parent=0 // pred_fallthru
    _
  // Predicated region
  $region6: #{custom_cnn_forward.6} parent=0 // pred_check
    _
  $region7: #{custom_cnn_forward.6} parent=0 // pred_check_branch
    %11 = sbr.rel (0) target = $region9
  $region8: #{custom_cnn_forward.6} parent=0 // pred_region
    _
  $region9: #{custom_cnn_forward.6} parent=0 // pred_fallthru
    _
  // Predicated region
  $region10: #{custom_cnn_forward.6} parent=0 // pred_check
    _
  $region11: #{custom_cnn_forward.6} parent=0 // pred_check_branch
    %13 = sbr.rel (0) target = $region13
  $region12: #{custom_cnn_forward.6} parent=0 // pred_region
    _
  $region13: #{custom_cnn_forward.6} parent=0 // pred_fallthru
    _
  %v15 = vld [vmem:[%s0] sm:$0xff]
  %v16 = vld [vmem:[%s0 + $0x8] sm:$0xff]
  %v17 = vld [vmem:[%s0 + $0x10] sm:$0xf]
  %v18 = vld [vmem:[%s0 + $0x14] sm:$0xff]
  %v19 = vld [vmem:[%s0 + $0x1c] sm:$0xff]
  %v20 = vld [vmem:[%s0 + $0x24] sm:$0xf]
  %v21 = vld [vmem:[%s0 + $0x28] sm:$0xff]
  %v22 = vld [vmem:[%s0 + $0x30] sm:$0xff]
  %v23 = vld [vmem:[%s0 + $0x38] sm:$0xf]
  %v24 = vld [vmem:[%s0 + $0x3c] sm:$0xff]
  %v25 = vld [vmem:[%s0 + $0x44] sm:$0xff]
  %v26 = vld [vmem:[%s0 + $0x4c] sm:$0xf]
  %v27 = vld [vmem:[%s0 + $0x50] sm:$0xff]
  %v28 = vld [vmem:[%s0 + $0x58] sm:$0xff]
  %v29 = vld [vmem:[%s0 + $0x60] sm:$0xf]
  %v30 = vld [vmem:[%s0 + $0x64] sm:$0xff]
  %v31 = vld [vmem:[%s0 + $0x6c] sm:$0xff]
  %v32 = vld [vmem:[%s0 + $0x74] sm:$0xf]
  %v33 = vld [vmem:[%s0 + $0x78] sm:$0xff]
  %v34 = vld [vmem:[%s0 + $0x80] sm:$0xff]
  %v35 = vld [vmem:[%s0 + $0x88] sm:$0xf]
  %v36 = vld [vmem:[%s0 + $0x8c] sm:$0xff]
  %v37 = vld [vmem:[%s0 + $0x94] sm:$0xff]
  %v38 = vld [vmem:[%s0 + $0x9c] sm:$0xf]
  %v39 = vld [vmem:[%s0 + $0xa0] sm:$0xff]
  %v40 = vld [vmem:[%s0 + $0xa8] sm:$0xff]
  %v41 = vld [vmem:[%s0 + $0xb0] sm:$0xf]
  %v42 = vld [vmem:[%s0 + $0xb4] sm:$0xff]
  %v43 = vld [vmem:[%s0 + $0xbc] sm:$0xff]
  %v44 = vld [vmem:[%s0 + $0xc4] sm:$0xf]
  %v45 = vld [vmem:[%s0 + $0xc8] sm:$0xff]
  %v46 = vld [vmem:[%s0 + $0xd0] sm:$0xff]
  %v47 = vld [vmem:[%s0 + $0xd8] sm:$0xf]
  %v48 = vld [vmem:[%s0 + $0xdc] sm:$0xff]
  %v49 = vld [vmem:[%s0 + $0xe4] sm:$0xff]
  %v50 = vld [vmem:[%s0 + $0xec] sm:$0xf]
  %v51 = vld [vmem:[%s0 + $0xf0] sm:$0x11]
  %v52 = vld [vmem:[%s0 + $0xf8] sm:$0x11]
  %v53 = vld [vmem:[%s0 + $0x100] sm:$0x1]
  %v54 = vld [vmem:[%s1] sm:$0xf]
  %v55 = vld [vmem:[%s1 + $0x4] sm:$0xf]
  %v56 = vld [vmem:[%s1 + $0x8] sm:$0xf]
  %v57 = vld [vmem:[%s1 + $0xc] sm:$0xf]
  %v58 = vld [vmem:[%s1 + $0x10] sm:$0xf]
  %v59 = vld [vmem:[%s1 + $0x14] sm:$0xf]
  %v60 = vld [vmem:[%s1 + $0x18] sm:$0xf]
  %v61 = vld [vmem:[%s1 + $0x1c] sm:$0xf]
  %v62 = vld [vmem:[%s1 + $0x20] sm:$0xf]
  %v63 = vld [vmem:[%s1 + $0x24] sm:$0xf]
  %v64 = vld [vmem:[%s1 + $0x28] sm:$0xf]
  %v65 = vld [vmem:[%s1 + $0x2c] sm:$0xf]
  %v66 = vld [vmem:[%s1 + $0x30] sm:$0xf]
  %v67 = vld [vmem:[%s1 + $0x34] sm:$0xf]
  %v68 = vld [vmem:[%s1 + $0x38] sm:$0xf]
  %v69 = vld [vmem:[%s1 + $0x3c] sm:$0xf]
  %v70 = vld [vmem:[%s1 + $0x40] sm:$0xf]
  %v71 = vld [vmem:[%s1 + $0x44] sm:$0xf]
  %v72 = vld [vmem:[%s1 + $0x48] sm:$0xf]
  %v73 = vld [vmem:[%s1 + $0x4c] sm:$0xf]
  %v74 = vld [vmem:[%s1 + $0x50] sm:$0xf]
  %v75 = vld [vmem:[%s1 + $0x54] sm:$0xf]
  %v76 = vld [vmem:[%s1 + $0x58] sm:$0xf]
  %v77 = vld [vmem:[%s1 + $0x5c] sm:$0xf]
  %v78 = vld [vmem:[%s1 + $0x60] sm:$0xf]
  %v79 = vld [vmem:[%s1 + $0x64] sm:$0xf]
  %v80 = vld [vmem:[%s1 + $0x68] sm:$0xf]
  %v81 = vld [vmem:[%s1 + $0x6c] sm:$0xf]
  %v82 = vld [vmem:[%s1 + $0x70] sm:$0xf]
  %v83 = vld [vmem:[%s1 + $0x74] sm:$0xf]
  %v84 = vld [vmem:[%s1 + $0x78] sm:$0xf]
  %v85 = vld [vmem:[%s1 + $0x7c] sm:$0xf]
  %v86 = vld [vmem:[%s1 + $0x80] sm:$0xf]
  %v87 = vld [vmem:[%s1 + $0x84] sm:$0xf]
  %v88 = vld [vmem:[%s1 + $0x88] sm:$0xf]
  %v89 = vld [vmem:[%s1 + $0x8c] sm:$0xf]
  %v90 = vld [vmem:[%s1 + $0x90] sm:$0xf]
  %v91 = vld [vmem:[%s1 + $0x94] sm:$0xf]
  %v92 = vld [vmem:[%s1 + $0x98] sm:$0xf]
  %v93 = vld [vmem:[%s1 + $0x9c] sm:$0xf]
  %v94 = vld [vmem:[%s1 + $0xa0] sm:$0xf]
  %v95 = vld [vmem:[%s1 + $0xa4] sm:$0xf]
  %v96 = vld [vmem:[%s1 + $0xa8] sm:$0xf]
  %v97 = vld [vmem:[%s1 + $0xac] sm:$0xf]
  %v98 = vld [vmem:[%s1 + $0xb0] sm:$0xf]
  %v99 = vld [vmem:[%s1 + $0xb4] sm:$0xf]
  %v100 = vld [vmem:[%s1 + $0xb8] sm:$0xf]
  %v101 = vld [vmem:[%s1 + $0xbc] sm:$0xf]
  %v102 = vld [vmem:[%s1 + $0xc0] sm:$0xf]
  %v103 = vld [vmem:[%s1 + $0xc4] sm:$0xf]
  %v104 = vld [vmem:[%s1 + $0xc8] sm:$0xf]
  %v105 = vld [vmem:[%s1 + $0xcc] sm:$0xf]
  %v106 = vld [vmem:[%s1 + $0xd0] sm:$0xf]
  %v107 = vld [vmem:[%s1 + $0xd4] sm:$0xf]
  %v108 = vld [vmem:[%s1 + $0xd8] sm:$0xf]
  %v109 = vld [vmem:[%s1 + $0xdc] sm:$0xf]
  %v110 = vld [vmem:[%s1 + $0xe0] sm:$0xf]
  %v111 = vld [vmem:[%s1 + $0xe4] sm:$0xf]
  %v112 = vld [vmem:[%s1 + $0xe8] sm:$0xf]
  %v113 = vld [vmem:[%s1 + $0xec] sm:$0xf]
  %v114 = vld [vmem:[%s1 + $0xf0] sm:$0xf]
  %v115 = vld [vmem:[%s1 + $0xf4] sm:$0xf]
  %v116 = vld [vmem:[%s1 + $0xf8] sm:$0xf]
  %v117 = vld [vmem:[%s1 + $0xfc] sm:$0xf]
  %v118 = vld [vmem:[%s1 + $0x100] sm:$0xf]
  %v119 = vld [vmem:[%s1 + $0x104] sm:$0xf]
  %v120 = vld [vmem:[%s1 + $0x108] sm:$0xf]
  %v121 = vld [vmem:[%s1 + $0x10c] sm:$0xf]
  %v122 = vld [vmem:[%s1 + $0x110] sm:$0xf]
  %v123 = vld [vmem:[%s1 + $0x114] sm:$0xf]
  %v124 = vld [vmem:[%s1 + $0x118] sm:$0xf]
  %v125 = vld [vmem:[%s1 + $0x11c] sm:$0xf]
  %v126 = vld [vmem:[%s2] sm:$0x1]
  %v128 = vperm.slane %v126, 0
  %v169 = vunpack.c.l.b16 %v15
  %v170 = vunpack.c.h.b16 %v15
  %v171 = vunpack.c.l.b16 %v16
  %v172 = vunpack.c.h.b16 %v16
  %v173 = vunpack.c.l.b16 %v17
  %v174 = vunpack.c.l.b16 %v18
  %v175 = vunpack.c.h.b16 %v18
  %v176 = vunpack.c.l.b16 %v19
  %v177 = vunpack.c.h.b16 %v19
  %v178 = vunpack.c.l.b16 %v20
  %v179 = vunpack.c.l.b16 %v21
  %v180 = vunpack.c.h.b16 %v21
  %v181 = vunpack.c.l.b16 %v22
  %v182 = vunpack.c.h.b16 %v22
  %v183 = vunpack.c.l.b16 %v23
  %v184 = vunpack.c.l.b16 %v24
  %v185 = vunpack.c.h.b16 %v24
  %v186 = vunpack.c.l.b16 %v25
  %v187 = vunpack.c.h.b16 %v25
  %v188 = vunpack.c.l.b16 %v26
  %v189 = vunpack.c.l.b16 %v27
  %v190 = vunpack.c.h.b16 %v27
  %v191 = vunpack.c.l.b16 %v28
  %v192 = vunpack.c.h.b16 %v28
  %v193 = vunpack.c.l.b16 %v29
  %v194 = vunpack.c.l.b16 %v30
  %v195 = vunpack.c.h.b16 %v30
  %v196 = vunpack.c.l.b16 %v31
  %v197 = vunpack.c.h.b16 %v31
  %v198 = vunpack.c.l.b16 %v32
  %v199 = vunpack.c.l.b16 %v33
  %v200 = vunpack.c.h.b16 %v33
  %v201 = vunpack.c.l.b16 %v34
  %v202 = vunpack.c.h.b16 %v34
  %v203 = vunpack.c.l.b16 %v35
  %v204 = vunpack.c.l.b16 %v36
  %v205 = vunpack.c.h.b16 %v36
  %v206 = vunpack.c.l.b16 %v37
  %v207 = vunpack.c.h.b16 %v37
  %v208 = vunpack.c.l.b16 %v38
  %v209 = vunpack.c.l.b16 %v39
  %v210 = vunpack.c.h.b16 %v39
  %v211 = vunpack.c.l.b16 %v40
  %v212 = vunpack.c.h.b16 %v40
  %v213 = vunpack.c.l.b16 %v41
  %v214 = vunpack.c.l.b16 %v42
  %v215 = vunpack.c.h.b16 %v42
  %v216 = vunpack.c.l.b16 %v43
  %v217 = vunpack.c.h.b16 %v43
  %v218 = vunpack.c.l.b16 %v44
  %v219 = vunpack.c.l.b16 %v45
  %v220 = vunpack.c.h.b16 %v45
  %v221 = vunpack.c.l.b16 %v46
  %v222 = vunpack.c.h.b16 %v46
  %v223 = vunpack.c.l.b16 %v47
  %v224 = vunpack.c.l.b16 %v48
  %v225 = vunpack.c.h.b16 %v48
  %v226 = vunpack.c.l.b16 %v49
  %v227 = vunpack.c.h.b16 %v49
  %v228 = vunpack.c.l.b16 %v50
  %v229 = vunpack.c.l.b16 %v51
  %v230 = vunpack.c.h.b16 %v51
  %v231 = vunpack.c.l.b16 %v52
  %v232 = vunpack.c.h.b16 %v52
  %v233 = vunpack.c.l.b16 %v53
  %v234 = vpack.c.b16 %v174, %v169
  %v235 = vpack.c.b16 %v175, %v170
  %v236 = vpack.c.b16 %v176, %v171
  %v237 = vpack.c.b16 %v177, %v172
  %v238 = vpack.c.b16 %v178, %v173
  %v239 = vpack.c.b16 %v184, %v179
  %v240 = vpack.c.b16 %v185, %v180
  %v241 = vpack.c.b16 %v186, %v181
  %v242 = vpack.c.b16 %v187, %v182
  %v243 = vpack.c.b16 %v188, %v183
  %v244 = vpack.c.b16 %v194, %v189
  %v245 = vpack.c.b16 %v195, %v190
  %v246 = vpack.c.b16 %v196, %v191
  %v247 = vpack.c.b16 %v197, %v192
  %v248 = vpack.c.b16 %v198, %v193
  %v249 = vpack.c.b16 %v204, %v199
  %v250 = vpack.c.b16 %v205, %v200
  %v251 = vpack.c.b16 %v206, %v201
  %v252 = vpack.c.b16 %v207, %v202
  %v253 = vpack.c.b16 %v208, %v203
  %v254 = vpack.c.b16 %v214, %v209
  %v255 = vpack.c.b16 %v215, %v210
  %v256 = vpack.c.b16 %v216, %v211
  %v257 = vpack.c.b16 %v217, %v212
  %v258 = vpack.c.b16 %v218, %v213
  %v259 = vpack.c.b16 %v224, %v219
  %v260 = vpack.c.b16 %v225, %v220
  %v261 = vpack.c.b16 %v226, %v221
  %v262 = vpack.c.b16 %v227, %v222
  %v263 = vpack.c.b16 %v228, %v223
  %v264 = vpack.c.b16 %v229, %v229
  %v265 = vpack.c.b16 %v230, %v230
  %v266 = vpack.c.b16 %v231, %v231
  %v267 = vpack.c.b16 %v232, %v232
  %v268 = vpack.c.b16 %v233, %v233
  %v369 = vunpack.c.l.b16 %v54
  %v370 = vunpack.c.l.b16 %v55
  %v371 = vunpack.c.l.b16 %v56
  %v372 = vunpack.c.l.b16 %v57
  %v373 = vunpack.c.l.b16 %v58
  %v374 = vunpack.c.l.b16 %v59
  %v375 = vunpack.c.l.b16 %v60
  %v376 = vunpack.c.l.b16 %v61
  %v377 = vunpack.c.l.b16 %v62
  %v378 = vunpack.c.l.b16 %v63
  %v379 = vunpack.c.l.b16 %v64
  %v380 = vunpack.c.l.b16 %v65
  %v381 = vunpack.c.l.b16 %v66
  %v382 = vunpack.c.l.b16 %v67
  %v383 = vunpack.c.l.b16 %v68
  %v384 = vunpack.c.l.b16 %v69
  %v385 = vunpack.c.l.b16 %v70
  %v386 = vunpack.c.l.b16 %v71
  %v387 = vunpack.c.l.b16 %v72
  %v388 = vunpack.c.l.b16 %v73
  %v389 = vunpack.c.l.b16 %v74
  %v390 = vunpack.c.l.b16 %v75
  %v391 = vunpack.c.l.b16 %v76
  %v392 = vunpack.c.l.b16 %v77
  %v393 = vunpack.c.l.b16 %v78
  %v394 = vunpack.c.l.b16 %v79
  %v395 = vunpack.c.l.b16 %v80
  %v396 = vunpack.c.l.b16 %v81
  %v397 = vunpack.c.l.b16 %v82
  %v398 = vunpack.c.l.b16 %v83
  %v399 = vunpack.c.l.b16 %v84
  %v400 = vunpack.c.l.b16 %v85
  %v401 = vunpack.c.l.b16 %v86
  %v402 = vunpack.c.l.b16 %v87
  %v403 = vunpack.c.l.b16 %v88
  %v404 = vunpack.c.l.b16 %v89
  %v405 = vunpack.c.l.b16 %v90
  %v406 = vunpack.c.l.b16 %v91
  %v407 = vunpack.c.l.b16 %v92
  %v408 = vunpack.c.l.b16 %v93
  %v409 = vunpack.c.l.b16 %v94
  %v410 = vunpack.c.l.b16 %v95
  %v411 = vunpack.c.l.b16 %v96
  %v412 = vunpack.c.l.b16 %v97
  %v413 = vunpack.c.l.b16 %v98
  %v414 = vunpack.c.l.b16 %v99
  %v415 = vunpack.c.l.b16 %v100
  %v416 = vunpack.c.l.b16 %v101
  %v417 = vunpack.c.l.b16 %v102
  %v418 = vunpack.c.l.b16 %v103
  %v419 = vunpack.c.l.b16 %v104
  %v420 = vunpack.c.l.b16 %v105
  %v421 = vunpack.c.l.b16 %v106
  %v422 = vunpack.c.l.b16 %v107
  %v423 = vunpack.c.l.b16 %v108
  %v424 = vunpack.c.l.b16 %v109
  %v425 = vunpack.c.l.b16 %v110
  %v426 = vunpack.c.l.b16 %v111
  %v427 = vunpack.c.l.b16 %v112
  %v428 = vunpack.c.l.b16 %v113
  %v429 = vunpack.c.l.b16 %v114
  %v430 = vunpack.c.l.b16 %v115
  %v431 = vunpack.c.l.b16 %v116
  %v432 = vunpack.c.l.b16 %v117
  %v433 = vunpack.c.l.b16 %v118
  %v434 = vunpack.c.l.b16 %v119
  %v435 = vunpack.c.l.b16 %v120
  %v436 = vunpack.c.l.b16 %v121
  %v437 = vunpack.c.l.b16 %v122
  %v438 = vunpack.c.l.b16 %v123
  %v439 = vunpack.c.l.b16 %v124
  %v440 = vunpack.c.l.b16 %v125
  %v441 = vpack.c.b16 %v370, %v369
  %v442 = vpack.c.b16 %v372, %v371
  %v443 = vpack.c.b16 %v374, %v373
  %v444 = vpack.c.b16 %v376, %v375
  %v445 = vpack.c.b16 %v378, %v377
  %v446 = vpack.c.b16 %v380, %v379
  %v447 = vpack.c.b16 %v382, %v381
  %v448 = vpack.c.b16 %v384, %v383
  %v449 = vpack.c.b16 %v386, %v385
  %v450 = vpack.c.b16 %v388, %v387
  %v451 = vpack.c.b16 %v390, %v389
  %v452 = vpack.c.b16 %v392, %v391
  %v453 = vpack.c.b16 %v394, %v393
  %v454 = vpack.c.b16 %v396, %v395
  %v455 = vpack.c.b16 %v398, %v397
  %v456 = vpack.c.b16 %v400, %v399
  %v457 = vpack.c.b16 %v402, %v401
  %v458 = vpack.c.b16 %v404, %v403
  %v459 = vpack.c.b16 %v406, %v405
  %v460 = vpack.c.b16 %v408, %v407
  %v461 = vpack.c.b16 %v410, %v409
  %v462 = vpack.c.b16 %v412, %v411
  %v463 = vpack.c.b16 %v414, %v413
  %v464 = vpack.c.b16 %v416, %v415
  %v465 = vpack.c.b16 %v418, %v417
  %v466 = vpack.c.b16 %v420, %v419
  %v467 = vpack.c.b16 %v422, %v421
  %v468 = vpack.c.b16 %v424, %v423
  %v469 = vpack.c.b16 %v426, %v425
  %v470 = vpack.c.b16 %v428, %v427
  %v471 = vpack.c.b16 %v430, %v429
  %v472 = vpack.c.b16 %v432, %v431
  %v473 = vpack.c.b16 %v434, %v433
  %v474 = vpack.c.b16 %v436, %v435
  %v475 = vpack.c.b16 %v438, %v437
  %v476 = vpack.c.b16 %v440, %v439
  %vm513 = vcmask 523264
  %v515 = vsel %vm513, %v238, 0
  %v518 = vsel %vm513, %v243, 0
  %v521 = vsel %vm513, %v248, 0
  %v524 = vsel %vm513, %v253, 0
  %v527 = vsel %vm513, %v258, 0
  %v530 = vsel %vm513, %v263, 0
  %v533 = vsel %vm513, %v268, 0
  %535 = vmatpush.bf16.msra.mxu0 %v448
  %536 = vmatpush.bf16.msra.mxu0 %v447
  %537 = vmatpush.bf16.msra.mxu0 %v446
  %538 = vmatpush.bf16.msra.mxu0 %v445
  %539 = vmatpush.bf16.msra.mxu0 %v444
  %540 = vmatpush.bf16.msra.mxu0 %v443
  %541 = vmatpush.bf16.msra.mxu0 %v442
  %542 = vmatpush.bf16.msra.mxu0 %v441
  %543 = vmatmul.bf16.gmra.mxu0 %v234
  %v544 = vpop.f32.mrf.mxu0
  %v545 = vadd.f32 %v128, %v544
  %v546 = vpop.f32.mrf.mxu0
  %v547 = vadd.f32 %v128, %v546
  %548 = vmatmul.bf16.gmra.mxu0 %v239
  %v549 = vpop.f32.mrf.mxu0
  %v550 = vadd.f32 %v128, %v549
  %v551 = vpop.f32.mrf.mxu0
  %v552 = vadd.f32 %v128, %v551
  %553 = vmatmul.bf16.gmra.mxu0 %v244
  %v554 = vpop.f32.mrf.mxu0
  %v555 = vadd.f32 %v128, %v554
  %v556 = vpop.f32.mrf.mxu0
  %v557 = vadd.f32 %v128, %v556
  %558 = vmatmul.bf16.gmra.mxu0 %v249
  %v559 = vpop.f32.mrf.mxu0
  %v560 = vadd.f32 %v128, %v559
  %v561 = vpop.f32.mrf.mxu0
  %v562 = vadd.f32 %v128, %v561
  %563 = vmatmul.bf16.gmra.mxu0 %v254
  %v564 = vpop.f32.mrf.mxu0
  %v565 = vadd.f32 %v128, %v564
  %v566 = vpop.f32.mrf.mxu0
  %v567 = vadd.f32 %v128, %v566
  %568 = vmatmul.bf16.gmra.mxu0 %v259
  %v569 = vpop.f32.mrf.mxu0
  %v570 = vadd.f32 %v128, %v569
  %v571 = vpop.f32.mrf.mxu0
  %v572 = vadd.f32 %v128, %v571
  %573 = vmatmul.bf16.gmra.mxu0 %v264
  %v574 = vpop.f32.mrf.mxu0
  %v575 = vadd.f32 %v128, %v574
  %v576 = vpop.f32.mrf.mxu0
  %577 = vdwg.mxu0
  %578 = vmatpush.bf16.msra.mxu0 %v456
  %579 = vmatpush.bf16.msra.mxu0 %v455
  %580 = vmatpush.bf16.msra.mxu0 %v454
  %581 = vmatpush.bf16.msra.mxu0 %v453
  %582 = vmatpush.bf16.msra.mxu0 %v452
  %583 = vmatpush.bf16.msra.mxu0 %v451
  %584 = vmatpush.bf16.msra.mxu0 %v450
  %585 = vmatpush.bf16.msra.mxu0 %v449
  %586 = vmatmul.bf16.gmra.mxu0 %v235
  %v587 = vpop.f32.mrf.mxu0
  %v588 = vadd.f32 %v545, %v587
  %v589 = vpop.f32.mrf.mxu0
  %v590 = vadd.f32 %v547, %v589
  %591 = vmatmul.bf16.gmra.mxu0 %v240
  %v592 = vpop.f32.mrf.mxu0
  %v593 = vadd.f32 %v550, %v592
  %v594 = vpop.f32.mrf.mxu0
  %v595 = vadd.f32 %v552, %v594
  %596 = vmatmul.bf16.gmra.mxu0 %v245
  %v597 = vpop.f32.mrf.mxu0
  %v598 = vadd.f32 %v555, %v597
  %v599 = vpop.f32.mrf.mxu0
  %v600 = vadd.f32 %v557, %v599
  %601 = vmatmul.bf16.gmra.mxu0 %v250
  %v602 = vpop.f32.mrf.mxu0
  %v603 = vadd.f32 %v560, %v602
  %v604 = vpop.f32.mrf.mxu0
  %v605 = vadd.f32 %v562, %v604
  %606 = vmatmul.bf16.gmra.mxu0 %v255
  %v607 = vpop.f32.mrf.mxu0
  %v608 = vadd.f32 %v565, %v607
  %v609 = vpop.f32.mrf.mxu0
  %v610 = vadd.f32 %v567, %v609
  %611 = vmatmul.bf16.gmra.mxu0 %v260
  %v612 = vpop.f32.mrf.mxu0
  %v613 = vadd.f32 %v570, %v612
  %v614 = vpop.f32.mrf.mxu0
  %v615 = vadd.f32 %v572, %v614
  %616 = vmatmul.bf16.gmra.mxu0 %v265
  %v617 = vpop.f32.mrf.mxu0
  %v618 = vadd.f32 %v575, %v617
  %v619 = vpop.f32.mrf.mxu0
  %620 = vdwg.mxu0
  %621 = vmatpush.bf16.msra.mxu0 %v464
  %622 = vmatpush.bf16.msra.mxu0 %v463
  %623 = vmatpush.bf16.msra.mxu0 %v462
  %624 = vmatpush.bf16.msra.mxu0 %v461
  %625 = vmatpush.bf16.msra.mxu0 %v460
  %626 = vmatpush.bf16.msra.mxu0 %v459
  %627 = vmatpush.bf16.msra.mxu0 %v458
  %628 = vmatpush.bf16.msra.mxu0 %v457
  %629 = vmatmul.bf16.gmra.mxu0 %v236
  %v630 = vpop.f32.mrf.mxu0
  %v631 = vadd.f32 %v588, %v630
  %v632 = vpop.f32.mrf.mxu0
  %v633 = vadd.f32 %v590, %v632
  %634 = vmatmul.bf16.gmra.mxu0 %v241
  %v635 = vpop.f32.mrf.mxu0
  %v636 = vadd.f32 %v593, %v635
  %v637 = vpop.f32.mrf.mxu0
  %v638 = vadd.f32 %v595, %v637
  %639 = vmatmul.bf16.gmra.mxu0 %v246
  %v640 = vpop.f32.mrf.mxu0
  %v641 = vadd.f32 %v598, %v640
  %v642 = vpop.f32.mrf.mxu0
  %v643 = vadd.f32 %v600, %v642
  %644 = vmatmul.bf16.gmra.mxu0 %v251
  %v645 = vpop.f32.mrf.mxu0
  %v646 = vadd.f32 %v603, %v645
  %v647 = vpop.f32.mrf.mxu0
  %v648 = vadd.f32 %v605, %v647
  %649 = vmatmul.bf16.gmra.mxu0 %v256
  %v650 = vpop.f32.mrf.mxu0
  %v651 = vadd.f32 %v608, %v650
  %v652 = vpop.f32.mrf.mxu0
  %v653 = vadd.f32 %v610, %v652
  %654 = vmatmul.bf16.gmra.mxu0 %v261
  %v655 = vpop.f32.mrf.mxu0
  %v656 = vadd.f32 %v613, %v655
  %v657 = vpop.f32.mrf.mxu0
  %v658 = vadd.f32 %v615, %v657
  %659 = vmatmul.bf16.gmra.mxu0 %v266
  %v660 = vpop.f32.mrf.mxu0
  %v661 = vadd.f32 %v618, %v660
  %v662 = vpop.f32.mrf.mxu0
  %663 = vdwg.mxu0
  %664 = vmatpush.bf16.msra.mxu0 %v472
  %665 = vmatpush.bf16.msra.mxu0 %v471
  %666 = vmatpush.bf16.msra.mxu0 %v470
  %667 = vmatpush.bf16.msra.mxu0 %v469
  %668 = vmatpush.bf16.msra.mxu0 %v468
  %669 = vmatpush.bf16.msra.mxu0 %v467
  %670 = vmatpush.bf16.msra.mxu0 %v466
  %671 = vmatpush.bf16.msra.mxu0 %v465
  %672 = vmatmul.bf16.gmra.mxu0 %v237
  %v673 = vpop.f32.mrf.mxu0
  %v674 = vadd.f32 %v631, %v673
  %v675 = vpop.f32.mrf.mxu0
  %v676 = vadd.f32 %v633, %v675
  %677 = vmatmul.bf16.gmra.mxu0 %v242
  %v678 = vpop.f32.mrf.mxu0
  %v679 = vadd.f32 %v636, %v678
  %v680 = vpop.f32.mrf.mxu0
  %v681 = vadd.f32 %v638, %v680
  %682 = vmatmul.bf16.gmra.mxu0 %v247
  %v683 = vpop.f32.mrf.mxu0
  %v684 = vadd.f32 %v641, %v683
  %v685 = vpop.f32.mrf.mxu0
  %v686 = vadd.f32 %v643, %v685
  %687 = vmatmul.bf16.gmra.mxu0 %v252
  %v688 = vpop.f32.mrf.mxu0
  %v689 = vadd.f32 %v646, %v688
  %v690 = vpop.f32.mrf.mxu0
  %v691 = vadd.f32 %v648, %v690
  %692 = vmatmul.bf16.gmra.mxu0 %v257
  %v693 = vpop.f32.mrf.mxu0
  %v694 = vadd.f32 %v651, %v693
  %v695 = vpop.f32.mrf.mxu0
  %v696 = vadd.f32 %v653, %v695
  %697 = vmatmul.bf16.gmra.mxu0 %v262
  %v698 = vpop.f32.mrf.mxu0
  %v699 = vadd.f32 %v656, %v698
  %v700 = vpop.f32.mrf.mxu0
  %v701 = vadd.f32 %v658, %v700
  %702 = vmatmul.bf16.gmra.mxu0 %v267
  %v703 = vpop.f32.mrf.mxu0
  %v704 = vadd.f32 %v661, %v703
  %v705 = vpop.f32.mrf.mxu0
  %706 = vdwg.mxu0
  %707 = vmatpush.bf16.msra.mxu0 0
  %708 = vmatpush.bf16.msra.mxu0 0
  %709 = vmatpush.bf16.msra.mxu0 0
  %710 = vmatpush.bf16.msra.mxu0 0
  %711 = vmatpush.bf16.msra.mxu0 %v476
  %712 = vmatpush.bf16.msra.mxu0 %v475
  %713 = vmatpush.bf16.msra.mxu0 %v474
  %714 = vmatpush.bf16.msra.mxu0 %v473
  %715 = vmatmul.bf16.gmra.mxu0 %v515
  %v716 = vpop.f32.mrf.mxu0
  %v717 = vadd.f32 %v674, %v716
  %v718 = vpop.f32.mrf.mxu0
  %v719 = vadd.f32 %v676, %v718
  %720 = vmatmul.bf16.gmra.mxu0 %v518
  %v721 = vpop.f32.mrf.mxu0
  %v722 = vadd.f32 %v679, %v721
  %v723 = vpop.f32.mrf.mxu0
  %v724 = vadd.f32 %v681, %v723
  %725 = vmatmul.bf16.gmra.mxu0 %v521
  %v726 = vpop.f32.mrf.mxu0
  %v727 = vadd.f32 %v684, %v726
  %v728 = vpop.f32.mrf.mxu0
  %v729 = vadd.f32 %v686, %v728
  %730 = vmatmul.bf16.gmra.mxu0 %v524
  %v731 = vpop.f32.mrf.mxu0
  %v732 = vadd.f32 %v689, %v731
  %v733 = vpop.f32.mrf.mxu0
  %v734 = vadd.f32 %v691, %v733
  %735 = vmatmul.bf16.gmra.mxu0 %v527
  %v736 = vpop.f32.mrf.mxu0
  %v737 = vadd.f32 %v694, %v736
  %v738 = vpop.f32.mrf.mxu0
  %v739 = vadd.f32 %v696, %v738
  %740 = vmatmul.bf16.gmra.mxu0 %v530
  %v741 = vpop.f32.mrf.mxu0
  %v742 = vadd.f32 %v699, %v741
  %v743 = vpop.f32.mrf.mxu0
  %v744 = vadd.f32 %v701, %v743
  %745 = vmatmul.bf16.gmra.mxu0 %v533
  %v746 = vpop.f32.mrf.mxu0
  %v747 = vadd.f32 %v704, %v746
  %v748 = vpop.f32.mrf.mxu0
  %749 = vdwg.mxu0
  %v750 = vmax.f32 %v717, 0.0
  %v751 = vmax.f32 %v719, 0.0
  %v752 = vmax.f32 %v722, 0.0
  %v753 = vmax.f32 %v724, 0.0
  %v754 = vmax.f32 %v727, 0.0
  %v755 = vmax.f32 %v729, 0.0
  %v756 = vmax.f32 %v732, 0.0
  %v757 = vmax.f32 %v734, 0.0
  %v758 = vmax.f32 %v737, 0.0
  %v759 = vmax.f32 %v739, 0.0
  %v760 = vmax.f32 %v742, 0.0
  %v761 = vmax.f32 %v744, 0.0
  %v762 = vmax.f32 %v747, 0.0
  %v763 = vpack.c.bf16 %v750, %v750
  %v764 = vpack.c.bf16 %v751, %v751
  %v765 = vpack.c.bf16 %v752, %v752
  %v766 = vpack.c.bf16 %v753, %v753
  %v767 = vpack.c.bf16 %v754, %v754
  %v768 = vpack.c.bf16 %v755, %v755
  %v769 = vpack.c.bf16 %v756, %v756
  %v770 = vpack.c.bf16 %v757, %v757
  %v771 = vpack.c.bf16 %v758, %v758
  %v772 = vpack.c.bf16 %v759, %v759
  %v773 = vpack.c.bf16 %v760, %v760
  %v774 = vpack.c.bf16 %v761, %v761
  %v775 = vpack.c.bf16 %v762, %v762
  %vm776 = vcmask 519168
  %777 = vst.msk [vmem:[%s3] sm:$0xf] %vm776, %v763
  %778 = vst.msk [vmem:[%s3 + $0x4] sm:$0xf] %vm776, %v764
  %779 = vst.msk [vmem:[%s3 + $0x8] sm:$0xf] %vm776, %v765
  %780 = vst.msk [vmem:[%s3 + $0xc] sm:$0xf] %vm776, %v766
  %781 = vst.msk [vmem:[%s3 + $0x10] sm:$0xf] %vm776, %v767
  %782 = vst.msk [vmem:[%s3 + $0x14] sm:$0xf] %vm776, %v768
  %783 = vst.msk [vmem:[%s3 + $0x18] sm:$0xf] %vm776, %v769
  %784 = vst.msk [vmem:[%s3 + $0x1c] sm:$0xf] %vm776, %v770
  %785 = vst.msk [vmem:[%s3 + $0x20] sm:$0xf] %vm776, %v771
  %786 = vst.msk [vmem:[%s3 + $0x24] sm:$0xf] %vm776, %v772
  %787 = vst.msk [vmem:[%s3 + $0x28] sm:$0xf] %vm776, %v773
  %788 = vst.msk [vmem:[%s3 + $0x2c] sm:$0xf] %vm776, %v774
  %vm789 = vcmask 516096
  %790 = vst.msk [vmem:[%s3 + $0x30] sm:$0x1] %vm789, %v775
  // Predicated region
  $region14: #{custom_cnn_forward.6} parent=0 // pred_check
    _
  $region15: #{custom_cnn_forward.6} parent=0 // pred_check_branch
    %792 = sbr.rel (0) target = $region17
  $region16: #{custom_cnn_forward.6} parent=0 // pred_region
    _
  $region17: #{custom_cnn_forward.6} parent=0 // pred_fallthru
    _
  // Predicated region
  $region18: #{custom_cnn_forward.6} parent=0 // pred_check
    _
  $region19: #{custom_cnn_forward.6} parent=0 // pred_check_branch
    %794 = sbr.rel (0) target = $region21
  $region20: #{custom_cnn_forward.6} parent=0 // pred_region
    _
  $region21: #{custom_cnn_forward.6} parent=0 // pred_fallthru
    _

// kernel: custom_cnn_forward.7
$region0: #{custom_cnn_forward.7}
  #allocation0 [shape = 'u32[]', space=smem, size = 0x4, offset = 0x4, fixed_abs, tag = 'smem constant byte address 0x4 - core index']
  #allocation1 [shape = 'u32[72,128]{1,0:T(1,128)}', space=vmem, size = 0x9000, scoped, tag = 'internal scratch']
  %s0 = inlined_call_operand.vmem [shape: bf16[2,3136], index: 0, kind: input, shape index: {}]
  %s1 = inlined_call_operand.vmem [shape: bf16[3136,512], index: 1, kind: input, shape index: {}]
  %s2 = inlined_call_operand.vmem [shape: f32[1,512], index: 2, kind: input, shape index: {}]
  %s3 = inlined_call_operand.vmem [shape: bf16[512,128], index: 3, kind: input, shape index: {}]
  %s4 = inlined_call_operand.vmem [shape: f32[1,128], index: 4, kind: input, shape index: {}]
  %s5 = inlined_call_operand.hbm [shape: f32[2,128], index: 5, kind: output, shape index: {}]
  %s6 = sld [smem:[#allocation0]]
  $region30: #{custom_cnn_forward.7} parent=0
    _
  %s8 = ssub.s32 1, %s6
  %s9 = scalar_select 0, %s8, %s6
  $region1: #{custom_cnn_forward.7} parent=0
    #allocation2 [shape = 'u8[1024]{0}', space=vmem, size = 0x400, scoped, tag = 'output window, operand 0, single buffered']
    #allocation3 [shape = 's32[1]{0}', space=sflag, size = 0x4, scoped, tag = 'scoped memory for custom_cnn_forward.7']
    %10 = vsyncpa [#allocation3], 0
    // Predicated region
    $region2: #{custom_cnn_forward.7} parent=1 // pred_check
      _
    $region3: #{custom_cnn_forward.7} parent=1 // pred_check_branch
      %12 = sbr.rel (0) target = $region5
    $region4: #{custom_cnn_forward.7} parent=1 // pred_region
      _
    $region5: #{custom_cnn_forward.7} parent=1 // pred_fallthru
      _
    // Predicated region
    $region6: #{custom_cnn_forward.7} parent=1 // pred_check
      _
    $region7: #{custom_cnn_forward.7} parent=1 // pred_check_branch
      %14 = sbr.rel (0) target = $region9
    $region8: #{custom_cnn_forward.7} parent=1 // pred_region
      _
    $region9: #{custom_cnn_forward.7} parent=1 // pred_fallthru
      _
    // Predicated region
    $region10: #{custom_cnn_forward.7} parent=1 // pred_check
      _
    $region11: #{custom_cnn_forward.7} parent=1 // pred_check_branch
      %16 = sbr.rel (0) target = $region13
    $region12: #{custom_cnn_forward.7} parent=1 // pred_region
      _
    $region13: #{custom_cnn_forward.7} parent=1 // pred_fallthru
      _
    // Predicated region
    $region14: #{custom_cnn_forward.7} parent=1 // pred_check
      _
    $region15: #{custom_cnn_forward.7} parent=1 // pred_check_branch
      %18 = sbr.rel (0) target = $region17
    $region16: #{custom_cnn_forward.7} parent=1 // pred_region
      _
    $region17: #{custom_cnn_forward.7} parent=1 // pred_fallthru
      _
    // Predicated region
    $region18: #{custom_cnn_forward.7} parent=1 // pred_check
      _
    $region19: #{custom_cnn_forward.7} parent=1 // pred_check_branch
      %20 = sbr.rel (0) target = $region21
    $region20: #{custom_cnn_forward.7} parent=1 // pred_region
      _
    $region21: #{custom_cnn_forward.7} parent=1 // pred_fallthru
      _
    %v22 = vld [vmem:[%s0] sm:$0xff]
    %v23 = vld [vmem:[%s0 + $0x8] sm:$0xff]
    %v24 = vld [vmem:[%s0 + $0x10] sm:$0xff]
    %v25 = vld [vmem:[%s0 + $0x18] sm:$0x1]
    %v26 = vld [vmem:[%s1] sm:$0xff]
    %v27 = vld [vmem:[%s1 + $0x8] sm:$0xff]
    %v28 = vld [vmem:[%s1 + $0x10] sm:$0xff]
    %v29 = vld [vmem:[%s1 + $0x18] sm:$0xff]
    %v30 = vld [vmem:[%s1 + $0x20] sm:$0xff]
    %v31 = vld [vmem:[%s1 + $0x28] sm:$0xff]
    %v32 = vld [vmem:[%s1 + $0x30] sm:$0xff]
    %v33 = vld [vmem:[%s1 + $0x38] sm:$0xff]
    %v34 = vld [vmem:[%s1 + $0x40] sm:$0xff]
    %v35 = vld [vmem:[%s1 + $0x48] sm:$0xff]
    %v36 = vld [vmem:[%s1 + $0x50] sm:$0xff]
    %v37 = vld [vmem:[%s1 + $0x58] sm:$0xff]
    %v38 = vld [vmem:[%s1 + $0x60] sm:$0xff]
    %v39 = vld [vmem:[%s1 + $0x68] sm:$0xff]
    %v40 = vld [vmem:[%s1 + $0x70] sm:$0xff]
    %v41 = vld [vmem:[%s1 + $0x78] sm:$0xff]
    %v42 = vld [vmem:[%s1 + $0x80] sm:$0xff]
    %v43 = vld [vmem:[%s1 + $0x88] sm:$0xff]
    %v44 = vld [vmem:[%s1 + $0x90] sm:$0xff]
    %v45 = vld [vmem:[%s1 + $0x98] sm:$0xff]
    %v46 = vld [vmem:[%s1 + $0xa0] sm:$0xff]
    %v47 = vld [vmem:[%s1 + $0xa8] sm:$0xff]
    %v48 = vld [vmem:[%s1 + $0xb0] sm:$0xff]
    %v49 = vld [vmem:[%s1 + $0xb8] sm:$0xff]
    %v50 = vld [vmem:[%s1 + $0xc0] sm:$0xff]
    %v51 = vld [vmem:[%s1 + $0xc8] sm:$0xff]
    %v52 = vld [vmem:[%s1 + $0xd0] sm:$0xff]
    %v53 = vld [vmem:[%s1 + $0xd8] sm:$0xff]
    %v54 = vld [vmem:[%s1 + $0xe0] sm:$0xff]
    %v55 = vld [vmem:[%s1 + $0xe8] sm:$0xff]
    %v56 = vld [vmem:[%s1 + $0xf0] sm:$0xff]
    %v57 = vld [vmem:[%s1 + $0xf8] sm:$0xff]
    %v58 = vld [vmem:[%s1 + $0x100] sm:$0xff]
    %v59 = vld [vmem:[%s1 + $0x108] sm:$0xff]
    %v60 = vld [vmem:[%s1 + $0x110] sm:$0xff]
    %v61 = vld [vmem:[%s1 + $0x118] sm:$0xff]
    %v62 = vld [vmem:[%s1 + $0x120] sm:$0xff]
    %v63 = vld [vmem:[%s1 + $0x128] sm:$0xff]
    %v64 = vld [vmem:[%s1 + $0x130] sm:$0xff]
    %v65 = vld [vmem:[%s1 + $0x138] sm:$0xff]
    %v66 = vld [vmem:[%s1 + $0x140] sm:$0xff]
    %v67 = vld [vmem:[%s1 + $0x148] sm:$0xff]
    %v68 = vld [vmem:[%s1 + $0x150] sm:$0xff]
    %v69 = vld [vmem:[%s1 + $0x158] sm:$0xff]
    %v70 = vld [vmem:[%s1 + $0x160] sm:$0xff]
    %v71 = vld [vmem:[%s1 + $0x168] sm:$0xff]
    %v72 = vld [vmem:[%s1 + $0x170] sm:$0xff]
    %v73 = vld [vmem:[%s1 + $0x178] sm:$0xff]
    %v74 = vld [vmem:[%s1 + $0x180] sm:$0xff]
    %v75 = vld [vmem:[%s1 + $0x188] sm:$0xff]
    %v76 = vld [vmem:[%s1 + $0x190] sm:$0xff]
    %v77 = vld [vmem:[%s1 + $0x198] sm:$0xff]
    %v78 = vld [vmem:[%s1 + $0x1a0] sm:$0xff]
    %v79 = vld [vmem:[%s1 + $0x1a8] sm:$0xff]
    %v80 = vld [vmem:[%s1 + $0x1b0] sm:$0xff]
    %v81 = vld [vmem:[%s1 + $0x1b8] sm:$0xff]
    %v82 = vld [vmem:[%s1 + $0x1c0] sm:$0xff]
    %v83 = vld [vmem:[%s1 + $0x1c8] sm:$0xff]
    %v84 = vld [vmem:[%s1 + $0x1d0] sm:$0xff]
    %v85 = vld [vmem:[%s1 + $0x1d8] sm:$0xff]
    %v86 = vld [vmem:[%s1 + $0x1e0] sm:$0xff]
    %v87 = vld [vmem:[%s1 + $0x1e8] sm:$0xff]
    %v88 = vld [vmem:[%s1 + $0x1f0] sm:$0xff]
    %v89 = vld [vmem:[%s1 + $0x1f8] sm:$0xff]
    %v90 = vld [vmem:[%s1 + $0x200] sm:$0xff]
    %v91 = vld [vmem:[%s1 + $0x208] sm:$0xff]
    %v92 = vld [vmem:[%s1 + $0x210] sm:$0xff]
    %v93 = vld [vmem:[%s1 + $0x218] sm:$0xff]
    %v94 = vld [vmem:[%s1 + $0x220] sm:$0xff]
    %v95 = vld [vmem:[%s1 + $0x228] sm:$0xff]
    %v96 = vld [vmem:[%s1 + $0x230] sm:$0xff]
    %v97 = vld [vmem:[%s1 + $0x238] sm:$0xff]
    %v98 = vld [vmem:[%s1 + $0x240] sm:$0xff]
    %v99 = vld [vmem:[%s1 + $0x248] sm:$0xff]
    %v100 = vld [vmem:[%s1 + $0x250] sm:$0xff]
    %v101 = vld [vmem:[%s1 + $0x258] sm:$0xff]
    %v102 = vld [vmem:[%s1 + $0x260] sm:$0xff]
    %v103 = vld [vmem:[%s1 + $0x268] sm:$0xff]
    %v104 = vld [vmem:[%s1 + $0x270] sm:$0xff]
    %v105 = vld [vmem:[%s1 + $0x278] sm:$0xff]
    %v106 = vld [vmem:[%s1 + $0x280] sm:$0xff]
    %v107 = vld [vmem:[%s1 + $0x288] sm:$0xff]
    %v108 = vld [vmem:[%s1 + $0x290] sm:$0xff]
    %v109 = vld [vmem:[%s1 + $0x298] sm:$0xff]
    %v110 = vld [vmem:[%s1 + $0x2a0] sm:$0xff]
    %v111 = vld [vmem:[%s1 + $0x2a8] sm:$0xff]
    %v112 = vld [vmem:[%s1 + $0x2b0] sm:$0xff]
    %v113 = vld [vmem:[%s1 + $0x2b8] sm:$0xff]
    %v114 = vld [vmem:[%s1 + $0x2c0] sm:$0xff]
    %v115 = vld [vmem:[%s1 + $0x2c8] sm:$0xff]
    %v116 = vld [vmem:[%s1 + $0x2d0] sm:$0xff]
    %v117 = vld [vmem:[%s1 + $0x2d8] sm:$0xff]
    %v118 = vld [vmem:[%s1 + $0x2e0] sm:$0xff]
    %v119 = vld [vmem:[%s1 + $0x2e8] sm:$0xff]
    %v120 = vld [vmem:[%s1 + $0x2f0] sm:$0xff]
    %v121 = vld [vmem:[%s1 + $0x2f8] sm:$0xff]
    %v122 = vld [vmem:[%s1 + $0x300] sm:$0xff]
    %v123 = vld [vmem:[%s1 + $0x308] sm:$0xff]
    %v124 = vld [vmem:[%s1 + $0x310] sm:$0xff]
    %v125 = vld [vmem:[%s1 + $0x318] sm:$0xff]
    %v126 = vld [vmem:[%s1 + $0x320] sm:$0xff]
    %v127 = vld [vmem:[%s1 + $0x328] sm:$0xff]
    %v128 = vld [vmem:[%s1 + $0x330] sm:$0xff]
    %v129 = vld [vmem:[%s1 + $0x338] sm:$0xff]
    %v130 = vld [vmem:[%s1 + $0x340] sm:$0xff]
    %v131 = vld [vmem:[%s1 + $0x348] sm:$0xff]
    %v132 = vld [vmem:[%s1 + $0x350] sm:$0xff]
    %v133 = vld [vmem:[%s1 + $0x358] sm:$0xff]
    %v134 = vld [vmem:[%s1 + $0x360] sm:$0xff]
    %v135 = vld [vmem:[%s1 + $0x368] sm:$0xff]
    %v136 = vld [vmem:[%s1 + $0x370] sm:$0xff]
    %v137 = vld [vmem:[%s1 + $0x378] sm:$0xff]
    %v138 = vld [vmem:[%s1 + $0x380] sm:$0xff]
    %v139 = vld [vmem:[%s1 + $0x388] sm:$0xff]
    %v140 = vld [vmem:[%s1 + $0x390] sm:$0xff]
    %v141 = vld [vmem:[%s1 + $0x398] sm:$0xff]
    %v142 = vld [vmem:[%s1 + $0x3a0] sm:$0xff]
    %v143 = vld [vmem:[%s1 + $0x3a8] sm:$0xff]
    %v144 = vld [vmem:[%s1 + $0x3b0] sm:$0xff]
    %v145 = vld [vmem:[%s1 + $0x3b8] sm:$0xff]
    %v146 = vld [vmem:[%s1 + $0x3c0] sm:$0xff]
    %v147 = vld [vmem:[%s1 + $0x3c8] sm:$0xff]
    %v148 = vld [vmem:[%s1 + $0x3d0] sm:$0xff]
    %v149 = vld [vmem:[%s1 + $0x3d8] sm:$0xff]
    %v150 = vld [vmem:[%s1 + $0x3e0] sm:$0xff]
    %v151 = vld [vmem:[%s1 + $0x3e8] sm:$0xff]
    %v152 = vld [vmem:[%s1 + $0x3f0] sm:$0xff]
    %v153 = vld [vmem:[%s1 + $0x3f8] sm:$0xff]
    %v154 = vld [vmem:[%s1 + $0x400] sm:$0xff]
    %v155 = vld [vmem:[%s1 + $0x408] sm:$0xff]
    %v156 = vld [vmem:[%s1 + $0x410] sm:$0xff]
    %v157 = vld [vmem:[%s1 + $0x418] sm:$0xff]
    %v158 = vld [vmem:[%s1 + $0x420] sm:$0xff]
    %v159 = vld [vmem:[%s1 + $0x428] sm:$0xff]
    %v160 = vld [vmem:[%s1 + $0x430] sm:$0xff]
    %v161 = vld [vmem:[%s1 + $0x438] sm:$0xff]
    %v162 = vld [vmem:[%s1 + $0x440] sm:$0xff]
    %v163 = vld [vmem:[%s1 + $0x448] sm:$0xff]
    %v164 = vld [vmem:[%s1 + $0x450] sm:$0xff]
    %v165 = vld [vmem:[%s1 + $0x458] sm:$0xff]
    %v166 = vld [vmem:[%s1 + $0x460] sm:$0xff]
    %v167 = vld [vmem:[%s1 + $0x468] sm:$0xff]
    %v168 = vld [vmem:[%s1 + $0x470] sm:$0xff]
    %v169 = vld [vmem:[%s1 + $0x478] sm:$0xff]
    %v170 = vld [vmem:[%s1 + $0x480] sm:$0xff]
    %v171 = vld [vmem:[%s1 + $0x488] sm:$0xff]
    %v172 = vld [vmem:[%s1 + $0x490] sm:$0xff]
    %v173 = vld [vmem:[%s1 + $0x498] sm:$0xff]
    %v174 = vld [vmem:[%s1 + $0x4a0] sm:$0xff]
    %v175 = vld [vmem:[%s1 + $0x4a8] sm:$0xff]
    %v176 = vld [vmem:[%s1 + $0x4b0] sm:$0xff]
    %v177 = vld [vmem:[%s1 + $0x4b8] sm:$0xff]
    %v178 = vld [vmem:[%s1 + $0x4c0] sm:$0xff]
    %v179 = vld [vmem:[%s1 + $0x4c8] sm:$0xff]
    %v180 = vld [vmem:[%s1 + $0x4d0] sm:$0xff]
    %v181 = vld [vmem:[%s1 + $0x4d8] sm:$0xff]
    %v182 = vld [vmem:[%s1 + $0x4e0] sm:$0xff]
    %v183 = vld [vmem:[%s1 + $0x4e8] sm:$0xff]
    %v184 = vld [vmem:[%s1 + $0x4f0] sm:$0xff]
    %v185 = vld [vmem:[%s1 + $0x4f8] sm:$0xff]
    %v186 = vld [vmem:[%s1 + $0x500] sm:$0xff]
    %v187 = vld [vmem:[%s1 + $0x508] sm:$0xff]
    %v188 = vld [vmem:[%s1 + $0x510] sm:$0xff]
    %v189 = vld [vmem:[%s1 + $0x518] sm:$0xff]
    %v190 = vld [vmem:[%s1 + $0x520] sm:$0xff]
    %v191 = vld [vmem:[%s1 + $0x528] sm:$0xff]
    %v192 = vld [vmem:[%s1 + $0x530] sm:$0xff]
    %v193 = vld [vmem:[%s1 + $0x538] sm:$0xff]
    %v194 = vld [vmem:[%s1 + $0x540] sm:$0xff]
    %v195 = vld [vmem:[%s1 + $0x548] sm:$0xff]
    %v196 = vld [vmem:[%s1 + $0x550] sm:$0xff]
    %v197 = vld [vmem:[%s1 + $0x558] sm:$0xff]
    %v198 = vld [vmem:[%s1 + $0x560] sm:$0xff]
    %v199 = vld [vmem:[%s1 + $0x568] sm:$0xff]
    %v200 = vld [vmem:[%s1 + $0x570] sm:$0xff]
    %v201 = vld [vmem:[%s1 + $0x578] sm:$0xff]
    %v202 = vld [vmem:[%s1 + $0x580] sm:$0xff]
    %v203 = vld [vmem:[%s1 + $0x588] sm:$0xff]
    %v204 = vld [vmem:[%s1 + $0x590] sm:$0xff]
    %v205 = vld [vmem:[%s1 + $0x598] sm:$0xff]
    %v206 = vld [vmem:[%s1 + $0x5a0] sm:$0xff]
    %v207 = vld [vmem:[%s1 + $0x5a8] sm:$0xff]
    %v208 = vld [vmem:[%s1 + $0x5b0] sm:$0xff]
    %v209 = vld [vmem:[%s1 + $0x5b8] sm:$0xff]
    %v210 = vld [vmem:[%s1 + $0x5c0] sm:$0xff]
    %v211 = vld [vmem:[%s1 + $0x5c8] sm:$0xff]
    %v212 = vld [vmem:[%s1 + $0x5d0] sm:$0xff]
    %v213 = vld [vmem:[%s1 + $0x5d8] sm:$0xff]
    %v214 = vld [vmem:[%s1 + $0x5e0] sm:$0xff]
    %v215 = vld [vmem:[%s1 + $0x5e8] sm:$0xff]
    %v216 = vld [vmem:[%s1 + $0x5f0] sm:$0xff]
    %v217 = vld [vmem:[%s1 + $0x5f8] sm:$0xff]
    %v218 = vld [vmem:[%s1 + $0x600] sm:$0xff]
    %v219 = vld [vmem:[%s1 + $0x608] sm:$0xff]
    %v220 = vld [vmem:[%s1 + $0x610] sm:$0xff]
    %v221 = vld [vmem:[%s1 + $0x618] sm:$0xff]
    %v222 = vld [vmem:[%s1 + $0x620] sm:$0xff]
    %v223 = vld [vmem:[%s1 + $0x628] sm:$0xff]
    %v224 = vld [vmem:[%s1 + $0x630] sm:$0xff]
    %v225 = vld [vmem:[%s1 + $0x638] sm:$0xff]
    %v226 = vld [vmem:[%s1 + $0x640] sm:$0xff]
    %v227 = vld [vmem:[%s1 + $0x648] sm:$0xff]
    %v228 = vld [vmem:[%s1 + $0x650] sm:$0xff]
    %v229 = vld [vmem:[%s1 + $0x658] sm:$0xff]
    %v230 = vld [vmem:[%s1 + $0x660] sm:$0xff]
    %v231 = vld [vmem:[%s1 + $0x668] sm:$0xff]
    %v232 = vld [vmem:[%s1 + $0x670] sm:$0xff]
    %v233 = vld [vmem:[%s1 + $0x678] sm:$0xff]
    %v234 = vld [vmem:[%s1 + $0x680] sm:$0xff]
    %v235 = vld [vmem:[%s1 + $0x688] sm:$0xff]
    %v236 = vld [vmem:[%s1 + $0x690] sm:$0xff]
    %v237 = vld [vmem:[%s1 + $0x698] sm:$0xff]
    %v238 = vld [vmem:[%s1 + $0x6a0] sm:$0xff]
    %v239 = vld [vmem:[%s1 + $0x6a8] sm:$0xff]
    %v240 = vld [vmem:[%s1 + $0x6b0] sm:$0xff]
    %v241 = vld [vmem:[%s1 + $0x6b8] sm:$0xff]
    %v242 = vld [vmem:[%s1 + $0x6c0] sm:$0xff]
    %v243 = vld [vmem:[%s1 + $0x6c8] sm:$0xff]
    %v244 = vld [vmem:[%s1 + $0x6d0] sm:$0xff]
    %v245 = vld [vmem:[%s1 + $0x6d8] sm:$0xff]
    %v246 = vld [vmem:[%s1 + $0x6e0] sm:$0xff]
    %v247 = vld [vmem:[%s1 + $0x6e8] sm:$0xff]
    %v248 = vld [vmem:[%s1 + $0x6f0] sm:$0xff]
    %v249 = vld [vmem:[%s1 + $0x6f8] sm:$0xff]
    %v250 = vld [vmem:[%s1 + $0x700] sm:$0xff]
    %v251 = vld [vmem:[%s1 + $0x708] sm:$0xff]
    %v252 = vld [vmem:[%s1 + $0x710] sm:$0xff]
    %v253 = vld [vmem:[%s1 + $0x718] sm:$0xff]
    %v254 = vld [vmem:[%s1 + $0x720] sm:$0xff]
    %v255 = vld [vmem:[%s1 + $0x728] sm:$0xff]
    %v256 = vld [vmem:[%s1 + $0x730] sm:$0xff]
    %v257 = vld [vmem:[%s1 + $0x738] sm:$0xff]
    %v258 = vld [vmem:[%s1 + $0x740] sm:$0xff]
    %v259 = vld [vmem:[%s1 + $0x748] sm:$0xff]
    %v260 = vld [vmem:[%s1 + $0x750] sm:$0xff]
    %v261 = vld [vmem:[%s1 + $0x758] sm:$0xff]
    %v262 = vld [vmem:[%s1 + $0x760] sm:$0xff]
    %v263 = vld [vmem:[%s1 + $0x768] sm:$0xff]
    %v264 = vld [vmem:[%s1 + $0x770] sm:$0xff]
    %v265 = vld [vmem:[%s1 + $0x778] sm:$0xff]
    %v266 = vld [vmem:[%s1 + $0x780] sm:$0xff]
    %v267 = vld [vmem:[%s1 + $0x788] sm:$0xff]
    %v268 = vld [vmem:[%s1 + $0x790] sm:$0xff]
    %v269 = vld [vmem:[%s1 + $0x798] sm:$0xff]
    %v270 = vld [vmem:[%s1 + $0x7a0] sm:$0xff]
    %v271 = vld [vmem:[%s1 + $0x7a8] sm:$0xff]
    %v272 = vld [vmem:[%s1 + $0x7b0] sm:$0xff]
    %v273 = vld [vmem:[%s1 + $0x7b8] sm:$0xff]
    %v274 = vld [vmem:[%s1 + $0x7c0] sm:$0xff]
    %v275 = vld [vmem:[%s1 + $0x7c8] sm:$0xff]
    %v276 = vld [vmem:[%s1 + $0x7d0] sm:$0xff]
    %v277 = vld [vmem:[%s1 + $0x7d8] sm:$0xff]
    %v278 = vld [vmem:[%s1 + $0x7e0] sm:$0xff]
    %v279 = vld [vmem:[%s1 + $0x7e8] sm:$0xff]
    %v280 = vld [vmem:[%s1 + $0x7f0] sm:$0xff]
    %v281 = vld [vmem:[%s1 + $0x7f8] sm:$0xff]
    %v282 = vld [vmem:[%s1 + $0x800] sm:$0xff]
    %v283 = vld [vmem:[%s1 + $0x808] sm:$0xff]
    %v284 = vld [vmem:[%s1 + $0x810] sm:$0xff]
    %v285 = vld [vmem:[%s1 + $0x818] sm:$0xff]
    %v286 = vld [vmem:[%s1 + $0x820] sm:$0xff]
    %v287 = vld [vmem:[%s1 + $0x828] sm:$0xff]
    %v288 = vld [vmem:[%s1 + $0x830] sm:$0xff]
    %v289 = vld [vmem:[%s1 + $0x838] sm:$0xff]
    %v290 = vld [vmem:[%s1 + $0x840] sm:$0xff]
    %v291 = vld [vmem:[%s1 + $0x848] sm:$0xff]
    %v292 = vld [vmem:[%s1 + $0x850] sm:$0xff]
    %v293 = vld [vmem:[%s1 + $0x858] sm:$0xff]
    %v294 = vld [vmem:[%s1 + $0x860] sm:$0xff]
    %v295 = vld [vmem:[%s1 + $0x868] sm:$0xff]
    %v296 = vld [vmem:[%s1 + $0x870] sm:$0xff]
    %v297 = vld [vmem:[%s1 + $0x878] sm:$0xff]
    %v298 = vld [vmem:[%s1 + $0x880] sm:$0xff]
    %v299 = vld [vmem:[%s1 + $0x888] sm:$0xff]
    %v300 = vld [vmem:[%s1 + $0x890] sm:$0xff]
    %v301 = vld [vmem:[%s1 + $0x898] sm:$0xff]
    %v302 = vld [vmem:[%s1 + $0x8a0] sm:$0xff]
    %v303 = vld [vmem:[%s1 + $0x8a8] sm:$0xff]
    %v304 = vld [vmem:[%s1 + $0x8b0] sm:$0xff]
    %v305 = vld [vmem:[%s1 + $0x8b8] sm:$0xff]
    %v306 = vld [vmem:[%s1 + $0x8c0] sm:$0xff]
    %v307 = vld [vmem:[%s1 + $0x8c8] sm:$0xff]
    %v308 = vld [vmem:[%s1 + $0x8d0] sm:$0xff]
    %v309 = vld [vmem:[%s1 + $0x8d8] sm:$0xff]
    %v310 = vld [vmem:[%s1 + $0x8e0] sm:$0xff]
    %v311 = vld [vmem:[%s1 + $0x8e8] sm:$0xff]
    %v312 = vld [vmem:[%s1 + $0x8f0] sm:$0xff]
    %v313 = vld [vmem:[%s1 + $0x8f8] sm:$0xff]
    %v314 = vld [vmem:[%s1 + $0x900] sm:$0xff]
    %v315 = vld [vmem:[%s1 + $0x908] sm:$0xff]
    %v316 = vld [vmem:[%s1 + $0x910] sm:$0xff]
    %v317 = vld [vmem:[%s1 + $0x918] sm:$0xff]
    %v318 = vld [vmem:[%s1 + $0x920] sm:$0xff]
    %v319 = vld [vmem:[%s1 + $0x928] sm:$0xff]
    %v320 = vld [vmem:[%s1 + $0x930] sm:$0xff]
    %v321 = vld [vmem:[%s1 + $0x938] sm:$0xff]
    %v322 = vld [vmem:[%s1 + $0x940] sm:$0xff]
    %v323 = vld [vmem:[%s1 + $0x948] sm:$0xff]
    %v324 = vld [vmem:[%s1 + $0x950] sm:$0xff]
    %v325 = vld [vmem:[%s1 + $0x958] sm:$0xff]
    %v326 = vld [vmem:[%s1 + $0x960] sm:$0xff]
    %v327 = vld [vmem:[%s1 + $0x968] sm:$0xff]
    %v328 = vld [vmem:[%s1 + $0x970] sm:$0xff]
    %v329 = vld [vmem:[%s1 + $0x978] sm:$0xff]
    %v330 = vld [vmem:[%s1 + $0x980] sm:$0xff]
    %v331 = vld [vmem:[%s1 + $0x988] sm:$0xff]
    %v332 = vld [vmem:[%s1 + $0x990] sm:$0xff]
    %v333 = vld [vmem:[%s1 + $0x998] sm:$0xff]
    %v334 = vld [vmem:[%s1 + $0x9a0] sm:$0xff]
    %v335 = vld [vmem:[%s1 + $0x9a8] sm:$0xff]
    %v336 = vld [vmem:[%s1 + $0x9b0] sm:$0xff]
    %v337 = vld [vmem:[%s1 + $0x9b8] sm:$0xff]
    %v338 = vld [vmem:[%s1 + $0x9c0] sm:$0xff]
    %v339 = vld [vmem:[%s1 + $0x9c8] sm:$0xff]
    %v340 = vld [vmem:[%s1 + $0x9d0] sm:$0xff]
    %v341 = vld [vmem:[%s1 + $0x9d8] sm:$0xff]
    %v342 = vld [vmem:[%s1 + $0x9e0] sm:$0xff]
    %v343 = vld [vmem:[%s1 + $0x9e8] sm:$0xff]
    %v344 = vld [vmem:[%s1 + $0x9f0] sm:$0xff]
    %v345 = vld [vmem:[%s1 + $0x9f8] sm:$0xff]
    %v346 = vld [vmem:[%s1 + $0xa00] sm:$0xff]
    %v347 = vld [vmem:[%s1 + $0xa08] sm:$0xff]
    %v348 = vld [vmem:[%s1 + $0xa10] sm:$0xff]
    %v349 = vld [vmem:[%s1 + $0xa18] sm:$0xff]
    %v350 = vld [vmem:[%s1 + $0xa20] sm:$0xff]
    %v351 = vld [vmem:[%s1 + $0xa28] sm:$0xff]
    %v352 = vld [vmem:[%s1 + $0xa30] sm:$0xff]
    %v353 = vld [vmem:[%s1 + $0xa38] sm:$0xff]
    %v354 = vld [vmem:[%s1 + $0xa40] sm:$0xff]
    %v355 = vld [vmem:[%s1 + $0xa48] sm:$0xff]
    %v356 = vld [vmem:[%s1 + $0xa50] sm:$0xff]
    %v357 = vld [vmem:[%s1 + $0xa58] sm:$0xff]
    %v358 = vld [vmem:[%s1 + $0xa60] sm:$0xff]
    %v359 = vld [vmem:[%s1 + $0xa68] sm:$0xff]
    %v360 = vld [vmem:[%s1 + $0xa70] sm:$0xff]
    %v361 = vld [vmem:[%s1 + $0xa78] sm:$0xff]
    %v362 = vld [vmem:[%s1 + $0xa80] sm:$0xff]
    %v363 = vld [vmem:[%s1 + $0xa88] sm:$0xff]
    %v364 = vld [vmem:[%s1 + $0xa90] sm:$0xff]
    %v365 = vld [vmem:[%s1 + $0xa98] sm:$0xff]
    %v366 = vld [vmem:[%s1 + $0xaa0] sm:$0xff]
    %v367 = vld [vmem:[%s1 + $0xaa8] sm:$0xff]
    %v368 = vld [vmem:[%s1 + $0xab0] sm:$0xff]
    %v369 = vld [vmem:[%s1 + $0xab8] sm:$0xff]
    %v370 = vld [vmem:[%s1 + $0xac0] sm:$0xff]
    %v371 = vld [vmem:[%s1 + $0xac8] sm:$0xff]
    %v372 = vld [vmem:[%s1 + $0xad0] sm:$0xff]
    %v373 = vld [vmem:[%s1 + $0xad8] sm:$0xff]
    %v374 = vld [vmem:[%s1 + $0xae0] sm:$0xff]
    %v375 = vld [vmem:[%s1 + $0xae8] sm:$0xff]
    %v376 = vld [vmem:[%s1 + $0xaf0] sm:$0xff]
    %v377 = vld [vmem:[%s1 + $0xaf8] sm:$0xff]
    %v378 = vld [vmem:[%s1 + $0xb00] sm:$0xff]
    %v379 = vld [vmem:[%s1 + $0xb08] sm:$0xff]
    %v380 = vld [vmem:[%s1 + $0xb10] sm:$0xff]
    %v381 = vld [vmem:[%s1 + $0xb18] sm:$0xff]
    %v382 = vld [vmem:[%s1 + $0xb20] sm:$0xff]
    %v383 = vld [vmem:[%s1 + $0xb28] sm:$0xff]
    %v384 = vld [vmem:[%s1 + $0xb30] sm:$0xff]
    %v385 = vld [vmem:[%s1 + $0xb38] sm:$0xff]
    %v386 = vld [vmem:[%s1 + $0xb40] sm:$0xff]
    %v387 = vld [vmem:[%s1 + $0xb48] sm:$0xff]
    %v388 = vld [vmem:[%s1 + $0xb50] sm:$0xff]
    %v389 = vld [vmem:[%s1 + $0xb58] sm:$0xff]
    %v390 = vld [vmem:[%s1 + $0xb60] sm:$0xff]
    %v391 = vld [vmem:[%s1 + $0xb68] sm:$0xff]
    %v392 = vld [vmem:[%s1 + $0xb70] sm:$0xff]
    %v393 = vld [vmem:[%s1 + $0xb78] sm:$0xff]
    %v394 = vld [vmem:[%s1 + $0xb80] sm:$0xff]
    %v395 = vld [vmem:[%s1 + $0xb88] sm:$0xff]
    %v396 = vld [vmem:[%s1 + $0xb90] sm:$0xff]
    %v397 = vld [vmem:[%s1 + $0xb98] sm:$0xff]
    %v398 = vld [vmem:[%s1 + $0xba0] sm:$0xff]
    %v399 = vld [vmem:[%s1 + $0xba8] sm:$0xff]
    %v400 = vld [vmem:[%s1 + $0xbb0] sm:$0xff]
    %v401 = vld [vmem:[%s1 + $0xbb8] sm:$0xff]
    %v402 = vld [vmem:[%s1 + $0xbc0] sm:$0xff]
    %v403 = vld [vmem:[%s1 + $0xbc8] sm:$0xff]
    %v404 = vld [vmem:[%s1 + $0xbd0] sm:$0xff]
    %v405 = vld [vmem:[%s1 + $0xbd8] sm:$0xff]
    %v406 = vld [vmem:[%s1 + $0xbe0] sm:$0xff]
    %v407 = vld [vmem:[%s1 + $0xbe8] sm:$0xff]
    %v408 = vld [vmem:[%s1 + $0xbf0] sm:$0xff]
    %v409 = vld [vmem:[%s1 + $0xbf8] sm:$0xff]
    %v410 = vld [vmem:[%s1 + $0xc00] sm:$0xff]
    %v411 = vld [vmem:[%s1 + $0xc08] sm:$0xff]
    %v412 = vld [vmem:[%s1 + $0xc10] sm:$0xff]
    %v413 = vld [vmem:[%s1 + $0xc18] sm:$0xff]
    %v414 = vld [vmem:[%s1 + $0xc20] sm:$0xff]
    %v415 = vld [vmem:[%s1 + $0xc28] sm:$0xff]
    %v416 = vld [vmem:[%s1 + $0xc30] sm:$0xff]
    %v417 = vld [vmem:[%s1 + $0xc38] sm:$0xff]
    %v418 = vld [vmem:[%s1 + $0xc40] sm:$0xff]
    %v419 = vld [vmem:[%s1 + $0xc48] sm:$0xff]
    %v420 = vld [vmem:[%s1 + $0xc50] sm:$0xff]
    %v421 = vld [vmem:[%s1 + $0xc58] sm:$0xff]
    %v422 = vld [vmem:[%s1 + $0xc60] sm:$0xff]
    %v423 = vld [vmem:[%s1 + $0xc68] sm:$0xff]
    %v424 = vld [vmem:[%s1 + $0xc70] sm:$0xff]
    %v425 = vld [vmem:[%s1 + $0xc78] sm:$0xff]
    %v426 = vld [vmem:[%s1 + $0xc80] sm:$0xff]
    %v427 = vld [vmem:[%s1 + $0xc88] sm:$0xff]
    %v428 = vld [vmem:[%s1 + $0xc90] sm:$0xff]
    %v429 = vld [vmem:[%s1 + $0xc98] sm:$0xff]
    %v430 = vld [vmem:[%s1 + $0xca0] sm:$0xff]
    %v431 = vld [vmem:[%s1 + $0xca8] sm:$0xff]
    %v432 = vld [vmem:[%s1 + $0xcb0] sm:$0xff]
    %v433 = vld [vmem:[%s1 + $0xcb8] sm:$0xff]
    %v434 = vld [vmem:[%s1 + $0xcc0] sm:$0xff]
    %v435 = vld [vmem:[%s1 + $0xcc8] sm:$0xff]
    %v436 = vld [vmem:[%s1 + $0xcd0] sm:$0xff]
    %v437 = vld [vmem:[%s1 + $0xcd8] sm:$0xff]
    %v438 = vld [vmem:[%s1 + $0xce0] sm:$0xff]
    %v439 = vld [vmem:[%s1 + $0xce8] sm:$0xff]
    %v440 = vld [vmem:[%s1 + $0xcf0] sm:$0xff]
    %v441 = vld [vmem:[%s1 + $0xcf8] sm:$0xff]
    %v442 = vld [vmem:[%s1 + $0xd00] sm:$0xff]
    %v443 = vld [vmem:[%s1 + $0xd08] sm:$0xff]
    %v444 = vld [vmem:[%s1 + $0xd10] sm:$0xff]
    %v445 = vld [vmem:[%s1 + $0xd18] sm:$0xff]
    %v446 = vld [vmem:[%s1 + $0xd20] sm:$0xff]
    %v447 = vld [vmem:[%s1 + $0xd28] sm:$0xff]
    %v448 = vld [vmem:[%s1 + $0xd30] sm:$0xff]
    %v449 = vld [vmem:[%s1 + $0xd38] sm:$0xff]
    %v450 = vld [vmem:[%s1 + $0xd40] sm:$0xff]
    %v451 = vld [vmem:[%s1 + $0xd48] sm:$0xff]
    %v452 = vld [vmem:[%s1 + $0xd50] sm:$0xff]
    %v453 = vld [vmem:[%s1 + $0xd58] sm:$0xff]
    %v454 = vld [vmem:[%s1 + $0xd60] sm:$0xff]
    %v455 = vld [vmem:[%s1 + $0xd68] sm:$0xff]
    %v456 = vld [vmem:[%s1 + $0xd70] sm:$0xff]
    %v457 = vld [vmem:[%s1 + $0xd78] sm:$0xff]
    %v458 = vld [vmem:[%s1 + $0xd80] sm:$0xff]
    %v459 = vld [vmem:[%s1 + $0xd88] sm:$0xff]
    %v460 = vld [vmem:[%s1 + $0xd90] sm:$0xff]
    %v461 = vld [vmem:[%s1 + $0xd98] sm:$0xff]
    %v462 = vld [vmem:[%s1 + $0xda0] sm:$0xff]
    %v463 = vld [vmem:[%s1 + $0xda8] sm:$0xff]
    %v464 = vld [vmem:[%s1 + $0xdb0] sm:$0xff]
    %v465 = vld [vmem:[%s1 + $0xdb8] sm:$0xff]
    %v466 = vld [vmem:[%s1 + $0xdc0] sm:$0xff]
    %v467 = vld [vmem:[%s1 + $0xdc8] sm:$0xff]
    %v468 = vld [vmem:[%s1 + $0xdd0] sm:$0xff]
    %v469 = vld [vmem:[%s1 + $0xdd8] sm:$0xff]
    %v470 = vld [vmem:[%s1 + $0xde0] sm:$0xff]
    %v471 = vld [vmem:[%s1 + $0xde8] sm:$0xff]
    %v472 = vld [vmem:[%s1 + $0xdf0] sm:$0xff]
    %v473 = vld [vmem:[%s1 + $0xdf8] sm:$0xff]
    %v474 = vld [vmem:[%s1 + $0xe00] sm:$0xff]
    %v475 = vld [vmem:[%s1 + $0xe08] sm:$0xff]
    %v476 = vld [vmem:[%s1 + $0xe10] sm:$0xff]
    %v477 = vld [vmem:[%s1 + $0xe18] sm:$0xff]
    %v478 = vld [vmem:[%s1 + $0xe20] sm:$0xff]
    %v479 = vld [vmem:[%s1 + $0xe28] sm:$0xff]
    %v480 = vld [vmem:[%s1 + $0xe30] sm:$0xff]
    %v481 = vld [vmem:[%s1 + $0xe38] sm:$0xff]
    %v482 = vld [vmem:[%s1 + $0xe40] sm:$0xff]
    %v483 = vld [vmem:[%s1 + $0xe48] sm:$0xff]
    %v484 = vld [vmem:[%s1 + $0xe50] sm:$0xff]
    %v485 = vld [vmem:[%s1 + $0xe58] sm:$0xff]
    %v486 = vld [vmem:[%s1 + $0xe60] sm:$0xff]
    %v487 = vld [vmem:[%s1 + $0xe68] sm:$0xff]
    %v488 = vld [vmem:[%s1 + $0xe70] sm:$0xff]
    %v489 = vld [vmem:[%s1 + $0xe78] sm:$0xff]
    %v490 = vld [vmem:[%s1 + $0xe80] sm:$0xff]
    %v491 = vld [vmem:[%s1 + $0xe88] sm:$0xff]
    %v492 = vld [vmem:[%s1 + $0xe90] sm:$0xff]
    %v493 = vld [vmem:[%s1 + $0xe98] sm:$0xff]
    %v494 = vld [vmem:[%s1 + $0xea0] sm:$0xff]
    %v495 = vld [vmem:[%s1 + $0xea8] sm:$0xff]
    %v496 = vld [vmem:[%s1 + $0xeb0] sm:$0xff]
    %v497 = vld [vmem:[%s1 + $0xeb8] sm:$0xff]
    %v498 = vld [vmem:[%s1 + $0xec0] sm:$0xff]
    %v499 = vld [vmem:[%s1 + $0xec8] sm:$0xff]
    %v500 = vld [vmem:[%s1 + $0xed0] sm:$0xff]
    %v501 = vld [vmem:[%s1 + $0xed8] sm:$0xff]
    %v502 = vld [vmem:[%s1 + $0xee0] sm:$0xff]
    %v503 = vld [vmem:[%s1 + $0xee8] sm:$0xff]
    %v504 = vld [vmem:[%s1 + $0xef0] sm:$0xff]
    %v505 = vld [vmem:[%s1 + $0xef8] sm:$0xff]
    %v506 = vld [vmem:[%s1 + $0xf00] sm:$0xff]
    %v507 = vld [vmem:[%s1 + $0xf08] sm:$0xff]
    %v508 = vld [vmem:[%s1 + $0xf10] sm:$0xff]
    %v509 = vld [vmem:[%s1 + $0xf18] sm:$0xff]
    %v510 = vld [vmem:[%s1 + $0xf20] sm:$0xff]
    %v511 = vld [vmem:[%s1 + $0xf28] sm:$0xff]
    %v512 = vld [vmem:[%s1 + $0xf30] sm:$0xff]
    %v513 = vld [vmem:[%s1 + $0xf38] sm:$0xff]
    %v514 = vld [vmem:[%s1 + $0xf40] sm:$0xff]
    %v515 = vld [vmem:[%s1 + $0xf48] sm:$0xff]
    %v516 = vld [vmem:[%s1 + $0xf50] sm:$0xff]
    %v517 = vld [vmem:[%s1 + $0xf58] sm:$0xff]
    %v518 = vld [vmem:[%s1 + $0xf60] sm:$0xff]
    %v519 = vld [vmem:[%s1 + $0xf68] sm:$0xff]
    %v520 = vld [vmem:[%s1 + $0xf70] sm:$0xff]
    %v521 = vld [vmem:[%s1 + $0xf78] sm:$0xff]
    %v522 = vld [vmem:[%s1 + $0xf80] sm:$0xff]
    %v523 = vld [vmem:[%s1 + $0xf88] sm:$0xff]
    %v524 = vld [vmem:[%s1 + $0xf90] sm:$0xff]
    %v525 = vld [vmem:[%s1 + $0xf98] sm:$0xff]
    %v526 = vld [vmem:[%s1 + $0xfa0] sm:$0xff]
    %v527 = vld [vmem:[%s1 + $0xfa8] sm:$0xff]
    %v528 = vld [vmem:[%s1 + $0xfb0] sm:$0xff]
    %v529 = vld [vmem:[%s1 + $0xfb8] sm:$0xff]
    %v530 = vld [vmem:[%s1 + $0xfc0] sm:$0xff]
    %v531 = vld [vmem:[%s1 + $0xfc8] sm:$0xff]
    %v532 = vld [vmem:[%s1 + $0xfd0] sm:$0xff]
    %v533 = vld [vmem:[%s1 + $0xfd8] sm:$0xff]
    %v534 = vld [vmem:[%s1 + $0xfe0] sm:$0xff]
    %v535 = vld [vmem:[%s1 + $0xfe8] sm:$0xff]
    %v536 = vld [vmem:[%s1 + $0xff0] sm:$0xff]
    %v537 = vld [vmem:[%s1 + $0xff8] sm:$0xff]
    %v538 = vld [vmem:[%s1 + $0x1000] sm:$0xff]
    %v539 = vld [vmem:[%s1 + $0x1008] sm:$0xff]
    %v540 = vld [vmem:[%s1 + $0x1010] sm:$0xff]
    %v541 = vld [vmem:[%s1 + $0x1018] sm:$0xff]
    %v542 = vld [vmem:[%s1 + $0x1020] sm:$0xff]
    %v543 = vld [vmem:[%s1 + $0x1028] sm:$0xff]
    %v544 = vld [vmem:[%s1 + $0x1030] sm:$0xff]
    %v545 = vld [vmem:[%s1 + $0x1038] sm:$0xff]
    %v546 = vld [vmem:[%s1 + $0x1040] sm:$0xff]
    %v547 = vld [vmem:[%s1 + $0x1048] sm:$0xff]
    %v548 = vld [vmem:[%s1 + $0x1050] sm:$0xff]
    %v549 = vld [vmem:[%s1 + $0x1058] sm:$0xff]
    %v550 = vld [vmem:[%s1 + $0x1060] sm:$0xff]
    %v551 = vld [vmem:[%s1 + $0x1068] sm:$0xff]
    %v552 = vld [vmem:[%s1 + $0x1070] sm:$0xff]
    %v553 = vld [vmem:[%s1 + $0x1078] sm:$0xff]
    %v554 = vld [vmem:[%s1 + $0x1080] sm:$0xff]
    %v555 = vld [vmem:[%s1 + $0x1088] sm:$0xff]
    %v556 = vld [vmem:[%s1 + $0x1090] sm:$0xff]
    %v557 = vld [vmem:[%s1 + $0x1098] sm:$0xff]
    %v558 = vld [vmem:[%s1 + $0x10a0] sm:$0xff]
    %v559 = vld [vmem:[%s1 + $0x10a8] sm:$0xff]
    %v560 = vld [vmem:[%s1 + $0x10b0] sm:$0xff]
    %v561 = vld [vmem:[%s1 + $0x10b8] sm:$0xff]
    %v562 = vld [vmem:[%s1 + $0x10c0] sm:$0xff]
    %v563 = vld [vmem:[%s1 + $0x10c8] sm:$0xff]
    %v564 = vld [vmem:[%s1 + $0x10d0] sm:$0xff]
    %v565 = vld [vmem:[%s1 + $0x10d8] sm:$0xff]
    %v566 = vld [vmem:[%s1 + $0x10e0] sm:$0xff]
    %v567 = vld [vmem:[%s1 + $0x10e8] sm:$0xff]
    %v568 = vld [vmem:[%s1 + $0x10f0] sm:$0xff]
    %v569 = vld [vmem:[%s1 + $0x10f8] sm:$0xff]
    %v570 = vld [vmem:[%s1 + $0x1100] sm:$0xff]
    %v571 = vld [vmem:[%s1 + $0x1108] sm:$0xff]
    %v572 = vld [vmem:[%s1 + $0x1110] sm:$0xff]
    %v573 = vld [vmem:[%s1 + $0x1118] sm:$0xff]
    %v574 = vld [vmem:[%s1 + $0x1120] sm:$0xff]
    %v575 = vld [vmem:[%s1 + $0x1128] sm:$0xff]
    %v576 = vld [vmem:[%s1 + $0x1130] sm:$0xff]
    %v577 = vld [vmem:[%s1 + $0x1138] sm:$0xff]
    %v578 = vld [vmem:[%s1 + $0x1140] sm:$0xff]
    %v579 = vld [vmem:[%s1 + $0x1148] sm:$0xff]
    %v580 = vld [vmem:[%s1 + $0x1150] sm:$0xff]
    %v581 = vld [vmem:[%s1 + $0x1158] sm:$0xff]
    %v582 = vld [vmem:[%s1 + $0x1160] sm:$0xff]
    %v583 = vld [vmem:[%s1 + $0x1168] sm:$0xff]
    %v584 = vld [vmem:[%s1 + $0x1170] sm:$0xff]
    %v585 = vld [vmem:[%s1 + $0x1178] sm:$0xff]
    %v586 = vld [vmem:[%s1 + $0x1180] sm:$0xff]
    %v587 = vld [vmem:[%s1 + $0x1188] sm:$0xff]
    %v588 = vld [vmem:[%s1 + $0x1190] sm:$0xff]
    %v589 = vld [vmem:[%s1 + $0x1198] sm:$0xff]
    %v590 = vld [vmem:[%s1 + $0x11a0] sm:$0xff]
    %v591 = vld [vmem:[%s1 + $0x11a8] sm:$0xff]
    %v592 = vld [vmem:[%s1 + $0x11b0] sm:$0xff]
    %v593 = vld [vmem:[%s1 + $0x11b8] sm:$0xff]
    %v594 = vld [vmem:[%s1 + $0x11c0] sm:$0xff]
    %v595 = vld [vmem:[%s1 + $0x11c8] sm:$0xff]
    %v596 = vld [vmem:[%s1 + $0x11d0] sm:$0xff]
    %v597 = vld [vmem:[%s1 + $0x11d8] sm:$0xff]
    %v598 = vld [vmem:[%s1 + $0x11e0] sm:$0xff]
    %v599 = vld [vmem:[%s1 + $0x11e8] sm:$0xff]
    %v600 = vld [vmem:[%s1 + $0x11f0] sm:$0xff]
    %v601 = vld [vmem:[%s1 + $0x11f8] sm:$0xff]
    %v602 = vld [vmem:[%s1 + $0x1200] sm:$0xff]
    %v603 = vld [vmem:[%s1 + $0x1208] sm:$0xff]
    %v604 = vld [vmem:[%s1 + $0x1210] sm:$0xff]
    %v605 = vld [vmem:[%s1 + $0x1218] sm:$0xff]
    %v606 = vld [vmem:[%s1 + $0x1220] sm:$0xff]
    %v607 = vld [vmem:[%s1 + $0x1228] sm:$0xff]
    %v608 = vld [vmem:[%s1 + $0x1230] sm:$0xff]
    %v609 = vld [vmem:[%s1 + $0x1238] sm:$0xff]
    %v610 = vld [vmem:[%s1 + $0x1240] sm:$0xff]
    %v611 = vld [vmem:[%s1 + $0x1248] sm:$0xff]
    %v612 = vld [vmem:[%s1 + $0x1250] sm:$0xff]
    %v613 = vld [vmem:[%s1 + $0x1258] sm:$0xff]
    %v614 = vld [vmem:[%s1 + $0x1260] sm:$0xff]
    %v615 = vld [vmem:[%s1 + $0x1268] sm:$0xff]
    %v616 = vld [vmem:[%s1 + $0x1270] sm:$0xff]
    %v617 = vld [vmem:[%s1 + $0x1278] sm:$0xff]
    %v618 = vld [vmem:[%s1 + $0x1280] sm:$0xff]
    %v619 = vld [vmem:[%s1 + $0x1288] sm:$0xff]
    %v620 = vld [vmem:[%s1 + $0x1290] sm:$0xff]
    %v621 = vld [vmem:[%s1 + $0x1298] sm:$0xff]
    %v622 = vld [vmem:[%s1 + $0x12a0] sm:$0xff]
    %v623 = vld [vmem:[%s1 + $0x12a8] sm:$0xff]
    %v624 = vld [vmem:[%s1 + $0x12b0] sm:$0xff]
    %v625 = vld [vmem:[%s1 + $0x12b8] sm:$0xff]
    %v626 = vld [vmem:[%s1 + $0x12c0] sm:$0xff]
    %v627 = vld [vmem:[%s1 + $0x12c8] sm:$0xff]
    %v628 = vld [vmem:[%s1 + $0x12d0] sm:$0xff]
    %v629 = vld [vmem:[%s1 + $0x12d8] sm:$0xff]
    %v630 = vld [vmem:[%s1 + $0x12e0] sm:$0xff]
    %v631 = vld [vmem:[%s1 + $0x12e8] sm:$0xff]
    %v632 = vld [vmem:[%s1 + $0x12f0] sm:$0xff]
    %v633 = vld [vmem:[%s1 + $0x12f8] sm:$0xff]
    %v634 = vld [vmem:[%s1 + $0x1300] sm:$0xff]
    %v635 = vld [vmem:[%s1 + $0x1308] sm:$0xff]
    %v636 = vld [vmem:[%s1 + $0x1310] sm:$0xff]
    %v637 = vld [vmem:[%s1 + $0x1318] sm:$0xff]
    %v638 = vld [vmem:[%s1 + $0x1320] sm:$0xff]
    %v639 = vld [vmem:[%s1 + $0x1328] sm:$0xff]
    %v640 = vld [vmem:[%s1 + $0x1330] sm:$0xff]
    %v641 = vld [vmem:[%s1 + $0x1338] sm:$0xff]
    %v642 = vld [vmem:[%s1 + $0x1340] sm:$0xff]
    %v643 = vld [vmem:[%s1 + $0x1348] sm:$0xff]
    %v644 = vld [vmem:[%s1 + $0x1350] sm:$0xff]
    %v645 = vld [vmem:[%s1 + $0x1358] sm:$0xff]
    %v646 = vld [vmem:[%s1 + $0x1360] sm:$0xff]
    %v647 = vld [vmem:[%s1 + $0x1368] sm:$0xff]
    %v648 = vld [vmem:[%s1 + $0x1370] sm:$0xff]
    %v649 = vld [vmem:[%s1 + $0x1378] sm:$0xff]
    %v650 = vld [vmem:[%s1 + $0x1380] sm:$0xff]
    %v651 = vld [vmem:[%s1 + $0x1388] sm:$0xff]
    %v652 = vld [vmem:[%s1 + $0x1390] sm:$0xff]
    %v653 = vld [vmem:[%s1 + $0x1398] sm:$0xff]
    %v654 = vld [vmem:[%s1 + $0x13a0] sm:$0xff]
    %v655 = vld [vmem:[%s1 + $0x13a8] sm:$0xff]
    %v656 = vld [vmem:[%s1 + $0x13b0] sm:$0xff]
    %v657 = vld [vmem:[%s1 + $0x13b8] sm:$0xff]
    %v658 = vld [vmem:[%s1 + $0x13c0] sm:$0xff]
    %v659 = vld [vmem:[%s1 + $0x13c8] sm:$0xff]
    %v660 = vld [vmem:[%s1 + $0x13d0] sm:$0xff]
    %v661 = vld [vmem:[%s1 + $0x13d8] sm:$0xff]
    %v662 = vld [vmem:[%s1 + $0x13e0] sm:$0xff]
    %v663 = vld [vmem:[%s1 + $0x13e8] sm:$0xff]
    %v664 = vld [vmem:[%s1 + $0x13f0] sm:$0xff]
    %v665 = vld [vmem:[%s1 + $0x13f8] sm:$0xff]
    %v666 = vld [vmem:[%s1 + $0x1400] sm:$0xff]
    %v667 = vld [vmem:[%s1 + $0x1408] sm:$0xff]
    %v668 = vld [vmem:[%s1 + $0x1410] sm:$0xff]
    %v669 = vld [vmem:[%s1 + $0x1418] sm:$0xff]
    %v670 = vld [vmem:[%s1 + $0x1420] sm:$0xff]
    %v671 = vld [vmem:[%s1 + $0x1428] sm:$0xff]
    %v672 = vld [vmem:[%s1 + $0x1430] sm:$0xff]
    %v673 = vld [vmem:[%s1 + $0x1438] sm:$0xff]
    %v674 = vld [vmem:[%s1 + $0x1440] sm:$0xff]
    %v675 = vld [vmem:[%s1 + $0x1448] sm:$0xff]
    %v676 = vld [vmem:[%s1 + $0x1450] sm:$0xff]
    %v677 = vld [vmem:[%s1 + $0x1458] sm:$0xff]
    %v678 = vld [vmem:[%s1 + $0x1460] sm:$0xff]
    %v679 = vld [vmem:[%s1 + $0x1468] sm:$0xff]
    %v680 = vld [vmem:[%s1 + $0x1470] sm:$0xff]
    %v681 = vld [vmem:[%s1 + $0x1478] sm:$0xff]
    %v682 = vld [vmem:[%s1 + $0x1480] sm:$0xff]
    %v683 = vld [vmem:[%s1 + $0x1488] sm:$0xff]
    %v684 = vld [vmem:[%s1 + $0x1490] sm:$0xff]
    %v685 = vld [vmem:[%s1 + $0x1498] sm:$0xff]
    %v686 = vld [vmem:[%s1 + $0x14a0] sm:$0xff]
    %v687 = vld [vmem:[%s1 + $0x14a8] sm:$0xff]
    %v688 = vld [vmem:[%s1 + $0x14b0] sm:$0xff]
    %v689 = vld [vmem:[%s1 + $0x14b8] sm:$0xff]
    %v690 = vld [vmem:[%s1 + $0x14c0] sm:$0xff]
    %v691 = vld [vmem:[%s1 + $0x14c8] sm:$0xff]
    %v692 = vld [vmem:[%s1 + $0x14d0] sm:$0xff]
    %v693 = vld [vmem:[%s1 + $0x14d8] sm:$0xff]
    %v694 = vld [vmem:[%s1 + $0x14e0] sm:$0xff]
    %v695 = vld [vmem:[%s1 + $0x14e8] sm:$0xff]
    %v696 = vld [vmem:[%s1 + $0x14f0] sm:$0xff]
    %v697 = vld [vmem:[%s1 + $0x14f8] sm:$0xff]
    %v698 = vld [vmem:[%s1 + $0x1500] sm:$0xff]
    %v699 = vld [vmem:[%s1 + $0x1508] sm:$0xff]
    %v700 = vld [vmem:[%s1 + $0x1510] sm:$0xff]
    %v701 = vld [vmem:[%s1 + $0x1518] sm:$0xff]
    %v702 = vld [vmem:[%s1 + $0x1520] sm:$0xff]
    %v703 = vld [vmem:[%s1 + $0x1528] sm:$0xff]
    %v704 = vld [vmem:[%s1 + $0x1530] sm:$0xff]
    %v705 = vld [vmem:[%s1 + $0x1538] sm:$0xff]
    %v706 = vld [vmem:[%s1 + $0x1540] sm:$0xff]
    %v707 = vld [vmem:[%s1 + $0x1548] sm:$0xff]
    %v708 = vld [vmem:[%s1 + $0x1550] sm:$0xff]
    %v709 = vld [vmem:[%s1 + $0x1558] sm:$0xff]
    %v710 = vld [vmem:[%s1 + $0x1560] sm:$0xff]
    %v711 = vld [vmem:[%s1 + $0x1568] sm:$0xff]
    %v712 = vld [vmem:[%s1 + $0x1570] sm:$0xff]
    %v713 = vld [vmem:[%s1 + $0x1578] sm:$0xff]
    %v714 = vld [vmem:[%s1 + $0x1580] sm:$0xff]
    %v715 = vld [vmem:[%s1 + $0x1588] sm:$0xff]
    %v716 = vld [vmem:[%s1 + $0x1590] sm:$0xff]
    %v717 = vld [vmem:[%s1 + $0x1598] sm:$0xff]
    %v718 = vld [vmem:[%s1 + $0x15a0] sm:$0xff]
    %v719 = vld [vmem:[%s1 + $0x15a8] sm:$0xff]
    %v720 = vld [vmem:[%s1 + $0x15b0] sm:$0xff]
    %v721 = vld [vmem:[%s1 + $0x15b8] sm:$0xff]
    %v722 = vld [vmem:[%s1 + $0x15c0] sm:$0xff]
    %v723 = vld [vmem:[%s1 + $0x15c8] sm:$0xff]
    %v724 = vld [vmem:[%s1 + $0x15d0] sm:$0xff]
    %v725 = vld [vmem:[%s1 + $0x15d8] sm:$0xff]
    %v726 = vld [vmem:[%s1 + $0x15e0] sm:$0xff]
    %v727 = vld [vmem:[%s1 + $0x15e8] sm:$0xff]
    %v728 = vld [vmem:[%s1 + $0x15f0] sm:$0xff]
    %v729 = vld [vmem:[%s1 + $0x15f8] sm:$0xff]
    %v730 = vld [vmem:[%s1 + $0x1600] sm:$0xff]
    %v731 = vld [vmem:[%s1 + $0x1608] sm:$0xff]
    %v732 = vld [vmem:[%s1 + $0x1610] sm:$0xff]
    %v733 = vld [vmem:[%s1 + $0x1618] sm:$0xff]
    %v734 = vld [vmem:[%s1 + $0x1620] sm:$0xff]
    %v735 = vld [vmem:[%s1 + $0x1628] sm:$0xff]
    %v736 = vld [vmem:[%s1 + $0x1630] sm:$0xff]
    %v737 = vld [vmem:[%s1 + $0x1638] sm:$0xff]
    %v738 = vld [vmem:[%s1 + $0x1640] sm:$0xff]
    %v739 = vld [vmem:[%s1 + $0x1648] sm:$0xff]
    %v740 = vld [vmem:[%s1 + $0x1650] sm:$0xff]
    %v741 = vld [vmem:[%s1 + $0x1658] sm:$0xff]
    %v742 = vld [vmem:[%s1 + $0x1660] sm:$0xff]
    %v743 = vld [vmem:[%s1 + $0x1668] sm:$0xff]
    %v744 = vld [vmem:[%s1 + $0x1670] sm:$0xff]
    %v745 = vld [vmem:[%s1 + $0x1678] sm:$0xff]
    %v746 = vld [vmem:[%s1 + $0x1680] sm:$0xff]
    %v747 = vld [vmem:[%s1 + $0x1688] sm:$0xff]
    %v748 = vld [vmem:[%s1 + $0x1690] sm:$0xff]
    %v749 = vld [vmem:[%s1 + $0x1698] sm:$0xff]
    %v750 = vld [vmem:[%s1 + $0x16a0] sm:$0xff]
    %v751 = vld [vmem:[%s1 + $0x16a8] sm:$0xff]
    %v752 = vld [vmem:[%s1 + $0x16b0] sm:$0xff]
    %v753 = vld [vmem:[%s1 + $0x16b8] sm:$0xff]
    %v754 = vld [vmem:[%s1 + $0x16c0] sm:$0xff]
    %v755 = vld [vmem:[%s1 + $0x16c8] sm:$0xff]
    %v756 = vld [vmem:[%s1 + $0x16d0] sm:$0xff]
    %v757 = vld [vmem:[%s1 + $0x16d8] sm:$0xff]
    %v758 = vld [vmem:[%s1 + $0x16e0] sm:$0xff]
    %v759 = vld [vmem:[%s1 + $0x16e8] sm:$0xff]
    %v760 = vld [vmem:[%s1 + $0x16f0] sm:$0xff]
    %v761 = vld [vmem:[%s1 + $0x16f8] sm:$0xff]
    %v762 = vld [vmem:[%s1 + $0x1700] sm:$0xff]
    %v763 = vld [vmem:[%s1 + $0x1708] sm:$0xff]
    %v764 = vld [vmem:[%s1 + $0x1710] sm:$0xff]
    %v765 = vld [vmem:[%s1 + $0x1718] sm:$0xff]
    %v766 = vld [vmem:[%s1 + $0x1720] sm:$0xff]
    %v767 = vld [vmem:[%s1 + $0x1728] sm:$0xff]
    %v768 = vld [vmem:[%s1 + $0x1730] sm:$0xff]
    %v769 = vld [vmem:[%s1 + $0x1738] sm:$0xff]
    %v770 = vld [vmem:[%s1 + $0x1740] sm:$0xff]
    %v771 = vld [vmem:[%s1 + $0x1748] sm:$0xff]
    %v772 = vld [vmem:[%s1 + $0x1750] sm:$0xff]
    %v773 = vld [vmem:[%s1 + $0x1758] sm:$0xff]
    %v774 = vld [vmem:[%s1 + $0x1760] sm:$0xff]
    %v775 = vld [vmem:[%s1 + $0x1768] sm:$0xff]
    %v776 = vld [vmem:[%s1 + $0x1770] sm:$0xff]
    %v777 = vld [vmem:[%s1 + $0x1778] sm:$0xff]
    %v778 = vld [vmem:[%s1 + $0x1780] sm:$0xff]
    %v779 = vld [vmem:[%s1 + $0x1788] sm:$0xff]
    %v780 = vld [vmem:[%s1 + $0x1790] sm:$0xff]
    %v781 = vld [vmem:[%s1 + $0x1798] sm:$0xff]
    %v782 = vld [vmem:[%s1 + $0x17a0] sm:$0xff]
    %v783 = vld [vmem:[%s1 + $0x17a8] sm:$0xff]
    %v784 = vld [vmem:[%s1 + $0x17b0] sm:$0xff]
    %v785 = vld [vmem:[%s1 + $0x17b8] sm:$0xff]
    %v786 = vld [vmem:[%s1 + $0x17c0] sm:$0xff]
    %v787 = vld [vmem:[%s1 + $0x17c8] sm:$0xff]
    %v788 = vld [vmem:[%s1 + $0x17d0] sm:$0xff]
    %v789 = vld [vmem:[%s1 + $0x17d8] sm:$0xff]
    %v790 = vld [vmem:[%s1 + $0x17e0] sm:$0xff]
    %v791 = vld [vmem:[%s1 + $0x17e8] sm:$0xff]
    %v792 = vld [vmem:[%s1 + $0x17f0] sm:$0xff]
    %v793 = vld [vmem:[%s1 + $0x17f8] sm:$0xff]
    %v794 = vld [vmem:[%s1 + $0x1800] sm:$0xff]
    %v795 = vld [vmem:[%s1 + $0x1808] sm:$0xff]
    %v796 = vld [vmem:[%s1 + $0x1810] sm:$0xff]
    %v797 = vld [vmem:[%s1 + $0x1818] sm:$0xff]
    %v798 = vld [vmem:[%s1 + $0x1820] sm:$0xff]
    %v799 = vld [vmem:[%s1 + $0x1828] sm:$0xff]
    %v800 = vld [vmem:[%s1 + $0x1830] sm:$0xff]
    %v801 = vld [vmem:[%s1 + $0x1838] sm:$0xff]
    %v802 = vld [vmem:[%s1 + $0x1840] sm:$0xff]
    %v803 = vld [vmem:[%s1 + $0x1848] sm:$0xff]
    %v804 = vld [vmem:[%s1 + $0x1850] sm:$0xff]
    %v805 = vld [vmem:[%s1 + $0x1858] sm:$0xff]
    %v806 = vld [vmem:[%s1 + $0x1860] sm:$0xff]
    %v807 = vld [vmem:[%s1 + $0x1868] sm:$0xff]
    %v808 = vld [vmem:[%s1 + $0x1870] sm:$0xff]
    %v809 = vld [vmem:[%s1 + $0x1878] sm:$0xff]
    %v810 = vld [vmem:[%s2] sm:$0xf]
    %v812 = vperm.slane %v810, 0
    %v813 = vperm.slane %v810, 1
    %v814 = vperm.slane %v810, 2
    %v815 = vperm.slane %v810, 3
    %821 = vst [vmem:[#allocation1] ss:$9 sm:$0xff] %v22
    %v822 = vld [vmem:[#allocation1] sm:$0xff]
    %v823 = vld [vmem:[#allocation1 + $0x9] sm:$0xff]
    %v824 = vld [vmem:[#allocation1 + $0x12] sm:$0xff]
    %v825 = vld [vmem:[#allocation1 + $0x1b] sm:$0xff]
    %v826 = vld [vmem:[#allocation1 + $0x24] sm:$0xff]
    %v827 = vld [vmem:[#allocation1 + $0x2d] sm:$0xff]
    %v828 = vld [vmem:[#allocation1 + $0x36] sm:$0xff]
    %v829 = vld [vmem:[#allocation1 + $0x3f] sm:$0xff]
    %831 = vst [vmem:[#allocation1] ss:$9 sm:$0xff] %v23
    %v832 = vld [vmem:[#allocation1] sm:$0xff]
    %v833 = vld [vmem:[#allocation1 + $0x9] sm:$0xff]
    %v834 = vld [vmem:[#allocation1 + $0x12] sm:$0xff]
    %v835 = vld [vmem:[#allocation1 + $0x1b] sm:$0xff]
    %v836 = vld [vmem:[#allocation1 + $0x24] sm:$0xff]
    %v837 = vld [vmem:[#allocation1 + $0x2d] sm:$0xff]
    %v838 = vld [vmem:[#allocation1 + $0x36] sm:$0xff]
    %v839 = vld [vmem:[#allocation1 + $0x3f] sm:$0xff]
    %841 = vst [vmem:[#allocation1] ss:$9 sm:$0xff] %v24
    %v842 = vld [vmem:[#allocation1] sm:$0xff]
    %v843 = vld [vmem:[#allocation1 + $0x9] sm:$0xff]
    %v844 = vld [vmem:[#allocation1 + $0x12] sm:$0xff]
    %v845 = vld [vmem:[#allocation1 + $0x1b] sm:$0xff]
    %v846 = vld [vmem:[#allocation1 + $0x24] sm:$0xff]
    %v847 = vld [vmem:[#allocation1 + $0x2d] sm:$0xff]
    %v848 = vld [vmem:[#allocation1 + $0x36] sm:$0xff]
    %v849 = vld [vmem:[#allocation1 + $0x3f] sm:$0xff]
    %851 = vst [vmem:[#allocation1] ss:$9 sm:$0xff] %v25
    %v852 = vld [vmem:[#allocation1] sm:$0xff]
    %v1661 = vunpack.c.l.b16 %v26
    %v1662 = vunpack.c.h.b16 %v26
    %v1663 = vunpack.c.l.b16 %v27
    %v1664 = vunpack.c.h.b16 %v27
    %v1665 = vunpack.c.l.b16 %v28
    %v1666 = vunpack.c.h.b16 %v28
    %v1667 = vunpack.c.l.b16 %v29
    %v1668 = vunpack.c.h.b16 %v29
    %v1669 = vunpack.c.l.b16 %v30
    %v1670 = vunpack.c.h.b16 %v30
    %v1671 = vunpack.c.l.b16 %v31
    %v1672 = vunpack.c.h.b16 %v31
    %v1673 = vunpack.c.l.b16 %v32
    %v1674 = vunpack.c.h.b16 %v32
    %v1675 = vunpack.c.l.b16 %v33
    %v1676 = vunpack.c.h.b16 %v33
    %v1677 = vunpack.c.l.b16 %v34
    %v1678 = vunpack.c.h.b16 %v34
    %v1679 = vunpack.c.l.b16 %v35
    %v1680 = vunpack.c.h.b16 %v35
    %v1681 = vunpack.c.l.b16 %v36
    %v1682 = vunpack.c.h.b16 %v36
    %v1683 = vunpack.c.l.b16 %v37
    %v1684 = vunpack.c.h.b16 %v37
    %v1685 = vunpack.c.l.b16 %v38
    %v1686 = vunpack.c.h.b16 %v38
    %v1687 = vunpack.c.l.b16 %v39
    %v1688 = vunpack.c.h.b16 %v39
    %v1689 = vunpack.c.l.b16 %v40
    %v1690 = vunpack.c.h.b16 %v40
    %v1691 = vunpack.c.l.b16 %v41
    %v1692 = vunpack.c.h.b16 %v41
    %v1693 = vunpack.c.l.b16 %v42
    %v1694 = vunpack.c.h.b16 %v42
    %v1695 = vunpack.c.l.b16 %v43
    %v1696 = vunpack.c.h.b16 %v43
    %v1697 = vunpack.c.l.b16 %v44
    %v1698 = vunpack.c.h.b16 %v44
    %v1699 = vunpack.c.l.b16 %v45
    %v1700 = vunpack.c.h.b16 %v45
    %v1701 = vunpack.c.l.b16 %v46
    %v1702 = vunpack.c.h.b16 %v46
    %v1703 = vunpack.c.l.b16 %v47
    %v1704 = vunpack.c.h.b16 %v47
    %v1705 = vunpack.c.l.b16 %v48
    %v1706 = vunpack.c.h.b16 %v48
    %v1707 = vunpack.c.l.b16 %v49
    %v1708 = vunpack.c.h.b16 %v49
    %v1709 = vunpack.c.l.b16 %v50
    %v1710 = vunpack.c.h.b16 %v50
    %v1711 = vunpack.c.l.b16 %v51
    %v1712 = vunpack.c.h.b16 %v51
    %v1713 = vunpack.c.l.b16 %v52
    %v1714 = vunpack.c.h.b16 %v52
    %v1715 = vunpack.c.l.b16 %v53
    %v1716 = vunpack.c.h.b16 %v53
    %v1717 = vunpack.c.l.b16 %v54
    %v1718 = vunpack.c.h.b16 %v54
    %v1719 = vunpack.c.l.b16 %v55
    %v1720 = vunpack.c.h.b16 %v55
    %v1721 = vunpack.c.l.b16 %v56
    %v1722 = vunpack.c.h.b16 %v56
    %v1723 = vunpack.c.l.b16 %v57
    %v1724 = vunpack.c.h.b16 %v57
    %v1725 = vunpack.c.l.b16 %v58
    %v1726 = vunpack.c.h.b16 %v58
    %v1727 = vunpack.c.l.b16 %v59
    %v1728 = vunpack.c.h.b16 %v59
    %v1729 = vunpack.c.l.b16 %v60
    %v1730 = vunpack.c.h.b16 %v60
    %v1731 = vunpack.c.l.b16 %v61
    %v1732 = vunpack.c.h.b16 %v61
    %v1733 = vunpack.c.l.b16 %v62
    %v1734 = vunpack.c.h.b16 %v62
    %v1735 = vunpack.c.l.b16 %v63
    %v1736 = vunpack.c.h.b16 %v63
    %v1737 = vunpack.c.l.b16 %v64
    %v1738 = vunpack.c.h.b16 %v64
    %v1739 = vunpack.c.l.b16 %v65
    %v1740 = vunpack.c.h.b16 %v65
    %v1741 = vunpack.c.l.b16 %v66
    %v1742 = vunpack.c.h.b16 %v66
    %v1743 = vunpack.c.l.b16 %v67
    %v1744 = vunpack.c.h.b16 %v67
    %v1745 = vunpack.c.l.b16 %v68
    %v1746 = vunpack.c.h.b16 %v68
    %v1747 = vunpack.c.l.b16 %v69
    %v1748 = vunpack.c.h.b16 %v69
    %v1749 = vunpack.c.l.b16 %v70
    %v1750 = vunpack.c.h.b16 %v70
    %v1751 = vunpack.c.l.b16 %v71
    %v1752 = vunpack.c.h.b16 %v71
    %v1753 = vunpack.c.l.b16 %v72
    %v1754 = vunpack.c.h.b16 %v72
    %v1755 = vunpack.c.l.b16 %v73
    %v1756 = vunpack.c.h.b16 %v73
    %v1757 = vunpack.c.l.b16 %v74
    %v1758 = vunpack.c.h.b16 %v74
    %v1759 = vunpack.c.l.b16 %v75
    %v1760 = vunpack.c.h.b16 %v75
    %v1761 = vunpack.c.l.b16 %v76
    %v1762 = vunpack.c.h.b16 %v76
    %v1763 = vunpack.c.l.b16 %v77
    %v1764 = vunpack.c.h.b16 %v77
    %v1765 = vunpack.c.l.b16 %v78
    %v1766 = vunpack.c.h.b16 %v78
    %v1767 = vunpack.c.l.b16 %v79
    %v1768 = vunpack.c.h.b16 %v79
    %v1769 = vunpack.c.l.b16 %v80
    %v1770 = vunpack.c.h.b16 %v80
    %v1771 = vunpack.c.l.b16 %v81
    %v1772 = vunpack.c.h.b16 %v81
    %v1773 = vunpack.c.l.b16 %v82
    %v1774 = vunpack.c.h.b16 %v82
    %v1775 = vunpack.c.l.b16 %v83
    %v1776 = vunpack.c.h.b16 %v83
    %v1777 = vunpack.c.l.b16 %v84
    %v1778 = vunpack.c.h.b16 %v84
    %v1779 = vunpack.c.l.b16 %v85
    %v1780 = vunpack.c.h.b16 %v85
    %v1781 = vunpack.c.l.b16 %v86
    %v1782 = vunpack.c.h.b16 %v86
    %v1783 = vunpack.c.l.b16 %v87
    %v1784 = vunpack.c.h.b16 %v87
    %v1785 = vunpack.c.l.b16 %v88
    %v1786 = vunpack.c.h.b16 %v88
    %v1787 = vunpack.c.l.b16 %v89
    %v1788 = vunpack.c.h.b16 %v89
    %v1789 = vunpack.c.l.b16 %v90
    %v1790 = vunpack.c.h.b16 %v90
    %v1791 = vunpack.c.l.b16 %v91
    %v1792 = vunpack.c.h.b16 %v91
    %v1793 = vunpack.c.l.b16 %v92
    %v1794 = vunpack.c.h.b16 %v92
    %v1795 = vunpack.c.l.b16 %v93
    %v1796 = vunpack.c.h.b16 %v93
    %v1797 = vunpack.c.l.b16 %v94
    %v1798 = vunpack.c.h.b16 %v94
    %v1799 = vunpack.c.l.b16 %v95
    %v1800 = vunpack.c.h.b16 %v95
    %v1801 = vunpack.c.l.b16 %v96
    %v1802 = vunpack.c.h.b16 %v96
    %v1803 = vunpack.c.l.b16 %v97
    %v1804 = vunpack.c.h.b16 %v97
    %v1805 = vunpack.c.l.b16 %v98
    %v1806 = vunpack.c.h.b16 %v98
    %v1807 = vunpack.c.l.b16 %v99
    %v1808 = vunpack.c.h.b16 %v99
    %v1809 = vunpack.c.l.b16 %v100
    %v1810 = vunpack.c.h.b16 %v100
    %v1811 = vunpack.c.l.b16 %v101
    %v1812 = vunpack.c.h.b16 %v101
    %v1813 = vunpack.c.l.b16 %v102
    %v1814 = vunpack.c.h.b16 %v102
    %v1815 = vunpack.c.l.b16 %v103
    %v1816 = vunpack.c.h.b16 %v103
    %v1817 = vunpack.c.l.b16 %v104
    %v1818 = vunpack.c.h.b16 %v104
    %v1819 = vunpack.c.l.b16 %v105
    %v1820 = vunpack.c.h.b16 %v105
    %v1821 = vunpack.c.l.b16 %v106
    %v1822 = vunpack.c.h.b16 %v106
    %v1823 = vunpack.c.l.b16 %v107
    %v1824 = vunpack.c.h.b16 %v107
    %v1825 = vunpack.c.l.b16 %v108
    %v1826 = vunpack.c.h.b16 %v108
    %v1827 = vunpack.c.l.b16 %v109
    %v1828 = vunpack.c.h.b16 %v109
    %v1829 = vunpack.c.l.b16 %v110
    %v1830 = vunpack.c.h.b16 %v110
    %v1831 = vunpack.c.l.b16 %v111
    %v1832 = vunpack.c.h.b16 %v111
    %v1833 = vunpack.c.l.b16 %v112
    %v1834 = vunpack.c.h.b16 %v112
    %v1835 = vunpack.c.l.b16 %v113
    %v1836 = vunpack.c.h.b16 %v113
    %v1837 = vunpack.c.l.b16 %v114
    %v1838 = vunpack.c.h.b16 %v114
    %v1839 = vunpack.c.l.b16 %v115
    %v1840 = vunpack.c.h.b16 %v115
    %v1841 = vunpack.c.l.b16 %v116
    %v1842 = vunpack.c.h.b16 %v116
    %v1843 = vunpack.c.l.b16 %v117
    %v1844 = vunpack.c.h.b16 %v117
    %v1845 = vunpack.c.l.b16 %v118
    %v1846 = vunpack.c.h.b16 %v118
    %v1847 = vunpack.c.l.b16 %v119
    %v1848 = vunpack.c.h.b16 %v119
    %v1849 = vunpack.c.l.b16 %v120
    %v1850 = vunpack.c.h.b16 %v120
    %v1851 = vunpack.c.l.b16 %v121
    %v1852 = vunpack.c.h.b16 %v121
    %v1853 = vunpack.c.l.b16 %v122
    %v1854 = vunpack.c.h.b16 %v122
    %v1855 = vunpack.c.l.b16 %v123
    %v1856 = vunpack.c.h.b16 %v123
    %v1857 = vunpack.c.l.b16 %v124
    %v1858 = vunpack.c.h.b16 %v124
    %v1859 = vunpack.c.l.b16 %v125
    %v1860 = vunpack.c.h.b16 %v125
    %v1861 = vunpack.c.l.b16 %v126
    %v1862 = vunpack.c.h.b16 %v126
    %v1863 = vunpack.c.l.b16 %v127
    %v1864 = vunpack.c.h.b16 %v127
    %v1865 = vunpack.c.l.b16 %v128
    %v1866 = vunpack.c.h.b16 %v128
    %v1867 = vunpack.c.l.b16 %v129
    %v1868 = vunpack.c.h.b16 %v129
    %v1869 = vunpack.c.l.b16 %v130
    %v1870 = vunpack.c.h.b16 %v130
    %v1871 = vunpack.c.l.b16 %v131
    %v1872 = vunpack.c.h.b16 %v131
    %v1873 = vunpack.c.l.b16 %v132
    %v1874 = vunpack.c.h.b16 %v132
    %v1875 = vunpack.c.l.b16 %v133
    %v1876 = vunpack.c.h.b16 %v133
    %v1877 = vunpack.c.l.b16 %v134
    %v1878 = vunpack.c.h.b16 %v134
    %v1879 = vunpack.c.l.b16 %v135
    %v1880 = vunpack.c.h.b16 %v135
    %v1881 = vunpack.c.l.b16 %v136
    %v1882 = vunpack.c.h.b16 %v136
    %v1883 = vunpack.c.l.b16 %v137
    %v1884 = vunpack.c.h.b16 %v137
    %v1885 = vunpack.c.l.b16 %v138
    %v1886 = vunpack.c.h.b16 %v138
    %v1887 = vunpack.c.l.b16 %v139
    %v1888 = vunpack.c.h.b16 %v139
    %v1889 = vunpack.c.l.b16 %v140
    %v1890 = vunpack.c.h.b16 %v140
    %v1891 = vunpack.c.l.b16 %v141
    %v1892 = vunpack.c.h.b16 %v141
    %v1893 = vunpack.c.l.b16 %v142
    %v1894 = vunpack.c.h.b16 %v142
    %v1895 = vunpack.c.l.b16 %v143
    %v1896 = vunpack.c.h.b16 %v143
    %v1897 = vunpack.c.l.b16 %v144
    %v1898 = vunpack.c.h.b16 %v144
    %v1899 = vunpack.c.l.b16 %v145
    %v1900 = vunpack.c.h.b16 %v145
    %v1901 = vunpack.c.l.b16 %v146
    %v1902 = vunpack.c.h.b16 %v146
    %v1903 = vunpack.c.l.b16 %v147
    %v1904 = vunpack.c.h.b16 %v147
    %v1905 = vunpack.c.l.b16 %v148
    %v1906 = vunpack.c.h.b16 %v148
    %v1907 = vunpack.c.l.b16 %v149
    %v1908 = vunpack.c.h.b16 %v149
    %v1909 = vunpack.c.l.b16 %v150
    %v1910 = vunpack.c.h.b16 %v150
    %v1911 = vunpack.c.l.b16 %v151
    %v1912 = vunpack.c.h.b16 %v151
    %v1913 = vunpack.c.l.b16 %v152
    %v1914 = vunpack.c.h.b16 %v152
    %v1915 = vunpack.c.l.b16 %v153
    %v1916 = vunpack.c.h.b16 %v153
    %v1917 = vunpack.c.l.b16 %v154
    %v1918 = vunpack.c.h.b16 %v154
    %v1919 = vunpack.c.l.b16 %v155
    %v1920 = vunpack.c.h.b16 %v155
    %v1921 = vunpack.c.l.b16 %v156
    %v1922 = vunpack.c.h.b16 %v156
    %v1923 = vunpack.c.l.b16 %v157
    %v1924 = vunpack.c.h.b16 %v157
    %v1925 = vunpack.c.l.b16 %v158
    %v1926 = vunpack.c.h.b16 %v158
    %v1927 = vunpack.c.l.b16 %v159
    %v1928 = vunpack.c.h.b16 %v159
    %v1929 = vunpack.c.l.b16 %v160
    %v1930 = vunpack.c.h.b16 %v160
    %v1931 = vunpack.c.l.b16 %v161
    %v1932 = vunpack.c.h.b16 %v161
    %v1933 = vunpack.c.l.b16 %v162
    %v1934 = vunpack.c.h.b16 %v162
    %v1935 = vunpack.c.l.b16 %v163
    %v1936 = vunpack.c.h.b16 %v163
    %v1937 = vunpack.c.l.b16 %v164
    %v1938 = vunpack.c.h.b16 %v164
    %v1939 = vunpack.c.l.b16 %v165
    %v1940 = vunpack.c.h.b16 %v165
    %v1941 = vunpack.c.l.b16 %v166
    %v1942 = vunpack.c.h.b16 %v166
    %v1943 = vunpack.c.l.b16 %v167
    %v1944 = vunpack.c.h.b16 %v167
    %v1945 = vunpack.c.l.b16 %v168
    %v1946 = vunpack.c.h.b16 %v168
    %v1947 = vunpack.c.l.b16 %v169
    %v1948 = vunpack.c.h.b16 %v169
    %v1949 = vunpack.c.l.b16 %v170
    %v1950 = vunpack.c.h.b16 %v170
    %v1951 = vunpack.c.l.b16 %v171
    %v1952 = vunpack.c.h.b16 %v171
    %v1953 = vunpack.c.l.b16 %v172
    %v1954 = vunpack.c.h.b16 %v172
    %v1955 = vunpack.c.l.b16 %v173
    %v1956 = vunpack.c.h.b16 %v173
    %v1957 = vunpack.c.l.b16 %v174
    %v1958 = vunpack.c.h.b16 %v174
    %v1959 = vunpack.c.l.b16 %v175
    %v1960 = vunpack.c.h.b16 %v175
    %v1961 = vunpack.c.l.b16 %v176
    %v1962 = vunpack.c.h.b16 %v176
    %v1963 = vunpack.c.l.b16 %v177
    %v1964 = vunpack.c.h.b16 %v177
    %v1965 = vunpack.c.l.b16 %v178
    %v1966 = vunpack.c.h.b16 %v178
    %v1967 = vunpack.c.l.b16 %v179
    %v1968 = vunpack.c.h.b16 %v179
    %v1969 = vunpack.c.l.b16 %v180
    %v1970 = vunpack.c.h.b16 %v180
    %v1971 = vunpack.c.l.b16 %v181
    %v1972 = vunpack.c.h.b16 %v181
    %v1973 = vunpack.c.l.b16 %v182
    %v1974 = vunpack.c.h.b16 %v182
    %v1975 = vunpack.c.l.b16 %v183
    %v1976 = vunpack.c.h.b16 %v183
    %v1977 = vunpack.c.l.b16 %v184
    %v1978 = vunpack.c.h.b16 %v184
    %v1979 = vunpack.c.l.b16 %v185
    %v1980 = vunpack.c.h.b16 %v185
    %v1981 = vunpack.c.l.b16 %v186
    %v1982 = vunpack.c.h.b16 %v186
    %v1983 = vunpack.c.l.b16 %v187
    %v1984 = vunpack.c.h.b16 %v187
    %v1985 = vunpack.c.l.b16 %v188
    %v1986 = vunpack.c.h.b16 %v188
    %v1987 = vunpack.c.l.b16 %v189
    %v1988 = vunpack.c.h.b16 %v189
    %v1989 = vunpack.c.l.b16 %v190
    %v1990 = vunpack.c.h.b16 %v190
    %v1991 = vunpack.c.l.b16 %v191
    %v1992 = vunpack.c.h.b16 %v191
    %v1993 = vunpack.c.l.b16 %v192
    %v1994 = vunpack.c.h.b16 %v192
    %v1995 = vunpack.c.l.b16 %v193
    %v1996 = vunpack.c.h.b16 %v193
    %v1997 = vunpack.c.l.b16 %v194
    %v1998 = vunpack.c.h.b16 %v194
    %v1999 = vunpack.c.l.b16 %v195
    %v2000 = vunpack.c.h.b16 %v195
    %v2001 = vunpack.c.l.b16 %v196
    %v2002 = vunpack.c.h.b16 %v196
    %v2003 = vunpack.c.l.b16 %v197
    %v2004 = vunpack.c.h.b16 %v197
    %v2005 = vunpack.c.l.b16 %v198
    %v2006 = vunpack.c.h.b16 %v198
    %v2007 = vunpack.c.l.b16 %v199
    %v2008 = vunpack.c.h.b16 %v199
    %v2009 = vunpack.c.l.b16 %v200
    %v2010 = vunpack.c.h.b16 %v200
    %v2011 = vunpack.c.l.b16 %v201
    %v2012 = vunpack.c.h.b16 %v201
    %v2013 = vunpack.c.l.b16 %v202
    %v2014 = vunpack.c.h.b16 %v202
    %v2015 = vunpack.c.l.b16 %v203
    %v2016 = vunpack.c.h.b16 %v203
    %v2017 = vunpack.c.l.b16 %v204
    %v2018 = vunpack.c.h.b16 %v204
    %v2019 = vunpack.c.l.b16 %v205
    %v2020 = vunpack.c.h.b16 %v205
    %v2021 = vunpack.c.l.b16 %v206
    %v2022 = vunpack.c.h.b16 %v206
    %v2023 = vunpack.c.l.b16 %v207
    %v2024 = vunpack.c.h.b16 %v207
    %v2025 = vunpack.c.l.b16 %v208
    %v2026 = vunpack.c.h.b16 %v208
    %v2027 = vunpack.c.l.b16 %v209
    %v2028 = vunpack.c.h.b16 %v209
    %v2029 = vunpack.c.l.b16 %v210
    %v2030 = vunpack.c.h.b16 %v210
    %v2031 = vunpack.c.l.b16 %v211
    %v2032 = vunpack.c.h.b16 %v211
    %v2033 = vunpack.c.l.b16 %v212
    %v2034 = vunpack.c.h.b16 %v212
    %v2035 = vunpack.c.l.b16 %v213
    %v2036 = vunpack.c.h.b16 %v213
    %v2037 = vunpack.c.l.b16 %v214
    %v2038 = vunpack.c.h.b16 %v214
    %v2039 = vunpack.c.l.b16 %v215
    %v2040 = vunpack.c.h.b16 %v215
    %v2041 = vunpack.c.l.b16 %v216
    %v2042 = vunpack.c.h.b16 %v216
    %v2043 = vunpack.c.l.b16 %v217
    %v2044 = vunpack.c.h.b16 %v217
    %v2045 = vunpack.c.l.b16 %v218
    %v2046 = vunpack.c.h.b16 %v218
    %v2047 = vunpack.c.l.b16 %v219
    %v2048 = vunpack.c.h.b16 %v219
    %v2049 = vunpack.c.l.b16 %v220
    %v2050 = vunpack.c.h.b16 %v220
    %v2051 = vunpack.c.l.b16 %v221
    %v2052 = vunpack.c.h.b16 %v221
    %v2053 = vunpack.c.l.b16 %v222
    %v2054 = vunpack.c.h.b16 %v222
    %v2055 = vunpack.c.l.b16 %v223
    %v2056 = vunpack.c.h.b16 %v223
    %v2057 = vunpack.c.l.b16 %v224
    %v2058 = vunpack.c.h.b16 %v224
    %v2059 = vunpack.c.l.b16 %v225
    %v2060 = vunpack.c.h.b16 %v225
    %v2061 = vunpack.c.l.b16 %v226
    %v2062 = vunpack.c.h.b16 %v226
    %v2063 = vunpack.c.l.b16 %v227
    %v2064 = vunpack.c.h.b16 %v227
    %v2065 = vunpack.c.l.b16 %v228
    %v2066 = vunpack.c.h.b16 %v228
    %v2067 = vunpack.c.l.b16 %v229
    %v2068 = vunpack.c.h.b16 %v229
    %v2069 = vunpack.c.l.b16 %v230
    %v2070 = vunpack.c.h.b16 %v230
    %v2071 = vunpack.c.l.b16 %v231
    %v2072 = vunpack.c.h.b16 %v231
    %v2073 = vunpack.c.l.b16 %v232
    %v2074 = vunpack.c.h.b16 %v232
    %v2075 = vunpack.c.l.b16 %v233
    %v2076 = vunpack.c.h.b16 %v233
    %v2077 = vunpack.c.l.b16 %v234
    %v2078 = vunpack.c.h.b16 %v234
    %v2079 = vunpack.c.l.b16 %v235
    %v2080 = vunpack.c.h.b16 %v235
    %v2081 = vunpack.c.l.b16 %v236
    %v2082 = vunpack.c.h.b16 %v236
    %v2083 = vunpack.c.l.b16 %v237
    %v2084 = vunpack.c.h.b16 %v237
    %v2085 = vunpack.c.l.b16 %v238
    %v2086 = vunpack.c.h.b16 %v238
    %v2087 = vunpack.c.l.b16 %v239
    %v2088 = vunpack.c.h.b16 %v239
    %v2089 = vunpack.c.l.b16 %v240
    %v2090 = vunpack.c.h.b16 %v240
    %v2091 = vunpack.c.l.b16 %v241
    %v2092 = vunpack.c.h.b16 %v241
    %v2093 = vunpack.c.l.b16 %v242
    %v2094 = vunpack.c.h.b16 %v242
    %v2095 = vunpack.c.l.b16 %v243
    %v2096 = vunpack.c.h.b16 %v243
    %v2097 = vunpack.c.l.b16 %v244
    %v2098 = vunpack.c.h.b16 %v244
    %v2099 = vunpack.c.l.b16 %v245
    %v2100 = vunpack.c.h.b16 %v245
    %v2101 = vunpack.c.l.b16 %v246
    %v2102 = vunpack.c.h.b16 %v246
    %v2103 = vunpack.c.l.b16 %v247
    %v2104 = vunpack.c.h.b16 %v247
    %v2105 = vunpack.c.l.b16 %v248
    %v2106 = vunpack.c.h.b16 %v248
    %v2107 = vunpack.c.l.b16 %v249
    %v2108 = vunpack.c.h.b16 %v249
    %v2109 = vunpack.c.l.b16 %v250
    %v2110 = vunpack.c.h.b16 %v250
    %v2111 = vunpack.c.l.b16 %v251
    %v2112 = vunpack.c.h.b16 %v251
    %v2113 = vunpack.c.l.b16 %v252
    %v2114 = vunpack.c.h.b16 %v252
    %v2115 = vunpack.c.l.b16 %v253
    %v2116 = vunpack.c.h.b16 %v253
    %v2117 = vunpack.c.l.b16 %v254
    %v2118 = vunpack.c.h.b16 %v254
    %v2119 = vunpack.c.l.b16 %v255
    %v2120 = vunpack.c.h.b16 %v255
    %v2121 = vunpack.c.l.b16 %v256
    %v2122 = vunpack.c.h.b16 %v256
    %v2123 = vunpack.c.l.b16 %v257
    %v2124 = vunpack.c.h.b16 %v257
    %v2125 = vunpack.c.l.b16 %v258
    %v2126 = vunpack.c.h.b16 %v258
    %v2127 = vunpack.c.l.b16 %v259
    %v2128 = vunpack.c.h.b16 %v259
    %v2129 = vunpack.c.l.b16 %v260
    %v2130 = vunpack.c.h.b16 %v260
    %v2131 = vunpack.c.l.b16 %v261
    %v2132 = vunpack.c.h.b16 %v261
    %v2133 = vunpack.c.l.b16 %v262
    %v2134 = vunpack.c.h.b16 %v262
    %v2135 = vunpack.c.l.b16 %v263
    %v2136 = vunpack.c.h.b16 %v263
    %v2137 = vunpack.c.l.b16 %v264
    %v2138 = vunpack.c.h.b16 %v264
    %v2139 = vunpack.c.l.b16 %v265
    %v2140 = vunpack.c.h.b16 %v265
    %v2141 = vunpack.c.l.b16 %v266
    %v2142 = vunpack.c.h.b16 %v266
    %v2143 = vunpack.c.l.b16 %v267
    %v2144 = vunpack.c.h.b16 %v267
    %v2145 = vunpack.c.l.b16 %v268
    %v2146 = vunpack.c.h.b16 %v268
    %v2147 = vunpack.c.l.b16 %v269
    %v2148 = vunpack.c.h.b16 %v269
    %v2149 = vunpack.c.l.b16 %v270
    %v2150 = vunpack.c.h.b16 %v270
    %v2151 = vunpack.c.l.b16 %v271
    %v2152 = vunpack.c.h.b16 %v271
    %v2153 = vunpack.c.l.b16 %v272
    %v2154 = vunpack.c.h.b16 %v272
    %v2155 = vunpack.c.l.b16 %v273
    %v2156 = vunpack.c.h.b16 %v273
    %v2157 = vunpack.c.l.b16 %v274
    %v2158 = vunpack.c.h.b16 %v274
    %v2159 = vunpack.c.l.b16 %v275
    %v2160 = vunpack.c.h.b16 %v275
    %v2161 = vunpack.c.l.b16 %v276
    %v2162 = vunpack.c.h.b16 %v276
    %v2163 = vunpack.c.l.b16 %v277
    %v2164 = vunpack.c.h.b16 %v277
    %v2165 = vunpack.c.l.b16 %v278
    %v2166 = vunpack.c.h.b16 %v278
    %v2167 = vunpack.c.l.b16 %v279
    %v2168 = vunpack.c.h.b16 %v279
    %v2169 = vunpack.c.l.b16 %v280
    %v2170 = vunpack.c.h.b16 %v280
    %v2171 = vunpack.c.l.b16 %v281
    %v2172 = vunpack.c.h.b16 %v281
    %v2173 = vunpack.c.l.b16 %v282
    %v2174 = vunpack.c.h.b16 %v282
    %v2175 = vunpack.c.l.b16 %v283
    %v2176 = vunpack.c.h.b16 %v283
    %v2177 = vunpack.c.l.b16 %v284
    %v2178 = vunpack.c.h.b16 %v284
    %v2179 = vunpack.c.l.b16 %v285
    %v2180 = vunpack.c.h.b16 %v285
    %v2181 = vunpack.c.l.b16 %v286
    %v2182 = vunpack.c.h.b16 %v286
    %v2183 = vunpack.c.l.b16 %v287
    %v2184 = vunpack.c.h.b16 %v287
    %v2185 = vunpack.c.l.b16 %v288
    %v2186 = vunpack.c.h.b16 %v288
    %v2187 = vunpack.c.l.b16 %v289
    %v2188 = vunpack.c.h.b16 %v289
    %v2189 = vunpack.c.l.b16 %v290
    %v2190 = vunpack.c.h.b16 %v290
    %v2191 = vunpack.c.l.b16 %v291
    %v2192 = vunpack.c.h.b16 %v291
    %v2193 = vunpack.c.l.b16 %v292
    %v2194 = vunpack.c.h.b16 %v292
    %v2195 = vunpack.c.l.b16 %v293
    %v2196 = vunpack.c.h.b16 %v293
    %v2197 = vunpack.c.l.b16 %v294
    %v2198 = vunpack.c.h.b16 %v294
    %v2199 = vunpack.c.l.b16 %v295
    %v2200 = vunpack.c.h.b16 %v295
    %v2201 = vunpack.c.l.b16 %v296
    %v2202 = vunpack.c.h.b16 %v296
    %v2203 = vunpack.c.l.b16 %v297
    %v2204 = vunpack.c.h.b16 %v297
    %v2205 = vunpack.c.l.b16 %v298
    %v2206 = vunpack.c.h.b16 %v298
    %v2207 = vunpack.c.l.b16 %v299
    %v2208 = vunpack.c.h.b16 %v299
    %v2209 = vunpack.c.l.b16 %v300
    %v2210 = vunpack.c.h.b16 %v300
    %v2211 = vunpack.c.l.b16 %v301
    %v2212 = vunpack.c.h.b16 %v301
    %v2213 = vunpack.c.l.b16 %v302
    %v2214 = vunpack.c.h.b16 %v302
    %v2215 = vunpack.c.l.b16 %v303
    %v2216 = vunpack.c.h.b16 %v303
    %v2217 = vunpack.c.l.b16 %v304
    %v2218 = vunpack.c.h.b16 %v304
    %v2219 = vunpack.c.l.b16 %v305
    %v2220 = vunpack.c.h.b16 %v305
    %v2221 = vunpack.c.l.b16 %v306
    %v2222 = vunpack.c.h.b16 %v306
    %v2223 = vunpack.c.l.b16 %v307
    %v2224 = vunpack.c.h.b16 %v307
    %v2225 = vunpack.c.l.b16 %v308
    %v2226 = vunpack.c.h.b16 %v308
    %v2227 = vunpack.c.l.b16 %v309
    %v2228 = vunpack.c.h.b16 %v309
    %v2229 = vunpack.c.l.b16 %v310
    %v2230 = vunpack.c.h.b16 %v310
    %v2231 = vunpack.c.l.b16 %v311
    %v2232 = vunpack.c.h.b16 %v311
    %v2233 = vunpack.c.l.b16 %v312
    %v2234 = vunpack.c.h.b16 %v312
    %v2235 = vunpack.c.l.b16 %v313
    %v2236 = vunpack.c.h.b16 %v313
    %v2237 = vunpack.c.l.b16 %v314
    %v2238 = vunpack.c.h.b16 %v314
    %v2239 = vunpack.c.l.b16 %v315
    %v2240 = vunpack.c.h.b16 %v315
    %v2241 = vunpack.c.l.b16 %v316
    %v2242 = vunpack.c.h.b16 %v316
    %v2243 = vunpack.c.l.b16 %v317
    %v2244 = vunpack.c.h.b16 %v317
    %v2245 = vunpack.c.l.b16 %v318
    %v2246 = vunpack.c.h.b16 %v318
    %v2247 = vunpack.c.l.b16 %v319
    %v2248 = vunpack.c.h.b16 %v319
    %v2249 = vunpack.c.l.b16 %v320
    %v2250 = vunpack.c.h.b16 %v320
    %v2251 = vunpack.c.l.b16 %v321
    %v2252 = vunpack.c.h.b16 %v321
    %v2253 = vunpack.c.l.b16 %v322
    %v2254 = vunpack.c.h.b16 %v322
    %v2255 = vunpack.c.l.b16 %v323
    %v2256 = vunpack.c.h.b16 %v323
    %v2257 = vunpack.c.l.b16 %v324
    %v2258 = vunpack.c.h.b16 %v324
    %v2259 = vunpack.c.l.b16 %v325
    %v2260 = vunpack.c.h.b16 %v325
    %v2261 = vunpack.c.l.b16 %v326
    %v2262 = vunpack.c.h.b16 %v326
    %v2263 = vunpack.c.l.b16 %v327
    %v2264 = vunpack.c.h.b16 %v327
    %v2265 = vunpack.c.l.b16 %v328
    %v2266 = vunpack.c.h.b16 %v328
    %v2267 = vunpack.c.l.b16 %v329
    %v2268 = vunpack.c.h.b16 %v329
    %v2269 = vunpack.c.l.b16 %v330
    %v2270 = vunpack.c.h.b16 %v330
    %v2271 = vunpack.c.l.b16 %v331
    %v2272 = vunpack.c.h.b16 %v331
    %v2273 = vunpack.c.l.b16 %v332
    %v2274 = vunpack.c.h.b16 %v332
    %v2275 = vunpack.c.l.b16 %v333
    %v2276 = vunpack.c.h.b16 %v333
    %v2277 = vunpack.c.l.b16 %v334
    %v2278 = vunpack.c.h.b16 %v334
    %v2279 = vunpack.c.l.b16 %v335
    %v2280 = vunpack.c.h.b16 %v335
    %v2281 = vunpack.c.l.b16 %v336
    %v2282 = vunpack.c.h.b16 %v336
    %v2283 = vunpack.c.l.b16 %v337
    %v2284 = vunpack.c.h.b16 %v337
    %v2285 = vunpack.c.l.b16 %v338
    %v2286 = vunpack.c.h.b16 %v338
    %v2287 = vunpack.c.l.b16 %v339
    %v2288 = vunpack.c.h.b16 %v339
    %v2289 = vunpack.c.l.b16 %v340
    %v2290 = vunpack.c.h.b16 %v340
    %v2291 = vunpack.c.l.b16 %v341
    %v2292 = vunpack.c.h.b16 %v341
    %v2293 = vunpack.c.l.b16 %v342
    %v2294 = vunpack.c.h.b16 %v342
    %v2295 = vunpack.c.l.b16 %v343
    %v2296 = vunpack.c.h.b16 %v343
    %v2297 = vunpack.c.l.b16 %v344
    %v2298 = vunpack.c.h.b16 %v344
    %v2299 = vunpack.c.l.b16 %v345
    %v2300 = vunpack.c.h.b16 %v345
    %v2301 = vunpack.c.l.b16 %v346
    %v2302 = vunpack.c.h.b16 %v346
    %v2303 = vunpack.c.l.b16 %v347
    %v2304 = vunpack.c.h.b16 %v347
    %v2305 = vunpack.c.l.b16 %v348
    %v2306 = vunpack.c.h.b16 %v348
    %v2307 = vunpack.c.l.b16 %v349
    %v2308 = vunpack.c.h.b16 %v349
    %v2309 = vunpack.c.l.b16 %v350
    %v2310 = vunpack.c.h.b16 %v350
    %v2311 = vunpack.c.l.b16 %v351
    %v2312 = vunpack.c.h.b16 %v351
    %v2313 = vunpack.c.l.b16 %v352
    %v2314 = vunpack.c.h.b16 %v352
    %v2315 = vunpack.c.l.b16 %v353
    %v2316 = vunpack.c.h.b16 %v353
    %v2317 = vunpack.c.l.b16 %v354
    %v2318 = vunpack.c.h.b16 %v354
    %v2319 = vunpack.c.l.b16 %v355
    %v2320 = vunpack.c.h.b16 %v355
    %v2321 = vunpack.c.l.b16 %v356
    %v2322 = vunpack.c.h.b16 %v356
    %v2323 = vunpack.c.l.b16 %v357
    %v2324 = vunpack.c.h.b16 %v357
    %v2325 = vunpack.c.l.b16 %v358
    %v2326 = vunpack.c.h.b16 %v358
    %v2327 = vunpack.c.l.b16 %v359
    %v2328 = vunpack.c.h.b16 %v359
    %v2329 = vunpack.c.l.b16 %v360
    %v2330 = vunpack.c.h.b16 %v360
    %v2331 = vunpack.c.l.b16 %v361
    %v2332 = vunpack.c.h.b16 %v361
    %v2333 = vunpack.c.l.b16 %v362
    %v2334 = vunpack.c.h.b16 %v362
    %v2335 = vunpack.c.l.b16 %v363
    %v2336 = vunpack.c.h.b16 %v363
    %v2337 = vunpack.c.l.b16 %v364
    %v2338 = vunpack.c.h.b16 %v364
    %v2339 = vunpack.c.l.b16 %v365
    %v2340 = vunpack.c.h.b16 %v365
    %v2341 = vunpack.c.l.b16 %v366
    %v2342 = vunpack.c.h.b16 %v366
    %v2343 = vunpack.c.l.b16 %v367
    %v2344 = vunpack.c.h.b16 %v367
    %v2345 = vunpack.c.l.b16 %v368
    %v2346 = vunpack.c.h.b16 %v368
    %v2347 = vunpack.c.l.b16 %v369
    %v2348 = vunpack.c.h.b16 %v369
    %v2349 = vunpack.c.l.b16 %v370
    %v2350 = vunpack.c.h.b16 %v370
    %v2351 = vunpack.c.l.b16 %v371
    %v2352 = vunpack.c.h.b16 %v371
    %v2353 = vunpack.c.l.b16 %v372
    %v2354 = vunpack.c.h.b16 %v372
    %v2355 = vunpack.c.l.b16 %v373
    %v2356 = vunpack.c.h.b16 %v373
    %v2357 = vunpack.c.l.b16 %v374
    %v2358 = vunpack.c.h.b16 %v374
    %v2359 = vunpack.c.l.b16 %v375
    %v2360 = vunpack.c.h.b16 %v375
    %v2361 = vunpack.c.l.b16 %v376
    %v2362 = vunpack.c.h.b16 %v376
    %v2363 = vunpack.c.l.b16 %v377
    %v2364 = vunpack.c.h.b16 %v377
    %v2365 = vunpack.c.l.b16 %v378
    %v2366 = vunpack.c.h.b16 %v378
    %v2367 = vunpack.c.l.b16 %v379
    %v2368 = vunpack.c.h.b16 %v379
    %v2369 = vunpack.c.l.b16 %v380
    %v2370 = vunpack.c.h.b16 %v380
    %v2371 = vunpack.c.l.b16 %v381
    %v2372 = vunpack.c.h.b16 %v381
    %v2373 = vunpack.c.l.b16 %v382
    %v2374 = vunpack.c.h.b16 %v382
    %v2375 = vunpack.c.l.b16 %v383
    %v2376 = vunpack.c.h.b16 %v383
    %v2377 = vunpack.c.l.b16 %v384
    %v2378 = vunpack.c.h.b16 %v384
    %v2379 = vunpack.c.l.b16 %v385
    %v2380 = vunpack.c.h.b16 %v385
    %v2381 = vunpack.c.l.b16 %v386
    %v2382 = vunpack.c.h.b16 %v386
    %v2383 = vunpack.c.l.b16 %v387
    %v2384 = vunpack.c.h.b16 %v387
    %v2385 = vunpack.c.l.b16 %v388
    %v2386 = vunpack.c.h.b16 %v388
    %v2387 = vunpack.c.l.b16 %v389
    %v2388 = vunpack.c.h.b16 %v389
    %v2389 = vunpack.c.l.b16 %v390
    %v2390 = vunpack.c.h.b16 %v390
    %v2391 = vunpack.c.l.b16 %v391
    %v2392 = vunpack.c.h.b16 %v391
    %v2393 = vunpack.c.l.b16 %v392
    %v2394 = vunpack.c.h.b16 %v392
    %v2395 = vunpack.c.l.b16 %v393
    %v2396 = vunpack.c.h.b16 %v393
    %v2397 = vunpack.c.l.b16 %v394
    %v2398 = vunpack.c.h.b16 %v394
    %v2399 = vunpack.c.l.b16 %v395
    %v2400 = vunpack.c.h.b16 %v395
    %v2401 = vunpack.c.l.b16 %v396
    %v2402 = vunpack.c.h.b16 %v396
    %v2403 = vunpack.c.l.b16 %v397
    %v2404 = vunpack.c.h.b16 %v397
    %v2405 = vunpack.c.l.b16 %v398
    %v2406 = vunpack.c.h.b16 %v398
    %v2407 = vunpack.c.l.b16 %v399
    %v2408 = vunpack.c.h.b16 %v399
    %v2409 = vunpack.c.l.b16 %v400
    %v2410 = vunpack.c.h.b16 %v400
    %v2411 = vunpack.c.l.b16 %v401
    %v2412 = vunpack.c.h.b16 %v401
    %v2413 = vunpack.c.l.b16 %v402
    %v2414 = vunpack.c.h.b16 %v402
    %v2415 = vunpack.c.l.b16 %v403
    %v2416 = vunpack.c.h.b16 %v403
    %v2417 = vunpack.c.l.b16 %v404
    %v2418 = vunpack.c.h.b16 %v404
    %v2419 = vunpack.c.l.b16 %v405
    %v2420 = vunpack.c.h.b16 %v405
    %v2421 = vunpack.c.l.b16 %v406
    %v2422 = vunpack.c.h.b16 %v406
    %v2423 = vunpack.c.l.b16 %v407
    %v2424 = vunpack.c.h.b16 %v407
    %v2425 = vunpack.c.l.b16 %v408
    %v2426 = vunpack.c.h.b16 %v408
    %v2427 = vunpack.c.l.b16 %v409
    %v2428 = vunpack.c.h.b16 %v409
    %v2429 = vunpack.c.l.b16 %v410
    %v2430 = vunpack.c.h.b16 %v410
    %v2431 = vunpack.c.l.b16 %v411
    %v2432 = vunpack.c.h.b16 %v411
    %v2433 = vunpack.c.l.b16 %v412
    %v2434 = vunpack.c.h.b16 %v412
    %v2435 = vunpack.c.l.b16 %v413
    %v2436 = vunpack.c.h.b16 %v413
    %v2437 = vunpack.c.l.b16 %v414
    %v2438 = vunpack.c.h.b16 %v414
    %v2439 = vunpack.c.l.b16 %v415
    %v2440 = vunpack.c.h.b16 %v415
    %v2441 = vunpack.c.l.b16 %v416
    %v2442 = vunpack.c.h.b16 %v416
    %v2443 = vunpack.c.l.b16 %v417
    %v2444 = vunpack.c.h.b16 %v417
    %v2445 = vunpack.c.l.b16 %v418
    %v2446 = vunpack.c.h.b16 %v418
    %v2447 = vunpack.c.l.b16 %v419
    %v2448 = vunpack.c.h.b16 %v419
    %v2449 = vunpack.c.l.b16 %v420
    %v2450 = vunpack.c.h.b16 %v420
    %v2451 = vunpack.c.l.b16 %v421
    %v2452 = vunpack.c.h.b16 %v421
    %v2453 = vunpack.c.l.b16 %v422
    %v2454 = vunpack.c.h.b16 %v422
    %v2455 = vunpack.c.l.b16 %v423
    %v2456 = vunpack.c.h.b16 %v423
    %v2457 = vunpack.c.l.b16 %v424
    %v2458 = vunpack.c.h.b16 %v424
    %v2459 = vunpack.c.l.b16 %v425
    %v2460 = vunpack.c.h.b16 %v425
    %v2461 = vunpack.c.l.b16 %v426
    %v2462 = vunpack.c.h.b16 %v426
    %v2463 = vunpack.c.l.b16 %v427
    %v2464 = vunpack.c.h.b16 %v427
    %v2465 = vunpack.c.l.b16 %v428
    %v2466 = vunpack.c.h.b16 %v428
    %v2467 = vunpack.c.l.b16 %v429
    %v2468 = vunpack.c.h.b16 %v429
    %v2469 = vunpack.c.l.b16 %v430
    %v2470 = vunpack.c.h.b16 %v430
    %v2471 = vunpack.c.l.b16 %v431
    %v2472 = vunpack.c.h.b16 %v431
    %v2473 = vunpack.c.l.b16 %v432
    %v2474 = vunpack.c.h.b16 %v432
    %v2475 = vunpack.c.l.b16 %v433
    %v2476 = vunpack.c.h.b16 %v433
    %v2477 = vunpack.c.l.b16 %v434
    %v2478 = vunpack.c.h.b16 %v434
    %v2479 = vunpack.c.l.b16 %v435
    %v2480 = vunpack.c.h.b16 %v435
    %v2481 = vunpack.c.l.b16 %v436
    %v2482 = vunpack.c.h.b16 %v436
    %v2483 = vunpack.c.l.b16 %v437
    %v2484 = vunpack.c.h.b16 %v437
    %v2485 = vunpack.c.l.b16 %v438
    %v2486 = vunpack.c.h.b16 %v438
    %v2487 = vunpack.c.l.b16 %v439
    %v2488 = vunpack.c.h.b16 %v439
    %v2489 = vunpack.c.l.b16 %v440
    %v2490 = vunpack.c.h.b16 %v440
    %v2491 = vunpack.c.l.b16 %v441
    %v2492 = vunpack.c.h.b16 %v441
    %v2493 = vunpack.c.l.b16 %v442
    %v2494 = vunpack.c.h.b16 %v442
    %v2495 = vunpack.c.l.b16 %v443
    %v2496 = vunpack.c.h.b16 %v443
    %v2497 = vunpack.c.l.b16 %v444
    %v2498 = vunpack.c.h.b16 %v444
    %v2499 = vunpack.c.l.b16 %v445
    %v2500 = vunpack.c.h.b16 %v445
    %v2501 = vunpack.c.l.b16 %v446
    %v2502 = vunpack.c.h.b16 %v446
    %v2503 = vunpack.c.l.b16 %v447
    %v2504 = vunpack.c.h.b16 %v447
    %v2505 = vunpack.c.l.b16 %v448
    %v2506 = vunpack.c.h.b16 %v448
    %v2507 = vunpack.c.l.b16 %v449
    %v2508 = vunpack.c.h.b16 %v449
    %v2509 = vunpack.c.l.b16 %v450
    %v2510 = vunpack.c.h.b16 %v450
    %v2511 = vunpack.c.l.b16 %v451
    %v2512 = vunpack.c.h.b16 %v451
    %v2513 = vunpack.c.l.b16 %v452
    %v2514 = vunpack.c.h.b16 %v452
    %v2515 = vunpack.c.l.b16 %v453
    %v2516 = vunpack.c.h.b16 %v453
    %v2517 = vunpack.c.l.b16 %v454
    %v2518 = vunpack.c.h.b16 %v454
    %v2519 = vunpack.c.l.b16 %v455
    %v2520 = vunpack.c.h.b16 %v455
    %v2521 = vunpack.c.l.b16 %v456
    %v2522 = vunpack.c.h.b16 %v456
    %v2523 = vunpack.c.l.b16 %v457
    %v2524 = vunpack.c.h.b16 %v457
    %v2525 = vunpack.c.l.b16 %v458
    %v2526 = vunpack.c.h.b16 %v458
    %v2527 = vunpack.c.l.b16 %v459
    %v2528 = vunpack.c.h.b16 %v459
    %v2529 = vunpack.c.l.b16 %v460
    %v2530 = vunpack.c.h.b16 %v460
    %v2531 = vunpack.c.l.b16 %v461
    %v2532 = vunpack.c.h.b16 %v461
    %v2533 = vunpack.c.l.b16 %v462
    %v2534 = vunpack.c.h.b16 %v462
    %v2535 = vunpack.c.l.b16 %v463
    %v2536 = vunpack.c.h.b16 %v463
    %v2537 = vunpack.c.l.b16 %v464
    %v2538 = vunpack.c.h.b16 %v464
    %v2539 = vunpack.c.l.b16 %v465
    %v2540 = vunpack.c.h.b16 %v465
    %v2541 = vunpack.c.l.b16 %v466
    %v2542 = vunpack.c.h.b16 %v466
    %v2543 = vunpack.c.l.b16 %v467
    %v2544 = vunpack.c.h.b16 %v467
    %v2545 = vunpack.c.l.b16 %v468
    %v2546 = vunpack.c.h.b16 %v468
    %v2547 = vunpack.c.l.b16 %v469
    %v2548 = vunpack.c.h.b16 %v469
    %v2549 = vunpack.c.l.b16 %v470
    %v2550 = vunpack.c.h.b16 %v470
    %v2551 = vunpack.c.l.b16 %v471
    %v2552 = vunpack.c.h.b16 %v471
    %v2553 = vunpack.c.l.b16 %v472
    %v2554 = vunpack.c.h.b16 %v472
    %v2555 = vunpack.c.l.b16 %v473
    %v2556 = vunpack.c.h.b16 %v473
    %v2557 = vunpack.c.l.b16 %v474
    %v2558 = vunpack.c.h.b16 %v474
    %v2559 = vunpack.c.l.b16 %v475
    %v2560 = vunpack.c.h.b16 %v475
    %v2561 = vunpack.c.l.b16 %v476
    %v2562 = vunpack.c.h.b16 %v476
    %v2563 = vunpack.c.l.b16 %v477
    %v2564 = vunpack.c.h.b16 %v477
    %v2565 = vunpack.c.l.b16 %v478
    %v2566 = vunpack.c.h.b16 %v478
    %v2567 = vunpack.c.l.b16 %v479
    %v2568 = vunpack.c.h.b16 %v479
    %v2569 = vunpack.c.l.b16 %v480
    %v2570 = vunpack.c.h.b16 %v480
    %v2571 = vunpack.c.l.b16 %v481
    %v2572 = vunpack.c.h.b16 %v481
    %v2573 = vunpack.c.l.b16 %v482
    %v2574 = vunpack.c.h.b16 %v482
    %v2575 = vunpack.c.l.b16 %v483
    %v2576 = vunpack.c.h.b16 %v483
    %v2577 = vunpack.c.l.b16 %v484
    %v2578 = vunpack.c.h.b16 %v484
    %v2579 = vunpack.c.l.b16 %v485
    %v2580 = vunpack.c.h.b16 %v485
    %v2581 = vunpack.c.l.b16 %v486
    %v2582 = vunpack.c.h.b16 %v486
    %v2583 = vunpack.c.l.b16 %v487
    %v2584 = vunpack.c.h.b16 %v487
    %v2585 = vunpack.c.l.b16 %v488
    %v2586 = vunpack.c.h.b16 %v488
    %v2587 = vunpack.c.l.b16 %v489
    %v2588 = vunpack.c.h.b16 %v489
    %v2589 = vunpack.c.l.b16 %v490
    %v2590 = vunpack.c.h.b16 %v490
    %v2591 = vunpack.c.l.b16 %v491
    %v2592 = vunpack.c.h.b16 %v491
    %v2593 = vunpack.c.l.b16 %v492
    %v2594 = vunpack.c.h.b16 %v492
    %v2595 = vunpack.c.l.b16 %v493
    %v2596 = vunpack.c.h.b16 %v493
    %v2597 = vunpack.c.l.b16 %v494
    %v2598 = vunpack.c.h.b16 %v494
    %v2599 = vunpack.c.l.b16 %v495
    %v2600 = vunpack.c.h.b16 %v495
    %v2601 = vunpack.c.l.b16 %v496
    %v2602 = vunpack.c.h.b16 %v496
    %v2603 = vunpack.c.l.b16 %v497
    %v2604 = vunpack.c.h.b16 %v497
    %v2605 = vunpack.c.l.b16 %v498
    %v2606 = vunpack.c.h.b16 %v498
    %v2607 = vunpack.c.l.b16 %v499
    %v2608 = vunpack.c.h.b16 %v499
    %v2609 = vunpack.c.l.b16 %v500
    %v2610 = vunpack.c.h.b16 %v500
    %v2611 = vunpack.c.l.b16 %v501
    %v2612 = vunpack.c.h.b16 %v501
    %v2613 = vunpack.c.l.b16 %v502
    %v2614 = vunpack.c.h.b16 %v502
    %v2615 = vunpack.c.l.b16 %v503
    %v2616 = vunpack.c.h.b16 %v503
    %v2617 = vunpack.c.l.b16 %v504
    %v2618 = vunpack.c.h.b16 %v504
    %v2619 = vunpack.c.l.b16 %v505
    %v2620 = vunpack.c.h.b16 %v505
    %v2621 = vunpack.c.l.b16 %v506
    %v2622 = vunpack.c.h.b16 %v506
    %v2623 = vunpack.c.l.b16 %v507
    %v2624 = vunpack.c.h.b16 %v507
    %v2625 = vunpack.c.l.b16 %v508
    %v2626 = vunpack.c.h.b16 %v508
    %v2627 = vunpack.c.l.b16 %v509
    %v2628 = vunpack.c.h.b16 %v509
    %v2629 = vunpack.c.l.b16 %v510
    %v2630 = vunpack.c.h.b16 %v510
    %v2631 = vunpack.c.l.b16 %v511
    %v2632 = vunpack.c.h.b16 %v511
    %v2633 = vunpack.c.l.b16 %v512
    %v2634 = vunpack.c.h.b16 %v512
    %v2635 = vunpack.c.l.b16 %v513
    %v2636 = vunpack.c.h.b16 %v513
    %v2637 = vunpack.c.l.b16 %v514
    %v2638 = vunpack.c.h.b16 %v514
    %v2639 = vunpack.c.l.b16 %v515
    %v2640 = vunpack.c.h.b16 %v515
    %v2641 = vunpack.c.l.b16 %v516
    %v2642 = vunpack.c.h.b16 %v516
    %v2643 = vunpack.c.l.b16 %v517
    %v2644 = vunpack.c.h.b16 %v517
    %v2645 = vunpack.c.l.b16 %v518
    %v2646 = vunpack.c.h.b16 %v518
    %v2647 = vunpack.c.l.b16 %v519
    %v2648 = vunpack.c.h.b16 %v519
    %v2649 = vunpack.c.l.b16 %v520
    %v2650 = vunpack.c.h.b16 %v520
    %v2651 = vunpack.c.l.b16 %v521
    %v2652 = vunpack.c.h.b16 %v521
    %v2653 = vunpack.c.l.b16 %v522
    %v2654 = vunpack.c.h.b16 %v522
    %v2655 = vunpack.c.l.b16 %v523
    %v2656 = vunpack.c.h.b16 %v523
    %v2657 = vunpack.c.l.b16 %v524
    %v2658 = vunpack.c.h.b16 %v524
    %v2659 = vunpack.c.l.b16 %v525
    %v2660 = vunpack.c.h.b16 %v525
    %v2661 = vunpack.c.l.b16 %v526
    %v2662 = vunpack.c.h.b16 %v526
    %v2663 = vunpack.c.l.b16 %v527
    %v2664 = vunpack.c.h.b16 %v527
    %v2665 = vunpack.c.l.b16 %v528
    %v2666 = vunpack.c.h.b16 %v528
    %v2667 = vunpack.c.l.b16 %v529
    %v2668 = vunpack.c.h.b16 %v529
    %v2669 = vunpack.c.l.b16 %v530
    %v2670 = vunpack.c.h.b16 %v530
    %v2671 = vunpack.c.l.b16 %v531
    %v2672 = vunpack.c.h.b16 %v531
    %v2673 = vunpack.c.l.b16 %v532
    %v2674 = vunpack.c.h.b16 %v532
    %v2675 = vunpack.c.l.b16 %v533
    %v2676 = vunpack.c.h.b16 %v533
    %v2677 = vunpack.c.l.b16 %v534
    %v2678 = vunpack.c.h.b16 %v534
    %v2679 = vunpack.c.l.b16 %v535
    %v2680 = vunpack.c.h.b16 %v535
    %v2681 = vunpack.c.l.b16 %v536
    %v2682 = vunpack.c.h.b16 %v536
    %v2683 = vunpack.c.l.b16 %v537
    %v2684 = vunpack.c.h.b16 %v537
    %v2685 = vunpack.c.l.b16 %v538
    %v2686 = vunpack.c.h.b16 %v538
    %v2687 = vunpack.c.l.b16 %v539
    %v2688 = vunpack.c.h.b16 %v539
    %v2689 = vunpack.c.l.b16 %v540
    %v2690 = vunpack.c.h.b16 %v540
    %v2691 = vunpack.c.l.b16 %v541
    %v2692 = vunpack.c.h.b16 %v541
    %v2693 = vunpack.c.l.b16 %v542
    %v2694 = vunpack.c.h.b16 %v542
    %v2695 = vunpack.c.l.b16 %v543
    %v2696 = vunpack.c.h.b16 %v543
    %v2697 = vunpack.c.l.b16 %v544
    %v2698 = vunpack.c.h.b16 %v544
    %v2699 = vunpack.c.l.b16 %v545
    %v2700 = vunpack.c.h.b16 %v545
    %v2701 = vunpack.c.l.b16 %v546
    %v2702 = vunpack.c.h.b16 %v546
    %v2703 = vunpack.c.l.b16 %v547
    %v2704 = vunpack.c.h.b16 %v547
    %v2705 = vunpack.c.l.b16 %v548
    %v2706 = vunpack.c.h.b16 %v548
    %v2707 = vunpack.c.l.b16 %v549
    %v2708 = vunpack.c.h.b16 %v549
    %v2709 = vunpack.c.l.b16 %v550
    %v2710 = vunpack.c.h.b16 %v550
    %v2711 = vunpack.c.l.b16 %v551
    %v2712 = vunpack.c.h.b16 %v551
    %v2713 = vunpack.c.l.b16 %v552
    %v2714 = vunpack.c.h.b16 %v552
    %v2715 = vunpack.c.l.b16 %v553
    %v2716 = vunpack.c.h.b16 %v553
    %v2717 = vunpack.c.l.b16 %v554
    %v2718 = vunpack.c.h.b16 %v554
    %v2719 = vunpack.c.l.b16 %v555
    %v2720 = vunpack.c.h.b16 %v555
    %v2721 = vunpack.c.l.b16 %v556
    %v2722 = vunpack.c.h.b16 %v556
    %v2723 = vunpack.c.l.b16 %v557
    %v2724 = vunpack.c.h.b16 %v557
    %v2725 = vunpack.c.l.b16 %v558
    %v2726 = vunpack.c.h.b16 %v558
    %v2727 = vunpack.c.l.b16 %v559
    %v2728 = vunpack.c.h.b16 %v559
    %v2729 = vunpack.c.l.b16 %v560
    %v2730 = vunpack.c.h.b16 %v560
    %v2731 = vunpack.c.l.b16 %v561
    %v2732 = vunpack.c.h.b16 %v561
    %v2733 = vunpack.c.l.b16 %v562
    %v2734 = vunpack.c.h.b16 %v562
    %v2735 = vunpack.c.l.b16 %v563
    %v2736 = vunpack.c.h.b16 %v563
    %v2737 = vunpack.c.l.b16 %v564
    %v2738 = vunpack.c.h.b16 %v564
    %v2739 = vunpack.c.l.b16 %v565
    %v2740 = vunpack.c.h.b16 %v565
    %v2741 = vunpack.c.l.b16 %v566
    %v2742 = vunpack.c.h.b16 %v566
    %v2743 = vunpack.c.l.b16 %v567
    %v2744 = vunpack.c.h.b16 %v567
    %v2745 = vunpack.c.l.b16 %v568
    %v2746 = vunpack.c.h.b16 %v568
    %v2747 = vunpack.c.l.b16 %v569
    %v2748 = vunpack.c.h.b16 %v569
    %v2749 = vunpack.c.l.b16 %v570
    %v2750 = vunpack.c.h.b16 %v570
    %v2751 = vunpack.c.l.b16 %v571
    %v2752 = vunpack.c.h.b16 %v571
    %v2753 = vunpack.c.l.b16 %v572
    %v2754 = vunpack.c.h.b16 %v572
    %v2755 = vunpack.c.l.b16 %v573
    %v2756 = vunpack.c.h.b16 %v573
    %v2757 = vunpack.c.l.b16 %v574
    %v2758 = vunpack.c.h.b16 %v574
    %v2759 = vunpack.c.l.b16 %v575
    %v2760 = vunpack.c.h.b16 %v575
    %v2761 = vunpack.c.l.b16 %v576
    %v2762 = vunpack.c.h.b16 %v576
    %v2763 = vunpack.c.l.b16 %v577
    %v2764 = vunpack.c.h.b16 %v577
    %v2765 = vunpack.c.l.b16 %v578
    %v2766 = vunpack.c.h.b16 %v578
    %v2767 = vunpack.c.l.b16 %v579
    %v2768 = vunpack.c.h.b16 %v579
    %v2769 = vunpack.c.l.b16 %v580
    %v2770 = vunpack.c.h.b16 %v580
    %v2771 = vunpack.c.l.b16 %v581
    %v2772 = vunpack.c.h.b16 %v581
    %v2773 = vunpack.c.l.b16 %v582
    %v2774 = vunpack.c.h.b16 %v582
    %v2775 = vunpack.c.l.b16 %v583
    %v2776 = vunpack.c.h.b16 %v583
    %v2777 = vunpack.c.l.b16 %v584
    %v2778 = vunpack.c.h.b16 %v584
    %v2779 = vunpack.c.l.b16 %v585
    %v2780 = vunpack.c.h.b16 %v585
    %v2781 = vunpack.c.l.b16 %v586
    %v2782 = vunpack.c.h.b16 %v586
    %v2783 = vunpack.c.l.b16 %v587
    %v2784 = vunpack.c.h.b16 %v587
    %v2785 = vunpack.c.l.b16 %v588
    %v2786 = vunpack.c.h.b16 %v588
    %v2787 = vunpack.c.l.b16 %v589
    %v2788 = vunpack.c.h.b16 %v589
    %v2789 = vunpack.c.l.b16 %v590
    %v2790 = vunpack.c.h.b16 %v590
    %v2791 = vunpack.c.l.b16 %v591
    %v2792 = vunpack.c.h.b16 %v591
    %v2793 = vunpack.c.l.b16 %v592
    %v2794 = vunpack.c.h.b16 %v592
    %v2795 = vunpack.c.l.b16 %v593
    %v2796 = vunpack.c.h.b16 %v593
    %v2797 = vunpack.c.l.b16 %v594
    %v2798 = vunpack.c.h.b16 %v594
    %v2799 = vunpack.c.l.b16 %v595
    %v2800 = vunpack.c.h.b16 %v595
    %v2801 = vunpack.c.l.b16 %v596
    %v2802 = vunpack.c.h.b16 %v596
    %v2803 = vunpack.c.l.b16 %v597
    %v2804 = vunpack.c.h.b16 %v597
    %v2805 = vunpack.c.l.b16 %v598
    %v2806 = vunpack.c.h.b16 %v598
    %v2807 = vunpack.c.l.b16 %v599
    %v2808 = vunpack.c.h.b16 %v599
    %v2809 = vunpack.c.l.b16 %v600
    %v2810 = vunpack.c.h.b16 %v600
    %v2811 = vunpack.c.l.b16 %v601
    %v2812 = vunpack.c.h.b16 %v601
    %v2813 = vunpack.c.l.b16 %v602
    %v2814 = vunpack.c.h.b16 %v602
    %v2815 = vunpack.c.l.b16 %v603
    %v2816 = vunpack.c.h.b16 %v603
    %v2817 = vunpack.c.l.b16 %v604
    %v2818 = vunpack.c.h.b16 %v604
    %v2819 = vunpack.c.l.b16 %v605
    %v2820 = vunpack.c.h.b16 %v605
    %v2821 = vunpack.c.l.b16 %v606
    %v2822 = vunpack.c.h.b16 %v606
    %v2823 = vunpack.c.l.b16 %v607
    %v2824 = vunpack.c.h.b16 %v607
    %v2825 = vunpack.c.l.b16 %v608
    %v2826 = vunpack.c.h.b16 %v608
    %v2827 = vunpack.c.l.b16 %v609
    %v2828 = vunpack.c.h.b16 %v609
    %v2829 = vunpack.c.l.b16 %v610
    %v2830 = vunpack.c.h.b16 %v610
    %v2831 = vunpack.c.l.b16 %v611
    %v2832 = vunpack.c.h.b16 %v611
    %v2833 = vunpack.c.l.b16 %v612
    %v2834 = vunpack.c.h.b16 %v612
    %v2835 = vunpack.c.l.b16 %v613
    %v2836 = vunpack.c.h.b16 %v613
    %v2837 = vunpack.c.l.b16 %v614
    %v2838 = vunpack.c.h.b16 %v614
    %v2839 = vunpack.c.l.b16 %v615
    %v2840 = vunpack.c.h.b16 %v615
    %v2841 = vunpack.c.l.b16 %v616
    %v2842 = vunpack.c.h.b16 %v616
    %v2843 = vunpack.c.l.b16 %v617
    %v2844 = vunpack.c.h.b16 %v617
    %v2845 = vunpack.c.l.b16 %v618
    %v2846 = vunpack.c.h.b16 %v618
    %v2847 = vunpack.c.l.b16 %v619
    %v2848 = vunpack.c.h.b16 %v619
    %v2849 = vunpack.c.l.b16 %v620
    %v2850 = vunpack.c.h.b16 %v620
    %v2851 = vunpack.c.l.b16 %v621
    %v2852 = vunpack.c.h.b16 %v621
    %v2853 = vunpack.c.l.b16 %v622
    %v2854 = vunpack.c.h.b16 %v622
    %v2855 = vunpack.c.l.b16 %v623
    %v2856 = vunpack.c.h.b16 %v623
    %v2857 = vunpack.c.l.b16 %v624
    %v2858 = vunpack.c.h.b16 %v624
    %v2859 = vunpack.c.l.b16 %v625
    %v2860 = vunpack.c.h.b16 %v625
    %v2861 = vunpack.c.l.b16 %v626
    %v2862 = vunpack.c.h.b16 %v626
    %v2863 = vunpack.c.l.b16 %v627
    %v2864 = vunpack.c.h.b16 %v627
    %v2865 = vunpack.c.l.b16 %v628
    %v2866 = vunpack.c.h.b16 %v628
    %v2867 = vunpack.c.l.b16 %v629
    %v2868 = vunpack.c.h.b16 %v629
    %v2869 = vunpack.c.l.b16 %v630
    %v2870 = vunpack.c.h.b16 %v630
    %v2871 = vunpack.c.l.b16 %v631
    %v2872 = vunpack.c.h.b16 %v631
    %v2873 = vunpack.c.l.b16 %v632
    %v2874 = vunpack.c.h.b16 %v632
    %v2875 = vunpack.c.l.b16 %v633
    %v2876 = vunpack.c.h.b16 %v633
    %v2877 = vunpack.c.l.b16 %v634
    %v2878 = vunpack.c.h.b16 %v634
    %v2879 = vunpack.c.l.b16 %v635
    %v2880 = vunpack.c.h.b16 %v635
    %v2881 = vunpack.c.l.b16 %v636
    %v2882 = vunpack.c.h.b16 %v636
    %v2883 = vunpack.c.l.b16 %v637
    %v2884 = vunpack.c.h.b16 %v637
    %v2885 = vunpack.c.l.b16 %v638
    %v2886 = vunpack.c.h.b16 %v638
    %v2887 = vunpack.c.l.b16 %v639
    %v2888 = vunpack.c.h.b16 %v639
    %v2889 = vunpack.c.l.b16 %v640
    %v2890 = vunpack.c.h.b16 %v640
    %v2891 = vunpack.c.l.b16 %v641
    %v2892 = vunpack.c.h.b16 %v641
    %v2893 = vunpack.c.l.b16 %v642
    %v2894 = vunpack.c.h.b16 %v642
    %v2895 = vunpack.c.l.b16 %v643
    %v2896 = vunpack.c.h.b16 %v643
    %v2897 = vunpack.c.l.b16 %v644
    %v2898 = vunpack.c.h.b16 %v644
    %v2899 = vunpack.c.l.b16 %v645
    %v2900 = vunpack.c.h.b16 %v645
    %v2901 = vunpack.c.l.b16 %v646
    %v2902 = vunpack.c.h.b16 %v646
    %v2903 = vunpack.c.l.b16 %v647
    %v2904 = vunpack.c.h.b16 %v647
    %v2905 = vunpack.c.l.b16 %v648
    %v2906 = vunpack.c.h.b16 %v648
    %v2907 = vunpack.c.l.b16 %v649
    %v2908 = vunpack.c.h.b16 %v649
    %v2909 = vunpack.c.l.b16 %v650
    %v2910 = vunpack.c.h.b16 %v650
    %v2911 = vunpack.c.l.b16 %v651
    %v2912 = vunpack.c.h.b16 %v651
    %v2913 = vunpack.c.l.b16 %v652
    %v2914 = vunpack.c.h.b16 %v652
    %v2915 = vunpack.c.l.b16 %v653
    %v2916 = vunpack.c.h.b16 %v653
    %v2917 = vunpack.c.l.b16 %v654
    %v2918 = vunpack.c.h.b16 %v654
    %v2919 = vunpack.c.l.b16 %v655
    %v2920 = vunpack.c.h.b16 %v655
    %v2921 = vunpack.c.l.b16 %v656
    %v2922 = vunpack.c.h.b16 %v656
    %v2923 = vunpack.c.l.b16 %v657
    %v2924 = vunpack.c.h.b16 %v657
    %v2925 = vunpack.c.l.b16 %v658
    %v2926 = vunpack.c.h.b16 %v658
    %v2927 = vunpack.c.l.b16 %v659
    %v2928 = vunpack.c.h.b16 %v659
    %v2929 = vunpack.c.l.b16 %v660
    %v2930 = vunpack.c.h.b16 %v660
    %v2931 = vunpack.c.l.b16 %v661
    %v2932 = vunpack.c.h.b16 %v661
    %v2933 = vunpack.c.l.b16 %v662
    %v2934 = vunpack.c.h.b16 %v662
    %v2935 = vunpack.c.l.b16 %v663
    %v2936 = vunpack.c.h.b16 %v663
    %v2937 = vunpack.c.l.b16 %v664
    %v2938 = vunpack.c.h.b16 %v664
    %v2939 = vunpack.c.l.b16 %v665
    %v2940 = vunpack.c.h.b16 %v665
    %v2941 = vunpack.c.l.b16 %v666
    %v2942 = vunpack.c.h.b16 %v666
    %v2943 = vunpack.c.l.b16 %v667
    %v2944 = vunpack.c.h.b16 %v667
    %v2945 = vunpack.c.l.b16 %v668
    %v2946 = vunpack.c.h.b16 %v668
    %v2947 = vunpack.c.l.b16 %v669
    %v2948 = vunpack.c.h.b16 %v669
    %v2949 = vunpack.c.l.b16 %v670
    %v2950 = vunpack.c.h.b16 %v670
    %v2951 = vunpack.c.l.b16 %v671
    %v2952 = vunpack.c.h.b16 %v671
    %v2953 = vunpack.c.l.b16 %v672
    %v2954 = vunpack.c.h.b16 %v672
    %v2955 = vunpack.c.l.b16 %v673
    %v2956 = vunpack.c.h.b16 %v673
    %v2957 = vunpack.c.l.b16 %v674
    %v2958 = vunpack.c.h.b16 %v674
    %v2959 = vunpack.c.l.b16 %v675
    %v2960 = vunpack.c.h.b16 %v675
    %v2961 = vunpack.c.l.b16 %v676
    %v2962 = vunpack.c.h.b16 %v676
    %v2963 = vunpack.c.l.b16 %v677
    %v2964 = vunpack.c.h.b16 %v677
    %v2965 = vunpack.c.l.b16 %v678
    %v2966 = vunpack.c.h.b16 %v678
    %v2967 = vunpack.c.l.b16 %v679
    %v2968 = vunpack.c.h.b16 %v679
    %v2969 = vunpack.c.l.b16 %v680
    %v2970 = vunpack.c.h.b16 %v680
    %v2971 = vunpack.c.l.b16 %v681
    %v2972 = vunpack.c.h.b16 %v681
    %v2973 = vunpack.c.l.b16 %v682
    %v2974 = vunpack.c.h.b16 %v682
    %v2975 = vunpack.c.l.b16 %v683
    %v2976 = vunpack.c.h.b16 %v683
    %v2977 = vunpack.c.l.b16 %v684
    %v2978 = vunpack.c.h.b16 %v684
    %v2979 = vunpack.c.l.b16 %v685
    %v2980 = vunpack.c.h.b16 %v685
    %v2981 = vunpack.c.l.b16 %v686
    %v2982 = vunpack.c.h.b16 %v686
    %v2983 = vunpack.c.l.b16 %v687
    %v2984 = vunpack.c.h.b16 %v687
    %v2985 = vunpack.c.l.b16 %v688
    %v2986 = vunpack.c.h.b16 %v688
    %v2987 = vunpack.c.l.b16 %v689
    %v2988 = vunpack.c.h.b16 %v689
    %v2989 = vunpack.c.l.b16 %v690
    %v2990 = vunpack.c.h.b16 %v690
    %v2991 = vunpack.c.l.b16 %v691
    %v2992 = vunpack.c.h.b16 %v691
    %v2993 = vunpack.c.l.b16 %v692
    %v2994 = vunpack.c.h.b16 %v692
    %v2995 = vunpack.c.l.b16 %v693
    %v2996 = vunpack.c.h.b16 %v693
    %v2997 = vunpack.c.l.b16 %v694
    %v2998 = vunpack.c.h.b16 %v694
    %v2999 = vunpack.c.l.b16 %v695
    %v3000 = vunpack.c.h.b16 %v695
    %v3001 = vunpack.c.l.b16 %v696
    %v3002 = vunpack.c.h.b16 %v696
    %v3003 = vunpack.c.l.b16 %v697
    %v3004 = vunpack.c.h.b16 %v697
    %v3005 = vunpack.c.l.b16 %v698
    %v3006 = vunpack.c.h.b16 %v698
    %v3007 = vunpack.c.l.b16 %v699
    %v3008 = vunpack.c.h.b16 %v699
    %v3009 = vunpack.c.l.b16 %v700
    %v3010 = vunpack.c.h.b16 %v700
    %v3011 = vunpack.c.l.b16 %v701
    %v3012 = vunpack.c.h.b16 %v701
    %v3013 = vunpack.c.l.b16 %v702
    %v3014 = vunpack.c.h.b16 %v702
    %v3015 = vunpack.c.l.b16 %v703
    %v3016 = vunpack.c.h.b16 %v703
    %v3017 = vunpack.c.l.b16 %v704
    %v3018 = vunpack.c.h.b16 %v704
    %v3019 = vunpack.c.l.b16 %v705
    %v3020 = vunpack.c.h.b16 %v705
    %v3021 = vunpack.c.l.b16 %v706
    %v3022 = vunpack.c.h.b16 %v706
    %v3023 = vunpack.c.l.b16 %v707
    %v3024 = vunpack.c.h.b16 %v707
    %v3025 = vunpack.c.l.b16 %v708
    %v3026 = vunpack.c.h.b16 %v708
    %v3027 = vunpack.c.l.b16 %v709
    %v3028 = vunpack.c.h.b16 %v709
    %v3029 = vunpack.c.l.b16 %v710
    %v3030 = vunpack.c.h.b16 %v710
    %v3031 = vunpack.c.l.b16 %v711
    %v3032 = vunpack.c.h.b16 %v711
    %v3033 = vunpack.c.l.b16 %v712
    %v3034 = vunpack.c.h.b16 %v712
    %v3035 = vunpack.c.l.b16 %v713
    %v3036 = vunpack.c.h.b16 %v713
    %v3037 = vunpack.c.l.b16 %v714
    %v3038 = vunpack.c.h.b16 %v714
    %v3039 = vunpack.c.l.b16 %v715
    %v3040 = vunpack.c.h.b16 %v715
    %v3041 = vunpack.c.l.b16 %v716
    %v3042 = vunpack.c.h.b16 %v716
    %v3043 = vunpack.c.l.b16 %v717
    %v3044 = vunpack.c.h.b16 %v717
    %v3045 = vunpack.c.l.b16 %v718
    %v3046 = vunpack.c.h.b16 %v718
    %v3047 = vunpack.c.l.b16 %v719
    %v3048 = vunpack.c.h.b16 %v719
    %v3049 = vunpack.c.l.b16 %v720
    %v3050 = vunpack.c.h.b16 %v720
    %v3051 = vunpack.c.l.b16 %v721
    %v3052 = vunpack.c.h.b16 %v721
    %v3053 = vunpack.c.l.b16 %v722
    %v3054 = vunpack.c.h.b16 %v722
    %v3055 = vunpack.c.l.b16 %v723
    %v3056 = vunpack.c.h.b16 %v723
    %v3057 = vunpack.c.l.b16 %v724
    %v3058 = vunpack.c.h.b16 %v724
    %v3059 = vunpack.c.l.b16 %v725
    %v3060 = vunpack.c.h.b16 %v725
    %v3061 = vunpack.c.l.b16 %v726
    %v3062 = vunpack.c.h.b16 %v726
    %v3063 = vunpack.c.l.b16 %v727
    %v3064 = vunpack.c.h.b16 %v727
    %v3065 = vunpack.c.l.b16 %v728
    %v3066 = vunpack.c.h.b16 %v728
    %v3067 = vunpack.c.l.b16 %v729
    %v3068 = vunpack.c.h.b16 %v729
    %v3069 = vunpack.c.l.b16 %v730
    %v3070 = vunpack.c.h.b16 %v730
    %v3071 = vunpack.c.l.b16 %v731
    %v3072 = vunpack.c.h.b16 %v731
    %v3073 = vunpack.c.l.b16 %v732
    %v3074 = vunpack.c.h.b16 %v732
    %v3075 = vunpack.c.l.b16 %v733
    %v3076 = vunpack.c.h.b16 %v733
    %v3077 = vunpack.c.l.b16 %v734
    %v3078 = vunpack.c.h.b16 %v734
    %v3079 = vunpack.c.l.b16 %v735
    %v3080 = vunpack.c.h.b16 %v735
    %v3081 = vunpack.c.l.b16 %v736
    %v3082 = vunpack.c.h.b16 %v736
    %v3083 = vunpack.c.l.b16 %v737
    %v3084 = vunpack.c.h.b16 %v737
    %v3085 = vunpack.c.l.b16 %v738
    %v3086 = vunpack.c.h.b16 %v738
    %v3087 = vunpack.c.l.b16 %v739
    %v3088 = vunpack.c.h.b16 %v739
    %v3089 = vunpack.c.l.b16 %v740
    %v3090 = vunpack.c.h.b16 %v740
    %v3091 = vunpack.c.l.b16 %v741
    %v3092 = vunpack.c.h.b16 %v741
    %v3093 = vunpack.c.l.b16 %v742
    %v3094 = vunpack.c.h.b16 %v742
    %v3095 = vunpack.c.l.b16 %v743
    %v3096 = vunpack.c.h.b16 %v743
    %v3097 = vunpack.c.l.b16 %v744
    %v3098 = vunpack.c.h.b16 %v744
    %v3099 = vunpack.c.l.b16 %v745
    %v3100 = vunpack.c.h.b16 %v745
    %v3101 = vunpack.c.l.b16 %v746
    %v3102 = vunpack.c.h.b16 %v746
    %v3103 = vunpack.c.l.b16 %v747
    %v3104 = vunpack.c.h.b16 %v747
    %v3105 = vunpack.c.l.b16 %v748
    %v3106 = vunpack.c.h.b16 %v748
    %v3107 = vunpack.c.l.b16 %v749
    %v3108 = vunpack.c.h.b16 %v749
    %v3109 = vunpack.c.l.b16 %v750
    %v3110 = vunpack.c.h.b16 %v750
    %v3111 = vunpack.c.l.b16 %v751
    %v3112 = vunpack.c.h.b16 %v751
    %v3113 = vunpack.c.l.b16 %v752
    %v3114 = vunpack.c.h.b16 %v752
    %v3115 = vunpack.c.l.b16 %v753
    %v3116 = vunpack.c.h.b16 %v753
    %v3117 = vunpack.c.l.b16 %v754
    %v3118 = vunpack.c.h.b16 %v754
    %v3119 = vunpack.c.l.b16 %v755
    %v3120 = vunpack.c.h.b16 %v755
    %v3121 = vunpack.c.l.b16 %v756
    %v3122 = vunpack.c.h.b16 %v756
    %v3123 = vunpack.c.l.b16 %v757
    %v3124 = vunpack.c.h.b16 %v757
    %v3125 = vunpack.c.l.b16 %v758
    %v3126 = vunpack.c.h.b16 %v758
    %v3127 = vunpack.c.l.b16 %v759
    %v3128 = vunpack.c.h.b16 %v759
    %v3129 = vunpack.c.l.b16 %v760
    %v3130 = vunpack.c.h.b16 %v760
    %v3131 = vunpack.c.l.b16 %v761
    %v3132 = vunpack.c.h.b16 %v761
    %v3133 = vunpack.c.l.b16 %v762
    %v3134 = vunpack.c.h.b16 %v762
    %v3135 = vunpack.c.l.b16 %v763
    %v3136 = vunpack.c.h.b16 %v763
    %v3137 = vunpack.c.l.b16 %v764
    %v3138 = vunpack.c.h.b16 %v764
    %v3139 = vunpack.c.l.b16 %v765
    %v3140 = vunpack.c.h.b16 %v765
    %v3141 = vunpack.c.l.b16 %v766
    %v3142 = vunpack.c.h.b16 %v766
    %v3143 = vunpack.c.l.b16 %v767
    %v3144 = vunpack.c.h.b16 %v767
    %v3145 = vunpack.c.l.b16 %v768
    %v3146 = vunpack.c.h.b16 %v768
    %v3147 = vunpack.c.l.b16 %v769
    %v3148 = vunpack.c.h.b16 %v769
    %v3149 = vunpack.c.l.b16 %v770
    %v3150 = vunpack.c.h.b16 %v770
    %v3151 = vunpack.c.l.b16 %v771
    %v3152 = vunpack.c.h.b16 %v771
    %v3153 = vunpack.c.l.b16 %v772
    %v3154 = vunpack.c.h.b16 %v772
    %v3155 = vunpack.c.l.b16 %v773
    %v3156 = vunpack.c.h.b16 %v773
    %v3157 = vunpack.c.l.b16 %v774
    %v3158 = vunpack.c.h.b16 %v774
    %v3159 = vunpack.c.l.b16 %v775
    %v3160 = vunpack.c.h.b16 %v775
    %v3161 = vunpack.c.l.b16 %v776
    %v3162 = vunpack.c.h.b16 %v776
    %v3163 = vunpack.c.l.b16 %v777
    %v3164 = vunpack.c.h.b16 %v777
    %v3165 = vunpack.c.l.b16 %v778
    %v3166 = vunpack.c.h.b16 %v778
    %v3167 = vunpack.c.l.b16 %v779
    %v3168 = vunpack.c.h.b16 %v779
    %v3169 = vunpack.c.l.b16 %v780
    %v3170 = vunpack.c.h.b16 %v780
    %v3171 = vunpack.c.l.b16 %v781
    %v3172 = vunpack.c.h.b16 %v781
    %v3173 = vunpack.c.l.b16 %v782
    %v3174 = vunpack.c.h.b16 %v782
    %v3175 = vunpack.c.l.b16 %v783
    %v3176 = vunpack.c.h.b16 %v783
    %v3177 = vunpack.c.l.b16 %v784
    %v3178 = vunpack.c.h.b16 %v784
    %v3179 = vunpack.c.l.b16 %v785
    %v3180 = vunpack.c.h.b16 %v785
    %v3181 = vunpack.c.l.b16 %v786
    %v3182 = vunpack.c.h.b16 %v786
    %v3183 = vunpack.c.l.b16 %v787
    %v3184 = vunpack.c.h.b16 %v787
    %v3185 = vunpack.c.l.b16 %v788
    %v3186 = vunpack.c.h.b16 %v788
    %v3187 = vunpack.c.l.b16 %v789
    %v3188 = vunpack.c.h.b16 %v789
    %v3189 = vunpack.c.l.b16 %v790
    %v3190 = vunpack.c.h.b16 %v790
    %v3191 = vunpack.c.l.b16 %v791
    %v3192 = vunpack.c.h.b16 %v791
    %v3193 = vunpack.c.l.b16 %v792
    %v3194 = vunpack.c.h.b16 %v792
    %v3195 = vunpack.c.l.b16 %v793
    %v3196 = vunpack.c.h.b16 %v793
    %v3197 = vunpack.c.l.b16 %v794
    %v3198 = vunpack.c.h.b16 %v794
    %v3199 = vunpack.c.l.b16 %v795
    %v3200 = vunpack.c.h.b16 %v795
    %v3201 = vunpack.c.l.b16 %v796
    %v3202 = vunpack.c.h.b16 %v796
    %v3203 = vunpack.c.l.b16 %v797
    %v3204 = vunpack.c.h.b16 %v797
    %v3205 = vunpack.c.l.b16 %v798
    %v3206 = vunpack.c.h.b16 %v798
    %v3207 = vunpack.c.l.b16 %v799
    %v3208 = vunpack.c.h.b16 %v799
    %v3209 = vunpack.c.l.b16 %v800
    %v3210 = vunpack.c.h.b16 %v800
    %v3211 = vunpack.c.l.b16 %v801
    %v3212 = vunpack.c.h.b16 %v801
    %v3213 = vunpack.c.l.b16 %v802
    %v3214 = vunpack.c.h.b16 %v802
    %v3215 = vunpack.c.l.b16 %v803
    %v3216 = vunpack.c.h.b16 %v803
    %v3217 = vunpack.c.l.b16 %v804
    %v3218 = vunpack.c.h.b16 %v804
    %v3219 = vunpack.c.l.b16 %v805
    %v3220 = vunpack.c.h.b16 %v805
    %v3221 = vunpack.c.l.b16 %v806
    %v3222 = vunpack.c.h.b16 %v806
    %v3223 = vunpack.c.l.b16 %v807
    %v3224 = vunpack.c.h.b16 %v807
    %v3225 = vunpack.c.l.b16 %v808
    %v3226 = vunpack.c.h.b16 %v808
    %v3227 = vunpack.c.l.b16 %v809
    %v3228 = vunpack.c.h.b16 %v809
    %v3229 = vpack.c.b16 %v1665, %v1661
    %v3230 = vpack.c.b16 %v1666, %v1662
    %v3231 = vpack.c.b16 %v1667, %v1663
    %v3232 = vpack.c.b16 %v1668, %v1664
    %v3233 = vpack.c.b16 %v1673, %v1669
    %v3234 = vpack.c.b16 %v1674, %v1670
    %v3235 = vpack.c.b16 %v1675, %v1671
    %v3236 = vpack.c.b16 %v1676, %v1672
    %v3237 = vpack.c.b16 %v1681, %v1677
    %v3238 = vpack.c.b16 %v1682, %v1678
    %v3239 = vpack.c.b16 %v1683, %v1679
    %v3240 = vpack.c.b16 %v1684, %v1680
    %v3241 = vpack.c.b16 %v1689, %v1685
    %v3242 = vpack.c.b16 %v1690, %v1686
    %v3243 = vpack.c.b16 %v1691, %v1687
    %v3244 = vpack.c.b16 %v1692, %v1688
    %v3245 = vpack.c.b16 %v1697, %v1693
    %v3246 = vpack.c.b16 %v1698, %v1694
    %v3247 = vpack.c.b16 %v1699, %v1695
    %v3248 = vpack.c.b16 %v1700, %v1696
    %v3249 = vpack.c.b16 %v1705, %v1701
    %v3250 = vpack.c.b16 %v1706, %v1702
    %v3251 = vpack.c.b16 %v1707, %v1703
    %v3252 = vpack.c.b16 %v1708, %v1704
    %v3253 = vpack.c.b16 %v1713, %v1709
    %v3254 = vpack.c.b16 %v1714, %v1710
    %v3255 = vpack.c.b16 %v1715, %v1711
    %v3256 = vpack.c.b16 %v1716, %v1712
    %v3257 = vpack.c.b16 %v1721, %v1717
    %v3258 = vpack.c.b16 %v1722, %v1718
    %v3259 = vpack.c.b16 %v1723, %v1719
    %v3260 = vpack.c.b16 %v1724, %v1720
    %v3261 = vpack.c.b16 %v1729, %v1725
    %v3262 = vpack.c.b16 %v1730, %v1726
    %v3263 = vpack.c.b16 %v1731, %v1727
    %v3264 = vpack.c.b16 %v1732, %v1728
    %v3265 = vpack.c.b16 %v1737, %v1733
    %v3266 = vpack.c.b16 %v1738, %v1734
    %v3267 = vpack.c.b16 %v1739, %v1735
    %v3268 = vpack.c.b16 %v1740, %v1736
    %v3269 = vpack.c.b16 %v1745, %v1741
    %v3270 = vpack.c.b16 %v1746, %v1742
    %v3271 = vpack.c.b16 %v1747, %v1743
    %v3272 = vpack.c.b16 %v1748, %v1744
    %v3273 = vpack.c.b16 %v1753, %v1749
    %v3274 = vpack.c.b16 %v1754, %v1750
    %v3275 = vpack.c.b16 %v1755, %v1751
    %v3276 = vpack.c.b16 %v1756, %v1752
    %v3277 = vpack.c.b16 %v1761, %v1757
    %v3278 = vpack.c.b16 %v1762, %v1758
    %v3279 = vpack.c.b16 %v1763, %v1759
    %v3280 = vpack.c.b16 %v1764, %v1760
    %v3281 = vpack.c.b16 %v1769, %v1765
    %v3282 = vpack.c.b16 %v1770, %v1766
    %v3283 = vpack.c.b16 %v1771, %v1767
    %v3284 = vpack.c.b16 %v1772, %v1768
    %v3285 = vpack.c.b16 %v1777, %v1773
    %v3286 = vpack.c.b16 %v1778, %v1774
    %v3287 = vpack.c.b16 %v1779, %v1775
    %v3288 = vpack.c.b16 %v1780, %v1776
    %v3289 = vpack.c.b16 %v1785, %v1781
    %v3290 = vpack.c.b16 %v1786, %v1782
    %v3291 = vpack.c.b16 %v1787, %v1783
    %v3292 = vpack.c.b16 %v1788, %v1784
    %v3293 = vpack.c.b16 %v1793, %v1789
    %v3294 = vpack.c.b16 %v1794, %v1790
    %v3295 = vpack.c.b16 %v1795, %v1791
    %v3296 = vpack.c.b16 %v1796, %v1792
    %v3297 = vpack.c.b16 %v1801, %v1797
    %v3298 = vpack.c.b16 %v1802, %v1798
    %v3299 = vpack.c.b16 %v1803, %v1799
    %v3300 = vpack.c.b16 %v1804, %v1800
    %v3301 = vpack.c.b16 %v1809, %v1805
    %v3302 = vpack.c.b16 %v1810, %v1806
    %v3303 = vpack.c.b16 %v1811, %v1807
    %v3304 = vpack.c.b16 %v1812, %v1808
    %v3305 = vpack.c.b16 %v1817, %v1813
    %v3306 = vpack.c.b16 %v1818, %v1814
    %v3307 = vpack.c.b16 %v1819, %v1815
    %v3308 = vpack.c.b16 %v1820, %v1816
    %v3309 = vpack.c.b16 %v1825, %v1821
    %v3310 = vpack.c.b16 %v1826, %v1822
    %v3311 = vpack.c.b16 %v1827, %v1823
    %v3312 = vpack.c.b16 %v1828, %v1824
    %v3313 = vpack.c.b16 %v1833, %v1829
    %v3314 = vpack.c.b16 %v1834, %v1830
    %v3315 = vpack.c.b16 %v1835, %v1831
    %v3316 = vpack.c.b16 %v1836, %v1832
    %v3317 = vpack.c.b16 %v1841, %v1837
    %v3318 = vpack.c.b16 %v1842, %v1838
    %v3319 = vpack.c.b16 %v1843, %v1839
    %v3320 = vpack.c.b16 %v1844, %v1840
    %v3321 = vpack.c.b16 %v1849, %v1845
    %v3322 = vpack.c.b16 %v1850, %v1846
    %v3323 = vpack.c.b16 %v1851, %v1847
    %v3324 = vpack.c.b16 %v1852, %v1848
    %v3325 = vpack.c.b16 %v1857, %v1853
    %v3326 = vpack.c.b16 %v1858, %v1854
    %v3327 = vpack.c.b16 %v1859, %v1855
    %v3328 = vpack.c.b16 %v1860, %v1856
    %v3329 = vpack.c.b16 %v1865, %v1861
    %v3330 = vpack.c.b16 %v1866, %v1862
    %v3331 = vpack.c.b16 %v1867, %v1863
    %v3332 = vpack.c.b16 %v1868, %v1864
    %v3333 = vpack.c.b16 %v1873, %v1869
    %v3334 = vpack.c.b16 %v1874, %v1870
    %v3335 = vpack.c.b16 %v1875, %v1871
    %v3336 = vpack.c.b16 %v1876, %v1872
    %v3337 = vpack.c.b16 %v1881, %v1877
    %v3338 = vpack.c.b16 %v1882, %v1878
    %v3339 = vpack.c.b16 %v1883, %v1879
    %v3340 = vpack.c.b16 %v1884, %v1880
    %v3341 = vpack.c.b16 %v1889, %v1885
    %v3342 = vpack.c.b16 %v1890, %v1886
    %v3343 = vpack.c.b16 %v1891, %v1887
    %v3344 = vpack.c.b16 %v1892, %v1888
    %v3345 = vpack.c.b16 %v1897, %v1893
    %v3346 = vpack.c.b16 %v1898, %v1894
    %v3347 = vpack.c.b16 %v1899, %v1895
    %v3348 = vpack.c.b16 %v1900, %v1896
    %v3349 = vpack.c.b16 %v1905, %v1901
    %v3350 = vpack.c.b16 %v1906, %v1902
    %v3351 = vpack.c.b16 %v1907, %v1903
    %v3352 = vpack.c.b16 %v1908, %v1904
    %v3353 = vpack.c.b16 %v1913, %v1909
    %v3354 = vpack.c.b16 %v1914, %v1910
    %v3355 = vpack.c.b16 %v1915, %v1911
    %v3356 = vpack.c.b16 %v1916, %v1912
    %v3357 = vpack.c.b16 %v1921, %v1917
    %v3358 = vpack.c.b16 %v1922, %v1918
    %v3359 = vpack.c.b16 %v1923, %v1919
    %v3360 = vpack.c.b16 %v1924, %v1920
    %v3361 = vpack.c.b16 %v1929, %v1925
    %v3362 = vpack.c.b16 %v1930, %v1926
    %v3363 = vpack.c.b16 %v1931, %v1927
    %v3364 = vpack.c.b16 %v1932, %v1928
    %v3365 = vpack.c.b16 %v1937, %v1933
    %v3366 = vpack.c.b16 %v1938, %v1934
    %v3367 = vpack.c.b16 %v1939, %v1935
    %v3368 = vpack.c.b16 %v1940, %v1936
    %v3369 = vpack.c.b16 %v1945, %v1941
    %v3370 = vpack.c.b16 %v1946, %v1942
    %v3371 = vpack.c.b16 %v1947, %v1943
    %v3372 = vpack.c.b16 %v1948, %v1944
    %v3373 = vpack.c.b16 %v1953, %v1949
    %v3374 = vpack.c.b16 %v1954, %v1950
    %v3375 = vpack.c.b16 %v1955, %v1951
    %v3376 = vpack.c.b16 %v1956, %v1952
    %v3377 = vpack.c.b16 %v1961, %v1957
    %v3378 = vpack.c.b16 %v1962, %v1958
    %v3379 = vpack.c.b16 %v1963, %v1959
    %v3380 = vpack.c.b16 %v1964, %v1960
    %v3381 = vpack.c.b16 %v1969, %v1965
    %v3382 = vpack.c.b16 %v1970, %v1966
    %v3383 = vpack.c.b16 %v1971, %v1967
    %v3384 = vpack.c.b16 %v1972, %v1968
    %v3385 = vpack.c.b16 %v1977, %v1973
    %v3386 = vpack.c.b16 %v1978, %v1974
    %v3387 = vpack.c.b16 %v1979, %v1975
    %v3388 = vpack.c.b16 %v1980, %v1976
    %v3389 = vpack.c.b16 %v1985, %v1981
    %v3390 = vpack.c.b16 %v1986, %v1982
    %v3391 = vpack.c.b16 %v1987, %v1983
    %v3392 = vpack.c.b16 %v1988, %v1984
    %v3393 = vpack.c.b16 %v1993, %v1989
    %v3394 = vpack.c.b16 %v1994, %v1990
    %v3395 = vpack.c.b16 %v1995, %v1991
    %v3396 = vpack.c.b16 %v1996, %v1992
    %v3397 = vpack.c.b16 %v2001, %v1997
    %v3398 = vpack.c.b16 %v2002, %v1998
    %v3399 = vpack.c.b16 %v2003, %v1999
    %v3400 = vpack.c.b16 %v2004, %v2000
    %v3401 = vpack.c.b16 %v2009, %v2005
    %v3402 = vpack.c.b16 %v2010, %v2006
    %v3403 = vpack.c.b16 %v2011, %v2007
    %v3404 = vpack.c.b16 %v2012, %v2008
    %v3405 = vpack.c.b16 %v2017, %v2013
    %v3406 = vpack.c.b16 %v2018, %v2014
    %v3407 = vpack.c.b16 %v2019, %v2015
    %v3408 = vpack.c.b16 %v2020, %v2016
    %v3409 = vpack.c.b16 %v2025, %v2021
    %v3410 = vpack.c.b16 %v2026, %v2022
    %v3411 = vpack.c.b16 %v2027, %v2023
    %v3412 = vpack.c.b16 %v2028, %v2024
    %v3413 = vpack.c.b16 %v2033, %v2029
    %v3414 = vpack.c.b16 %v2034, %v2030
    %v3415 = vpack.c.b16 %v2035, %v2031
    %v3416 = vpack.c.b16 %v2036, %v2032
    %v3417 = vpack.c.b16 %v2041, %v2037
    %v3418 = vpack.c.b16 %v2042, %v2038
    %v3419 = vpack.c.b16 %v2043, %v2039
    %v3420 = vpack.c.b16 %v2044, %v2040
    %v3421 = vpack.c.b16 %v2049, %v2045
    %v3422 = vpack.c.b16 %v2050, %v2046
    %v3423 = vpack.c.b16 %v2051, %v2047
    %v3424 = vpack.c.b16 %v2052, %v2048
    %v3425 = vpack.c.b16 %v2057, %v2053
    %v3426 = vpack.c.b16 %v2058, %v2054
    %v3427 = vpack.c.b16 %v2059, %v2055
    %v3428 = vpack.c.b16 %v2060, %v2056
    %v3429 = vpack.c.b16 %v2065, %v2061
    %v3430 = vpack.c.b16 %v2066, %v2062
    %v3431 = vpack.c.b16 %v2067, %v2063
    %v3432 = vpack.c.b16 %v2068, %v2064
    %v3433 = vpack.c.b16 %v2073, %v2069
    %v3434 = vpack.c.b16 %v2074, %v2070
    %v3435 = vpack.c.b16 %v2075, %v2071
    %v3436 = vpack.c.b16 %v2076, %v2072
    %v3437 = vpack.c.b16 %v2081, %v2077
    %v3438 = vpack.c.b16 %v2082, %v2078
    %v3439 = vpack.c.b16 %v2083, %v2079
    %v3440 = vpack.c.b16 %v2084, %v2080
    %v3441 = vpack.c.b16 %v2089, %v2085
    %v3442 = vpack.c.b16 %v2090, %v2086
    %v3443 = vpack.c.b16 %v2091, %v2087
    %v3444 = vpack.c.b16 %v2092, %v2088
    %v3445 = vpack.c.b16 %v2097, %v2093
    %v3446 = vpack.c.b16 %v2098, %v2094
    %v3447 = vpack.c.b16 %v2099, %v2095
    %v3448 = vpack.c.b16 %v2100, %v2096
    %v3449 = vpack.c.b16 %v2105, %v2101
    %v3450 = vpack.c.b16 %v2106, %v2102
    %v3451 = vpack.c.b16 %v2107, %v2103
    %v3452 = vpack.c.b16 %v2108, %v2104
    %v3453 = vpack.c.b16 %v2113, %v2109
    %v3454 = vpack.c.b16 %v2114, %v2110
    %v3455 = vpack.c.b16 %v2115, %v2111
    %v3456 = vpack.c.b16 %v2116, %v2112
    %v3457 = vpack.c.b16 %v2121, %v2117
    %v3458 = vpack.c.b16 %v2122, %v2118
    %v3459 = vpack.c.b16 %v2123, %v2119
    %v3460 = vpack.c.b16 %v2124, %v2120
    %v3461 = vpack.c.b16 %v2129, %v2125
    %v3462 = vpack.c.b16 %v2130, %v2126
    %v3463 = vpack.c.b16 %v2131, %v2127
    %v3464 = vpack.c.b16 %v2132, %v2128
    %v3465 = vpack.c.b16 %v2137, %v2133
    %v3466 = vpack.c.b16 %v2138, %v2134
    %v3467 = vpack.c.b16 %v2139, %v2135
    %v3468 = vpack.c.b16 %v2140, %v2136
    %v3469 = vpack.c.b16 %v2145, %v2141
    %v3470 = vpack.c.b16 %v2146, %v2142
    %v3471 = vpack.c.b16 %v2147, %v2143
    %v3472 = vpack.c.b16 %v2148, %v2144
    %v3473 = vpack.c.b16 %v2153, %v2149
    %v3474 = vpack.c.b16 %v2154, %v2150
    %v3475 = vpack.c.b16 %v2155, %v2151
    %v3476 = vpack.c.b16 %v2156, %v2152
    %v3477 = vpack.c.b16 %v2161, %v2157
    %v3478 = vpack.c.b16 %v2162, %v2158
    %v3479 = vpack.c.b16 %v2163, %v2159
    %v3480 = vpack.c.b16 %v2164, %v2160
    %v3481 = vpack.c.b16 %v2169, %v2165
    %v3482 = vpack.c.b16 %v2170, %v2166
    %v3483 = vpack.c.b16 %v2171, %v2167
    %v3484 = vpack.c.b16 %v2172, %v2168
    %v3485 = vpack.c.b16 %v2177, %v2173
    %v3486 = vpack.c.b16 %v2178, %v2174
    %v3487 = vpack.c.b16 %v2179, %v2175
    %v3488 = vpack.c.b16 %v2180, %v2176
    %v3489 = vpack.c.b16 %v2185, %v2181
    %v3490 = vpack.c.b16 %v2186, %v2182
    %v3491 = vpack.c.b16 %v2187, %v2183
    %v3492 = vpack.c.b16 %v2188, %v2184
    %v3493 = vpack.c.b16 %v2193, %v2189
    %v3494 = vpack.c.b16 %v2194, %v2190
    %v3495 = vpack.c.b16 %v2195, %v2191
    %v3496 = vpack.c.b16 %v2196, %v2192
    %v3497 = vpack.c.b16 %v2201, %v2197
    %v3498 = vpack.c.b16 %v2202, %v2198
    %v3499 = vpack.c.b16 %v2203, %v2199
    %v3500 = vpack.c.b16 %v2204, %v2200
    %v3501 = vpack.c.b16 %v2209, %v2205
    %v3502 = vpack.c.b16 %v2210, %v2206
    %v3503 = vpack.c.b16 %v2211, %v2207
    %v3504 = vpack.c.b16 %v2212, %v2208
    %v3505 = vpack.c.b16 %v2217, %v2213
    %v3506 = vpack.c.b16 %v2218, %v2214
    %v3507 = vpack.c.b16 %v2219, %v2215
    %v3508 = vpack.c.b16 %v2220, %v2216
    %v3509 = vpack.c.b16 %v2225, %v2221
    %v3510 = vpack.c.b16 %v2226, %v2222
    %v3511 = vpack.c.b16 %v2227, %v2223
    %v3512 = vpack.c.b16 %v2228, %v2224
    %v3513 = vpack.c.b16 %v2233, %v2229
    %v3514 = vpack.c.b16 %v2234, %v2230
    %v3515 = vpack.c.b16 %v2235, %v2231
    %v3516 = vpack.c.b16 %v2236, %v2232
    %v3517 = vpack.c.b16 %v2241, %v2237
    %v3518 = vpack.c.b16 %v2242, %v2238
    %v3519 = vpack.c.b16 %v2243, %v2239
    %v3520 = vpack.c.b16 %v2244, %v2240
    %v3521 = vpack.c.b16 %v2249, %v2245
    %v3522 = vpack.c.b16 %v2250, %v2246
    %v3523 = vpack.c.b16 %v2251, %v2247
    %v3524 = vpack.c.b16 %v2252, %v2248
    %v3525 = vpack.c.b16 %v2257, %v2253
    %v3526 = vpack.c.b16 %v2258, %v2254
    %v3527 = vpack.c.b16 %v2259, %v2255
    %v3528 = vpack.c.b16 %v2260, %v2256
    %v3529 = vpack.c.b16 %v2265, %v2261
    %v3530 = vpack.c.b16 %v2266, %v2262
    %v3531 = vpack.c.b16 %v2267, %v2263
    %v3532 = vpack.c.b16 %v2268, %v2264
    %v3533 = vpack.c.b16 %v2273, %v2269
    %v3534 = vpack.c.b16 %v2274, %v2270
    %v3535 = vpack.c.b16 %v2275, %v2271
    %v3536 = vpack.c.b16 %v2276, %v2272
    %v3537 = vpack.c.b16 %v2281, %v2277
    %v3538 = vpack.c.b16 %v2282, %v2278
    %v3539 = vpack.c.b16 %v2283, %v2279
    %v3540 = vpack.c.b16 %v2284, %v2280
    %v3541 = vpack.c.b16 %v2289, %v2285
    %v3542 = vpack.c.b16 %v2290, %v2286
    %v3543 = vpack.c.b16 %v2291, %v2287
    %v3544 = vpack.c.b16 %v2292, %v2288
    %v3545 = vpack.c.b16 %v2297, %v2293
    %v3546 = vpack.c.b16 %v2298, %v2294
    %v3547 = vpack.c.b16 %v2299, %v2295
    %v3548 = vpack.c.b16 %v2300, %v2296
    %v3549 = vpack.c.b16 %v2305, %v2301
    %v3550 = vpack.c.b16 %v2306, %v2302
    %v3551 = vpack.c.b16 %v2307, %v2303
    %v3552 = vpack.c.b16 %v2308, %v2304
    %v3553 = vpack.c.b16 %v2313, %v2309
    %v3554 = vpack.c.b16 %v2314, %v2310
    %v3555 = vpack.c.b16 %v2315, %v2311
    %v3556 = vpack.c.b16 %v2316, %v2312
    %v3557 = vpack.c.b16 %v2321, %v2317
    %v3558 = vpack.c.b16 %v2322, %v2318
    %v3559 = vpack.c.b16 %v2323, %v2319
    %v3560 = vpack.c.b16 %v2324, %v2320
    %v3561 = vpack.c.b16 %v2329, %v2325
    %v3562 = vpack.c.b16 %v2330, %v2326
    %v3563 = vpack.c.b16 %v2331, %v2327
    %v3564 = vpack.c.b16 %v2332, %v2328
    %v3565 = vpack.c.b16 %v2337, %v2333
    %v3566 = vpack.c.b16 %v2338, %v2334
    %v3567 = vpack.c.b16 %v2339, %v2335
    %v3568 = vpack.c.b16 %v2340, %v2336
    %v3569 = vpack.c.b16 %v2345, %v2341
    %v3570 = vpack.c.b16 %v2346, %v2342
    %v3571 = vpack.c.b16 %v2347, %v2343
    %v3572 = vpack.c.b16 %v2348, %v2344
    %v3573 = vpack.c.b16 %v2353, %v2349
    %v3574 = vpack.c.b16 %v2354, %v2350
    %v3575 = vpack.c.b16 %v2355, %v2351
    %v3576 = vpack.c.b16 %v2356, %v2352
    %v3577 = vpack.c.b16 %v2361, %v2357
    %v3578 = vpack.c.b16 %v2362, %v2358
    %v3579 = vpack.c.b16 %v2363, %v2359
    %v3580 = vpack.c.b16 %v2364, %v2360
    %v3581 = vpack.c.b16 %v2369, %v2365
    %v3582 = vpack.c.b16 %v2370, %v2366
    %v3583 = vpack.c.b16 %v2371, %v2367
    %v3584 = vpack.c.b16 %v2372, %v2368
    %v3585 = vpack.c.b16 %v2377, %v2373
    %v3586 = vpack.c.b16 %v2378, %v2374
    %v3587 = vpack.c.b16 %v2379, %v2375
    %v3588 = vpack.c.b16 %v2380, %v2376
    %v3589 = vpack.c.b16 %v2385, %v2381
    %v3590 = vpack.c.b16 %v2386, %v2382
    %v3591 = vpack.c.b16 %v2387, %v2383
    %v3592 = vpack.c.b16 %v2388, %v2384
    %v3593 = vpack.c.b16 %v2393, %v2389
    %v3594 = vpack.c.b16 %v2394, %v2390
    %v3595 = vpack.c.b16 %v2395, %v2391
    %v3596 = vpack.c.b16 %v2396, %v2392
    %v3597 = vpack.c.b16 %v2401, %v2397
    %v3598 = vpack.c.b16 %v2402, %v2398
    %v3599 = vpack.c.b16 %v2403, %v2399
    %v3600 = vpack.c.b16 %v2404, %v2400
    %v3601 = vpack.c.b16 %v2409, %v2405
    %v3602 = vpack.c.b16 %v2410, %v2406
    %v3603 = vpack.c.b16 %v2411, %v2407
    %v3604 = vpack.c.b16 %v2412, %v2408
    %v3605 = vpack.c.b16 %v2417, %v2413
    %v3606 = vpack.c.b16 %v2418, %v2414
    %v3607 = vpack.c.b16 %v2419, %v2415
    %v3608 = vpack.c.b16 %v2420, %v2416
    %v3609 = vpack.c.b16 %v2425, %v2421
    %v3610 = vpack.c.b16 %v2426, %v2422
    %v3611 = vpack.c.b16 %v2427, %v2423
    %v3612 = vpack.c.b16 %v2428, %v2424
    %v3613 = vpack.c.b16 %v2433, %v2429
    %v3614 = vpack.c.b16 %v2434, %v2430
    %v3615 = vpack.c.b16 %v2435, %v2431
    %v3616 = vpack.c.b16 %v2436, %v2432
    %v3617 = vpack.c.b16 %v2441, %v2437
    %v3618 = vpack.c.b16 %v2442, %v2438
    %v3619 = vpack.c.b16 %v2443, %v2439
    %v3620 = vpack.c.b16 %v2444, %v2440
    %v3621 = vpack.c.b16 %v2449, %v2445
    %v3622 = vpack.c.b16 %v2450, %v2446
    %v3623 = vpack.c.b16 %v2451, %v2447
    %v3624 = vpack.c.b16 %v2452, %v2448
    %v3625 = vpack.c.b16 %v2457, %v2453
    %v3626 = vpack.c.b16 %v2458, %v2454
    %v3627 = vpack.c.b16 %v2459, %v2455
    %v3628 = vpack.c.b16 %v2460, %v2456
    %v3629 = vpack.c.b16 %v2465, %v2461
    %v3630 = vpack.c.b16 %v2466, %v2462
    %v3631 = vpack.c.b16 %v2467, %v2463
    %v3632 = vpack.c.b16 %v2468, %v2464
    %v3633 = vpack.c.b16 %v2473, %v2469
    %v3634 = vpack.c.b16 %v2474, %v2470
    %v3635 = vpack.c.b16 %v2475, %v2471
    %v3636 = vpack.c.b16 %v2476, %v2472
    %v3637 = vpack.c.b16 %v2481, %v2477
    %v3638 = vpack.c.b16 %v2482, %v2478
    %v3639 = vpack.c.b16 %v2483, %v2479
    %v3640 = vpack.c.b16 %v2484, %v2480
    %v3641 = vpack.c.b16 %v2489, %v2485
    %v3642 = vpack.c.b16 %v2490, %v2486
    %v3643 = vpack.c.b16 %v2491, %v2487
    %v3644 = vpack.c.b16 %v2492, %v2488
    %v3645 = vpack.c.b16 %v2497, %v2493
    %v3646 = vpack.c.b16 %v2498, %v2494
    %v3647 = vpack.c.b16 %v2499, %v2495
    %v3648 = vpack.c.b16 %v2500, %v2496
    %v3649 = vpack.c.b16 %v2505, %v2501
    %v3650 = vpack.c.b16 %v2506, %v2502
    %v3651 = vpack.c.b16 %v2507, %v2503
    %v3652 = vpack.c.b16 %v2508, %v2504
    %v3653 = vpack.c.b16 %v2513, %v2509
    %v3654 = vpack.c.b16 %v2514, %v2510
    %v3655 = vpack.c.b16 %v2515, %v2511
    %v3656 = vpack.c.b16 %v2516, %v2512
    %v3657 = vpack.c.b16 %v2521, %v2517
    %v3658 = vpack.c.b16 %v2522, %v2518
    %v3659 = vpack.c.b16 %v2523, %v2519
    %v3660 = vpack.c.b16 %v2524, %v2520
    %v3661 = vpack.c.b16 %v2529, %v2525
    %v3662 = vpack.c.b16 %v2530, %v2526
    %v3663 = vpack.c.b16 %v2531, %v2527
    %v3664 = vpack.c.b16 %v2532, %v2528
    %v3665 = vpack.c.b16 %v2537, %v2533
    %v3666 = vpack.c.b16 %v2538, %v2534
    %v3667 = vpack.c.b16 %v2539, %v2535
    %v3668 = vpack.c.b16 %v2540, %v2536
    %v3669 = vpack.c.b16 %v2545, %v2541
    %v3670 = vpack.c.b16 %v2546, %v2542
    %v3671 = vpack.c.b16 %v2547, %v2543
    %v3672 = vpack.c.b16 %v2548, %v2544
    %v3673 = vpack.c.b16 %v2553, %v2549
    %v3674 = vpack.c.b16 %v2554, %v2550
    %v3675 = vpack.c.b16 %v2555, %v2551
    %v3676 = vpack.c.b16 %v2556, %v2552
    %v3677 = vpack.c.b16 %v2561, %v2557
    %v3678 = vpack.c.b16 %v2562, %v2558
    %v3679 = vpack.c.b16 %v2563, %v2559
    %v3680 = vpack.c.b16 %v2564, %v2560
    %v3681 = vpack.c.b16 %v2569, %v2565
    %v3682 = vpack.c.b16 %v2570, %v2566
    %v3683 = vpack.c.b16 %v2571, %v2567
    %v3684 = vpack.c.b16 %v2572, %v2568
    %v3685 = vpack.c.b16 %v2577, %v2573
    %v3686 = vpack.c.b16 %v2578, %v2574
    %v3687 = vpack.c.b16 %v2579, %v2575
    %v3688 = vpack.c.b16 %v2580, %v2576
    %v3689 = vpack.c.b16 %v2585, %v2581
    %v3690 = vpack.c.b16 %v2586, %v2582
    %v3691 = vpack.c.b16 %v2587, %v2583
    %v3692 = vpack.c.b16 %v2588, %v2584
    %v3693 = vpack.c.b16 %v2593, %v2589
    %v3694 = vpack.c.b16 %v2594, %v2590
    %v3695 = vpack.c.b16 %v2595, %v2591
    %v3696 = vpack.c.b16 %v2596, %v2592
    %v3697 = vpack.c.b16 %v2601, %v2597
    %v3698 = vpack.c.b16 %v2602, %v2598
    %v3699 = vpack.c.b16 %v2603, %v2599
    %v3700 = vpack.c.b16 %v2604, %v2600
    %v3701 = vpack.c.b16 %v2609, %v2605
    %v3702 = vpack.c.b16 %v2610, %v2606
    %v3703 = vpack.c.b16 %v2611, %v2607
    %v3704 = vpack.c.b16 %v2612, %v2608
    %v3705 = vpack.c.b16 %v2617, %v2613
    %v3706 = vpack.c.b16 %v2618, %v2614
    %v3707 = vpack.c.b16 %v2619, %v2615
    %v3708 = vpack.c.b16 %v2620, %v2616
    %v3709 = vpack.c.b16 %v2625, %v2621
    %v3710 = vpack.c.b16 %v2626, %v2622
    %v3711 = vpack.c.b16 %v2627, %v2623
    %v3712 = vpack.c.b16 %v2628, %v2624
    %v3713 = vpack.c.b16 %v2633, %v2629
    %v3714 = vpack.c.b16 %v2634, %v2630
    %v3715 = vpack.c.b16 %v2635, %v2631
    %v3716 = vpack.c.b16 %v2636, %v2632
    %v3717 = vpack.c.b16 %v2641, %v2637
    %v3718 = vpack.c.b16 %v2642, %v2638
    %v3719 = vpack.c.b16 %v2643, %v2639
    %v3720 = vpack.c.b16 %v2644, %v2640
    %v3721 = vpack.c.b16 %v2649, %v2645
    %v3722 = vpack.c.b16 %v2650, %v2646
    %v3723 = vpack.c.b16 %v2651, %v2647
    %v3724 = vpack.c.b16 %v2652, %v2648
    %v3725 = vpack.c.b16 %v2657, %v2653
    %v3726 = vpack.c.b16 %v2658, %v2654
    %v3727 = vpack.c.b16 %v2659, %v2655
    %v3728 = vpack.c.b16 %v2660, %v2656
    %v3729 = vpack.c.b16 %v2665, %v2661
    %v3730 = vpack.c.b16 %v2666, %v2662
    %v3731 = vpack.c.b16 %v2667, %v2663
    %v3732 = vpack.c.b16 %v2668, %v2664
    %v3733 = vpack.c.b16 %v2673, %v2669
    %v3734 = vpack.c.b16 %v2674, %v2670
    %v3735 = vpack.c.b16 %v2675, %v2671
    %v3736 = vpack.c.b16 %v2676, %v2672
    %v3737 = vpack.c.b16 %v2681, %v2677
    %v3738 = vpack.c.b16 %v2682, %v2678
    %v3739 = vpack.c.b16 %v2683, %v2679
    %v3740 = vpack.c.b16 %v2684, %v2680
    %v3741 = vpack.c.b16 %v2689, %v2685
    %v3742 = vpack.c.b16 %v2690, %v2686
    %v3743 = vpack.c.b16 %v2691, %v2687
    %v3744 = vpack.c.b16 %v2692, %v2688
    %v3745 = vpack.c.b16 %v2697, %v2693
    %v3746 = vpack.c.b16 %v2698, %v2694
    %v3747 = vpack.c.b16 %v2699, %v2695
    %v3748 = vpack.c.b16 %v2700, %v2696
    %v3749 = vpack.c.b16 %v2705, %v2701
    %v3750 = vpack.c.b16 %v2706, %v2702
    %v3751 = vpack.c.b16 %v2707, %v2703
    %v3752 = vpack.c.b16 %v2708, %v2704
    %v3753 = vpack.c.b16 %v2713, %v2709
    %v3754 = vpack.c.b16 %v2714, %v2710
    %v3755 = vpack.c.b16 %v2715, %v2711
    %v3756 = vpack.c.b16 %v2716, %v2712
    %v3757 = vpack.c.b16 %v2721, %v2717
    %v3758 = vpack.c.b16 %v2722, %v2718
    %v3759 = vpack.c.b16 %v2723, %v2719
    %v3760 = vpack.c.b16 %v2724, %v2720
    %v3761 = vpack.c.b16 %v2729, %v2725
    %v3762 = vpack.c.b16 %v2730, %v2726
    %v3763 = vpack.c.b16 %v2731, %v2727
    %v3764 = vpack.c.b16 %v2732, %v2728
    %v3765 = vpack.c.b16 %v2737, %v2733
    %v3766 = vpack.c.b16 %v2738, %v2734
    %v3767 = vpack.c.b16 %v2739, %v2735
    %v3768 = vpack.c.b16 %v2740, %v2736
    %v3769 = vpack.c.b16 %v2745, %v2741
    %v3770 = vpack.c.b16 %v2746, %v2742
    %v3771 = vpack.c.b16 %v2747, %v2743
    %v3772 = vpack.c.b16 %v2748, %v2744
    %v3773 = vpack.c.b16 %v2753, %v2749
    %v3774 = vpack.c.b16 %v2754, %v2750
    %v3775 = vpack.c.b16 %v2755, %v2751
    %v3776 = vpack.c.b16 %v2756, %v2752
    %v3777 = vpack.c.b16 %v2761, %v2757
    %v3778 = vpack.c.b16 %v2762, %v2758
    %v3779 = vpack.c.b16 %v2763, %v2759
    %v3780 = vpack.c.b16 %v2764, %v2760
    %v3781 = vpack.c.b16 %v2769, %v2765
    %v3782 = vpack.c.b16 %v2770, %v2766
    %v3783 = vpack.c.b16 %v2771, %v2767
    %v3784 = vpack.c.b16 %v2772, %v2768
    %v3785 = vpack.c.b16 %v2777, %v2773
    %v3786 = vpack.c.b16 %v2778, %v2774
    %v3787 = vpack.c.b16 %v2779, %v2775
    %v3788 = vpack.c.b16 %v2780, %v2776
    %v3789 = vpack.c.b16 %v2785, %v2781
    %v3790 = vpack.c.b16 %v2786, %v2782
    %v3791 = vpack.c.b16 %v2787, %v2783
    %v3792 = vpack.c.b16 %v2788, %v2784
    %v3793 = vpack.c.b16 %v2793, %v2789
    %v3794 = vpack.c.b16 %v2794, %v2790
    %v3795 = vpack.c.b16 %v2795, %v2791
    %v3796 = vpack.c.b16 %v2796, %v2792
    %v3797 = vpack.c.b16 %v2801, %v2797
    %v3798 = vpack.c.b16 %v2802, %v2798
    %v3799 = vpack.c.b16 %v2803, %v2799
    %v3800 = vpack.c.b16 %v2804, %v2800
    %v3801 = vpack.c.b16 %v2809, %v2805
    %v3802 = vpack.c.b16 %v2810, %v2806
    %v3803 = vpack.c.b16 %v2811, %v2807
    %v3804 = vpack.c.b16 %v2812, %v2808
    %v3805 = vpack.c.b16 %v2817, %v2813
    %v3806 = vpack.c.b16 %v2818, %v2814
    %v3807 = vpack.c.b16 %v2819, %v2815
    %v3808 = vpack.c.b16 %v2820, %v2816
    %v3809 = vpack.c.b16 %v2825, %v2821
    %v3810 = vpack.c.b16 %v2826, %v2822
    %v3811 = vpack.c.b16 %v2827, %v2823
    %v3812 = vpack.c.b16 %v2828, %v2824
    %v3813 = vpack.c.b16 %v2833, %v2829
    %v3814 = vpack.c.b16 %v2834, %v2830
    %v3815 = vpack.c.b16 %v2835, %v2831
    %v3816 = vpack.c.b16 %v2836, %v2832
    %v3817 = vpack.c.b16 %v2841, %v2837
    %v3818 = vpack.c.b16 %v2842, %v2838
    %v3819 = vpack.c.b16 %v2843, %v2839
    %v3820 = vpack.c.b16 %v2844, %v2840
    %v3821 = vpack.c.b16 %v2849, %v2845
    %v3822 = vpack.c.b16 %v2850, %v2846
    %v3823 = vpack.c.b16 %v2851, %v2847
    %v3824 = vpack.c.b16 %v2852, %v2848
    %v3825 = vpack.c.b16 %v2857, %v2853
    %v3826 = vpack.c.b16 %v2858, %v2854
    %v3827 = vpack.c.b16 %v2859, %v2855
    %v3828 = vpack.c.b16 %v2860, %v2856
    %v3829 = vpack.c.b16 %v2865, %v2861
    %v3830 = vpack.c.b16 %v2866, %v2862
    %v3831 = vpack.c.b16 %v2867, %v2863
    %v3832 = vpack.c.b16 %v2868, %v2864
    %v3833 = vpack.c.b16 %v2873, %v2869
    %v3834 = vpack.c.b16 %v2874, %v2870
    %v3835 = vpack.c.b16 %v2875, %v2871
    %v3836 = vpack.c.b16 %v2876, %v2872
    %v3837 = vpack.c.b16 %v2881, %v2877
    %v3838 = vpack.c.b16 %v2882, %v2878
    %v3839 = vpack.c.b16 %v2883, %v2879
    %v3840 = vpack.c.b16 %v2884, %v2880
    %v3841 = vpack.c.b16 %v2889, %v2885
    %v3842 = vpack.c.b16 %v2890, %v2886
    %v3843 = vpack.c.b16 %v2891, %v2887
    %v3844 = vpack.c.b16 %v2892, %v2888
    %v3845 = vpack.c.b16 %v2897, %v2893
    %v3846 = vpack.c.b16 %v2898, %v2894
    %v3847 = vpack.c.b16 %v2899, %v2895
    %v3848 = vpack.c.b16 %v2900, %v2896
    %v3849 = vpack.c.b16 %v2905, %v2901
    %v3850 = vpack.c.b16 %v2906, %v2902
    %v3851 = vpack.c.b16 %v2907, %v2903
    %v3852 = vpack.c.b16 %v2908, %v2904
    %v3853 = vpack.c.b16 %v2913, %v2909
    %v3854 = vpack.c.b16 %v2914, %v2910
    %v3855 = vpack.c.b16 %v2915, %v2911
    %v3856 = vpack.c.b16 %v2916, %v2912
    %v3857 = vpack.c.b16 %v2921, %v2917
    %v3858 = vpack.c.b16 %v2922, %v2918
    %v3859 = vpack.c.b16 %v2923, %v2919
    %v3860 = vpack.c.b16 %v2924, %v2920
    %v3861 = vpack.c.b16 %v2929, %v2925
    %v3862 = vpack.c.b16 %v2930, %v2926
    %v3863 = vpack.c.b16 %v2931, %v2927
    %v3864 = vpack.c.b16 %v2932, %v2928
    %v3865 = vpack.c.b16 %v2937, %v2933
    %v3866 = vpack.c.b16 %v2938, %v2934
    %v3867 = vpack.c.b16 %v2939, %v2935
    %v3868 = vpack.c.b16 %v2940, %v2936
    %v3869 = vpack.c.b16 %v2945, %v2941
    %v3870 = vpack.c.b16 %v2946, %v2942
    %v3871 = vpack.c.b16 %v2947, %v2943
    %v3872 = vpack.c.b16 %v2948, %v2944
    %v3873 = vpack.c.b16 %v2953, %v2949
    %v3874 = vpack.c.b16 %v2954, %v2950
    %v3875 = vpack.c.b16 %v2955, %v2951
    %v3876 = vpack.c.b16 %v2956, %v2952
    %v3877 = vpack.c.b16 %v2961, %v2957
    %v3878 = vpack.c.b16 %v2962, %v2958
    %v3879 = vpack.c.b16 %v2963, %v2959
    %v3880 = vpack.c.b16 %v2964, %v2960
    %v3881 = vpack.c.b16 %v2969, %v2965
    %v3882 = vpack.c.b16 %v2970, %v2966
    %v3883 = vpack.c.b16 %v2971, %v2967
    %v3884 = vpack.c.b16 %v2972, %v2968
    %v3885 = vpack.c.b16 %v2977, %v2973
    %v3886 = vpack.c.b16 %v2978, %v2974
    %v3887 = vpack.c.b16 %v2979, %v2975
    %v3888 = vpack.c.b16 %v2980, %v2976
    %v3889 = vpack.c.b16 %v2985, %v2981
    %v3890 = vpack.c.b16 %v2986, %v2982
    %v3891 = vpack.c.b16 %v2987, %v2983
    %v3892 = vpack.c.b16 %v2988, %v2984
    %v3893 = vpack.c.b16 %v2993, %v2989
    %v3894 = vpack.c.b16 %v2994, %v2990
    %v3895 = vpack.c.b16 %v2995, %v2991
    %v3896 = vpack.c.b16 %v2996, %v2992
    %v3897 = vpack.c.b16 %v3001, %v2997
    %v3898 = vpack.c.b16 %v3002, %v2998
    %v3899 = vpack.c.b16 %v3003, %v2999
    %v3900 = vpack.c.b16 %v3004, %v3000
    %v3901 = vpack.c.b16 %v3009, %v3005
    %v3902 = vpack.c.b16 %v3010, %v3006
    %v3903 = vpack.c.b16 %v3011, %v3007
    %v3904 = vpack.c.b16 %v3012, %v3008
    %v3905 = vpack.c.b16 %v3017, %v3013
    %v3906 = vpack.c.b16 %v3018, %v3014
    %v3907 = vpack.c.b16 %v3019, %v3015
    %v3908 = vpack.c.b16 %v3020, %v3016
    %v3909 = vpack.c.b16 %v3025, %v3021
    %v3910 = vpack.c.b16 %v3026, %v3022
    %v3911 = vpack.c.b16 %v3027, %v3023
    %v3912 = vpack.c.b16 %v3028, %v3024
    %v3913 = vpack.c.b16 %v3033, %v3029
    %v3914 = vpack.c.b16 %v3034, %v3030
    %v3915 = vpack.c.b16 %v3035, %v3031
    %v3916 = vpack.c.b16 %v3036, %v3032
    %v3917 = vpack.c.b16 %v3041, %v3037
    %v3918 = vpack.c.b16 %v3042, %v3038
    %v3919 = vpack.c.b16 %v3043, %v3039
    %v3920 = vpack.c.b16 %v3044, %v3040
    %v3921 = vpack.c.b16 %v3049, %v3045
    %v3922 = vpack.c.b16 %v3050, %v3046
    %v3923 = vpack.c.b16 %v3051, %v3047
    %v3924 = vpack.c.b16 %v3052, %v3048
    %v3925 = vpack.c.b16 %v3057, %v3053
    %v3926 = vpack.c.b16 %v3058, %v3054
    %v3927 = vpack.c.b16 %v3059, %v3055
    %v3928 = vpack.c.b16 %v3060, %v3056
    %v3929 = vpack.c.b16 %v3065, %v3061
    %v3930 = vpack.c.b16 %v3066, %v3062
    %v3931 = vpack.c.b16 %v3067, %v3063
    %v3932 = vpack.c.b16 %v3068, %v3064
    %v3933 = vpack.c.b16 %v3073, %v3069
    %v3934 = vpack.c.b16 %v3074, %v3070
    %v3935 = vpack.c.b16 %v3075, %v3071
    %v3936 = vpack.c.b16 %v3076, %v3072
    %v3937 = vpack.c.b16 %v3081, %v3077
    %v3938 = vpack.c.b16 %v3082, %v3078
    %v3939 = vpack.c.b16 %v3083, %v3079
    %v3940 = vpack.c.b16 %v3084, %v3080
    %v3941 = vpack.c.b16 %v3089, %v3085
    %v3942 = vpack.c.b16 %v3090, %v3086
    %v3943 = vpack.c.b16 %v3091, %v3087
    %v3944 = vpack.c.b16 %v3092, %v3088
    %v3945 = vpack.c.b16 %v3097, %v3093
    %v3946 = vpack.c.b16 %v3098, %v3094
    %v3947 = vpack.c.b16 %v3099, %v3095
    %v3948 = vpack.c.b16 %v3100, %v3096
    %v3949 = vpack.c.b16 %v3105, %v3101
    %v3950 = vpack.c.b16 %v3106, %v3102
    %v3951 = vpack.c.b16 %v3107, %v3103
    %v3952 = vpack.c.b16 %v3108, %v3104
    %v3953 = vpack.c.b16 %v3113, %v3109
    %v3954 = vpack.c.b16 %v3114, %v3110
    %v3955 = vpack.c.b16 %v3115, %v3111
    %v3956 = vpack.c.b16 %v3116, %v3112
    %v3957 = vpack.c.b16 %v3121, %v3117
    %v3958 = vpack.c.b16 %v3122, %v3118
    %v3959 = vpack.c.b16 %v3123, %v3119
    %v3960 = vpack.c.b16 %v3124, %v3120
    %v3961 = vpack.c.b16 %v3129, %v3125
    %v3962 = vpack.c.b16 %v3130, %v3126
    %v3963 = vpack.c.b16 %v3131, %v3127
    %v3964 = vpack.c.b16 %v3132, %v3128
    %v3965 = vpack.c.b16 %v3137, %v3133
    %v3966 = vpack.c.b16 %v3138, %v3134
    %v3967 = vpack.c.b16 %v3139, %v3135
    %v3968 = vpack.c.b16 %v3140, %v3136
    %v3969 = vpack.c.b16 %v3145, %v3141
    %v3970 = vpack.c.b16 %v3146, %v3142
    %v3971 = vpack.c.b16 %v3147, %v3143
    %v3972 = vpack.c.b16 %v3148, %v3144
    %v3973 = vpack.c.b16 %v3153, %v3149
    %v3974 = vpack.c.b16 %v3154, %v3150
    %v3975 = vpack.c.b16 %v3155, %v3151
    %v3976 = vpack.c.b16 %v3156, %v3152
    %v3977 = vpack.c.b16 %v3161, %v3157
    %v3978 = vpack.c.b16 %v3162, %v3158
    %v3979 = vpack.c.b16 %v3163, %v3159
    %v3980 = vpack.c.b16 %v3164, %v3160
    %v3981 = vpack.c.b16 %v3169, %v3165
    %v3982 = vpack.c.b16 %v3170, %v3166
    %v3983 = vpack.c.b16 %v3171, %v3167
    %v3984 = vpack.c.b16 %v3172, %v3168
    %v3985 = vpack.c.b16 %v3177, %v3173
    %v3986 = vpack.c.b16 %v3178, %v3174
    %v3987 = vpack.c.b16 %v3179, %v3175
    %v3988 = vpack.c.b16 %v3180, %v3176
    %v3989 = vpack.c.b16 %v3185, %v3181
    %v3990 = vpack.c.b16 %v3186, %v3182
    %v3991 = vpack.c.b16 %v3187, %v3183
    %v3992 = vpack.c.b16 %v3188, %v3184
    %v3993 = vpack.c.b16 %v3193, %v3189
    %v3994 = vpack.c.b16 %v3194, %v3190
    %v3995 = vpack.c.b16 %v3195, %v3191
    %v3996 = vpack.c.b16 %v3196, %v3192
    %v3997 = vpack.c.b16 %v3201, %v3197
    %v3998 = vpack.c.b16 %v3202, %v3198
    %v3999 = vpack.c.b16 %v3203, %v3199
    %v4000 = vpack.c.b16 %v3204, %v3200
    %v4001 = vpack.c.b16 %v3209, %v3205
    %v4002 = vpack.c.b16 %v3210, %v3206
    %v4003 = vpack.c.b16 %v3211, %v3207
    %v4004 = vpack.c.b16 %v3212, %v3208
    %v4005 = vpack.c.b16 %v3217, %v3213
    %v4006 = vpack.c.b16 %v3218, %v3214
    %v4007 = vpack.c.b16 %v3219, %v3215
    %v4008 = vpack.c.b16 %v3220, %v3216
    %v4009 = vpack.c.b16 %v3225, %v3221
    %v4010 = vpack.c.b16 %v3226, %v3222
    %v4011 = vpack.c.b16 %v3227, %v3223
    %v4012 = vpack.c.b16 %v3228, %v3224
    %vm4797 = vcmask 523264
    %v4798 = vsel %vm4797, %v852, 0
    %4800 = vmatpush.bf16.msra.mxu0 %v3257
    %4801 = vmatpush.bf16.msra.mxu0 %v3253
    %4802 = vmatpush.bf16.msra.mxu0 %v3249
    %4803 = vmatpush.bf16.msra.mxu0 %v3245
    %4804 = vmatpush.bf16.msra.mxu0 %v3241
    %4805 = vmatpush.bf16.msra.mxu0 %v3237
    %4806 = vmatpush.bf16.msra.mxu0 %v3233
    %4807 = vmatpush.bf16.msra.mxu0 %v3229
    %4808 = vmatmul.bf16.gmra.mxu0 %v822
    %v4809 = vpop.f32.mrf.mxu0
    %v4810 = vadd.f32 %v812, %v4809
    %v4811 = vpop.f32.mrf.mxu0
    %4812 = vdwg.mxu0
    %4813 = vmatpush.bf16.msra.mxu0 %v3289
    %4814 = vmatpush.bf16.msra.mxu0 %v3285
    %4815 = vmatpush.bf16.msra.mxu0 %v3281
    %4816 = vmatpush.bf16.msra.mxu0 %v3277
    %4817 = vmatpush.bf16.msra.mxu0 %v3273
    %4818 = vmatpush.bf16.msra.mxu0 %v3269
    %4819 = vmatpush.bf16.msra.mxu0 %v3265
    %4820 = vmatpush.bf16.msra.mxu0 %v3261
    %4821 = vmatmul.bf16.gmra.mxu0 %v823
    %v4822 = vpop.f32.mrf.mxu0
    %v4823 = vadd.f32 %v4810, %v4822
    %v4824 = vpop.f32.mrf.mxu0
    %4825 = vdwg.mxu0
    %4826 = vmatpush.bf16.msra.mxu0 %v3321
    %4827 = vmatpush.bf16.msra.mxu0 %v3317
    %4828 = vmatpush.bf16.msra.mxu0 %v3313
    %4829 = vmatpush.bf16.msra.mxu0 %v3309
    %4830 = vmatpush.bf16.msra.mxu0 %v3305
    %4831 = vmatpush.bf16.msra.mxu0 %v3301
    %4832 = vmatpush.bf16.msra.mxu0 %v3297
    %4833 = vmatpush.bf16.msra.mxu0 %v3293
    %4834 = vmatmul.bf16.gmra.mxu0 %v824
    %v4835 = vpop.f32.mrf.mxu0
    %v4836 = vadd.f32 %v4823, %v4835
    %v4837 = vpop.f32.mrf.mxu0
    %4838 = vdwg.mxu0
    %4839 = vmatpush.bf16.msra.mxu0 %v3353
    %4840 = vmatpush.bf16.msra.mxu0 %v3349
    %4841 = vmatpush.bf16.msra.mxu0 %v3345
    %4842 = vmatpush.bf16.msra.mxu0 %v3341
    %4843 = vmatpush.bf16.msra.mxu0 %v3337
    %4844 = vmatpush.bf16.msra.mxu0 %v3333
    %4845 = vmatpush.bf16.msra.mxu0 %v3329
    %4846 = vmatpush.bf16.msra.mxu0 %v3325
    %4847 = vmatmul.bf16.gmra.mxu0 %v825
    %v4848 = vpop.f32.mrf.mxu0
    %v4849 = vadd.f32 %v4836, %v4848
    %v4850 = vpop.f32.mrf.mxu0
    %4851 = vdwg.mxu0
    %4852 = vmatpush.bf16.msra.mxu0 %v3385
    %4853 = vmatpush.bf16.msra.mxu0 %v3381
    %4854 = vmatpush.bf16.msra.mxu0 %v3377
    %4855 = vmatpush.bf16.msra.mxu0 %v3373
    %4856 = vmatpush.bf16.msra.mxu0 %v3369
    %4857 = vmatpush.bf16.msra.mxu0 %v3365
    %4858 = vmatpush.bf16.msra.mxu0 %v3361
    %4859 = vmatpush.bf16.msra.mxu0 %v3357
    %4860 = vmatmul.bf16.gmra.mxu0 %v826
    %v4861 = vpop.f32.mrf.mxu0
    %v4862 = vadd.f32 %v4849, %v4861
    %v4863 = vpop.f32.mrf.mxu0
    %4864 = vdwg.mxu0
    %4865 = vmatpush.bf16.msra.mxu0 %v3417
    %4866 = vmatpush.bf16.msra.mxu0 %v3413
    %4867 = vmatpush.bf16.msra.mxu0 %v3409
    %4868 = vmatpush.bf16.msra.mxu0 %v3405
    %4869 = vmatpush.bf16.msra.mxu0 %v3401
    %4870 = vmatpush.bf16.msra.mxu0 %v3397
    %4871 = vmatpush.bf16.msra.mxu0 %v3393
    %4872 = vmatpush.bf16.msra.mxu0 %v3389
    %4873 = vmatmul.bf16.gmra.mxu0 %v827
    %v4874 = vpop.f32.mrf.mxu0
    %v4875 = vadd.f32 %v4862, %v4874
    %v4876 = vpop.f32.mrf.mxu0
    %4877 = vdwg.mxu0
    %4878 = vmatpush.bf16.msra.mxu0 %v3449
    %4879 = vmatpush.bf16.msra.mxu0 %v3445
    %4880 = vmatpush.bf16.msra.mxu0 %v3441
    %4881 = vmatpush.bf16.msra.mxu0 %v3437
    %4882 = vmatpush.bf16.msra.mxu0 %v3433
    %4883 = vmatpush.bf16.msra.mxu0 %v3429
    %4884 = vmatpush.bf16.msra.mxu0 %v3425
    %4885 = vmatpush.bf16.msra.mxu0 %v3421
    %4886 = vmatmul.bf16.gmra.mxu0 %v828
    %v4887 = vpop.f32.mrf.mxu0
    %v4888 = vadd.f32 %v4875, %v4887
    %v4889 = vpop.f32.mrf.mxu0
    %4890 = vdwg.mxu0
    %4891 = vmatpush.bf16.msra.mxu0 %v3481
    %4892 = vmatpush.bf16.msra.mxu0 %v3477
    %4893 = vmatpush.bf16.msra.mxu0 %v3473
    %4894 = vmatpush.bf16.msra.mxu0 %v3469
    %4895 = vmatpush.bf16.msra.mxu0 %v3465
    %4896 = vmatpush.bf16.msra.mxu0 %v3461
    %4897 = vmatpush.bf16.msra.mxu0 %v3457
    %4898 = vmatpush.bf16.msra.mxu0 %v3453
    %4899 = vmatmul.bf16.gmra.mxu0 %v829
    %v4900 = vpop.f32.mrf.mxu0
    %v4901 = vadd.f32 %v4888, %v4900
    %v4902 = vpop.f32.mrf.mxu0
    %4903 = vdwg.mxu0
    %4904 = vmatpush.bf16.msra.mxu0 %v3513
    %4905 = vmatpush.bf16.msra.mxu0 %v3509
    %4906 = vmatpush.bf16.msra.mxu0 %v3505
    %4907 = vmatpush.bf16.msra.mxu0 %v3501
    %4908 = vmatpush.bf16.msra.mxu0 %v3497
    %4909 = vmatpush.bf16.msra.mxu0 %v3493
    %4910 = vmatpush.bf16.msra.mxu0 %v3489
    %4911 = vmatpush.bf16.msra.mxu0 %v3485
    %4912 = vmatmul.bf16.gmra.mxu0 %v832
    %v4913 = vpop.f32.mrf.mxu0
    %v4914 = vadd.f32 %v4901, %v4913
    %v4915 = vpop.f32.mrf.mxu0
    %4916 = vdwg.mxu0
    %4917 = vmatpush.bf16.msra.mxu0 %v3545
    %4918 = vmatpush.bf16.msra.mxu0 %v3541
    %4919 = vmatpush.bf16.msra.mxu0 %v3537
    %4920 = vmatpush.bf16.msra.mxu0 %v3533
    %4921 = vmatpush.bf16.msra.mxu0 %v3529
    %4922 = vmatpush.bf16.msra.mxu0 %v3525
    %4923 = vmatpush.bf16.msra.mxu0 %v3521
    %4924 = vmatpush.bf16.msra.mxu0 %v3517
    %4925 = vmatmul.bf16.gmra.mxu0 %v833
    %v4926 = vpop.f32.mrf.mxu0
    %v4927 = vadd.f32 %v4914, %v4926
    %v4928 = vpop.f32.mrf.mxu0
    %4929 = vdwg.mxu0
    %4930 = vmatpush.bf16.msra.mxu0 %v3577
    %4931 = vmatpush.bf16.msra.mxu0 %v3573
    %4932 = vmatpush.bf16.msra.mxu0 %v3569
    %4933 = vmatpush.bf16.msra.mxu0 %v3565
    %4934 = vmatpush.bf16.msra.mxu0 %v3561
    %4935 = vmatpush.bf16.msra.mxu0 %v3557
    %4936 = vmatpush.bf16.msra.mxu0 %v3553
    %4937 = vmatpush.bf16.msra.mxu0 %v3549
    %4938 = vmatmul.bf16.gmra.mxu0 %v834
    %v4939 = vpop.f32.mrf.mxu0
    %v4940 = vadd.f32 %v4927, %v4939
    %v4941 = vpop.f32.mrf.mxu0
    %4942 = vdwg.mxu0
    %4943 = vmatpush.bf16.msra.mxu0 %v3609
    %4944 = vmatpush.bf16.msra.mxu0 %v3605
    %4945 = vmatpush.bf16.msra.mxu0 %v3601
    %4946 = vmatpush.bf16.msra.mxu0 %v3597
    %4947 = vmatpush.bf16.msra.mxu0 %v3593
    %4948 = vmatpush.bf16.msra.mxu0 %v3589
    %4949 = vmatpush.bf16.msra.mxu0 %v3585
    %4950 = vmatpush.bf16.msra.mxu0 %v3581
    %4951 = vmatmul.bf16.gmra.mxu0 %v835
    %v4952 = vpop.f32.mrf.mxu0
    %v4953 = vadd.f32 %v4940, %v4952
    %v4954 = vpop.f32.mrf.mxu0
    %4955 = vdwg.mxu0
    %4956 = vmatpush.bf16.msra.mxu0 %v3641
    %4957 = vmatpush.bf16.msra.mxu0 %v3637
    %4958 = vmatpush.bf16.msra.mxu0 %v3633
    %4959 = vmatpush.bf16.msra.mxu0 %v3629
    %4960 = vmatpush.bf16.msra.mxu0 %v3625
    %4961 = vmatpush.bf16.msra.mxu0 %v3621
    %4962 = vmatpush.bf16.msra.mxu0 %v3617
    %4963 = vmatpush.bf16.msra.mxu0 %v3613
    %4964 = vmatmul.bf16.gmra.mxu0 %v836
    %v4965 = vpop.f32.mrf.mxu0
    %v4966 = vadd.f32 %v4953, %v4965
    %v4967 = vpop.f32.mrf.mxu0
    %4968 = vdwg.mxu0
    %4969 = vmatpush.bf16.msra.mxu0 %v3673
    %4970 = vmatpush.bf16.msra.mxu0 %v3669
    %4971 = vmatpush.bf16.msra.mxu0 %v3665
    %4972 = vmatpush.bf16.msra.mxu0 %v3661
    %4973 = vmatpush.bf16.msra.mxu0 %v3657
    %4974 = vmatpush.bf16.msra.mxu0 %v3653
    %4975 = vmatpush.bf16.msra.mxu0 %v3649
    %4976 = vmatpush.bf16.msra.mxu0 %v3645
    %4977 = vmatmul.bf16.gmra.mxu0 %v837
    %v4978 = vpop.f32.mrf.mxu0
    %v4979 = vadd.f32 %v4966, %v4978
    %v4980 = vpop.f32.mrf.mxu0
    %4981 = vdwg.mxu0
    %4982 = vmatpush.bf16.msra.mxu0 %v3705
    %4983 = vmatpush.bf16.msra.mxu0 %v3701
    %4984 = vmatpush.bf16.msra.mxu0 %v3697
    %4985 = vmatpush.bf16.msra.mxu0 %v3693
    %4986 = vmatpush.bf16.msra.mxu0 %v3689
    %4987 = vmatpush.bf16.msra.mxu0 %v3685
    %4988 = vmatpush.bf16.msra.mxu0 %v3681
    %4989 = vmatpush.bf16.msra.mxu0 %v3677
    %4990 = vmatmul.bf16.gmra.mxu0 %v838
    %v4991 = vpop.f32.mrf.mxu0
    %v4992 = vadd.f32 %v4979, %v4991
    %v4993 = vpop.f32.mrf.mxu0
    %4994 = vdwg.mxu0
    %4995 = vmatpush.bf16.msra.mxu0 %v3737
    %4996 = vmatpush.bf16.msra.mxu0 %v3733
    %4997 = vmatpush.bf16.msra.mxu0 %v3729
    %4998 = vmatpush.bf16.msra.mxu0 %v3725
    %4999 = vmatpush.bf16.msra.mxu0 %v3721
    %5000 = vmatpush.bf16.msra.mxu0 %v3717
    %5001 = vmatpush.bf16.msra.mxu0 %v3713
    %5002 = vmatpush.bf16.msra.mxu0 %v3709
    %5003 = vmatmul.bf16.gmra.mxu0 %v839
    %v5004 = vpop.f32.mrf.mxu0
    %v5005 = vadd.f32 %v4992, %v5004
    %v5006 = vpop.f32.mrf.mxu0
    %5007 = vdwg.mxu0
    %5008 = vmatpush.bf16.msra.mxu0 %v3769
    %5009 = vmatpush.bf16.msra.mxu0 %v3765
    %5010 = vmatpush.bf16.msra.mxu0 %v3761
    %5011 = vmatpush.bf16.msra.mxu0 %v3757
    %5012 = vmatpush.bf16.msra.mxu0 %v3753
    %5013 = vmatpush.bf16.msra.mxu0 %v3749
    %5014 = vmatpush.bf16.msra.mxu0 %v3745
    %5015 = vmatpush.bf16.msra.mxu0 %v3741
    %5016 = vmatmul.bf16.gmra.mxu0 %v842
    %v5017 = vpop.f32.mrf.mxu0
    %v5018 = vadd.f32 %v5005, %v5017
    %v5019 = vpop.f32.mrf.mxu0
    %5020 = vdwg.mxu0
    %5021 = vmatpush.bf16.msra.mxu0 %v3801
    %5022 = vmatpush.bf16.msra.mxu0 %v3797
    %5023 = vmatpush.bf16.msra.mxu0 %v3793
    %5024 = vmatpush.bf16.msra.mxu0 %v3789
    %5025 = vmatpush.bf16.msra.mxu0 %v3785
    %5026 = vmatpush.bf16.msra.mxu0 %v3781
    %5027 = vmatpush.bf16.msra.mxu0 %v3777
    %5028 = vmatpush.bf16.msra.mxu0 %v3773
    %5029 = vmatmul.bf16.gmra.mxu0 %v843
    %v5030 = vpop.f32.mrf.mxu0
    %v5031 = vadd.f32 %v5018, %v5030
    %v5032 = vpop.f32.mrf.mxu0
    %5033 = vdwg.mxu0
    %5034 = vmatpush.bf16.msra.mxu0 %v3833
    %5035 = vmatpush.bf16.msra.mxu0 %v3829
    %5036 = vmatpush.bf16.msra.mxu0 %v3825
    %5037 = vmatpush.bf16.msra.mxu0 %v3821
    %5038 = vmatpush.bf16.msra.mxu0 %v3817
    %5039 = vmatpush.bf16.msra.mxu0 %v3813
    %5040 = vmatpush.bf16.msra.mxu0 %v3809
    %5041 = vmatpush.bf16.msra.mxu0 %v3805
    %5042 = vmatmul.bf16.gmra.mxu0 %v844
    %v5043 = vpop.f32.mrf.mxu0
    %v5044 = vadd.f32 %v5031, %v5043
    %v5045 = vpop.f32.mrf.mxu0
    %5046 = vdwg.mxu0
    %5047 = vmatpush.bf16.msra.mxu0 %v3865
    %5048 = vmatpush.bf16.msra.mxu0 %v3861
    %5049 = vmatpush.bf16.msra.mxu0 %v3857
    %5050 = vmatpush.bf16.msra.mxu0 %v3853
    %5051 = vmatpush.bf16.msra.mxu0 %v3849
    %5052 = vmatpush.bf16.msra.mxu0 %v3845
    %5053 = vmatpush.bf16.msra.mxu0 %v3841
    %5054 = vmatpush.bf16.msra.mxu0 %v3837
    %5055 = vmatmul.bf16.gmra.mxu0 %v845
    %v5056 = vpop.f32.mrf.mxu0
    %v5057 = vadd.f32 %v5044, %v5056
    %v5058 = vpop.f32.mrf.mxu0
    %5059 = vdwg.mxu0
    %5060 = vmatpush.bf16.msra.mxu0 %v3897
    %5061 = vmatpush.bf16.msra.mxu0 %v3893
    %5062 = vmatpush.bf16.msra.mxu0 %v3889
    %5063 = vmatpush.bf16.msra.mxu0 %v3885
    %5064 = vmatpush.bf16.msra.mxu0 %v3881
    %5065 = vmatpush.bf16.msra.mxu0 %v3877
    %5066 = vmatpush.bf16.msra.mxu0 %v3873
    %5067 = vmatpush.bf16.msra.mxu0 %v3869
    %5068 = vmatmul.bf16.gmra.mxu0 %v846
    %v5069 = vpop.f32.mrf.mxu0
    %v5070 = vadd.f32 %v5057, %v5069
    %v5071 = vpop.f32.mrf.mxu0
    %5072 = vdwg.mxu0
    %5073 = vmatpush.bf16.msra.mxu0 %v3929
    %5074 = vmatpush.bf16.msra.mxu0 %v3925
    %5075 = vmatpush.bf16.msra.mxu0 %v3921
    %5076 = vmatpush.bf16.msra.mxu0 %v3917
    %5077 = vmatpush.bf16.msra.mxu0 %v3913
    %5078 = vmatpush.bf16.msra.mxu0 %v3909
    %5079 = vmatpush.bf16.msra.mxu0 %v3905
    %5080 = vmatpush.bf16.msra.mxu0 %v3901
    %5081 = vmatmul.bf16.gmra.mxu0 %v847
    %v5082 = vpop.f32.mrf.mxu0
    %v5083 = vadd.f32 %v5070, %v5082
    %v5084 = vpop.f32.mrf.mxu0
    %5085 = vdwg.mxu0
    %5086 = vmatpush.bf16.msra.mxu0 %v3961
    %5087 = vmatpush.bf16.msra.mxu0 %v3957
    %5088 = vmatpush.bf16.msra.mxu0 %v3953
    %5089 = vmatpush.bf16.msra.mxu0 %v3949
    %5090 = vmatpush.bf16.msra.mxu0 %v3945
    %5091 = vmatpush.bf16.msra.mxu0 %v3941
    %5092 = vmatpush.bf16.msra.mxu0 %v3937
    %5093 = vmatpush.bf16.msra.mxu0 %v3933
    %5094 = vmatmul.bf16.gmra.mxu0 %v848
    %v5095 = vpop.f32.mrf.mxu0
    %v5096 = vadd.f32 %v5083, %v5095
    %v5097 = vpop.f32.mrf.mxu0
    %5098 = vdwg.mxu0
    %5099 = vmatpush.bf16.msra.mxu0 %v3993
    %5100 = vmatpush.bf16.msra.mxu0 %v3989
    %5101 = vmatpush.bf16.msra.mxu0 %v3985
    %5102 = vmatpush.bf16.msra.mxu0 %v3981
    %5103 = vmatpush.bf16.msra.mxu0 %v3977
    %5104 = vmatpush.bf16.msra.mxu0 %v3973
    %5105 = vmatpush.bf16.msra.mxu0 %v3969
    %5106 = vmatpush.bf16.msra.mxu0 %v3965
    %5107 = vmatmul.bf16.gmra.mxu0 %v849
    %v5108 = vpop.f32.mrf.mxu0
    %v5109 = vadd.f32 %v5096, %v5108
    %v5110 = vpop.f32.mrf.mxu0
    %5111 = vdwg.mxu0
    %5112 = vmatpush.bf16.msra.mxu0 0
    %5113 = vmatpush.bf16.msra.mxu0 0
    %5114 = vmatpush.bf16.msra.mxu0 0
    %5115 = vmatpush.bf16.msra.mxu0 0
    %5116 = vmatpush.bf16.msra.mxu0 %v4009
    %5117 = vmatpush.bf16.msra.mxu0 %v4005
    %5118 = vmatpush.bf16.msra.mxu0 %v4001
    %5119 = vmatpush.bf16.msra.mxu0 %v3997
    %5120 = vmatmul.bf16.gmra.mxu0 %v4798
    %v5121 = vpop.f32.mrf.mxu0
    %v5122 = vadd.f32 %v5109, %v5121
    %v5123 = vpop.f32.mrf.mxu0
    %5124 = vdwg.mxu0
    %5125 = vmatpush.bf16.msra.mxu0 %v3258
    %5126 = vmatpush.bf16.msra.mxu0 %v3254
    %5127 = vmatpush.bf16.msra.mxu0 %v3250
    %5128 = vmatpush.bf16.msra.mxu0 %v3246
    %5129 = vmatpush.bf16.msra.mxu0 %v3242
    %5130 = vmatpush.bf16.msra.mxu0 %v3238
    %5131 = vmatpush.bf16.msra.mxu0 %v3234
    %5132 = vmatpush.bf16.msra.mxu0 %v3230
    %5133 = vmatmul.bf16.gmra.mxu0 %v822
    %v5134 = vpop.f32.mrf.mxu0
    %v5135 = vadd.f32 %v813, %v5134
    %v5136 = vpop.f32.mrf.mxu0
    %5137 = vdwg.mxu0
    %5138 = vmatpush.bf16.msra.mxu0 %v3290
    %5139 = vmatpush.bf16.msra.mxu0 %v3286
    %5140 = vmatpush.bf16.msra.mxu0 %v3282
    %5141 = vmatpush.bf16.msra.mxu0 %v3278
    %5142 = vmatpush.bf16.msra.mxu0 %v3274
    %5143 = vmatpush.bf16.msra.mxu0 %v3270
    %5144 = vmatpush.bf16.msra.mxu0 %v3266
    %5145 = vmatpush.bf16.msra.mxu0 %v3262
    %5146 = vmatmul.bf16.gmra.mxu0 %v823
    %v5147 = vpop.f32.mrf.mxu0
    %v5148 = vadd.f32 %v5135, %v5147
    %v5149 = vpop.f32.mrf.mxu0
    %5150 = vdwg.mxu0
    %5151 = vmatpush.bf16.msra.mxu0 %v3322
    %5152 = vmatpush.bf16.msra.mxu0 %v3318
    %5153 = vmatpush.bf16.msra.mxu0 %v3314
    %5154 = vmatpush.bf16.msra.mxu0 %v3310
    %5155 = vmatpush.bf16.msra.mxu0 %v3306
    %5156 = vmatpush.bf16.msra.mxu0 %v3302
    %5157 = vmatpush.bf16.msra.mxu0 %v3298
    %5158 = vmatpush.bf16.msra.mxu0 %v3294
    %5159 = vmatmul.bf16.gmra.mxu0 %v824
    %v5160 = vpop.f32.mrf.mxu0
    %v5161 = vadd.f32 %v5148, %v5160
    %v5162 = vpop.f32.mrf.mxu0
    %5163 = vdwg.mxu0
    %5164 = vmatpush.bf16.msra.mxu0 %v3354
    %5165 = vmatpush.bf16.msra.mxu0 %v3350
    %5166 = vmatpush.bf16.msra.mxu0 %v3346
    %5167 = vmatpush.bf16.msra.mxu0 %v3342
    %5168 = vmatpush.bf16.msra.mxu0 %v3338
    %5169 = vmatpush.bf16.msra.mxu0 %v3334
    %5170 = vmatpush.bf16.msra.mxu0 %v3330
    %5171 = vmatpush.bf16.msra.mxu0 %v3326
    %5172 = vmatmul.bf16.gmra.mxu0 %v825
    %v5173 = vpop.f32.mrf.mxu0
    %v5174 = vadd.f32 %v5161, %v5173
    %v5175 = vpop.f32.mrf.mxu0
    %5176 = vdwg.mxu0
    %5177 = vmatpush.bf16.msra.mxu0 %v3386
    %5178 = vmatpush.bf16.msra.mxu0 %v3382
    %5179 = vmatpush.bf16.msra.mxu0 %v3378
    %5180 = vmatpush.bf16.msra.mxu0 %v3374
    %5181 = vmatpush.bf16.msra.mxu0 %v3370
    %5182 = vmatpush.bf16.msra.mxu0 %v3366
    %5183 = vmatpush.bf16.msra.mxu0 %v3362
    %5184 = vmatpush.bf16.msra.mxu0 %v3358
    %5185 = vmatmul.bf16.gmra.mxu0 %v826
    %v5186 = vpop.f32.mrf.mxu0
    %v5187 = vadd.f32 %v5174, %v5186
    %v5188 = vpop.f32.mrf.mxu0
    %5189 = vdwg.mxu0
    %5190 = vmatpush.bf16.msra.mxu0 %v3418
    %5191 = vmatpush.bf16.msra.mxu0 %v3414
    %5192 = vmatpush.bf16.msra.mxu0 %v3410
    %5193 = vmatpush.bf16.msra.mxu0 %v3406
    %5194 = vmatpush.bf16.msra.mxu0 %v3402
    %5195 = vmatpush.bf16.msra.mxu0 %v3398
    %5196 = vmatpush.bf16.msra.mxu0 %v3394
    %5197 = vmatpush.bf16.msra.mxu0 %v3390
    %5198 = vmatmul.bf16.gmra.mxu0 %v827
    %v5199 = vpop.f32.mrf.mxu0
    %v5200 = vadd.f32 %v5187, %v5199
    %v5201 = vpop.f32.mrf.mxu0
    %5202 = vdwg.mxu0
    %5203 = vmatpush.bf16.msra.mxu0 %v3450
    %5204 = vmatpush.bf16.msra.mxu0 %v3446
    %5205 = vmatpush.bf16.msra.mxu0 %v3442
    %5206 = vmatpush.bf16.msra.mxu0 %v3438
    %5207 = vmatpush.bf16.msra.mxu0 %v3434
    %5208 = vmatpush.bf16.msra.mxu0 %v3430
    %5209 = vmatpush.bf16.msra.mxu0 %v3426
    %5210 = vmatpush.bf16.msra.mxu0 %v3422
    %5211 = vmatmul.bf16.gmra.mxu0 %v828
    %v5212 = vpop.f32.mrf.mxu0
    %v5213 = vadd.f32 %v5200, %v5212
    %v5214 = vpop.f32.mrf.mxu0
    %5215 = vdwg.mxu0
    %5216 = vmatpush.bf16.msra.mxu0 %v3482
    %5217 = vmatpush.bf16.msra.mxu0 %v3478
    %5218 = vmatpush.bf16.msra.mxu0 %v3474
    %5219 = vmatpush.bf16.msra.mxu0 %v3470
    %5220 = vmatpush.bf16.msra.mxu0 %v3466
    %5221 = vmatpush.bf16.msra.mxu0 %v3462
    %5222 = vmatpush.bf16.msra.mxu0 %v3458
    %5223 = vmatpush.bf16.msra.mxu0 %v3454
    %5224 = vmatmul.bf16.gmra.mxu0 %v829
    %v5225 = vpop.f32.mrf.mxu0
    %v5226 = vadd.f32 %v5213, %v5225
    %v5227 = vpop.f32.mrf.mxu0
    %5228 = vdwg.mxu0
    %5229 = vmatpush.bf16.msra.mxu0 %v3514
    %5230 = vmatpush.bf16.msra.mxu0 %v3510
    %5231 = vmatpush.bf16.msra.mxu0 %v3506
    %5232 = vmatpush.bf16.msra.mxu0 %v3502
    %5233 = vmatpush.bf16.msra.mxu0 %v3498
    %5234 = vmatpush.bf16.msra.mxu0 %v3494
    %5235 = vmatpush.bf16.msra.mxu0 %v3490
    %5236 = vmatpush.bf16.msra.mxu0 %v3486
    %5237 = vmatmul.bf16.gmra.mxu0 %v832
    %v5238 = vpop.f32.mrf.mxu0
    %v5239 = vadd.f32 %v5226, %v5238
    %v5240 = vpop.f32.mrf.mxu0
    %5241 = vdwg.mxu0
    %5242 = vmatpush.bf16.msra.mxu0 %v3546
    %5243 = vmatpush.bf16.msra.mxu0 %v3542
    %5244 = vmatpush.bf16.msra.mxu0 %v3538
    %5245 = vmatpush.bf16.msra.mxu0 %v3534
    %5246 = vmatpush.bf16.msra.mxu0 %v3530
    %5247 = vmatpush.bf16.msra.mxu0 %v3526
    %5248 = vmatpush.bf16.msra.mxu0 %v3522
    %5249 = vmatpush.bf16.msra.mxu0 %v3518
    %5250 = vmatmul.bf16.gmra.mxu0 %v833
    %v5251 = vpop.f32.mrf.mxu0
    %v5252 = vadd.f32 %v5239, %v5251
    %v5253 = vpop.f32.mrf.mxu0
    %5254 = vdwg.mxu0
    %5255 = vmatpush.bf16.msra.mxu0 %v3578
    %5256 = vmatpush.bf16.msra.mxu0 %v3574
    %5257 = vmatpush.bf16.msra.mxu0 %v3570
    %5258 = vmatpush.bf16.msra.mxu0 %v3566
    %5259 = vmatpush.bf16.msra.mxu0 %v3562
    %5260 = vmatpush.bf16.msra.mxu0 %v3558
    %5261 = vmatpush.bf16.msra.mxu0 %v3554
    %5262 = vmatpush.bf16.msra.mxu0 %v3550
    %5263 = vmatmul.bf16.gmra.mxu0 %v834
    %v5264 = vpop.f32.mrf.mxu0
    %v5265 = vadd.f32 %v5252, %v5264
    %v5266 = vpop.f32.mrf.mxu0
    %5267 = vdwg.mxu0
    %5268 = vmatpush.bf16.msra.mxu0 %v3610
    %5269 = vmatpush.bf16.msra.mxu0 %v3606
    %5270 = vmatpush.bf16.msra.mxu0 %v3602
    %5271 = vmatpush.bf16.msra.mxu0 %v3598
    %5272 = vmatpush.bf16.msra.mxu0 %v3594
    %5273 = vmatpush.bf16.msra.mxu0 %v3590
    %5274 = vmatpush.bf16.msra.mxu0 %v3586
    %5275 = vmatpush.bf16.msra.mxu0 %v3582
    %5276 = vmatmul.bf16.gmra.mxu0 %v835
    %v5277 = vpop.f32.mrf.mxu0
    %v5278 = vadd.f32 %v5265, %v5277
    %v5279 = vpop.f32.mrf.mxu0
    %5280 = vdwg.mxu0
    %5281 = vmatpush.bf16.msra.mxu0 %v3642
    %5282 = vmatpush.bf16.msra.mxu0 %v3638
    %5283 = vmatpush.bf16.msra.mxu0 %v3634
    %5284 = vmatpush.bf16.msra.mxu0 %v3630
    %5285 = vmatpush.bf16.msra.mxu0 %v3626
    %5286 = vmatpush.bf16.msra.mxu0 %v3622
    %5287 = vmatpush.bf16.msra.mxu0 %v3618
    %5288 = vmatpush.bf16.msra.mxu0 %v3614
    %5289 = vmatmul.bf16.gmra.mxu0 %v836
    %v5290 = vpop.f32.mrf.mxu0
    %v5291 = vadd.f32 %v5278, %v5290
    %v5292 = vpop.f32.mrf.mxu0
    %5293 = vdwg.mxu0
    %5294 = vmatpush.bf16.msra.mxu0 %v3674
    %5295 = vmatpush.bf16.msra.mxu0 %v3670
    %5296 = vmatpush.bf16.msra.mxu0 %v3666
    %5297 = vmatpush.bf16.msra.mxu0 %v3662
    %5298 = vmatpush.bf16.msra.mxu0 %v3658
    %5299 = vmatpush.bf16.msra.mxu0 %v3654
    %5300 = vmatpush.bf16.msra.mxu0 %v3650
    %5301 = vmatpush.bf16.msra.mxu0 %v3646
    %5302 = vmatmul.bf16.gmra.mxu0 %v837
    %v5303 = vpop.f32.mrf.mxu0
    %v5304 = vadd.f32 %v5291, %v5303
    %v5305 = vpop.f32.mrf.mxu0
    %5306 = vdwg.mxu0
    %5307 = vmatpush.bf16.msra.mxu0 %v3706
    %5308 = vmatpush.bf16.msra.mxu0 %v3702
    %5309 = vmatpush.bf16.msra.mxu0 %v3698
    %5310 = vmatpush.bf16.msra.mxu0 %v3694
    %5311 = vmatpush.bf16.msra.mxu0 %v3690
    %5312 = vmatpush.bf16.msra.mxu0 %v3686
    %5313 = vmatpush.bf16.msra.mxu0 %v3682
    %5314 = vmatpush.bf16.msra.mxu0 %v3678
    %5315 = vmatmul.bf16.gmra.mxu0 %v838
    %v5316 = vpop.f32.mrf.mxu0
    %v5317 = vadd.f32 %v5304, %v5316
    %v5318 = vpop.f32.mrf.mxu0
    %5319 = vdwg.mxu0
    %5320 = vmatpush.bf16.msra.mxu0 %v3738
    %5321 = vmatpush.bf16.msra.mxu0 %v3734
    %5322 = vmatpush.bf16.msra.mxu0 %v3730
    %5323 = vmatpush.bf16.msra.mxu0 %v3726
    %5324 = vmatpush.bf16.msra.mxu0 %v3722
    %5325 = vmatpush.bf16.msra.mxu0 %v3718
    %5326 = vmatpush.bf16.msra.mxu0 %v3714
    %5327 = vmatpush.bf16.msra.mxu0 %v3710
    %5328 = vmatmul.bf16.gmra.mxu0 %v839
    %v5329 = vpop.f32.mrf.mxu0
    %v5330 = vadd.f32 %v5317, %v5329
    %v5331 = vpop.f32.mrf.mxu0
    %5332 = vdwg.mxu0
    %5333 = vmatpush.bf16.msra.mxu0 %v3770
    %5334 = vmatpush.bf16.msra.mxu0 %v3766
    %5335 = vmatpush.bf16.msra.mxu0 %v3762
    %5336 = vmatpush.bf16.msra.mxu0 %v3758
    %5337 = vmatpush.bf16.msra.mxu0 %v3754
    %5338 = vmatpush.bf16.msra.mxu0 %v3750
    %5339 = vmatpush.bf16.msra.mxu0 %v3746
    %5340 = vmatpush.bf16.msra.mxu0 %v3742
    %5341 = vmatmul.bf16.gmra.mxu0 %v842
    %v5342 = vpop.f32.mrf.mxu0
    %v5343 = vadd.f32 %v5330, %v5342
    %v5344 = vpop.f32.mrf.mxu0
    %5345 = vdwg.mxu0
    %5346 = vmatpush.bf16.msra.mxu0 %v3802
    %5347 = vmatpush.bf16.msra.mxu0 %v3798
    %5348 = vmatpush.bf16.msra.mxu0 %v3794
    %5349 = vmatpush.bf16.msra.mxu0 %v3790
    %5350 = vmatpush.bf16.msra.mxu0 %v3786
    %5351 = vmatpush.bf16.msra.mxu0 %v3782
    %5352 = vmatpush.bf16.msra.mxu0 %v3778
    %5353 = vmatpush.bf16.msra.mxu0 %v3774
    %5354 = vmatmul.bf16.gmra.mxu0 %v843
    %v5355 = vpop.f32.mrf.mxu0
    %v5356 = vadd.f32 %v5343, %v5355
    %v5357 = vpop.f32.mrf.mxu0
    %5358 = vdwg.mxu0
    %5359 = vmatpush.bf16.msra.mxu0 %v3834
    %5360 = vmatpush.bf16.msra.mxu0 %v3830
    %5361 = vmatpush.bf16.msra.mxu0 %v3826
    %5362 = vmatpush.bf16.msra.mxu0 %v3822
    %5363 = vmatpush.bf16.msra.mxu0 %v3818
    %5364 = vmatpush.bf16.msra.mxu0 %v3814
    %5365 = vmatpush.bf16.msra.mxu0 %v3810
    %5366 = vmatpush.bf16.msra.mxu0 %v3806
    %5367 = vmatmul.bf16.gmra.mxu0 %v844
    %v5368 = vpop.f32.mrf.mxu0
    %v5369 = vadd.f32 %v5356, %v5368
    %v5370 = vpop.f32.mrf.mxu0
    %5371 = vdwg.mxu0
    %5372 = vmatpush.bf16.msra.mxu0 %v3866
    %5373 = vmatpush.bf16.msra.mxu0 %v3862
    %5374 = vmatpush.bf16.msra.mxu0 %v3858
    %5375 = vmatpush.bf16.msra.mxu0 %v3854
    %5376 = vmatpush.bf16.msra.mxu0 %v3850
    %5377 = vmatpush.bf16.msra.mxu0 %v3846
    %5378 = vmatpush.bf16.msra.mxu0 %v3842
    %5379 = vmatpush.bf16.msra.mxu0 %v3838
    %5380 = vmatmul.bf16.gmra.mxu0 %v845
    %v5381 = vpop.f32.mrf.mxu0
    %v5382 = vadd.f32 %v5369, %v5381
    %v5383 = vpop.f32.mrf.mxu0
    %5384 = vdwg.mxu0
    %5385 = vmatpush.bf16.msra.mxu0 %v3898
    %5386 = vmatpush.bf16.msra.mxu0 %v3894
    %5387 = vmatpush.bf16.msra.mxu0 %v3890
    %5388 = vmatpush.bf16.msra.mxu0 %v3886
    %5389 = vmatpush.bf16.msra.mxu0 %v3882
    %5390 = vmatpush.bf16.msra.mxu0 %v3878
    %5391 = vmatpush.bf16.msra.mxu0 %v3874
    %5392 = vmatpush.bf16.msra.mxu0 %v3870
    %5393 = vmatmul.bf16.gmra.mxu0 %v846
    %v5394 = vpop.f32.mrf.mxu0
    %v5395 = vadd.f32 %v5382, %v5394
    %v5396 = vpop.f32.mrf.mxu0
    %5397 = vdwg.mxu0
    %5398 = vmatpush.bf16.msra.mxu0 %v3930
    %5399 = vmatpush.bf16.msra.mxu0 %v3926
    %5400 = vmatpush.bf16.msra.mxu0 %v3922
    %5401 = vmatpush.bf16.msra.mxu0 %v3918
    %5402 = vmatpush.bf16.msra.mxu0 %v3914
    %5403 = vmatpush.bf16.msra.mxu0 %v3910
    %5404 = vmatpush.bf16.msra.mxu0 %v3906
    %5405 = vmatpush.bf16.msra.mxu0 %v3902
    %5406 = vmatmul.bf16.gmra.mxu0 %v847
    %v5407 = vpop.f32.mrf.mxu0
    %v5408 = vadd.f32 %v5395, %v5407
    %v5409 = vpop.f32.mrf.mxu0
    %5410 = vdwg.mxu0
    %5411 = vmatpush.bf16.msra.mxu0 %v3962
    %5412 = vmatpush.bf16.msra.mxu0 %v3958
    %5413 = vmatpush.bf16.msra.mxu0 %v3954
    %5414 = vmatpush.bf16.msra.mxu0 %v3950
    %5415 = vmatpush.bf16.msra.mxu0 %v3946
    %5416 = vmatpush.bf16.msra.mxu0 %v3942
    %5417 = vmatpush.bf16.msra.mxu0 %v3938
    %5418 = vmatpush.bf16.msra.mxu0 %v3934
    %5419 = vmatmul.bf16.gmra.mxu0 %v848
    %v5420 = vpop.f32.mrf.mxu0
    %v5421 = vadd.f32 %v5408, %v5420
    %v5422 = vpop.f32.mrf.mxu0
    %5423 = vdwg.mxu0
    %5424 = vmatpush.bf16.msra.mxu0 %v3994
    %5425 = vmatpush.bf16.msra.mxu0 %v3990
    %5426 = vmatpush.bf16.msra.mxu0 %v3986
    %5427 = vmatpush.bf16.msra.mxu0 %v3982
    %5428 = vmatpush.bf16.msra.mxu0 %v3978
    %5429 = vmatpush.bf16.msra.mxu0 %v3974
    %5430 = vmatpush.bf16.msra.mxu0 %v3970
    %5431 = vmatpush.bf16.msra.mxu0 %v3966
    %5432 = vmatmul.bf16.gmra.mxu0 %v849
    %v5433 = vpop.f32.mrf.mxu0
    %v5434 = vadd.f32 %v5421, %v5433
    %v5435 = vpop.f32.mrf.mxu0
    %5436 = vdwg.mxu0
    %5437 = vmatpush.bf16.msra.mxu0 0
    %5438 = vmatpush.bf16.msra.mxu0 0
    %5439 = vmatpush.bf16.msra.mxu0 0
    %5440 = vmatpush.bf16.msra.mxu0 0
    %5441 = vmatpush.bf16.msra.mxu0 %v4010
    %5442 = vmatpush.bf16.msra.mxu0 %v4006
    %5443 = vmatpush.bf16.msra.mxu0 %v4002
    %5444 = vmatpush.bf16.msra.mxu0 %v3998
    %5445 = vmatmul.bf16.gmra.mxu0 %v4798
    %v5446 = vpop.f32.mrf.mxu0
    %v5447 = vadd.f32 %v5434, %v5446
    %v5448 = vpop.f32.mrf.mxu0
    %5449 = vdwg.mxu0
    %5450 = vmatpush.bf16.msra.mxu0 %v3259
    %5451 = vmatpush.bf16.msra.mxu0 %v3255
    %5452 = vmatpush.bf16.msra.mxu0 %v3251
    %5453 = vmatpush.bf16.msra.mxu0 %v3247
    %5454 = vmatpush.bf16.msra.mxu0 %v3243
    %5455 = vmatpush.bf16.msra.mxu0 %v3239
    %5456 = vmatpush.bf16.msra.mxu0 %v3235
    %5457 = vmatpush.bf16.msra.mxu0 %v3231
    %5458 = vmatmul.bf16.gmra.mxu0 %v822
    %v5459 = vpop.f32.mrf.mxu0
    %v5460 = vadd.f32 %v814, %v5459
    %v5461 = vpop.f32.mrf.mxu0
    %5462 = vdwg.mxu0
    %5463 = vmatpush.bf16.msra.mxu0 %v3291
    %5464 = vmatpush.bf16.msra.mxu0 %v3287
    %5465 = vmatpush.bf16.msra.mxu0 %v3283
    %5466 = vmatpush.bf16.msra.mxu0 %v3279
    %5467 = vmatpush.bf16.msra.mxu0 %v3275
    %5468 = vmatpush.bf16.msra.mxu0 %v3271
    %5469 = vmatpush.bf16.msra.mxu0 %v3267
    %5470 = vmatpush.bf16.msra.mxu0 %v3263
    %5471 = vmatmul.bf16.gmra.mxu0 %v823
    %v5472 = vpop.f32.mrf.mxu0
    %v5473 = vadd.f32 %v5460, %v5472
    %v5474 = vpop.f32.mrf.mxu0
    %5475 = vdwg.mxu0
    %5476 = vmatpush.bf16.msra.mxu0 %v3323
    %5477 = vmatpush.bf16.msra.mxu0 %v3319
    %5478 = vmatpush.bf16.msra.mxu0 %v3315
    %5479 = vmatpush.bf16.msra.mxu0 %v3311
    %5480 = vmatpush.bf16.msra.mxu0 %v3307
    %5481 = vmatpush.bf16.msra.mxu0 %v3303
    %5482 = vmatpush.bf16.msra.mxu0 %v3299
    %5483 = vmatpush.bf16.msra.mxu0 %v3295
    %5484 = vmatmul.bf16.gmra.mxu0 %v824
    %v5485 = vpop.f32.mrf.mxu0
    %v5486 = vadd.f32 %v5473, %v5485
    %v5487 = vpop.f32.mrf.mxu0
    %5488 = vdwg.mxu0
    %5489 = vmatpush.bf16.msra.mxu0 %v3355
    %5490 = vmatpush.bf16.msra.mxu0 %v3351
    %5491 = vmatpush.bf16.msra.mxu0 %v3347
    %5492 = vmatpush.bf16.msra.mxu0 %v3343
    %5493 = vmatpush.bf16.msra.mxu0 %v3339
    %5494 = vmatpush.bf16.msra.mxu0 %v3335
    %5495 = vmatpush.bf16.msra.mxu0 %v3331
    %5496 = vmatpush.bf16.msra.mxu0 %v3327
    %5497 = vmatmul.bf16.gmra.mxu0 %v825
    %v5498 = vpop.f32.mrf.mxu0
    %v5499 = vadd.f32 %v5486, %v5498
    %v5500 = vpop.f32.mrf.mxu0
    %5501 = vdwg.mxu0
    %5502 = vmatpush.bf16.msra.mxu0 %v3387
    %5503 = vmatpush.bf16.msra.mxu0 %v3383
    %5504 = vmatpush.bf16.msra.mxu0 %v3379
    %5505 = vmatpush.bf16.msra.mxu0 %v3375
    %5506 = vmatpush.bf16.msra.mxu0 %v3371
    %5507 = vmatpush.bf16.msra.mxu0 %v3367
    %5508 = vmatpush.bf16.msra.mxu0 %v3363
    %5509 = vmatpush.bf16.msra.mxu0 %v3359
    %5510 = vmatmul.bf16.gmra.mxu0 %v826
    %v5511 = vpop.f32.mrf.mxu0
    %v5512 = vadd.f32 %v5499, %v5511
    %v5513 = vpop.f32.mrf.mxu0
    %5514 = vdwg.mxu0
    %5515 = vmatpush.bf16.msra.mxu0 %v3419
    %5516 = vmatpush.bf16.msra.mxu0 %v3415
    %5517 = vmatpush.bf16.msra.mxu0 %v3411
    %5518 = vmatpush.bf16.msra.mxu0 %v3407
    %5519 = vmatpush.bf16.msra.mxu0 %v3403
    %5520 = vmatpush.bf16.msra.mxu0 %v3399
    %5521 = vmatpush.bf16.msra.mxu0 %v3395
    %5522 = vmatpush.bf16.msra.mxu0 %v3391
    %5523 = vmatmul.bf16.gmra.mxu0 %v827
    %v5524 = vpop.f32.mrf.mxu0
    %v5525 = vadd.f32 %v5512, %v5524
    %v5526 = vpop.f32.mrf.mxu0
    %5527 = vdwg.mxu0
    %5528 = vmatpush.bf16.msra.mxu0 %v3451
    %5529 = vmatpush.bf16.msra.mxu0 %v3447
    %5530 = vmatpush.bf16.msra.mxu0 %v3443
    %5531 = vmatpush.bf16.msra.mxu0 %v3439
    %5532 = vmatpush.bf16.msra.mxu0 %v3435
    %5533 = vmatpush.bf16.msra.mxu0 %v3431
    %5534 = vmatpush.bf16.msra.mxu0 %v3427
    %5535 = vmatpush.bf16.msra.mxu0 %v3423
    %5536 = vmatmul.bf16.gmra.mxu0 %v828
    %v5537 = vpop.f32.mrf.mxu0
    %v5538 = vadd.f32 %v5525, %v5537
    %v5539 = vpop.f32.mrf.mxu0
    %5540 = vdwg.mxu0
    %5541 = vmatpush.bf16.msra.mxu0 %v3483
    %5542 = vmatpush.bf16.msra.mxu0 %v3479
    %5543 = vmatpush.bf16.msra.mxu0 %v3475
    %5544 = vmatpush.bf16.msra.mxu0 %v3471
    %5545 = vmatpush.bf16.msra.mxu0 %v3467
    %5546 = vmatpush.bf16.msra.mxu0 %v3463
    %5547 = vmatpush.bf16.msra.mxu0 %v3459
    %5548 = vmatpush.bf16.msra.mxu0 %v3455
    %5549 = vmatmul.bf16.gmra.mxu0 %v829
    %v5550 = vpop.f32.mrf.mxu0
    %v5551 = vadd.f32 %v5538, %v5550
    %v5552 = vpop.f32.mrf.mxu0
    %5553 = vdwg.mxu0
    %5554 = vmatpush.bf16.msra.mxu0 %v3515
    %5555 = vmatpush.bf16.msra.mxu0 %v3511
    %5556 = vmatpush.bf16.msra.mxu0 %v3507
    %5557 = vmatpush.bf16.msra.mxu0 %v3503
    %5558 = vmatpush.bf16.msra.mxu0 %v3499
    %5559 = vmatpush.bf16.msra.mxu0 %v3495
    %5560 = vmatpush.bf16.msra.mxu0 %v3491
    %5561 = vmatpush.bf16.msra.mxu0 %v3487
    %5562 = vmatmul.bf16.gmra.mxu0 %v832
    %v5563 = vpop.f32.mrf.mxu0
    %v5564 = vadd.f32 %v5551, %v5563
    %v5565 = vpop.f32.mrf.mxu0
    %5566 = vdwg.mxu0
    %5567 = vmatpush.bf16.msra.mxu0 %v3547
    %5568 = vmatpush.bf16.msra.mxu0 %v3543
    %5569 = vmatpush.bf16.msra.mxu0 %v3539
    %5570 = vmatpush.bf16.msra.mxu0 %v3535
    %5571 = vmatpush.bf16.msra.mxu0 %v3531
    %5572 = vmatpush.bf16.msra.mxu0 %v3527
    %5573 = vmatpush.bf16.msra.mxu0 %v3523
    %5574 = vmatpush.bf16.msra.mxu0 %v3519
    %5575 = vmatmul.bf16.gmra.mxu0 %v833
    %v5576 = vpop.f32.mrf.mxu0
    %v5577 = vadd.f32 %v5564, %v5576
    %v5578 = vpop.f32.mrf.mxu0
    %5579 = vdwg.mxu0
    %5580 = vmatpush.bf16.msra.mxu0 %v3579
    %5581 = vmatpush.bf16.msra.mxu0 %v3575
    %5582 = vmatpush.bf16.msra.mxu0 %v3571
    %5583 = vmatpush.bf16.msra.mxu0 %v3567
    %5584 = vmatpush.bf16.msra.mxu0 %v3563
    %5585 = vmatpush.bf16.msra.mxu0 %v3559
    %5586 = vmatpush.bf16.msra.mxu0 %v3555
    %5587 = vmatpush.bf16.msra.mxu0 %v3551
    %5588 = vmatmul.bf16.gmra.mxu0 %v834
    %v5589 = vpop.f32.mrf.mxu0
    %v5590 = vadd.f32 %v5577, %v5589
    %v5591 = vpop.f32.mrf.mxu0
    %5592 = vdwg.mxu0
    %5593 = vmatpush.bf16.msra.mxu0 %v3611
    %5594 = vmatpush.bf16.msra.mxu0 %v3607
    %5595 = vmatpush.bf16.msra.mxu0 %v3603
    %5596 = vmatpush.bf16.msra.mxu0 %v3599
    %5597 = vmatpush.bf16.msra.mxu0 %v3595
    %5598 = vmatpush.bf16.msra.mxu0 %v3591
    %5599 = vmatpush.bf16.msra.mxu0 %v3587
    %5600 = vmatpush.bf16.msra.mxu0 %v3583
    %5601 = vmatmul.bf16.gmra.mxu0 %v835
    %v5602 = vpop.f32.mrf.mxu0
    %v5603 = vadd.f32 %v5590, %v5602
    %v5604 = vpop.f32.mrf.mxu0
    %5605 = vdwg.mxu0
    %5606 = vmatpush.bf16.msra.mxu0 %v3643
    %5607 = vmatpush.bf16.msra.mxu0 %v3639
    %5608 = vmatpush.bf16.msra.mxu0 %v3635
    %5609 = vmatpush.bf16.msra.mxu0 %v3631
    %5610 = vmatpush.bf16.msra.mxu0 %v3627
    %5611 = vmatpush.bf16.msra.mxu0 %v3623
    %5612 = vmatpush.bf16.msra.mxu0 %v3619
    %5613 = vmatpush.bf16.msra.mxu0 %v3615
    %5614 = vmatmul.bf16.gmra.mxu0 %v836
    %v5615 = vpop.f32.mrf.mxu0
    %v5616 = vadd.f32 %v5603, %v5615
    %v5617 = vpop.f32.mrf.mxu0
    %5618 = vdwg.mxu0
    %5619 = vmatpush.bf16.msra.mxu0 %v3675
    %5620 = vmatpush.bf16.msra.mxu0 %v3671
    %5621 = vmatpush.bf16.msra.mxu0 %v3667
    %5622 = vmatpush.bf16.msra.mxu0 %v3663
    %5623 = vmatpush.bf16.msra.mxu0 %v3659
    %5624 = vmatpush.bf16.msra.mxu0 %v3655
    %5625 = vmatpush.bf16.msra.mxu0 %v3651
    %5626 = vmatpush.bf16.msra.mxu0 %v3647
    %5627 = vmatmul.bf16.gmra.mxu0 %v837
    %v5628 = vpop.f32.mrf.mxu0
    %v5629 = vadd.f32 %v5616, %v5628
    %v5630 = vpop.f32.mrf.mxu0
    %5631 = vdwg.mxu0
    %5632 = vmatpush.bf16.msra.mxu0 %v3707
    %5633 = vmatpush.bf16.msra.mxu0 %v3703
    %5634 = vmatpush.bf16.msra.mxu0 %v3699
    %5635 = vmatpush.bf16.msra.mxu0 %v3695
    %5636 = vmatpush.bf16.msra.mxu0 %v3691
    %5637 = vmatpush.bf16.msra.mxu0 %v3687
    %5638 = vmatpush.bf16.msra.mxu0 %v3683
    %5639 = vmatpush.bf16.msra.mxu0 %v3679
    %5640 = vmatmul.bf16.gmra.mxu0 %v838
    %v5641 = vpop.f32.mrf.mxu0
    %v5642 = vadd.f32 %v5629, %v5641
    %v5643 = vpop.f32.mrf.mxu0
    %5644 = vdwg.mxu0
    %5645 = vmatpush.bf16.msra.mxu0 %v3739
    %5646 = vmatpush.bf16.msra.mxu0 %v3735
    %5647 = vmatpush.bf16.msra.mxu0 %v3731
    %5648 = vmatpush.bf16.msra.mxu0 %v3727
    %5649 = vmatpush.bf16.msra.mxu0 %v3723
    %5650 = vmatpush.bf16.msra.mxu0 %v3719
    %5651 = vmatpush.bf16.msra.mxu0 %v3715
    %5652 = vmatpush.bf16.msra.mxu0 %v3711
    %5653 = vmatmul.bf16.gmra.mxu0 %v839
    %v5654 = vpop.f32.mrf.mxu0
    %v5655 = vadd.f32 %v5642, %v5654
    %v5656 = vpop.f32.mrf.mxu0
    %5657 = vdwg.mxu0
    %5658 = vmatpush.bf16.msra.mxu0 %v3771
    %5659 = vmatpush.bf16.msra.mxu0 %v3767
    %5660 = vmatpush.bf16.msra.mxu0 %v3763
    %5661 = vmatpush.bf16.msra.mxu0 %v3759
    %5662 = vmatpush.bf16.msra.mxu0 %v3755
    %5663 = vmatpush.bf16.msra.mxu0 %v3751
    %5664 = vmatpush.bf16.msra.mxu0 %v3747
    %5665 = vmatpush.bf16.msra.mxu0 %v3743
    %5666 = vmatmul.bf16.gmra.mxu0 %v842
    %v5667 = vpop.f32.mrf.mxu0
    %v5668 = vadd.f32 %v5655, %v5667
    %v5669 = vpop.f32.mrf.mxu0
    %5670 = vdwg.mxu0
    %5671 = vmatpush.bf16.msra.mxu0 %v3803
    %5672 = vmatpush.bf16.msra.mxu0 %v3799
    %5673 = vmatpush.bf16.msra.mxu0 %v3795
    %5674 = vmatpush.bf16.msra.mxu0 %v3791
    %5675 = vmatpush.bf16.msra.mxu0 %v3787
    %5676 = vmatpush.bf16.msra.mxu0 %v3783
    %5677 = vmatpush.bf16.msra.mxu0 %v3779
    %5678 = vmatpush.bf16.msra.mxu0 %v3775
    %5679 = vmatmul.bf16.gmra.mxu0 %v843
    %v5680 = vpop.f32.mrf.mxu0
    %v5681 = vadd.f32 %v5668, %v5680
    %v5682 = vpop.f32.mrf.mxu0
    %5683 = vdwg.mxu0
    %5684 = vmatpush.bf16.msra.mxu0 %v3835
    %5685 = vmatpush.bf16.msra.mxu0 %v3831
    %5686 = vmatpush.bf16.msra.mxu0 %v3827
    %5687 = vmatpush.bf16.msra.mxu0 %v3823
    %5688 = vmatpush.bf16.msra.mxu0 %v3819
    %5689 = vmatpush.bf16.msra.mxu0 %v3815
    %5690 = vmatpush.bf16.msra.mxu0 %v3811
    %5691 = vmatpush.bf16.msra.mxu0 %v3807
    %5692 = vmatmul.bf16.gmra.mxu0 %v844
    %v5693 = vpop.f32.mrf.mxu0
    %v5694 = vadd.f32 %v5681, %v5693
    %v5695 = vpop.f32.mrf.mxu0
    %5696 = vdwg.mxu0
    %5697 = vmatpush.bf16.msra.mxu0 %v3867
    %5698 = vmatpush.bf16.msra.mxu0 %v3863
    %5699 = vmatpush.bf16.msra.mxu0 %v3859
    %5700 = vmatpush.bf16.msra.mxu0 %v3855
    %5701 = vmatpush.bf16.msra.mxu0 %v3851
    %5702 = vmatpush.bf16.msra.mxu0 %v3847
    %5703 = vmatpush.bf16.msra.mxu0 %v3843
    %5704 = vmatpush.bf16.msra.mxu0 %v3839
    %5705 = vmatmul.bf16.gmra.mxu0 %v845
    %v5706 = vpop.f32.mrf.mxu0
    %v5707 = vadd.f32 %v5694, %v5706
    %v5708 = vpop.f32.mrf.mxu0
    %5709 = vdwg.mxu0
    %5710 = vmatpush.bf16.msra.mxu0 %v3899
    %5711 = vmatpush.bf16.msra.mxu0 %v3895
    %5712 = vmatpush.bf16.msra.mxu0 %v3891
    %5713 = vmatpush.bf16.msra.mxu0 %v3887
    %5714 = vmatpush.bf16.msra.mxu0 %v3883
    %5715 = vmatpush.bf16.msra.mxu0 %v3879
    %5716 = vmatpush.bf16.msra.mxu0 %v3875
    %5717 = vmatpush.bf16.msra.mxu0 %v3871
    %5718 = vmatmul.bf16.gmra.mxu0 %v846
    %v5719 = vpop.f32.mrf.mxu0
    %v5720 = vadd.f32 %v5707, %v5719
    %v5721 = vpop.f32.mrf.mxu0
    %5722 = vdwg.mxu0
    %5723 = vmatpush.bf16.msra.mxu0 %v3931
    %5724 = vmatpush.bf16.msra.mxu0 %v3927
    %5725 = vmatpush.bf16.msra.mxu0 %v3923
    %5726 = vmatpush.bf16.msra.mxu0 %v3919
    %5727 = vmatpush.bf16.msra.mxu0 %v3915
    %5728 = vmatpush.bf16.msra.mxu0 %v3911
    %5729 = vmatpush.bf16.msra.mxu0 %v3907
    %5730 = vmatpush.bf16.msra.mxu0 %v3903
    %5731 = vmatmul.bf16.gmra.mxu0 %v847
    %v5732 = vpop.f32.mrf.mxu0
    %v5733 = vadd.f32 %v5720, %v5732
    %v5734 = vpop.f32.mrf.mxu0
    %5735 = vdwg.mxu0
    %5736 = vmatpush.bf16.msra.mxu0 %v3963
    %5737 = vmatpush.bf16.msra.mxu0 %v3959
    %5738 = vmatpush.bf16.msra.mxu0 %v3955
    %5739 = vmatpush.bf16.msra.mxu0 %v3951
    %5740 = vmatpush.bf16.msra.mxu0 %v3947
    %5741 = vmatpush.bf16.msra.mxu0 %v3943
    %5742 = vmatpush.bf16.msra.mxu0 %v3939
    %5743 = vmatpush.bf16.msra.mxu0 %v3935
    %5744 = vmatmul.bf16.gmra.mxu0 %v848
    %v5745 = vpop.f32.mrf.mxu0
    %v5746 = vadd.f32 %v5733, %v5745
    %v5747 = vpop.f32.mrf.mxu0
    %5748 = vdwg.mxu0
    %5749 = vmatpush.bf16.msra.mxu0 %v3995
    %5750 = vmatpush.bf16.msra.mxu0 %v3991
    %5751 = vmatpush.bf16.msra.mxu0 %v3987
    %5752 = vmatpush.bf16.msra.mxu0 %v3983
    %5753 = vmatpush.bf16.msra.mxu0 %v3979
    %5754 = vmatpush.bf16.msra.mxu0 %v3975
    %5755 = vmatpush.bf16.msra.mxu0 %v3971
    %5756 = vmatpush.bf16.msra.mxu0 %v3967
    %5757 = vmatmul.bf16.gmra.mxu0 %v849
    %v5758 = vpop.f32.mrf.mxu0
    %v5759 = vadd.f32 %v5746, %v5758
    %v5760 = vpop.f32.mrf.mxu0
    %5761 = vdwg.mxu0
    %5762 = vmatpush.bf16.msra.mxu0 0
    %5763 = vmatpush.bf16.msra.mxu0 0
    %5764 = vmatpush.bf16.msra.mxu0 0
    %5765 = vmatpush.bf16.msra.mxu0 0
    %5766 = vmatpush.bf16.msra.mxu0 %v4011
    %5767 = vmatpush.bf16.msra.mxu0 %v4007
    %5768 = vmatpush.bf16.msra.mxu0 %v4003
    %5769 = vmatpush.bf16.msra.mxu0 %v3999
    %5770 = vmatmul.bf16.gmra.mxu0 %v4798
    %v5771 = vpop.f32.mrf.mxu0
    %v5772 = vadd.f32 %v5759, %v5771
    %v5773 = vpop.f32.mrf.mxu0
    %5774 = vdwg.mxu0
    %5775 = vmatpush.bf16.msra.mxu0 %v3260
    %5776 = vmatpush.bf16.msra.mxu0 %v3256
    %5777 = vmatpush.bf16.msra.mxu0 %v3252
    %5778 = vmatpush.bf16.msra.mxu0 %v3248
    %5779 = vmatpush.bf16.msra.mxu0 %v3244
    %5780 = vmatpush.bf16.msra.mxu0 %v3240
    %5781 = vmatpush.bf16.msra.mxu0 %v3236
    %5782 = vmatpush.bf16.msra.mxu0 %v3232
    %5783 = vmatmul.bf16.gmra.mxu0 %v822
    %v5784 = vpop.f32.mrf.mxu0
    %v5785 = vadd.f32 %v815, %v5784
    %v5786 = vpop.f32.mrf.mxu0
    %5787 = vdwg.mxu0
    %5788 = vmatpush.bf16.msra.mxu0 %v3292
    %5789 = vmatpush.bf16.msra.mxu0 %v3288
    %5790 = vmatpush.bf16.msra.mxu0 %v3284
    %5791 = vmatpush.bf16.msra.mxu0 %v3280
    %5792 = vmatpush.bf16.msra.mxu0 %v3276
    %5793 = vmatpush.bf16.msra.mxu0 %v3272
    %5794 = vmatpush.bf16.msra.mxu0 %v3268
    %5795 = vmatpush.bf16.msra.mxu0 %v3264
    %5796 = vmatmul.bf16.gmra.mxu0 %v823
    %v5797 = vpop.f32.mrf.mxu0
    %v5798 = vadd.f32 %v5785, %v5797
    %v5799 = vpop.f32.mrf.mxu0
    %5800 = vdwg.mxu0
    %5801 = vmatpush.bf16.msra.mxu0 %v3324
    %5802 = vmatpush.bf16.msra.mxu0 %v3320
    %5803 = vmatpush.bf16.msra.mxu0 %v3316
    %5804 = vmatpush.bf16.msra.mxu0 %v3312
    %5805 = vmatpush.bf16.msra.mxu0 %v3308
    %5806 = vmatpush.bf16.msra.mxu0 %v3304
    %5807 = vmatpush.bf16.msra.mxu0 %v3300
    %5808 = vmatpush.bf16.msra.mxu0 %v3296
    %5809 = vmatmul.bf16.gmra.mxu0 %v824
    %v5810 = vpop.f32.mrf.mxu0
    %v5811 = vadd.f32 %v5798, %v5810
    %v5812 = vpop.f32.mrf.mxu0
    %5813 = vdwg.mxu0
    %5814 = vmatpush.bf16.msra.mxu0 %v3356
    %5815 = vmatpush.bf16.msra.mxu0 %v3352
    %5816 = vmatpush.bf16.msra.mxu0 %v3348
    %5817 = vmatpush.bf16.msra.mxu0 %v3344
    %5818 = vmatpush.bf16.msra.mxu0 %v3340
    %5819 = vmatpush.bf16.msra.mxu0 %v3336
    %5820 = vmatpush.bf16.msra.mxu0 %v3332
    %5821 = vmatpush.bf16.msra.mxu0 %v3328
    %5822 = vmatmul.bf16.gmra.mxu0 %v825
    %v5823 = vpop.f32.mrf.mxu0
    %v5824 = vadd.f32 %v5811, %v5823
    %v5825 = vpop.f32.mrf.mxu0
    %5826 = vdwg.mxu0
    %5827 = vmatpush.bf16.msra.mxu0 %v3388
    %5828 = vmatpush.bf16.msra.mxu0 %v3384
    %5829 = vmatpush.bf16.msra.mxu0 %v3380
    %5830 = vmatpush.bf16.msra.mxu0 %v3376
    %5831 = vmatpush.bf16.msra.mxu0 %v3372
    %5832 = vmatpush.bf16.msra.mxu0 %v3368
    %5833 = vmatpush.bf16.msra.mxu0 %v3364
    %5834 = vmatpush.bf16.msra.mxu0 %v3360
    %5835 = vmatmul.bf16.gmra.mxu0 %v826
    %v5836 = vpop.f32.mrf.mxu0
    %v5837 = vadd.f32 %v5824, %v5836
    %v5838 = vpop.f32.mrf.mxu0
    %5839 = vdwg.mxu0
    %5840 = vmatpush.bf16.msra.mxu0 %v3420
    %5841 = vmatpush.bf16.msra.mxu0 %v3416
    %5842 = vmatpush.bf16.msra.mxu0 %v3412
    %5843 = vmatpush.bf16.msra.mxu0 %v3408
    %5844 = vmatpush.bf16.msra.mxu0 %v3404
    %5845 = vmatpush.bf16.msra.mxu0 %v3400
    %5846 = vmatpush.bf16.msra.mxu0 %v3396
    %5847 = vmatpush.bf16.msra.mxu0 %v3392
    %5848 = vmatmul.bf16.gmra.mxu0 %v827
    %v5849 = vpop.f32.mrf.mxu0
    %v5850 = vadd.f32 %v5837, %v5849
    %v5851 = vpop.f32.mrf.mxu0
    %5852 = vdwg.mxu0
    %5853 = vmatpush.bf16.msra.mxu0 %v3452
    %5854 = vmatpush.bf16.msra.mxu0 %v3448
    %5855 = vmatpush.bf16.msra.mxu0 %v3444
    %5856 = vmatpush.bf16.msra.mxu0 %v3440
    %5857 = vmatpush.bf16.msra.mxu0 %v3436
    %5858 = vmatpush.bf16.msra.mxu0 %v3432
    %5859 = vmatpush.bf16.msra.mxu0 %v3428
    %5860 = vmatpush.bf16.msra.mxu0 %v3424
    %5861 = vmatmul.bf16.gmra.mxu0 %v828
    %v5862 = vpop.f32.mrf.mxu0
    %v5863 = vadd.f32 %v5850, %v5862
    %v5864 = vpop.f32.mrf.mxu0
    %5865 = vdwg.mxu0
    %5866 = vmatpush.bf16.msra.mxu0 %v3484
    %5867 = vmatpush.bf16.msra.mxu0 %v3480
    %5868 = vmatpush.bf16.msra.mxu0 %v3476
    %5869 = vmatpush.bf16.msra.mxu0 %v3472
    %5870 = vmatpush.bf16.msra.mxu0 %v3468
    %5871 = vmatpush.bf16.msra.mxu0 %v3464
    %5872 = vmatpush.bf16.msra.mxu0 %v3460
    %5873 = vmatpush.bf16.msra.mxu0 %v3456
    %5874 = vmatmul.bf16.gmra.mxu0 %v829
    %v5875 = vpop.f32.mrf.mxu0
    %v5876 = vadd.f32 %v5863, %v5875
    %v5877 = vpop.f32.mrf.mxu0
    %5878 = vdwg.mxu0
    %5879 = vmatpush.bf16.msra.mxu0 %v3516
    %5880 = vmatpush.bf16.msra.mxu0 %v3512
    %5881 = vmatpush.bf16.msra.mxu0 %v3508
    %5882 = vmatpush.bf16.msra.mxu0 %v3504
    %5883 = vmatpush.bf16.msra.mxu0 %v3500
    %5884 = vmatpush.bf16.msra.mxu0 %v3496
    %5885 = vmatpush.bf16.msra.mxu0 %v3492
    %5886 = vmatpush.bf16.msra.mxu0 %v3488
    %5887 = vmatmul.bf16.gmra.mxu0 %v832
    %v5888 = vpop.f32.mrf.mxu0
    %v5889 = vadd.f32 %v5876, %v5888
    %v5890 = vpop.f32.mrf.mxu0
    %5891 = vdwg.mxu0
    %5892 = vmatpush.bf16.msra.mxu0 %v3548
    %5893 = vmatpush.bf16.msra.mxu0 %v3544
    %5894 = vmatpush.bf16.msra.mxu0 %v3540
    %5895 = vmatpush.bf16.msra.mxu0 %v3536
    %5896 = vmatpush.bf16.msra.mxu0 %v3532
    %5897 = vmatpush.bf16.msra.mxu0 %v3528
    %5898 = vmatpush.bf16.msra.mxu0 %v3524
    %5899 = vmatpush.bf16.msra.mxu0 %v3520
    %5900 = vmatmul.bf16.gmra.mxu0 %v833
    %v5901 = vpop.f32.mrf.mxu0
    %v5902 = vadd.f32 %v5889, %v5901
    %v5903 = vpop.f32.mrf.mxu0
    %5904 = vdwg.mxu0
    %5905 = vmatpush.bf16.msra.mxu0 %v3580
    %5906 = vmatpush.bf16.msra.mxu0 %v3576
    %5907 = vmatpush.bf16.msra.mxu0 %v3572
    %5908 = vmatpush.bf16.msra.mxu0 %v3568
    %5909 = vmatpush.bf16.msra.mxu0 %v3564
    %5910 = vmatpush.bf16.msra.mxu0 %v3560
    %5911 = vmatpush.bf16.msra.mxu0 %v3556
    %5912 = vmatpush.bf16.msra.mxu0 %v3552
    %5913 = vmatmul.bf16.gmra.mxu0 %v834
    %v5914 = vpop.f32.mrf.mxu0
    %v5915 = vadd.f32 %v5902, %v5914
    %v5916 = vpop.f32.mrf.mxu0
    %5917 = vdwg.mxu0
    %5918 = vmatpush.bf16.msra.mxu0 %v3612
    %5919 = vmatpush.bf16.msra.mxu0 %v3608
    %5920 = vmatpush.bf16.msra.mxu0 %v3604
    %5921 = vmatpush.bf16.msra.mxu0 %v3600
    %5922 = vmatpush.bf16.msra.mxu0 %v3596
    %5923 = vmatpush.bf16.msra.mxu0 %v3592
    %5924 = vmatpush.bf16.msra.mxu0 %v3588
    %5925 = vmatpush.bf16.msra.mxu0 %v3584
    %5926 = vmatmul.bf16.gmra.mxu0 %v835
    %v5927 = vpop.f32.mrf.mxu0
    %v5928 = vadd.f32 %v5915, %v5927
    %v5929 = vpop.f32.mrf.mxu0
    %5930 = vdwg.mxu0
    %5931 = vmatpush.bf16.msra.mxu0 %v3644
    %5932 = vmatpush.bf16.msra.mxu0 %v3640
    %5933 = vmatpush.bf16.msra.mxu0 %v3636
    %5934 = vmatpush.bf16.msra.mxu0 %v3632
    %5935 = vmatpush.bf16.msra.mxu0 %v3628
    %5936 = vmatpush.bf16.msra.mxu0 %v3624
    %5937 = vmatpush.bf16.msra.mxu0 %v3620
    %5938 = vmatpush.bf16.msra.mxu0 %v3616
    %5939 = vmatmul.bf16.gmra.mxu0 %v836
    %v5940 = vpop.f32.mrf.mxu0
    %v5941 = vadd.f32 %v5928, %v5940
    %v5942 = vpop.f32.mrf.mxu0
    %5943 = vdwg.mxu0
    %5944 = vmatpush.bf16.msra.mxu0 %v3676
    %5945 = vmatpush.bf16.msra.mxu0 %v3672
    %5946 = vmatpush.bf16.msra.mxu0 %v3668
    %5947 = vmatpush.bf16.msra.mxu0 %v3664
    %5948 = vmatpush.bf16.msra.mxu0 %v3660
    %5949 = vmatpush.bf16.msra.mxu0 %v3656
    %5950 = vmatpush.bf16.msra.mxu0 %v3652
    %5951 = vmatpush.bf16.msra.mxu0 %v3648
    %5952 = vmatmul.bf16.gmra.mxu0 %v837
    %v5953 = vpop.f32.mrf.mxu0
    %v5954 = vadd.f32 %v5941, %v5953
    %v5955 = vpop.f32.mrf.mxu0
    %5956 = vdwg.mxu0
    %5957 = vmatpush.bf16.msra.mxu0 %v3708
    %5958 = vmatpush.bf16.msra.mxu0 %v3704
    %5959 = vmatpush.bf16.msra.mxu0 %v3700
    %5960 = vmatpush.bf16.msra.mxu0 %v3696
    %5961 = vmatpush.bf16.msra.mxu0 %v3692
    %5962 = vmatpush.bf16.msra.mxu0 %v3688
    %5963 = vmatpush.bf16.msra.mxu0 %v3684
    %5964 = vmatpush.bf16.msra.mxu0 %v3680
    %5965 = vmatmul.bf16.gmra.mxu0 %v838
    %v5966 = vpop.f32.mrf.mxu0
    %v5967 = vadd.f32 %v5954, %v5966
    %v5968 = vpop.f32.mrf.mxu0
    %5969 = vdwg.mxu0
    %5970 = vmatpush.bf16.msra.mxu0 %v3740
    %5971 = vmatpush.bf16.msra.mxu0 %v3736
    %5972 = vmatpush.bf16.msra.mxu0 %v3732
    %5973 = vmatpush.bf16.msra.mxu0 %v3728
    %5974 = vmatpush.bf16.msra.mxu0 %v3724
    %5975 = vmatpush.bf16.msra.mxu0 %v3720
    %5976 = vmatpush.bf16.msra.mxu0 %v3716
    %5977 = vmatpush.bf16.msra.mxu0 %v3712
    %5978 = vmatmul.bf16.gmra.mxu0 %v839
    %v5979 = vpop.f32.mrf.mxu0
    %v5980 = vadd.f32 %v5967, %v5979
    %v5981 = vpop.f32.mrf.mxu0
    %5982 = vdwg.mxu0
    %5983 = vmatpush.bf16.msra.mxu0 %v3772
    %5984 = vmatpush.bf16.msra.mxu0 %v3768
    %5985 = vmatpush.bf16.msra.mxu0 %v3764
    %5986 = vmatpush.bf16.msra.mxu0 %v3760
    %5987 = vmatpush.bf16.msra.mxu0 %v3756
    %5988 = vmatpush.bf16.msra.mxu0 %v3752
    %5989 = vmatpush.bf16.msra.mxu0 %v3748
    %5990 = vmatpush.bf16.msra.mxu0 %v3744
    %5991 = vmatmul.bf16.gmra.mxu0 %v842
    %v5992 = vpop.f32.mrf.mxu0
    %v5993 = vadd.f32 %v5980, %v5992
    %v5994 = vpop.f32.mrf.mxu0
    %5995 = vdwg.mxu0
    %5996 = vmatpush.bf16.msra.mxu0 %v3804
    %5997 = vmatpush.bf16.msra.mxu0 %v3800
    %5998 = vmatpush.bf16.msra.mxu0 %v3796
    %5999 = vmatpush.bf16.msra.mxu0 %v3792
    %6000 = vmatpush.bf16.msra.mxu0 %v3788
    %6001 = vmatpush.bf16.msra.mxu0 %v3784
    %6002 = vmatpush.bf16.msra.mxu0 %v3780
    %6003 = vmatpush.bf16.msra.mxu0 %v3776
    %6004 = vmatmul.bf16.gmra.mxu0 %v843
    %v6005 = vpop.f32.mrf.mxu0
    %v6006 = vadd.f32 %v5993, %v6005
    %v6007 = vpop.f32.mrf.mxu0
    %6008 = vdwg.mxu0
    %6009 = vmatpush.bf16.msra.mxu0 %v3836
    %6010 = vmatpush.bf16.msra.mxu0 %v3832
    %6011 = vmatpush.bf16.msra.mxu0 %v3828
    %6012 = vmatpush.bf16.msra.mxu0 %v3824
    %6013 = vmatpush.bf16.msra.mxu0 %v3820
    %6014 = vmatpush.bf16.msra.mxu0 %v3816
    %6015 = vmatpush.bf16.msra.mxu0 %v3812
    %6016 = vmatpush.bf16.msra.mxu0 %v3808
    %6017 = vmatmul.bf16.gmra.mxu0 %v844
    %v6018 = vpop.f32.mrf.mxu0
    %v6019 = vadd.f32 %v6006, %v6018
    %v6020 = vpop.f32.mrf.mxu0
    %6021 = vdwg.mxu0
    %6022 = vmatpush.bf16.msra.mxu0 %v3868
    %6023 = vmatpush.bf16.msra.mxu0 %v3864
    %6024 = vmatpush.bf16.msra.mxu0 %v3860
    %6025 = vmatpush.bf16.msra.mxu0 %v3856
    %6026 = vmatpush.bf16.msra.mxu0 %v3852
    %6027 = vmatpush.bf16.msra.mxu0 %v3848
    %6028 = vmatpush.bf16.msra.mxu0 %v3844
    %6029 = vmatpush.bf16.msra.mxu0 %v3840
    %6030 = vmatmul.bf16.gmra.mxu0 %v845
    %v6031 = vpop.f32.mrf.mxu0
    %v6032 = vadd.f32 %v6019, %v6031
    %v6033 = vpop.f32.mrf.mxu0
    %6034 = vdwg.mxu0
    %6035 = vmatpush.bf16.msra.mxu0 %v3900
    %6036 = vmatpush.bf16.msra.mxu0 %v3896
    %6037 = vmatpush.bf16.msra.mxu0 %v3892
    %6038 = vmatpush.bf16.msra.mxu0 %v3888
    %6039 = vmatpush.bf16.msra.mxu0 %v3884
    %6040 = vmatpush.bf16.msra.mxu0 %v3880
    %6041 = vmatpush.bf16.msra.mxu0 %v3876
    %6042 = vmatpush.bf16.msra.mxu0 %v3872
    %6043 = vmatmul.bf16.gmra.mxu0 %v846
    %v6044 = vpop.f32.mrf.mxu0
    %v6045 = vadd.f32 %v6032, %v6044
    %v6046 = vpop.f32.mrf.mxu0
    %6047 = vdwg.mxu0
    %6048 = vmatpush.bf16.msra.mxu0 %v3932
    %6049 = vmatpush.bf16.msra.mxu0 %v3928
    %6050 = vmatpush.bf16.msra.mxu0 %v3924
    %6051 = vmatpush.bf16.msra.mxu0 %v3920
    %6052 = vmatpush.bf16.msra.mxu0 %v3916
    %6053 = vmatpush.bf16.msra.mxu0 %v3912
    %6054 = vmatpush.bf16.msra.mxu0 %v3908
    %6055 = vmatpush.bf16.msra.mxu0 %v3904
    %6056 = vmatmul.bf16.gmra.mxu0 %v847
    %v6057 = vpop.f32.mrf.mxu0
    %v6058 = vadd.f32 %v6045, %v6057
    %v6059 = vpop.f32.mrf.mxu0
    %6060 = vdwg.mxu0
    %6061 = vmatpush.bf16.msra.mxu0 %v3964
    %6062 = vmatpush.bf16.msra.mxu0 %v3960
    %6063 = vmatpush.bf16.msra.mxu0 %v3956
    %6064 = vmatpush.bf16.msra.mxu0 %v3952
    %6065 = vmatpush.bf16.msra.mxu0 %v3948
    %6066 = vmatpush.bf16.msra.mxu0 %v3944
    %6067 = vmatpush.bf16.msra.mxu0 %v3940
    %6068 = vmatpush.bf16.msra.mxu0 %v3936
    %6069 = vmatmul.bf16.gmra.mxu0 %v848
    %v6070 = vpop.f32.mrf.mxu0
    %v6071 = vadd.f32 %v6058, %v6070
    %v6072 = vpop.f32.mrf.mxu0
    %6073 = vdwg.mxu0
    %6074 = vmatpush.bf16.msra.mxu0 %v3996
    %6075 = vmatpush.bf16.msra.mxu0 %v3992
    %6076 = vmatpush.bf16.msra.mxu0 %v3988
    %6077 = vmatpush.bf16.msra.mxu0 %v3984
    %6078 = vmatpush.bf16.msra.mxu0 %v3980
    %6079 = vmatpush.bf16.msra.mxu0 %v3976
    %6080 = vmatpush.bf16.msra.mxu0 %v3972
    %6081 = vmatpush.bf16.msra.mxu0 %v3968
    %6082 = vmatmul.bf16.gmra.mxu0 %v849
    %v6083 = vpop.f32.mrf.mxu0
    %v6084 = vadd.f32 %v6071, %v6083
    %v6085 = vpop.f32.mrf.mxu0
    %6086 = vdwg.mxu0
    %6087 = vmatpush.bf16.msra.mxu0 0
    %6088 = vmatpush.bf16.msra.mxu0 0
    %6089 = vmatpush.bf16.msra.mxu0 0
    %6090 = vmatpush.bf16.msra.mxu0 0
    %6091 = vmatpush.bf16.msra.mxu0 %v4012
    %6092 = vmatpush.bf16.msra.mxu0 %v4008
    %6093 = vmatpush.bf16.msra.mxu0 %v4004
    %6094 = vmatpush.bf16.msra.mxu0 %v4000
    %6095 = vmatmul.bf16.gmra.mxu0 %v4798
    %v6096 = vpop.f32.mrf.mxu0
    %v6097 = vadd.f32 %v6084, %v6096
    %v6098 = vpop.f32.mrf.mxu0
    %6099 = vdwg.mxu0
    %v6100 = vmax.f32 %v5122, 0.0
    %v6101 = vmax.f32 %v5447, 0.0
    %v6102 = vmax.f32 %v5772, 0.0
    %v6103 = vmax.f32 %v6097, 0.0
    %v6104 = vpack.c.bf16 %v6100, %v6100
    %v6105 = vpack.c.bf16 %v6101, %v6101
    %v6106 = vpack.c.bf16 %v6102, %v6102
    %v6107 = vpack.c.bf16 %v6103, %v6103
    %v6108 = vld [vmem:[%s3] sm:$0xf]
    %v6109 = vld [vmem:[%s3 + $0x4] sm:$0xf]
    %v6110 = vld [vmem:[%s3 + $0x8] sm:$0xf]
    %v6111 = vld [vmem:[%s3 + $0xc] sm:$0xf]
    %v6112 = vld [vmem:[%s3 + $0x10] sm:$0xf]
    %v6113 = vld [vmem:[%s3 + $0x14] sm:$0xf]
    %v6114 = vld [vmem:[%s3 + $0x18] sm:$0xf]
    %v6115 = vld [vmem:[%s3 + $0x1c] sm:$0xf]
    %v6116 = vld [vmem:[%s3 + $0x20] sm:$0xf]
    %v6117 = vld [vmem:[%s3 + $0x24] sm:$0xf]
    %v6118 = vld [vmem:[%s3 + $0x28] sm:$0xf]
    %v6119 = vld [vmem:[%s3 + $0x2c] sm:$0xf]
    %v6120 = vld [vmem:[%s3 + $0x30] sm:$0xf]
    %v6121 = vld [vmem:[%s3 + $0x34] sm:$0xf]
    %v6122 = vld [vmem:[%s3 + $0x38] sm:$0xf]
    %v6123 = vld [vmem:[%s3 + $0x3c] sm:$0xf]
    %v6124 = vld [vmem:[%s3 + $0x40] sm:$0xf]
    %v6125 = vld [vmem:[%s3 + $0x44] sm:$0xf]
    %v6126 = vld [vmem:[%s3 + $0x48] sm:$0xf]
    %v6127 = vld [vmem:[%s3 + $0x4c] sm:$0xf]
    %v6128 = vld [vmem:[%s3 + $0x50] sm:$0xf]
    %v6129 = vld [vmem:[%s3 + $0x54] sm:$0xf]
    %v6130 = vld [vmem:[%s3 + $0x58] sm:$0xf]
    %v6131 = vld [vmem:[%s3 + $0x5c] sm:$0xf]
    %v6132 = vld [vmem:[%s3 + $0x60] sm:$0xf]
    %v6133 = vld [vmem:[%s3 + $0x64] sm:$0xf]
    %v6134 = vld [vmem:[%s3 + $0x68] sm:$0xf]
    %v6135 = vld [vmem:[%s3 + $0x6c] sm:$0xf]
    %v6136 = vld [vmem:[%s3 + $0x70] sm:$0xf]
    %v6137 = vld [vmem:[%s3 + $0x74] sm:$0xf]
    %v6138 = vld [vmem:[%s3 + $0x78] sm:$0xf]
    %v6139 = vld [vmem:[%s3 + $0x7c] sm:$0xf]
    %v6140 = vld [vmem:[%s3 + $0x80] sm:$0xf]
    %v6141 = vld [vmem:[%s3 + $0x84] sm:$0xf]
    %v6142 = vld [vmem:[%s3 + $0x88] sm:$0xf]
    %v6143 = vld [vmem:[%s3 + $0x8c] sm:$0xf]
    %v6144 = vld [vmem:[%s3 + $0x90] sm:$0xf]
    %v6145 = vld [vmem:[%s3 + $0x94] sm:$0xf]
    %v6146 = vld [vmem:[%s3 + $0x98] sm:$0xf]
    %v6147 = vld [vmem:[%s3 + $0x9c] sm:$0xf]
    %v6148 = vld [vmem:[%s3 + $0xa0] sm:$0xf]
    %v6149 = vld [vmem:[%s3 + $0xa4] sm:$0xf]
    %v6150 = vld [vmem:[%s3 + $0xa8] sm:$0xf]
    %v6151 = vld [vmem:[%s3 + $0xac] sm:$0xf]
    %v6152 = vld [vmem:[%s3 + $0xb0] sm:$0xf]
    %v6153 = vld [vmem:[%s3 + $0xb4] sm:$0xf]
    %v6154 = vld [vmem:[%s3 + $0xb8] sm:$0xf]
    %v6155 = vld [vmem:[%s3 + $0xbc] sm:$0xf]
    %v6156 = vld [vmem:[%s3 + $0xc0] sm:$0xf]
    %v6157 = vld [vmem:[%s3 + $0xc4] sm:$0xf]
    %v6158 = vld [vmem:[%s3 + $0xc8] sm:$0xf]
    %v6159 = vld [vmem:[%s3 + $0xcc] sm:$0xf]
    %v6160 = vld [vmem:[%s3 + $0xd0] sm:$0xf]
    %v6161 = vld [vmem:[%s3 + $0xd4] sm:$0xf]
    %v6162 = vld [vmem:[%s3 + $0xd8] sm:$0xf]
    %v6163 = vld [vmem:[%s3 + $0xdc] sm:$0xf]
    %v6164 = vld [vmem:[%s3 + $0xe0] sm:$0xf]
    %v6165 = vld [vmem:[%s3 + $0xe4] sm:$0xf]
    %v6166 = vld [vmem:[%s3 + $0xe8] sm:$0xf]
    %v6167 = vld [vmem:[%s3 + $0xec] sm:$0xf]
    %v6168 = vld [vmem:[%s3 + $0xf0] sm:$0xf]
    %v6169 = vld [vmem:[%s3 + $0xf4] sm:$0xf]
    %v6170 = vld [vmem:[%s3 + $0xf8] sm:$0xf]
    %v6171 = vld [vmem:[%s3 + $0xfc] sm:$0xf]
    %v6172 = vld [vmem:[%s4] sm:$0x1]
    %v6174 = vperm.slane %v6172, 0
    %v6240 = vunpack.c.l.b16 %v6108
    %v6241 = vunpack.c.l.b16 %v6109
    %v6242 = vunpack.c.l.b16 %v6110
    %v6243 = vunpack.c.l.b16 %v6111
    %v6244 = vunpack.c.l.b16 %v6112
    %v6245 = vunpack.c.l.b16 %v6113
    %v6246 = vunpack.c.l.b16 %v6114
    %v6247 = vunpack.c.l.b16 %v6115
    %v6248 = vunpack.c.l.b16 %v6116
    %v6249 = vunpack.c.l.b16 %v6117
    %v6250 = vunpack.c.l.b16 %v6118
    %v6251 = vunpack.c.l.b16 %v6119
    %v6252 = vunpack.c.l.b16 %v6120
    %v6253 = vunpack.c.l.b16 %v6121
    %v6254 = vunpack.c.l.b16 %v6122
    %v6255 = vunpack.c.l.b16 %v6123
    %v6256 = vunpack.c.l.b16 %v6124
    %v6257 = vunpack.c.l.b16 %v6125
    %v6258 = vunpack.c.l.b16 %v6126
    %v6259 = vunpack.c.l.b16 %v6127
    %v6260 = vunpack.c.l.b16 %v6128
    %v6261 = vunpack.c.l.b16 %v6129
    %v6262 = vunpack.c.l.b16 %v6130
    %v6263 = vunpack.c.l.b16 %v6131
    %v6264 = vunpack.c.l.b16 %v6132
    %v6265 = vunpack.c.l.b16 %v6133
    %v6266 = vunpack.c.l.b16 %v6134
    %v6267 = vunpack.c.l.b16 %v6135
    %v6268 = vunpack.c.l.b16 %v6136
    %v6269 = vunpack.c.l.b16 %v6137
    %v6270 = vunpack.c.l.b16 %v6138
    %v6271 = vunpack.c.l.b16 %v6139
    %v6272 = vunpack.c.l.b16 %v6140
    %v6273 = vunpack.c.l.b16 %v6141
    %v6274 = vunpack.c.l.b16 %v6142
    %v6275 = vunpack.c.l.b16 %v6143
    %v6276 = vunpack.c.l.b16 %v6144
    %v6277 = vunpack.c.l.b16 %v6145
    %v6278 = vunpack.c.l.b16 %v6146
    %v6279 = vunpack.c.l.b16 %v6147
    %v6280 = vunpack.c.l.b16 %v6148
    %v6281 = vunpack.c.l.b16 %v6149
    %v6282 = vunpack.c.l.b16 %v6150
    %v6283 = vunpack.c.l.b16 %v6151
    %v6284 = vunpack.c.l.b16 %v6152
    %v6285 = vunpack.c.l.b16 %v6153
    %v6286 = vunpack.c.l.b16 %v6154
    %v6287 = vunpack.c.l.b16 %v6155
    %v6288 = vunpack.c.l.b16 %v6156
    %v6289 = vunpack.c.l.b16 %v6157
    %v6290 = vunpack.c.l.b16 %v6158
    %v6291 = vunpack.c.l.b16 %v6159
    %v6292 = vunpack.c.l.b16 %v6160
    %v6293 = vunpack.c.l.b16 %v6161
    %v6294 = vunpack.c.l.b16 %v6162
    %v6295 = vunpack.c.l.b16 %v6163
    %v6296 = vunpack.c.l.b16 %v6164
    %v6297 = vunpack.c.l.b16 %v6165
    %v6298 = vunpack.c.l.b16 %v6166
    %v6299 = vunpack.c.l.b16 %v6167
    %v6300 = vunpack.c.l.b16 %v6168
    %v6301 = vunpack.c.l.b16 %v6169
    %v6302 = vunpack.c.l.b16 %v6170
    %v6303 = vunpack.c.l.b16 %v6171
    %v6304 = vpack.c.b16 %v6241, %v6240
    %v6305 = vpack.c.b16 %v6243, %v6242
    %v6306 = vpack.c.b16 %v6245, %v6244
    %v6307 = vpack.c.b16 %v6247, %v6246
    %v6308 = vpack.c.b16 %v6249, %v6248
    %v6309 = vpack.c.b16 %v6251, %v6250
    %v6310 = vpack.c.b16 %v6253, %v6252
    %v6311 = vpack.c.b16 %v6255, %v6254
    %v6312 = vpack.c.b16 %v6257, %v6256
    %v6313 = vpack.c.b16 %v6259, %v6258
    %v6314 = vpack.c.b16 %v6261, %v6260
    %v6315 = vpack.c.b16 %v6263, %v6262
    %v6316 = vpack.c.b16 %v6265, %v6264
    %v6317 = vpack.c.b16 %v6267, %v6266
    %v6318 = vpack.c.b16 %v6269, %v6268
    %v6319 = vpack.c.b16 %v6271, %v6270
    %v6320 = vpack.c.b16 %v6273, %v6272
    %v6321 = vpack.c.b16 %v6275, %v6274
    %v6322 = vpack.c.b16 %v6277, %v6276
    %v6323 = vpack.c.b16 %v6279, %v6278
    %v6324 = vpack.c.b16 %v6281, %v6280
    %v6325 = vpack.c.b16 %v6283, %v6282
    %v6326 = vpack.c.b16 %v6285, %v6284
    %v6327 = vpack.c.b16 %v6287, %v6286
    %v6328 = vpack.c.b16 %v6289, %v6288
    %v6329 = vpack.c.b16 %v6291, %v6290
    %v6330 = vpack.c.b16 %v6293, %v6292
    %v6331 = vpack.c.b16 %v6295, %v6294
    %v6332 = vpack.c.b16 %v6297, %v6296
    %v6333 = vpack.c.b16 %v6299, %v6298
    %v6334 = vpack.c.b16 %v6301, %v6300
    %v6335 = vpack.c.b16 %v6303, %v6302
    %6368 = vmatpush.bf16.msra.mxu0 %v6311
    %6369 = vmatpush.bf16.msra.mxu0 %v6310
    %6370 = vmatpush.bf16.msra.mxu0 %v6309
    %6371 = vmatpush.bf16.msra.mxu0 %v6308
    %6372 = vmatpush.bf16.msra.mxu0 %v6307
    %6373 = vmatpush.bf16.msra.mxu0 %v6306
    %6374 = vmatpush.bf16.msra.mxu0 %v6305
    %6375 = vmatpush.bf16.msra.mxu0 %v6304
    %6376 = vmatmul.bf16.gmra.mxu0 %v6104
    %v6377 = vpop.f32.mrf.mxu0
    %v6378 = vadd.f32 %v6174, %v6377
    %v6379 = vpop.f32.mrf.mxu0
    %6380 = vdwg.mxu0
    %6381 = vmatpush.bf16.msra.mxu0 %v6319
    %6382 = vmatpush.bf16.msra.mxu0 %v6318
    %6383 = vmatpush.bf16.msra.mxu0 %v6317
    %6384 = vmatpush.bf16.msra.mxu0 %v6316
    %6385 = vmatpush.bf16.msra.mxu0 %v6315
    %6386 = vmatpush.bf16.msra.mxu0 %v6314
    %6387 = vmatpush.bf16.msra.mxu0 %v6313
    %6388 = vmatpush.bf16.msra.mxu0 %v6312
    %6389 = vmatmul.bf16.gmra.mxu0 %v6105
    %v6390 = vpop.f32.mrf.mxu0
    %v6391 = vadd.f32 %v6378, %v6390
    %v6392 = vpop.f32.mrf.mxu0
    %6393 = vdwg.mxu0
    %6394 = vmatpush.bf16.msra.mxu0 %v6327
    %6395 = vmatpush.bf16.msra.mxu0 %v6326
    %6396 = vmatpush.bf16.msra.mxu0 %v6325
    %6397 = vmatpush.bf16.msra.mxu0 %v6324
    %6398 = vmatpush.bf16.msra.mxu0 %v6323
    %6399 = vmatpush.bf16.msra.mxu0 %v6322
    %6400 = vmatpush.bf16.msra.mxu0 %v6321
    %6401 = vmatpush.bf16.msra.mxu0 %v6320
    %6402 = vmatmul.bf16.gmra.mxu0 %v6106
    %v6403 = vpop.f32.mrf.mxu0
    %v6404 = vadd.f32 %v6391, %v6403
    %v6405 = vpop.f32.mrf.mxu0
    %6406 = vdwg.mxu0
    %6407 = vmatpush.bf16.msra.mxu0 %v6335
    %6408 = vmatpush.bf16.msra.mxu0 %v6334
    %6409 = vmatpush.bf16.msra.mxu0 %v6333
    %6410 = vmatpush.bf16.msra.mxu0 %v6332
    %6411 = vmatpush.bf16.msra.mxu0 %v6331
    %6412 = vmatpush.bf16.msra.mxu0 %v6330
    %6413 = vmatpush.bf16.msra.mxu0 %v6329
    %6414 = vmatpush.bf16.msra.mxu0 %v6328
    %6415 = vmatmul.bf16.gmra.mxu0 %v6107
    %v6416 = vpop.f32.mrf.mxu0
    %v6417 = vadd.f32 %v6404, %v6416
    %v6418 = vpop.f32.mrf.mxu0
    %6419 = vdwg.mxu0
    %6420 = vst [vmem:[#allocation2] sm:$0x3] %v6417
    // Predicated region
    $region22: #{custom_cnn_forward.7} parent=1 // pred_check
      _
    $region23: #{custom_cnn_forward.7} parent=1 // pred_check_branch
      %6422 = sbr.rel (0) target = $region25
    $region24: #{custom_cnn_forward.7} parent=1 // pred_region
      %6424 = vsyncadd [#allocation3], 0
      %s6426 = sshll.u32 [#allocation2], 4
      %s6427 = int_to_ptr.vmem [resolvable:$true] %s6426
      %s6428 = sshll.u32 %s5, 4
      %s6429 = int_to_ptr.hbm [resolvable:$true] %s6428
      %6431 = dma.vmem_to_hbm [thread:$0]  %s6427, 32, %s6429, [#allocation3]
    $region25: #{custom_cnn_forward.7} parent=1 // pred_fallthru
      _
    // Predicated region
    $region26: #{custom_cnn_forward.7} parent=1 // pred_check
      _
    $region27: #{custom_cnn_forward.7} parent=1 // pred_check_branch
      %6433 = sbr.rel (0) target = $region29
    $region28: #{custom_cnn_forward.7} parent=1 // pred_region
      %6435 = dma.done [#allocation3], 32
    $region29: #{custom_cnn_forward.7} parent=1 // pred_fallthru
      _
    %6436 = vsyncpa [#allocation3], 1

</llo_original>
